<compile_context>
chip_gen: v7x
topology: tpu7x:2x2x1
jax: 0.10.0
libtpu: 0.0.40
codegen_flags: <defaults>
</compile_context>

<pallas_src>
import jax
import jax.numpy as jnp
from jax.experimental import pallas as pl
from jax.experimental.pallas import tpu as pltpu

HIDDEN = 768     # hard-coded in the PyTorch module (768 * 3 input to the head)
OUT_PAD = 128    # lane-dense padding for the 64 / 8 / 2-wide tail layers


# ---------------------------------------------------------------------------
# Pallas kernels: CLS "concat" + MLP head (the compute defined by VulClassifier)
# ---------------------------------------------------------------------------
def _mlp_tail(y, b1_ref, w2_ref, b2_ref, w3_ref, b3_ref,
              w4_ref, b4_ref, w5_ref, b5_ref, out_ref):
    """bias+ReLU of layer 1 (y = x @ W1, f32) followed by layers 2..5."""
    h = jnp.maximum(y + b1_ref[...], 0.0)                        # [TB, 768] f32
    for w_ref, b_ref in ((w2_ref, b2_ref), (w3_ref, b3_ref),
                         (w4_ref, b4_ref), (w5_ref, b5_ref)):
        h = jnp.dot(h.astype(w_ref.dtype), w_ref[...],
                    preferred_element_type=jnp.float32)
        h = jnp.maximum(h + b_ref[...], 0.0)                     # eval: no dropout
    out_ref[...] = h.astype(out_ref.dtype)


def _head_kernel_staggered(act_ref, w1_ref, b1_ref, w2_ref, b2_ref,
                           w3_ref, b3_ref, w4_ref, b4_ref, w5_ref, b5_ref,
                           out_ref, acc_ref):
    """Small-batch path.  Grid = (batch_tiles, 3); W1 streams in 768x768
    slices along the last ('arbitrary') axis, partial dots accumulate in a
    VMEM scratch; tail layers + store run on the last slice only."""
    k = pl.program_id(1)

    @pl.when(k == 0)
    def _():
        acc_ref[...] = jnp.zeros_like(acc_ref)

    # act_ref block is (1, TB, 768): slice k of the stacked [text,comment,code]
    acc_ref[...] += jnp.dot(act_ref[0], w1_ref[...],
                            preferred_element_type=jnp.float32)

    @pl.when(k == pl.num_programs(1) - 1)
    def _():
        _mlp_tail(acc_ref[...], b1_ref, w2_ref, b2_ref, w3_ref, b3_ref,
                  w4_ref, b4_ref, w5_ref, b5_ref, out_ref)


def _head_kernel_resident(act_ref, w1_ref, b1_ref, w2_ref, b2_ref,
                          w3_ref, b3_ref, w4_ref, b4_ref, w5_ref, b5_ref,
                          out_ref):
    """Large-batch path.  Grid = (batch_tiles,); all weights stay resident in
    VMEM (constant index maps), cat(text,comment,code) @ W1 is computed as
    three partial dots against tile-aligned static slices of W1."""
    y = jnp.dot(act_ref[0], w1_ref[0:HIDDEN, :],
                preferred_element_type=jnp.float32)
    y = y + jnp.dot(act_ref[1], w1_ref[HIDDEN:2 * HIDDEN, :],
                    preferred_element_type=jnp.float32)
    y = y + jnp.dot(act_ref[2], w1_ref[2 * HIDDEN:3 * HIDDEN, :],
                    preferred_element_type=jnp.float32)
    _mlp_tail(y, b1_ref, w2_ref, b2_ref, w3_ref, b3_ref,
              w4_ref, b4_ref, w5_ref, b5_ref, out_ref)


# ---------------------------------------------------------------------------
# Wrapper: bf16 weights, lane padding, batch grid, staggered / resident W1
# ---------------------------------------------------------------------------
def _round_up(x, m):
    return ((x + m - 1) // m) * m


def prepare_head_params(params):
    """Cast weights to bf16; zero-pad the 64/8/2-wide tail layers to 128 lanes.
    Biases stay f32 (bias add happens on the f32 MXU accumulator).  Padding is
    exact under ReLU (padded lanes stay 0)."""
    (w1, b1), (w2, b2), (w3, b3), (w4, b4), (w5, b5) = params

    def pad2(a, rows, cols):
        return jnp.pad(a, ((0, rows - a.shape[0]), (0, cols - a.shape[1])))

    w3p, b3p = pad2(w3, 256, OUT_PAD), pad2(b3, 1, OUT_PAD)
    w4p, b4p = pad2(w4, OUT_PAD, OUT_PAD), pad2(b4, 1, OUT_PAD)
    w5p, b5p = pad2(w5, OUT_PAD, OUT_PAD), pad2(b5, 1, OUT_PAD)

    flat = []
    for w, b in ((w1, b1), (w2, b2), (w3p, b3p), (w4p, b4p), (w5p, b5p)):
        flat.append(w.astype(jnp.bfloat16))
        flat.append(b.astype(jnp.float32))
    return flat


def _vmem_limit_bytes(TB, stagger, flat_params):
    """Right-sized VMEM reservation computed from the actual block footprint
    (not a blanket 48 MiB).  Floor 16 MiB (fits v5e's default scoped limit),
    cap 32 MiB so we never over-reserve v7x's 64 MiB VMEM."""
    act_blk = TB * HIDDEN * 2                 # bf16 activation tile, per buffer
    out_blk = TB * OUT_PAD * 4                # f32 output tile, per buffer
    w1 = flat_params[0]
    if stagger:
        w1_bytes = 2 * HIDDEN * HIDDEN * w1.dtype.itemsize   # streamed, 2 bufs
        acc_bytes = TB * HIDDEN * 4                          # f32 accumulator
    else:
        w1_bytes = int(w1.size) * w1.dtype.itemsize          # resident, 1 buf
        acc_bytes = 0
    rest = sum(int(p.size) * p.dtype.itemsize for p in flat_params[1:])
    total = 2 * act_blk + 2 * out_blk + w1_bytes + rest + acc_bytes
    return int(min(max(2 * total, 16 * 2 ** 20), 32 * 2 ** 20))


def _pallas_head_call(acts, flat_params, TB, nb, stagger, single_buffer_weights):
    B_pad = nb * TB
    # Megacore split only when there are enough batch tiles that activation
    # traffic dominates the (duplicated-per-core) weight DMA.
    batch_sem = "parallel" if nb > 2 else "arbitrary"

    def const_spec(shape, index_map):
        # Constant-index weight/bias blocks are never re-fetched; a single
        # VMEM buffer is enough (frees ~4 MB vs the default double buffer).
        if single_buffer_weights:
            return pl.BlockSpec(shape, index_map, pipeline_mode=pl.Buffered(1))
        return pl.BlockSpec(shape, index_map)

    if stagger:
        grid = (nb, 3)
        const_map = lambda i, k: (0, 0)
        in_specs = [pl.BlockSpec((1, TB, HIDDEN), lambda i, k: (k, i, 0)),
                    pl.BlockSpec((HIDDEN, HIDDEN), lambda i, k: (k, 0))]
        for p in flat_params[1:]:
            in_specs.append(const_spec(p.shape, const_map))
        out_spec = pl.BlockSpec((TB, OUT_PAD), lambda i, k: (i, 0))
        scratch = [pltpu.VMEM((TB, HIDDEN), jnp.float32)]
        kernel = _head_kernel_staggered
        semantics = (batch_sem, "arbitrary")
    else:
        grid = (nb,)
        const_map = lambda i: (0, 0)
        in_specs = [pl.BlockSpec((3, TB, HIDDEN), lambda i: (0, i, 0))]
        for p in flat_params:
            in_specs.append(const_spec(p.shape, const_map))
        out_spec = pl.BlockSpec((TB, OUT_PAD), lambda i: (i, 0))
        scratch = []
        kernel = _head_kernel_resident
        semantics = (batch_sem,)

    # Advisory cost estimate so XLA schedules neighbours around this call.
    flops = 2 * B_pad * (3 * HIDDEN * HIDDEN + HIDDEN * 256
                         + 256 * OUT_PAD + OUT_PAD * OUT_PAD + OUT_PAD * OUT_PAD)
    w_bytes = sum(int(p.size) * p.dtype.itemsize for p in flat_params)
    if stagger and nb > 1:
        w1 = flat_params[0]
        w_bytes += (nb - 1) * int(w1.size) * w1.dtype.itemsize  # re-streamed W1
    bytes_accessed = (w_bytes + int(acts.size) * acts.dtype.itemsize
                      + B_pad * OUT_PAD * 4)
    cost = pl.CostEstimate(flops=flops, transcendentals=0,
                           bytes_accessed=bytes_accessed)

    return pl.pallas_call(
        kernel,
        out_shape=jax.ShapeDtypeStruct((B_pad, OUT_PAD), jnp.float32),
        grid=grid,
        in_specs=in_specs,
        out_specs=out_spec,
        scratch_shapes=scratch,
        compiler_params=pltpu.CompilerParams(
            dimension_semantics=semantics,
            vmem_limit_bytes=_vmem_limit_bytes(TB, stagger, flat_params)),
        cost_estimate=cost,
    )(acts, *flat_params)


def vul_classifier_head(text_cls, comment_cls, code_cls, params, *,
                        stagger_w1=None):
    """Pallas wrapper around the MLP head.  Picks a large batch tile (fills the
    256-wide MXU on v6e/v7x), pads batch to a multiple of 16 (bf16 sublanes),
    and chooses between the W1-staggered (small batch / latency) and
    W1-resident (large batch) kernel variants."""
    B = text_cls.shape[0]
    flat_params = prepare_head_params(params)

    tb_cap = 512 if B >= 1024 else 256          # bigger tiles when B is large
    TB = min(_round_up(B, 16), tb_cap)
    B_pad = _round_up(B, TB)
    nb = B_pad // TB

    if stagger_w1 is None:
        # Few batch tiles: the exposed W1 load dominates -> stream it in
        # 768-row slices.  Many batch tiles: keep W1 resident so it is DMA'd
        # exactly once instead of once per batch tile.
        stagger_w1 = nb <= 2

    def pad_rows(x):
        if x.shape[0] == B_pad:
            return x
        return jnp.pad(x, ((0, B_pad - x.shape[0]), (0, 0)))

    # Stack CLS activations as [3, B_pad, 768] bf16 (halves activation DMA;
    # the bf16 quantization is mirrored exactly in head_reference_bf16).
    acts = jnp.stack([pad_rows(x).astype(jnp.bfloat16)
                      for x in (text_cls, comment_cls, code_cls)])

    # TODO(synk): for serving with fixed weights, keep the ~4 MB weight set
    # resident across calls (cross-pallas_call future pattern) instead of
    # re-streaming it every invocation.
    try:
        out = _pallas_head_call(acts, flat_params, TB, nb, stagger_w1,
                                single_buffer_weights=True)
    except Exception:
        # Defensive fallback for jax builds that reject pl.Buffered(1) on the
        # resident weight blocks; everything else is unchanged.
        out = _pallas_head_call(acts, flat_params, TB, nb, stagger_w1,
                                single_buffer_weights=False)
    return out[:B, :2]


# ---------------------------------------------------------------------------
# Glue: deterministic parameter init + synthetic encoder stand-in
# ---------------------------------------------------------------------------
def init_head_params(key):
    """PyTorch-default-style uniform(-1/sqrt(fan_in), +1/sqrt(fan_in)) init."""
    dims = [(3 * HIDDEN, HIDDEN), (HIDDEN, 256), (256, 64), (64, 8), (8, 2)]
    params = []
    for (din, dout) in dims:
        key, kw, kb = jax.random.split(key, 3)
        bound = 1.0 / jnp.sqrt(din)
        w = jax.random.uniform(kw, (din, dout), jnp.float32, -bound, bound)
        b = jax.random.uniform(kb, (1, dout), jnp.float32, -bound, bound)
        params.append((w, b))
    return params


def synthetic_encoder(embed_table, input_ids, attention_mask):
    """Stand-in for BertModel / RoBERTa: masked embedding lookup -> [B, S, H].
    TODO(synk): real pretrained transformer layers are not reproducible here."""
    hidden = embed_table[input_ids]                                  # [B, S, H]
    hidden = hidden * attention_mask[..., None].astype(hidden.dtype)
    return hidden


def vul_classifier_forward(params, embed_text, embed_code,
                           text_id, comment_id, code_id,
                           text_mask, comment_mask, code_mask):
    text_output = synthetic_encoder(embed_text, text_id, text_mask)        # bert2
    comment_output = synthetic_encoder(embed_text, comment_id, comment_mask)
    code_output = synthetic_encoder(embed_code, code_id, code_mask)        # bert1.roberta
    text_cls = text_output[:, 0, :]
    comment_cls = comment_output[:, 0, :]
    code_cls = code_output[:, 0, :]
    return vul_classifier_head(text_cls, comment_cls, code_cls, params)


# ---------------------------------------------------------------------------
# References (correctness checks)
# ---------------------------------------------------------------------------
def head_reference_bf16(text_cls, comment_cls, code_cls, flat_params):
    """Pure-JAX mirror of the exact kernel math (bf16 inputs/weights, f32 acc,
    same partial-dot order); valid for both kernel variants."""
    w1, b1, w2, b2, w3, b3, w4, b4, w5, b5 = flat_params
    t = text_cls.astype(jnp.bfloat16)
    c = comment_cls.astype(jnp.bfloat16)
    d = code_cls.astype(jnp.bfloat16)
    y = jnp.dot(t, w1[0:HIDDEN], preferred_element_type=jnp.float32)
    y = y + jnp.dot(c, w1[HIDDEN:2 * HIDDEN], preferred_element_type=jnp.float32)
    y = y + jnp.dot(d, w1[2 * HIDDEN:], preferred_element_type=jnp.float32)
    h = jnp.maximum(y + b1, 0.0)
    for (w, b) in ((w2, b2), (w3, b3), (w4, b4), (w5, b5)):
        h = jnp.maximum(jnp.dot(h.astype(jnp.bfloat16), w,
                                preferred_element_type=jnp.float32) + b, 0.0)
    return h[:, :2]


def head_reference_f32(text_cls, comment_cls, code_cls, params):
    """Exact f32 reference of the original PyTorch head (eval-mode dropout)."""
    h = jnp.concatenate([text_cls, comment_cls, code_cls], axis=1)
    for (w, b) in params:
        h = jnp.maximum(h @ w + b, 0.0)
    return h


if __name__ == "__main__":
    key = jax.random.PRNGKey(0)
    B, S, V = 2, 8, 64  # small batch, short sequence, tiny vocab

    k_params, k_et, k_ec, k_t, k_c, k_d = jax.random.split(key, 6)
    params = init_head_params(k_params)
    embed_text = jax.random.normal(k_et, (V, HIDDEN), jnp.float32) * 0.02
    embed_code = jax.random.normal(k_ec, (V, HIDDEN), jnp.float32) * 0.02

    text_id = jax.random.randint(k_t, (B, S), 0, V, jnp.int32)
    comment_id = jax.random.randint(k_c, (B, S), 0, V, jnp.int32)
    code_id = jax.random.randint(k_d, (B, S), 0, V, jnp.int32)
    text_mask = jnp.ones((B, S), jnp.int32)
    comment_mask = jnp.ones((B, S), jnp.int32)
    code_mask = jnp.ones((B, S), jnp.int32)

    # Full forward (synthetic encoders + Pallas head, auto = staggered-W1 path).
    out = vul_classifier_forward(params, embed_text, embed_code,
                                 text_id, comment_id, code_id,
                                 text_mask, comment_mask, code_mask)
    out = jax.block_until_ready(out)
    assert out.shape == (B, 2) and out.dtype == jnp.float32

    # Recompute CLS activations for the checks.
    t_cls = (embed_text[text_id] * text_mask[..., None])[:, 0, :]
    c_cls = (embed_text[comment_id] * comment_mask[..., None])[:, 0, :]
    d_cls = (embed_code[code_id] * code_mask[..., None])[:, 0, :]

    # (1) Tight check against a pure-JAX mirror of the bf16 kernel math.
    flat_params = prepare_head_params(params)
    ref_bf16 = head_reference_bf16(t_cls, c_cls, d_cls, flat_params)
    assert jnp.allclose(out, ref_bf16, atol=1e-4, rtol=1e-4), \
        "kernel mismatch (bf16 mirror, staggered path)"

    # (2) Loose check against the exact f32 module semantics (bf16 quantization).
    ref_f32 = head_reference_f32(t_cls, c_cls, d_cls, params)
    assert jnp.allclose(out, ref_f32, atol=5e-2, rtol=5e-2), \
        "kernel drift vs f32 reference"

    # (3) Also exercise the large-batch (resident-W1) kernel variant.
    out_res = vul_classifier_head(t_cls, c_cls, d_cls, params, stagger_w1=False)
    out_res = jax.block_until_ready(out_res)
    assert out_res.shape == (B, 2)
    assert jnp.allclose(out_res, ref_bf16, atol=1e-4, rtol=1e-4), \
        "kernel mismatch (bf16 mirror, resident path)"

    print("KERNEL_OK")
</pallas_src>

<mosaic_0001>
module attributes {stable_mosaic.version = 11 : i64} {
  func.func @_head_kernel_staggered(%arg0: i32, %arg1: i32, %arg2: memref<1x16x768xbf16, #tpu.memory_space<vmem>>, %arg3: memref<768x768xbf16, #tpu.memory_space<vmem>>, %arg4: memref<1x768xf32, #tpu.memory_space<vmem>>, %arg5: memref<768x256xbf16, #tpu.memory_space<vmem>>, %arg6: memref<1x256xf32, #tpu.memory_space<vmem>>, %arg7: memref<256x128xbf16, #tpu.memory_space<vmem>>, %arg8: memref<1x128xf32, #tpu.memory_space<vmem>>, %arg9: memref<128x128xbf16, #tpu.memory_space<vmem>>, %arg10: memref<1x128xf32, #tpu.memory_space<vmem>>, %arg11: memref<128x128xbf16, #tpu.memory_space<vmem>>, %arg12: memref<1x128xf32, #tpu.memory_space<vmem>>, %arg13: memref<16x128xf32, #tpu.memory_space<vmem>>, %arg14: memref<16x768xf32, #tpu.memory_space<vmem>>) attributes {dimension_semantics = [#tpu.dimension_semantics<arbitrary>, #tpu.dimension_semantics<arbitrary>], iteration_bounds = array<i64: 1, 3>, scalar_prefetch = 0 : i64, scratch_operands = 1 : i64, tpu.core_type = #tpu.core_type<tc>, window_params = [{transform_indices = @transform_0, window_bounds = array<i64: 1, 16, 768>}, {transform_indices = @transform_1, window_bounds = array<i64: 768, 768>}, {pipeline_mode = #tpu.pipeline_mode<synchronous>, transform_indices = @transform_2, window_bounds = array<i64: 1, 768>}, {pipeline_mode = #tpu.pipeline_mode<synchronous>, transform_indices = @transform_3, window_bounds = array<i64: 768, 256>}, {pipeline_mode = #tpu.pipeline_mode<synchronous>, transform_indices = @transform_4, window_bounds = array<i64: 1, 256>}, {pipeline_mode = #tpu.pipeline_mode<synchronous>, transform_indices = @transform_5, window_bounds = array<i64: 256, 128>}, {pipeline_mode = #tpu.pipeline_mode<synchronous>, transform_indices = @transform_6, window_bounds = array<i64: 1, 128>}, {pipeline_mode = #tpu.pipeline_mode<synchronous>, transform_indices = @transform_7, window_bounds = array<i64: 128, 128>}, {pipeline_mode = #tpu.pipeline_mode<synchronous>, transform_indices = @transform_8, window_bounds = array<i64: 1, 128>}, {pipeline_mode = #tpu.pipeline_mode<synchronous>, transform_indices = @transform_9, window_bounds = array<i64: 128, 128>}, {pipeline_mode = #tpu.pipeline_mode<synchronous>, transform_indices = @transform_10, window_bounds = array<i64: 1, 128>}, {transform_indices = @transform_11, window_bounds = array<i64: 16, 128>}]} {
    %c0_i32 = arith.constant 0 : i32
    %0 = arith.cmpi eq, %arg1, %c0_i32 : i32
    %1 = arith.extui %0 : i1 to i32
    %c0_i32_0 = arith.constant 0 : i32
    %2 = arith.cmpi ne, %1, %c0_i32_0 : i32
    scf.if %2 {
      %cst_10 = arith.constant 0.000000e+00 : f32
      %13 = vector.broadcast %cst_10 : f32 to vector<16x768xf32>
      %c0_11 = arith.constant 0 : index
      %c0_12 = arith.constant 0 : index
      %14 = vector.load %arg14[%c0_11, %c0_12] : memref<16x768xf32, #tpu.memory_space<vmem>>, vector<16x768xf32>
      tpu.vector_store %arg14[%c0_11, %c0_12], %13 {strides = array<i32>} : memref<16x768xf32, #tpu.memory_space<vmem>>, vector<16x768xf32>,
    } else {
    }
    %c0 = arith.constant 0 : index
    %c0_1 = arith.constant 0 : index
    %3 = vector.load %arg14[%c0, %c0_1] : memref<16x768xf32, #tpu.memory_space<vmem>>, vector<16x768xf32>
    %c0_2 = arith.constant 0 : index
    %c0_3 = arith.constant 0 : index
    %c0_4 = arith.constant 0 : index
    %4 = vector.load %arg2[%c0_2, %c0_3, %c0_4] : memref<1x16x768xbf16, #tpu.memory_space<vmem>>, vector<1x16x768xbf16>
    %5 = vector.shape_cast %4 : vector<1x16x768xbf16> to vector<16x768xbf16>
    %c0_5 = arith.constant 0 : index
    %c0_6 = arith.constant 0 : index
    %6 = vector.load %arg3[%c0_5, %c0_6] : memref<768x768xbf16, #tpu.memory_space<vmem>>, vector<768x768xbf16>
    %cst = arith.constant dense<0.000000e+00> : vector<16x768xf32>
    %7 = tpu.matmul %5, %6, %cst {dimension_numbers = #tpu.dot_dimension_numbers<[1], [0], [0], [1], [0, 0, 1, 1], [], []>} : vector<16x768xbf16>, vector<768x768xbf16>, vector<16x768xf32> -> vector<16x768xf32>
    %8 = arith.addf %3, %7 : vector<16x768xf32>
    %c0_7 = arith.constant 0 : index
    %c0_8 = arith.constant 0 : index
    %9 = vector.load %arg14[%c0_7, %c0_8] : memref<16x768xf32, #tpu.memory_space<vmem>>, vector<16x768xf32>
    tpu.vector_store %arg14[%c0_7, %c0_8], %8 {strides = array<i32>} : memref<16x768xf32, #tpu.memory_space<vmem>>, vector<16x768xf32>,
    %c2_i32 = arith.constant 2 : i32
    %10 = arith.cmpi eq, %arg1, %c2_i32 : i32
    %11 = arith.extui %10 : i1 to i32
    %c0_i32_9 = arith.constant 0 : i32
    %12 = arith.cmpi ne, %11, %c0_i32_9 : i32
    scf.if %12 {
      %c0_10 = arith.constant 0 : index
      %c0_11 = arith.constant 0 : index
      %13 = vector.load %arg14[%c0_10, %c0_11] : memref<16x768xf32, #tpu.memory_space<vmem>>, vector<16x768xf32>
      %c0_12 = arith.constant 0 : index
      %c0_13 = arith.constant 0 : index
      %14 = vector.load %arg4[%c0_12, %c0_13] : memref<1x768xf32, #tpu.memory_space<vmem>>, vector<1x768xf32>
      %15 = vector.broadcast %14 : vector<1x768xf32> to vector<16x768xf32>
      %16 = arith.addf %13, %15 : vector<16x768xf32>
      %cst_14 = arith.constant 0.000000e+00 : f32
      %17 = vector.broadcast %cst_14 : f32 to vector<16x768xf32>
      %18 = arith.maximumf %16, %17 : vector<16x768xf32>
      %19 = arith.truncf %18 : vector<16x768xf32> to vector<16x768xbf16>
      %c0_15 = arith.constant 0 : index
      %c0_16 = arith.constant 0 : index
      %20 = vector.load %arg5[%c0_15, %c0_16] : memref<768x256xbf16, #tpu.memory_space<vmem>>, vector<768x256xbf16>
      %cst_17 = arith.constant dense<0.000000e+00> : vector<16x256xf32>
      %21 = tpu.matmul %19, %20, %cst_17 {dimension_numbers = #tpu.dot_dimension_numbers<[1], [0], [0], [1], [0, 0, 1, 1], [], []>} : vector<16x768xbf16>, vector<768x256xbf16>, vector<16x256xf32> -> vector<16x256xf32>
      %c0_18 = arith.constant 0 : index
      %c0_19 = arith.constant 0 : index
      %22 = vector.load %arg6[%c0_18, %c0_19] : memref<1x256xf32, #tpu.memory_space<vmem>>, vector<1x256xf32>
      %23 = vector.broadcast %22 : vector<1x256xf32> to vector<16x256xf32>
      %24 = arith.addf %21, %23 : vector<16x256xf32>
      %cst_20 = arith.constant 0.000000e+00 : f32
      %25 = vector.broadcast %cst_20 : f32 to vector<16x256xf32>
      %26 = arith.maximumf %24, %25 : vector<16x256xf32>
      %27 = arith.truncf %26 : vector<16x256xf32> to vector<16x256xbf16>
      %c0_21 = arith.constant 0 : index
      %c0_22 = arith.constant 0 : index
      %28 = vector.load %arg7[%c0_21, %c0_22] : memref<256x128xbf16, #tpu.memory_space<vmem>>, vector<256x128xbf16>
      %cst_23 = arith.constant dense<0.000000e+00> : vector<16x128xf32>
      %29 = tpu.matmul %27, %28, %cst_23 {dimension_numbers = #tpu.dot_dimension_numbers<[1], [0], [0], [1], [0, 0, 1, 1], [], []>} : vector<16x256xbf16>, vector<256x128xbf16>, vector<16x128xf32> -> vector<16x128xf32>
      %c0_24 = arith.constant 0 : index
      %c0_25 = arith.constant 0 : index
      %30 = vector.load %arg8[%c0_24, %c0_25] : memref<1x128xf32, #tpu.memory_space<vmem>>, vector<1x128xf32>
      %31 = vector.broadcast %30 : vector<1x128xf32> to vector<16x128xf32>
      %32 = arith.addf %29, %31 : vector<16x128xf32>
      %cst_26 = arith.constant 0.000000e+00 : f32
      %33 = vector.broadcast %cst_26 : f32 to vector<16x128xf32>
      %34 = arith.maximumf %32, %33 : vector<16x128xf32>
      %35 = arith.truncf %34 : vector<16x128xf32> to vector<16x128xbf16>
      %c0_27 = arith.constant 0 : index
      %c0_28 = arith.constant 0 : index
      %36 = vector.load %arg9[%c0_27, %c0_28] : memref<128x128xbf16, #tpu.memory_space<vmem>>, vector<128x128xbf16>
      %cst_29 = arith.constant dense<0.000000e+00> : vector<16x128xf32>
      %37 = tpu.matmul %35, %36, %cst_29 {dimension_numbers = #tpu.dot_dimension_numbers<[1], [0], [0], [1], [0, 0, 1, 1], [], []>} : vector<16x128xbf16>, vector<128x128xbf16>, vector<16x128xf32> -> vector<16x128xf32>
      %c0_30 = arith.constant 0 : index
      %c0_31 = arith.constant 0 : index
      %38 = vector.load %arg10[%c0_30, %c0_31] : memref<1x128xf32, #tpu.memory_space<vmem>>, vector<1x128xf32>
      %39 = vector.broadcast %38 : vector<1x128xf32> to vector<16x128xf32>
      %40 = arith.addf %37, %39 : vector<16x128xf32>
      %cst_32 = arith.constant 0.000000e+00 : f32
      %41 = vector.broadcast %cst_32 : f32 to vector<16x128xf32>
      %42 = arith.maximumf %40, %41 : vector<16x128xf32>
      %43 = arith.truncf %42 : vector<16x128xf32> to vector<16x128xbf16>
      %c0_33 = arith.constant 0 : index
      %c0_34 = arith.constant 0 : index
      %44 = vector.load %arg11[%c0_33, %c0_34] : memref<128x128xbf16, #tpu.memory_space<vmem>>, vector<128x128xbf16>
      %cst_35 = arith.constant dense<0.000000e+00> : vector<16x128xf32>
      %45 = tpu.matmul %43, %44, %cst_35 {dimension_numbers = #tpu.dot_dimension_numbers<[1], [0], [0], [1], [0, 0, 1, 1], [], []>} : vector<16x128xbf16>, vector<128x128xbf16>, vector<16x128xf32> -> vector<16x128xf32>
      %c0_36 = arith.constant 0 : index
      %c0_37 = arith.constant 0 : index
      %46 = vector.load %arg12[%c0_36, %c0_37] : memref<1x128xf32, #tpu.memory_space<vmem>>, vector<1x128xf32>
      %47 = vector.broadcast %46 : vector<1x128xf32> to vector<16x128xf32>
      %48 = arith.addf %45, %47 : vector<16x128xf32>
      %cst_38 = arith.constant 0.000000e+00 : f32
      %49 = vector.broadcast %cst_38 : f32 to vector<16x128xf32>
      %50 = arith.maximumf %48, %49 : vector<16x128xf32>
      %c0_39 = arith.constant 0 : index
      %c0_40 = arith.constant 0 : index
      %51 = vector.load %arg13[%c0_39, %c0_40] : memref<16x128xf32, #tpu.memory_space<vmem>>, vector<16x128xf32>
      tpu.vector_store %arg13[%c0_39, %c0_40], %50 {strides = array<i32>} : memref<16x128xf32, #tpu.memory_space<vmem>>, vector<16x128xf32>,
    } else {
    }
    return
  }
  func.func @transform_0(%arg0: i32, %arg1: i32) -> (i32, i32, i32) {
    %c0_i32 = arith.constant 0 : i32
    %c0_i32_0 = arith.constant 0 : i32
    return %arg1, %arg0, %c0_i32 : i32, i32, i32
  }
  func.func @transform_1(%arg0: i32, %arg1: i32) -> (i32, i32) {
    %c0_i32 = arith.constant 0 : i32
    %c0_i32_0 = arith.constant 0 : i32
    return %arg1, %c0_i32 : i32, i32
  }
  func.func @transform_2(%arg0: i32, %arg1: i32) -> (i32, i32) {
    %c0_i32 = arith.constant 0 : i32
    %c0_i32_0 = arith.constant 0 : i32
    %c0_i32_1 = arith.constant 0 : i32
    return %c0_i32, %c0_i32_0 : i32, i32
  }
  func.func @transform_3(%arg0: i32, %arg1: i32) -> (i32, i32) {
    %c0_i32 = arith.constant 0 : i32
    %c0_i32_0 = arith.constant 0 : i32
    %c0_i32_1 = arith.constant 0 : i32
    return %c0_i32, %c0_i32_0 : i32, i32
  }
  func.func @transform_4(%arg0: i32, %arg1: i32) -> (i32, i32) {
    %c0_i32 = arith.constant 0 : i32
    %c0_i32_0 = arith.constant 0 : i32
    %c0_i32_1 = arith.constant 0 : i32
    return %c0_i32, %c0_i32_0 : i32, i32
  }
  func.func @transform_5(%arg0: i32, %arg1: i32) -> (i32, i32) {
    %c0_i32 = arith.constant 0 : i32
    %c0_i32_0 = arith.constant 0 : i32
    %c0_i32_1 = arith.constant 0 : i32
    return %c0_i32, %c0_i32_0 : i32, i32
  }
  func.func @transform_6(%arg0: i32, %arg1: i32) -> (i32, i32) {
    %c0_i32 = arith.constant 0 : i32
    %c0_i32_0 = arith.constant 0 : i32
    %c0_i32_1 = arith.constant 0 : i32
    return %c0_i32, %c0_i32_0 : i32, i32
  }
  func.func @transform_7(%arg0: i32, %arg1: i32) -> (i32, i32) {
    %c0_i32 = arith.constant 0 : i32
    %c0_i32_0 = arith.constant 0 : i32
    %c0_i32_1 = arith.constant 0 : i32
    return %c0_i32, %c0_i32_0 : i32, i32
  }
  func.func @transform_8(%arg0: i32, %arg1: i32) -> (i32, i32) {
    %c0_i32 = arith.constant 0 : i32
    %c0_i32_0 = arith.constant 0 : i32
    %c0_i32_1 = arith.constant 0 : i32
    return %c0_i32, %c0_i32_0 : i32, i32
  }
  func.func @transform_9(%arg0: i32, %arg1: i32) -> (i32, i32) {
    %c0_i32 = arith.constant 0 : i32
    %c0_i32_0 = arith.constant 0 : i32
    %c0_i32_1 = arith.constant 0 : i32
    return %c0_i32, %c0_i32_0 : i32, i32
  }
  func.func @transform_10(%arg0: i32, %arg1: i32) -> (i32, i32) {
    %c0_i32 = arith.constant 0 : i32
    %c0_i32_0 = arith.constant 0 : i32
    %c0_i32_1 = arith.constant 0 : i32
    return %c0_i32, %c0_i32_0 : i32, i32
  }
  func.func @transform_11(%arg0: i32, %arg1: i32) -> (i32, i32) {
    %c0_i32 = arith.constant 0 : i32
    %c0_i32_0 = arith.constant 0 : i32
    return %arg0, %c0_i32 : i32, i32
  }
}

module attributes {stable_mosaic.version = 11 : i64} {
  func.func @_head_kernel_staggered(%arg0: i32, %arg1: i32, %arg2: memref<1x16x768xbf16, #tpu.memory_space<vmem>>, %arg3: memref<768x768xbf16, #tpu.memory_space<vmem>>, %arg4: memref<1x768xf32, #tpu.memory_space<vmem>>, %arg5: memref<768x256xbf16, #tpu.memory_space<vmem>>, %arg6: memref<1x256xf32, #tpu.memory_space<vmem>>, %arg7: memref<256x128xbf16, #tpu.memory_space<vmem>>, %arg8: memref<1x128xf32, #tpu.memory_space<vmem>>, %arg9: memref<128x128xbf16, #tpu.memory_space<vmem>>, %arg10: memref<1x128xf32, #tpu.memory_space<vmem>>, %arg11: memref<128x128xbf16, #tpu.memory_space<vmem>>, %arg12: memref<1x128xf32, #tpu.memory_space<vmem>>, %arg13: memref<16x128xf32, #tpu.memory_space<vmem>>, %arg14: memref<16x768xf32, #tpu.memory_space<vmem>>) attributes {dimension_semantics = [#tpu.dimension_semantics<arbitrary>, #tpu.dimension_semantics<arbitrary>], iteration_bounds = array<i64: 1, 3>, scalar_prefetch = 0 : i64, scratch_operands = 1 : i64, tpu.core_type = #tpu.core_type<tc>, window_params = [{transform_indices = @transform_0, window_bounds = array<i64: 1, 16, 768>}, {transform_indices = @transform_1, window_bounds = array<i64: 768, 768>}, {pipeline_mode = #tpu.pipeline_mode<synchronous>, transform_indices = @transform_2, window_bounds = array<i64: 1, 768>}, {pipeline_mode = #tpu.pipeline_mode<synchronous>, transform_indices = @transform_3, window_bounds = array<i64: 768, 256>}, {pipeline_mode = #tpu.pipeline_mode<synchronous>, transform_indices = @transform_4, window_bounds = array<i64: 1, 256>}, {pipeline_mode = #tpu.pipeline_mode<synchronous>, transform_indices = @transform_5, window_bounds = array<i64: 256, 128>}, {pipeline_mode = #tpu.pipeline_mode<synchronous>, transform_indices = @transform_6, window_bounds = array<i64: 1, 128>}, {pipeline_mode = #tpu.pipeline_mode<synchronous>, transform_indices = @transform_7, window_bounds = array<i64: 128, 128>}, {pipeline_mode = #tpu.pipeline_mode<synchronous>, transform_indices = @transform_8, window_bounds = array<i64: 1, 128>}, {pipeline_mode = #tpu.pipeline_mode<synchronous>, transform_indices = @transform_9, window_bounds = array<i64: 128, 128>}, {pipeline_mode = #tpu.pipeline_mode<synchronous>, transform_indices = @transform_10, window_bounds = array<i64: 1, 128>}, {transform_indices = @transform_11, window_bounds = array<i64: 16, 128>}]} {
    %c0_i32 = arith.constant 0 : i32
    %0 = arith.cmpi eq, %arg1, %c0_i32 : i32
    %1 = arith.extui %0 : i1 to i32
    %c0_i32_0 = arith.constant 0 : i32
    %2 = arith.cmpi ne, %1, %c0_i32_0 : i32
    scf.if %2 {
      %cst_10 = arith.constant 0.000000e+00 : f32
      %13 = vector.broadcast %cst_10 : f32 to vector<16x768xf32>
      %c0_11 = arith.constant 0 : index
      %c0_12 = arith.constant 0 : index
      %14 = vector.load %arg14[%c0_11, %c0_12] : memref<16x768xf32, #tpu.memory_space<vmem>>, vector<16x768xf32>
      tpu.vector_store %arg14[%c0_11, %c0_12], %13 {strides = array<i32>} : memref<16x768xf32, #tpu.memory_space<vmem>>, vector<16x768xf32>,
    } else {
    }
    %c0 = arith.constant 0 : index
    %c0_1 = arith.constant 0 : index
    %3 = vector.load %arg14[%c0, %c0_1] : memref<16x768xf32, #tpu.memory_space<vmem>>, vector<16x768xf32>
    %c0_2 = arith.constant 0 : index
    %c0_3 = arith.constant 0 : index
    %c0_4 = arith.constant 0 : index
    %4 = vector.load %arg2[%c0_2, %c0_3, %c0_4] : memref<1x16x768xbf16, #tpu.memory_space<vmem>>, vector<1x16x768xbf16>
    %5 = vector.shape_cast %4 : vector<1x16x768xbf16> to vector<16x768xbf16>
    %c0_5 = arith.constant 0 : index
    %c0_6 = arith.constant 0 : index
    %6 = vector.load %arg3[%c0_5, %c0_6] : memref<768x768xbf16, #tpu.memory_space<vmem>>, vector<768x768xbf16>
    %cst = arith.constant dense<0.000000e+00> : vector<16x768xf32>
    %7 = tpu.matmul %5, %6, %cst {dimension_numbers = #tpu.dot_dimension_numbers<[1], [0], [0], [1], [0, 0, 1, 1], [], []>} : vector<16x768xbf16>, vector<768x768xbf16>, vector<16x768xf32> -> vector<16x768xf32>
    %8 = arith.addf %3, %7 : vector<16x768xf32>
    %c0_7 = arith.constant 0 : index
    %c0_8 = arith.constant 0 : index
    %9 = vector.load %arg14[%c0_7, %c0_8] : memref<16x768xf32, #tpu.memory_space<vmem>>, vector<16x768xf32>
    tpu.vector_store %arg14[%c0_7, %c0_8], %8 {strides = array<i32>} : memref<16x768xf32, #tpu.memory_space<vmem>>, vector<16x768xf32>,
    %c2_i32 = arith.constant 2 : i32
    %10 = arith.cmpi eq, %arg1, %c2_i32 : i32
    %11 = arith.extui %10 : i1 to i32
    %c0_i32_9 = arith.constant 0 : i32
    %12 = arith.cmpi ne, %11, %c0_i32_9 : i32
    scf.if %12 {
      %c0_10 = arith.constant 0 : index
      %c0_11 = arith.constant 0 : index
      %13 = vector.load %arg14[%c0_10, %c0_11] : memref<16x768xf32, #tpu.memory_space<vmem>>, vector<16x768xf32>
      %c0_12 = arith.constant 0 : index
      %c0_13 = arith.constant 0 : index
      %14 = vector.load %arg4[%c0_12, %c0_13] : memref<1x768xf32, #tpu.memory_space<vmem>>, vector<1x768xf32>
      %15 = vector.broadcast %14 : vector<1x768xf32> to vector<16x768xf32>
      %16 = arith.addf %13, %15 : vector<16x768xf32>
      %cst_14 = arith.constant 0.000000e+00 : f32
      %17 = vector.broadcast %cst_14 : f32 to vector<16x768xf32>
      %18 = arith.maximumf %16, %17 : vector<16x768xf32>
      %19 = arith.truncf %18 : vector<16x768xf32> to vector<16x768xbf16>
      %c0_15 = arith.constant 0 : index
      %c0_16 = arith.constant 0 : index
      %20 = vector.load %arg5[%c0_15, %c0_16] : memref<768x256xbf16, #tpu.memory_space<vmem>>, vector<768x256xbf16>
      %cst_17 = arith.constant dense<0.000000e+00> : vector<16x256xf32>
      %21 = tpu.matmul %19, %20, %cst_17 {dimension_numbers = #tpu.dot_dimension_numbers<[1], [0], [0], [1], [0, 0, 1, 1], [], []>} : vector<16x768xbf16>, vector<768x256xbf16>, vector<16x256xf32> -> vector<16x256xf32>
      %c0_18 = arith.constant 0 : index
      %c0_19 = arith.constant 0 : index
      %22 = vector.load %arg6[%c0_18, %c0_19] : memref<1x256xf32, #tpu.memory_space<vmem>>, vector<1x256xf32>
      %23 = vector.broadcast %22 : vector<1x256xf32> to vector<16x256xf32>
      %24 = arith.addf %21, %23 : vector<16x256xf32>
      %cst_20 = arith.constant 0.000000e+00 : f32
      %25 = vector.broadcast %cst_20 : f32 to vector<16x256xf32>
      %26 = arith.maximumf %24, %25 : vector<16x256xf32>
      %27 = arith.truncf %26 : vector<16x256xf32> to vector<16x256xbf16>
      %c0_21 = arith.constant 0 : index
      %c0_22 = arith.constant 0 : index
      %28 = vector.load %arg7[%c0_21, %c0_22] : memref<256x128xbf16, #tpu.memory_space<vmem>>, vector<256x128xbf16>
      %cst_23 = arith.constant dense<0.000000e+00> : vector<16x128xf32>
      %29 = tpu.matmul %27, %28, %cst_23 {dimension_numbers = #tpu.dot_dimension_numbers<[1], [0], [0], [1], [0, 0, 1, 1], [], []>} : vector<16x256xbf16>, vector<256x128xbf16>, vector<16x128xf32> -> vector<16x128xf32>
      %c0_24 = arith.constant 0 : index
      %c0_25 = arith.constant 0 : index
      %30 = vector.load %arg8[%c0_24, %c0_25] : memref<1x128xf32, #tpu.memory_space<vmem>>, vector<1x128xf32>
      %31 = vector.broadcast %30 : vector<1x128xf32> to vector<16x128xf32>
      %32 = arith.addf %29, %31 : vector<16x128xf32>
      %cst_26 = arith.constant 0.000000e+00 : f32
      %33 = vector.broadcast %cst_26 : f32 to vector<16x128xf32>
      %34 = arith.maximumf %32, %33 : vector<16x128xf32>
      %35 = arith.truncf %34 : vector<16x128xf32> to vector<16x128xbf16>
      %c0_27 = arith.constant 0 : index
      %c0_28 = arith.constant 0 : index
      %36 = vector.load %arg9[%c0_27, %c0_28] : memref<128x128xbf16, #tpu.memory_space<vmem>>, vector<128x128xbf16>
      %cst_29 = arith.constant dense<0.000000e+00> : vector<16x128xf32>
      %37 = tpu.matmul %35, %36, %cst_29 {dimension_numbers = #tpu.dot_dimension_numbers<[1], [0], [0], [1], [0, 0, 1, 1], [], []>} : vector<16x128xbf16>, vector<128x128xbf16>, vector<16x128xf32> -> vector<16x128xf32>
      %c0_30 = arith.constant 0 : index
      %c0_31 = arith.constant 0 : index
      %38 = vector.load %arg10[%c0_30, %c0_31] : memref<1x128xf32, #tpu.memory_space<vmem>>, vector<1x128xf32>
      %39 = vector.broadcast %38 : vector<1x128xf32> to vector<16x128xf32>
      %40 = arith.addf %37, %39 : vector<16x128xf32>
      %cst_32 = arith.constant 0.000000e+00 : f32
      %41 = vector.broadcast %cst_32 : f32 to vector<16x128xf32>
      %42 = arith.maximumf %40, %41 : vector<16x128xf32>
      %43 = arith.truncf %42 : vector<16x128xf32> to vector<16x128xbf16>
      %c0_33 = arith.constant 0 : index
      %c0_34 = arith.constant 0 : index
      %44 = vector.load %arg11[%c0_33, %c0_34] : memref<128x128xbf16, #tpu.memory_space<vmem>>, vector<128x128xbf16>
      %cst_35 = arith.constant dense<0.000000e+00> : vector<16x128xf32>
      %45 = tpu.matmul %43, %44, %cst_35 {dimension_numbers = #tpu.dot_dimension_numbers<[1], [0], [0], [1], [0, 0, 1, 1], [], []>} : vector<16x128xbf16>, vector<128x128xbf16>, vector<16x128xf32> -> vector<16x128xf32>
      %c0_36 = arith.constant 0 : index
      %c0_37 = arith.constant 0 : index
      %46 = vector.load %arg12[%c0_36, %c0_37] : memref<1x128xf32, #tpu.memory_space<vmem>>, vector<1x128xf32>
      %47 = vector.broadcast %46 : vector<1x128xf32> to vector<16x128xf32>
      %48 = arith.addf %45, %47 : vector<16x128xf32>
      %cst_38 = arith.constant 0.000000e+00 : f32
      %49 = vector.broadcast %cst_38 : f32 to vector<16x128xf32>
      %50 = arith.maximumf %48, %49 : vector<16x128xf32>
      %c0_39 = arith.constant 0 : index
      %c0_40 = arith.constant 0 : index
      %51 = vector.load %arg13[%c0_39, %c0_40] : memref<16x128xf32, #tpu.memory_space<vmem>>, vector<16x128xf32>
      tpu.vector_store %arg13[%c0_39, %c0_40], %50 {strides = array<i32>} : memref<16x128xf32, #tpu.memory_space<vmem>>, vector<16x128xf32>,
    } else {
    }
    return
  }
  func.func @transform_0(%arg0: i32, %arg1: i32) -> (i32, i32, i32) {
    %c0_i32 = arith.constant 0 : i32
    %c0_i32_0 = arith.constant 0 : i32
    return %arg1, %arg0, %c0_i32 : i32, i32, i32
  }
  func.func @transform_1(%arg0: i32, %arg1: i32) -> (i32, i32) {
    %c0_i32 = arith.constant 0 : i32
    %c0_i32_0 = arith.constant 0 : i32
    return %arg1, %c0_i32 : i32, i32
  }
  func.func @transform_2(%arg0: i32, %arg1: i32) -> (i32, i32) {
    %c0_i32 = arith.constant 0 : i32
    %c0_i32_0 = arith.constant 0 : i32
    %c0_i32_1 = arith.constant 0 : i32
    return %c0_i32, %c0_i32_0 : i32, i32
  }
  func.func @transform_3(%arg0: i32, %arg1: i32) -> (i32, i32) {
    %c0_i32 = arith.constant 0 : i32
    %c0_i32_0 = arith.constant 0 : i32
    %c0_i32_1 = arith.constant 0 : i32
    return %c0_i32, %c0_i32_0 : i32, i32
  }
  func.func @transform_4(%arg0: i32, %arg1: i32) -> (i32, i32) {
    %c0_i32 = arith.constant 0 : i32
    %c0_i32_0 = arith.constant 0 : i32
    %c0_i32_1 = arith.constant 0 : i32
    return %c0_i32, %c0_i32_0 : i32, i32
  }
  func.func @transform_5(%arg0: i32, %arg1: i32) -> (i32, i32) {
    %c0_i32 = arith.constant 0 : i32
    %c0_i32_0 = arith.constant 0 : i32
    %c0_i32_1 = arith.constant 0 : i32
    return %c0_i32, %c0_i32_0 : i32, i32
  }
  func.func @transform_6(%arg0: i32, %arg1: i32) -> (i32, i32) {
    %c0_i32 = arith.constant 0 : i32
    %c0_i32_0 = arith.constant 0 : i32
    %c0_i32_1 = arith.constant 0 : i32
    return %c0_i32, %c0_i32_0 : i32, i32
  }
  func.func @transform_7(%arg0: i32, %arg1: i32) -> (i32, i32) {
    %c0_i32 = arith.constant 0 : i32
    %c0_i32_0 = arith.constant 0 : i32
    %c0_i32_1 = arith.constant 0 : i32
    return %c0_i32, %c0_i32_0 : i32, i32
  }
  func.func @transform_8(%arg0: i32, %arg1: i32) -> (i32, i32) {
    %c0_i32 = arith.constant 0 : i32
    %c0_i32_0 = arith.constant 0 : i32
    %c0_i32_1 = arith.constant 0 : i32
    return %c0_i32, %c0_i32_0 : i32, i32
  }
  func.func @transform_9(%arg0: i32, %arg1: i32) -> (i32, i32) {
    %c0_i32 = arith.constant 0 : i32
    %c0_i32_0 = arith.constant 0 : i32
    %c0_i32_1 = arith.constant 0 : i32
    return %c0_i32, %c0_i32_0 : i32, i32
  }
  func.func @transform_10(%arg0: i32, %arg1: i32) -> (i32, i32) {
    %c0_i32 = arith.constant 0 : i32
    %c0_i32_0 = arith.constant 0 : i32
    %c0_i32_1 = arith.constant 0 : i32
    return %c0_i32, %c0_i32_0 : i32, i32
  }
  func.func @transform_11(%arg0: i32, %arg1: i32) -> (i32, i32) {
    %c0_i32 = arith.constant 0 : i32
    %c0_i32_0 = arith.constant 0 : i32
    return %arg0, %c0_i32 : i32, i32
  }
}

</mosaic_0001>

<llo_original>
// kernel: tpu_custom_call.1
$region0: #{tpu_custom_call.1}
  #allocation0 [shape = 'u32[]', space=smem, size = 0x4, offset = 0x4, fixed_abs, tag = 'smem constant byte address 0x4 - core index']
  #allocation1 [shape = 'u32[144,128]{1,0:T(1,128)}', space=vmem, size = 0x12000, scoped, tag = 'internal scratch']
  #allocation2 [shape = 'f32[16,768]{1,0:T(8,128)}', space=vmem, size = 0xc000, scoped, tag = 'scratch operand']
  %s0 = inlined_call_operand.hbm [shape: bf16[3,16,768], index: 0, kind: input, shape index: {}]
  %s1 = inlined_call_operand.hbm [shape: bf16[2304,768], index: 1, kind: input, shape index: {}]
  %s2 = inlined_call_operand.hbm [shape: f32[1,768], index: 2, kind: input, shape index: {}]
  %s3 = inlined_call_operand.hbm [shape: bf16[768,256], index: 3, kind: input, shape index: {}]
  %s4 = inlined_call_operand.hbm [shape: f32[1,256], index: 4, kind: input, shape index: {}]
  %s5 = inlined_call_operand.hbm [shape: bf16[256,128], index: 5, kind: input, shape index: {}]
  %s6 = inlined_call_operand.hbm [shape: f32[1,128], index: 6, kind: input, shape index: {}]
  %s7 = inlined_call_operand.hbm [shape: bf16[128,128], index: 7, kind: input, shape index: {}]
  %s8 = inlined_call_operand.hbm [shape: f32[1,128], index: 8, kind: input, shape index: {}]
  %s9 = inlined_call_operand.hbm [shape: bf16[128,128], index: 9, kind: input, shape index: {}]
  %s10 = inlined_call_operand.hbm [shape: f32[1,128], index: 10, kind: input, shape index: {}]
  %s11 = inlined_call_operand.hbm [shape: f32[16,128], index: 11, kind: output, shape index: {}]
  %s12 = sld [smem:[#allocation0]]
  $region129: #{tpu_custom_call.1} parent=0
    _
  %s14 = ssub.s32 1, %s12
  %s15 = scalar_select 0, %s14, %s12
  $region1: #{tpu_custom_call.1} parent=0
    #allocation3 [shape = 'u8[49152]{0}', space=vmem, size = 0xc000, scoped, tag = 'input window, operand 0']
    #allocation4 [shape = 's32[2]{0}', space=sflag, size = 0x8, scoped, tag = 'scoped memory for tpu_custom_call.1']
    #allocation5 [shape = 's32[2]{0}', space=sflag, size = 0x8, scoped, tag = 'scoped memory for tpu_custom_call.1']
    #allocation6 [shape = 'u8[2359296]{0}', space=vmem, size = 0x240000, scoped, tag = 'input window, operand 1']
    #allocation7 [shape = 's32[2]{0}', space=sflag, size = 0x8, scoped, tag = 'scoped memory for tpu_custom_call.1']
    #allocation8 [shape = 'u8[3072]{0}', space=vmem, size = 0xc00, scoped, tag = 'input window, operand 2, single buffered']
    #allocation9 [shape = 'u8[393216]{0}', space=vmem, size = 0x60000, scoped, tag = 'input window, operand 3, single buffered']
    #allocation10 [shape = 's32[1]{0}', space=sflag, size = 0x4, scoped, tag = 'scoped memory for tpu_custom_call.1']
    #allocation11 [shape = 'u8[1024]{0}', space=vmem, size = 0x400, scoped, tag = 'input window, operand 4, single buffered']
    #allocation12 [shape = 'u8[65536]{0}', space=vmem, size = 0x10000, scoped, tag = 'input window, operand 5, single buffered']
    #allocation13 [shape = 's32[1]{0}', space=sflag, size = 0x4, scoped, tag = 'scoped memory for tpu_custom_call.1']
    #allocation14 [shape = 'u8[512]{0}', space=vmem, size = 0x400, scoped, tag = 'input window, operand 6, single buffered']
    #allocation15 [shape = 'u8[32768]{0}', space=vmem, size = 0x8000, scoped, tag = 'input window, operand 7, single buffered']
    #allocation16 [shape = 's32[1]{0}', space=sflag, size = 0x4, scoped, tag = 'scoped memory for tpu_custom_call.1']
    #allocation17 [shape = 'u8[512]{0}', space=vmem, size = 0x400, scoped, tag = 'input window, operand 8, single buffered']
    #allocation18 [shape = 'u8[32768]{0}', space=vmem, size = 0x8000, scoped, tag = 'input window, operand 9, single buffered']
    #allocation19 [shape = 's32[1]{0}', space=sflag, size = 0x4, scoped, tag = 'scoped memory for tpu_custom_call.1']
    #allocation20 [shape = 'u8[512]{0}', space=vmem, size = 0x400, scoped, tag = 'input window, operand 10, single buffered']
    #allocation21 [shape = 'u8[8192]{0}', space=vmem, size = 0x2000, scoped, tag = 'output window, operand 0, single buffered']
    %16 = vsyncpa [#allocation4], 0
    %s17 = scalar_lea.sflag [#allocation4], 1
    %18 = vsyncpa %s17, 0
    %19 = vsyncpa [#allocation7], 0
    %s20 = scalar_lea.sflag [#allocation7], 1
    %21 = vsyncpa %s20, 0
    %22 = vsyncpa [#allocation10], 0
    %23 = vsyncpa [#allocation13], 0
    %24 = vsyncpa [#allocation16], 0
    %25 = vsyncpa [#allocation19], 0
    %26 = vsyncpa [#allocation5], 0
    loop: start=0, step=1, limit=5
    $region2: #{tpu_custom_call.1} parent=1 // loop_pre_header
      _
    $region3: #{tpu_custom_call.1} parent=1 // loop_header
      %s28 = sphi 0, %s32
      %p29 = scmp.ge.s32.totalorder %s28, 5
      %s35 = sphi 0, %s47
      %s36 = sphi 0, %s43
      %s37 = sphi 0, %s35
      %s38 = sphi 0, %s36
      %s39 = sphi 0, %s37
      %s40 = sphi 0, %s38
      %s52 = sphi 0, %s54
      %s55 = sphi 0, %s52
      %s56 = sphi 0, %s55
      %s72 = sphi 0, %s56
      %s78 = sphi 0, %s80
      %s81 = sphi 0, %s78
      %s82 = sphi 0, %s81
      %s98 = sphi 0, %s82
      %s102 = sphi 0, %s102
      %s104 = sphi 0, %s102
      %s105 = sphi 0, %s104
      %s119 = sphi 0, %s105
      %s123 = sphi 0, %s123
      %s125 = sphi 0, %s123
      %s126 = sphi 0, %s125
      %s140 = sphi 0, %s126
      %s144 = sphi 0, %s144
      %s146 = sphi 0, %s144
      %s147 = sphi 0, %s146
      %s161 = sphi 0, %s147
      %s165 = sphi 0, %s165
      %s167 = sphi 0, %s165
      %s168 = sphi 0, %s167
      %s182 = sphi 0, %s168
      %s186 = sphi 0, %s186
      %s188 = sphi 0, %s186
      %s189 = sphi 0, %s188
      %s203 = sphi 0, %s189
      %s207 = sphi 0, %s207
      %s209 = sphi 0, %s207
      %s210 = sphi 0, %s209
      %s224 = sphi 0, %s210
      %s228 = sphi 0, %s228
      %s230 = sphi 0, %s228
      %s231 = sphi 0, %s230
      %s245 = sphi 0, %s231
      %s249 = sphi 0, %s249
      %s251 = sphi 0, %s249
      %s252 = sphi 0, %s251
      %s266 = sphi 0, %s252
      %s270 = sphi 0, %s270
      %s272 = sphi 0, %s270
      %s273 = sphi 0, %s272
      %s287 = sphi 0, %s273
      %s293 = sphi 0, %s295
      %s296 = sphi 0, %s293
      %s297 = sphi 0, %s296
      %s313 = sphi 0, %s297
    $region4: #{tpu_custom_call.1} parent=1 // loop_header_branch
      %31 = sbr.rel (%p29) target = $region8
    $region5: #{tpu_custom_call.1} parent=1 // loop_body
      %s33 = ssub.s32 %s28, 1
      %s34 = ssub.s32 %s28, 2
      %s41 = sadd.s32 1, %s36
      %p42 = scmp.ge.s32.totalorder %s41, 3
      %s43 = scalar_select %p42, 0, %s41
      %s44 = sadd.s32 1, %s35
      %s45 = scalar_select %p42, %s44, %s35
      %p46 = scmp.ge.s32.totalorder %s45, 1
      %s47 = scalar_select %p46, 0, %s45
      %s48 = ssub.s32 %s36, %s43
      %s49 = ssub.s32 %s35, %s47
      %s50 = sor.u32 %s48, %s49
      %p51 = scmp.eq.s32.totalorder %s50, 0
      %s53 = sadd.s32 %s52, 1
      %s54 = scalar_select %p51, %s52, %s53
      %p57 = pneg %p51
      %p58 = scmp.eq.s32.totalorder %s28, 2
      %p59 = por %p57, %p58
      %p60 = scmp.ne.s32.totalorder %s52, %s55
      %p61 = scmp.eq.s32.totalorder %s28, 0
      %p62 = por %p60, %p61
      %p63 = scmp.ne.s32.totalorder %s52, %s55
      %p64 = scmp.eq.s32.totalorder %s33, 2
      %p65 = por %p63, %p64
      %p66 = scmp.ne.s32.totalorder %s55, %s56
      %p67 = scmp.eq.s32.totalorder %s33, 0
      %p68 = por %p66, %p67
      %p69 = scmp.ne.s32.totalorder %s55, %s56
      %p70 = scmp.eq.s32.totalorder %s34, 2
      %p71 = por %p69, %p70
      %p73 = scmp.ne.s32.totalorder %s56, %s72
      %p74 = scmp.eq.s32.totalorder %s34, 0
      %p75 = por %p73, %p74
      %s76 = ssub.s32 %s36, %s43
      %p77 = scmp.eq.s32.totalorder %s76, 0
      %s79 = sadd.s32 %s78, 1
      %s80 = scalar_select %p77, %s78, %s79
      %p83 = pneg %p77
      %p84 = scmp.eq.s32.totalorder %s28, 2
      %p85 = por %p83, %p84
      %p86 = scmp.ne.s32.totalorder %s78, %s81
      %p87 = scmp.eq.s32.totalorder %s28, 0
      %p88 = por %p86, %p87
      %p89 = scmp.ne.s32.totalorder %s78, %s81
      %p90 = scmp.eq.s32.totalorder %s33, 2
      %p91 = por %p89, %p90
      %p92 = scmp.ne.s32.totalorder %s81, %s82
      %p93 = scmp.eq.s32.totalorder %s33, 0
      %p94 = por %p92, %p93
      %p95 = scmp.ne.s32.totalorder %s81, %s82
      %p96 = scmp.eq.s32.totalorder %s34, 2
      %p97 = por %p95, %p96
      %p99 = scmp.ne.s32.totalorder %s82, %s98
      %p100 = scmp.eq.s32.totalorder %s34, 0
      %p101 = por %p99, %p100
      %s103 = sadd.s32 %s102, 1
      %p106 = scmp.eq.s32.totalorder %s28, 2
      %p107 = scmp.ne.s32.totalorder %s102, %s104
      %p108 = scmp.eq.s32.totalorder %s28, 0
      %p109 = por %p107, %p108
      %p110 = scmp.ne.s32.totalorder %s102, %s104
      %p111 = scmp.eq.s32.totalorder %s33, 2
      %p112 = por %p110, %p111
      %p113 = scmp.ne.s32.totalorder %s104, %s105
      %p114 = scmp.eq.s32.totalorder %s33, 0
      %p115 = por %p113, %p114
      %p116 = scmp.ne.s32.totalorder %s104, %s105
      %p117 = scmp.eq.s32.totalorder %s34, 2
      %p118 = por %p116, %p117
      %p120 = scmp.ne.s32.totalorder %s105, %s119
      %p121 = scmp.eq.s32.totalorder %s34, 0
      %p122 = por %p120, %p121
      %s124 = sadd.s32 %s123, 1
      %p127 = scmp.eq.s32.totalorder %s28, 2
      %p128 = scmp.ne.s32.totalorder %s123, %s125
      %p129 = scmp.eq.s32.totalorder %s28, 0
      %p130 = por %p128, %p129
      %p131 = scmp.ne.s32.totalorder %s123, %s125
      %p132 = scmp.eq.s32.totalorder %s33, 2
      %p133 = por %p131, %p132
      %p134 = scmp.ne.s32.totalorder %s125, %s126
      %p135 = scmp.eq.s32.totalorder %s33, 0
      %p136 = por %p134, %p135
      %p137 = scmp.ne.s32.totalorder %s125, %s126
      %p138 = scmp.eq.s32.totalorder %s34, 2
      %p139 = por %p137, %p138
      %p141 = scmp.ne.s32.totalorder %s126, %s140
      %p142 = scmp.eq.s32.totalorder %s34, 0
      %p143 = por %p141, %p142
      %s145 = sadd.s32 %s144, 1
      %p148 = scmp.eq.s32.totalorder %s28, 2
      %p149 = scmp.ne.s32.totalorder %s144, %s146
      %p150 = scmp.eq.s32.totalorder %s28, 0
      %p151 = por %p149, %p150
      %p152 = scmp.ne.s32.totalorder %s144, %s146
      %p153 = scmp.eq.s32.totalorder %s33, 2
      %p154 = por %p152, %p153
      %p155 = scmp.ne.s32.totalorder %s146, %s147
      %p156 = scmp.eq.s32.totalorder %s33, 0
      %p157 = por %p155, %p156
      %p158 = scmp.ne.s32.totalorder %s146, %s147
      %p159 = scmp.eq.s32.totalorder %s34, 2
      %p160 = por %p158, %p159
      %p162 = scmp.ne.s32.totalorder %s147, %s161
      %p163 = scmp.eq.s32.totalorder %s34, 0
      %p164 = por %p162, %p163
      %s166 = sadd.s32 %s165, 1
      %p169 = scmp.eq.s32.totalorder %s28, 2
      %p170 = scmp.ne.s32.totalorder %s165, %s167
      %p171 = scmp.eq.s32.totalorder %s28, 0
      %p172 = por %p170, %p171
      %p173 = scmp.ne.s32.totalorder %s165, %s167
      %p174 = scmp.eq.s32.totalorder %s33, 2
      %p175 = por %p173, %p174
      %p176 = scmp.ne.s32.totalorder %s167, %s168
      %p177 = scmp.eq.s32.totalorder %s33, 0
      %p178 = por %p176, %p177
      %p179 = scmp.ne.s32.totalorder %s167, %s168
      %p180 = scmp.eq.s32.totalorder %s34, 2
      %p181 = por %p179, %p180
      %p183 = scmp.ne.s32.totalorder %s168, %s182
      %p184 = scmp.eq.s32.totalorder %s34, 0
      %p185 = por %p183, %p184
      %s187 = sadd.s32 %s186, 1
      %p190 = scmp.eq.s32.totalorder %s28, 2
      %p191 = scmp.ne.s32.totalorder %s186, %s188
      %p192 = scmp.eq.s32.totalorder %s28, 0
      %p193 = por %p191, %p192
      %p194 = scmp.ne.s32.totalorder %s186, %s188
      %p195 = scmp.eq.s32.totalorder %s33, 2
      %p196 = por %p194, %p195
      %p197 = scmp.ne.s32.totalorder %s188, %s189
      %p198 = scmp.eq.s32.totalorder %s33, 0
      %p199 = por %p197, %p198
      %p200 = scmp.ne.s32.totalorder %s188, %s189
      %p201 = scmp.eq.s32.totalorder %s34, 2
      %p202 = por %p200, %p201
      %p204 = scmp.ne.s32.totalorder %s189, %s203
      %p205 = scmp.eq.s32.totalorder %s34, 0
      %p206 = por %p204, %p205
      %s208 = sadd.s32 %s207, 1
      %p211 = scmp.eq.s32.totalorder %s28, 2
      %p212 = scmp.ne.s32.totalorder %s207, %s209
      %p213 = scmp.eq.s32.totalorder %s28, 0
      %p214 = por %p212, %p213
      %p215 = scmp.ne.s32.totalorder %s207, %s209
      %p216 = scmp.eq.s32.totalorder %s33, 2
      %p217 = por %p215, %p216
      %p218 = scmp.ne.s32.totalorder %s209, %s210
      %p219 = scmp.eq.s32.totalorder %s33, 0
      %p220 = por %p218, %p219
      %p221 = scmp.ne.s32.totalorder %s209, %s210
      %p222 = scmp.eq.s32.totalorder %s34, 2
      %p223 = por %p221, %p222
      %p225 = scmp.ne.s32.totalorder %s210, %s224
      %p226 = scmp.eq.s32.totalorder %s34, 0
      %p227 = por %p225, %p226
      %s229 = sadd.s32 %s228, 1
      %p232 = scmp.eq.s32.totalorder %s28, 2
      %p233 = scmp.ne.s32.totalorder %s228, %s230
      %p234 = scmp.eq.s32.totalorder %s28, 0
      %p235 = por %p233, %p234
      %p236 = scmp.ne.s32.totalorder %s228, %s230
      %p237 = scmp.eq.s32.totalorder %s33, 2
      %p238 = por %p236, %p237
      %p239 = scmp.ne.s32.totalorder %s230, %s231
      %p240 = scmp.eq.s32.totalorder %s33, 0
      %p241 = por %p239, %p240
      %p242 = scmp.ne.s32.totalorder %s230, %s231
      %p243 = scmp.eq.s32.totalorder %s34, 2
      %p244 = por %p242, %p243
      %p246 = scmp.ne.s32.totalorder %s231, %s245
      %p247 = scmp.eq.s32.totalorder %s34, 0
      %p248 = por %p246, %p247
      %s250 = sadd.s32 %s249, 1
      %p253 = scmp.eq.s32.totalorder %s28, 2
      %p254 = scmp.ne.s32.totalorder %s249, %s251
      %p255 = scmp.eq.s32.totalorder %s28, 0
      %p256 = por %p254, %p255
      %p257 = scmp.ne.s32.totalorder %s249, %s251
      %p258 = scmp.eq.s32.totalorder %s33, 2
      %p259 = por %p257, %p258
      %p260 = scmp.ne.s32.totalorder %s251, %s252
      %p261 = scmp.eq.s32.totalorder %s33, 0
      %p262 = por %p260, %p261
      %p263 = scmp.ne.s32.totalorder %s251, %s252
      %p264 = scmp.eq.s32.totalorder %s34, 2
      %p265 = por %p263, %p264
      %p267 = scmp.ne.s32.totalorder %s252, %s266
      %p268 = scmp.eq.s32.totalorder %s34, 0
      %p269 = por %p267, %p268
      %s271 = sadd.s32 %s270, 1
      %p274 = scmp.eq.s32.totalorder %s28, 2
      %p275 = scmp.ne.s32.totalorder %s270, %s272
      %p276 = scmp.eq.s32.totalorder %s28, 0
      %p277 = por %p275, %p276
      %p278 = scmp.ne.s32.totalorder %s270, %s272
      %p279 = scmp.eq.s32.totalorder %s33, 2
      %p280 = por %p278, %p279
      %p281 = scmp.ne.s32.totalorder %s272, %s273
      %p282 = scmp.eq.s32.totalorder %s33, 0
      %p283 = por %p281, %p282
      %p284 = scmp.ne.s32.totalorder %s272, %s273
      %p285 = scmp.eq.s32.totalorder %s34, 2
      %p286 = por %p284, %p285
      %p288 = scmp.ne.s32.totalorder %s273, %s287
      %p289 = scmp.eq.s32.totalorder %s34, 0
      %p290 = por %p288, %p289
      %s291 = ssub.s32 %s35, %s47
      %p292 = scmp.eq.s32.totalorder %s291, 0
      %s294 = sadd.s32 %s293, 1
      %s295 = scalar_select %p292, %s293, %s294
      %p298 = pneg %p292
      %p299 = scmp.eq.s32.totalorder %s28, 2
      %p300 = por %p298, %p299
      %p301 = scmp.ne.s32.totalorder %s293, %s296
      %p302 = scmp.eq.s32.totalorder %s28, 0
      %p303 = por %p301, %p302
      %p304 = scmp.ne.s32.totalorder %s293, %s296
      %p305 = scmp.eq.s32.totalorder %s33, 2
      %p306 = por %p304, %p305
      %p307 = scmp.ne.s32.totalorder %s296, %s297
      %p308 = scmp.eq.s32.totalorder %s33, 0
      %p309 = por %p307, %p308
      %p310 = scmp.ne.s32.totalorder %s296, %s297
      %p311 = scmp.eq.s32.totalorder %s34, 2
      %p312 = por %p310, %p311
      %p314 = scmp.ne.s32.totalorder %s297, %s313
      %p315 = scmp.eq.s32.totalorder %s34, 0
      %p316 = por %p314, %p315
      %p317 = scmp.le.s32.totalorder 1, %s28
      %p318 = scmp.lt.s32.totalorder %s28, 4
      %p319 = pnand %p317, %p318
      %p320 = pneg %p319
      // Predicated region
      $region9: #{tpu_custom_call.1} parent=5 // pred_check
        _
      $region10: #{tpu_custom_call.1} parent=5 // pred_check_branch
        %322 = sbr.rel (%p319) target = $region12
      $region11: #{tpu_custom_call.1} parent=5 // pred_region
        %s323 = ssub.s32 %s28, 1
        // Predicated region
        $region13: #{tpu_custom_call.1} parent=11 // pred_check
          %p324 = pneg %p115
        $region14: #{tpu_custom_call.1} parent=11 // pred_check_branch
          %326 = sbr.rel (%p324) target = $region16
        $region15: #{tpu_custom_call.1} parent=11 // pred_region
          %s328 = ssub.s32 96, 96
          %329 = vsyncadd [#allocation7], %s328
          %s331 = sshll.u32 [#allocation8], 4
          %s332 = int_to_ptr.vmem [resolvable:$true] %s331
          %334 = dma.hbm_to_vmem [thread:$0]  %s2, 96, %s332, [#allocation7]
        $region16: #{tpu_custom_call.1} parent=11 // pred_fallthru
          _
        // Predicated region
        $region17: #{tpu_custom_call.1} parent=11 // pred_check
          %p335 = pneg %p136
        $region18: #{tpu_custom_call.1} parent=11 // pred_check_branch
          %337 = sbr.rel (%p335) target = $region20
        $region19: #{tpu_custom_call.1} parent=11 // pred_region
          %s339 = ssub.s32 12288, 12288
          %340 = vsyncadd [#allocation10], %s339
          %s341 = sshll.u32 [#allocation9], 4
          %s342 = int_to_ptr.vmem [resolvable:$true] %s341
          %347 = dma.hbm_to_vmem [thread:$0]  %s3, 12288, %s342, [#allocation10], 128, 128, 8
        $region20: #{tpu_custom_call.1} parent=11 // pred_fallthru
          _
        // Predicated region
        $region21: #{tpu_custom_call.1} parent=11 // pred_check
          %p348 = pneg %p157
        $region22: #{tpu_custom_call.1} parent=11 // pred_check_branch
          %350 = sbr.rel (%p348) target = $region24
        $region23: #{tpu_custom_call.1} parent=11 // pred_region
          %s352 = ssub.s32 32, 32
          %353 = vsyncadd [#allocation10], %s352
          %s355 = sshll.u32 [#allocation11], 4
          %s356 = int_to_ptr.vmem [resolvable:$true] %s355
          %358 = dma.hbm_to_vmem [thread:$0]  %s4, 32, %s356, [#allocation10]
        $region24: #{tpu_custom_call.1} parent=11 // pred_fallthru
          _
        // Predicated region
        $region25: #{tpu_custom_call.1} parent=11 // pred_check
          %p359 = pneg %p178
        $region26: #{tpu_custom_call.1} parent=11 // pred_check_branch
          %361 = sbr.rel (%p359) target = $region28
        $region27: #{tpu_custom_call.1} parent=11 // pred_region
          %s363 = ssub.s32 2048, 2048
          %364 = vsyncadd [#allocation13], %s363
          %s365 = sshll.u32 [#allocation12], 4
          %s366 = int_to_ptr.vmem [resolvable:$true] %s365
          %371 = dma.hbm_to_vmem [thread:$0]  %s5, 2048, %s366, [#allocation13], 64, 64, 4
        $region28: #{tpu_custom_call.1} parent=11 // pred_fallthru
          _
        // Predicated region
        $region29: #{tpu_custom_call.1} parent=11 // pred_check
          %p372 = pneg %p199
        $region30: #{tpu_custom_call.1} parent=11 // pred_check_branch
          %374 = sbr.rel (%p372) target = $region32
        $region31: #{tpu_custom_call.1} parent=11 // pred_region
          %s376 = ssub.s32 16, 16
          %377 = vsyncadd [#allocation13], %s376
          %s379 = sshll.u32 [#allocation14], 4
          %s380 = int_to_ptr.vmem [resolvable:$true] %s379
          %382 = dma.hbm_to_vmem [thread:$0]  %s6, 16, %s380, [#allocation13]
        $region32: #{tpu_custom_call.1} parent=11 // pred_fallthru
          _
        // Predicated region
        $region33: #{tpu_custom_call.1} parent=11 // pred_check
          %p383 = pneg %p220
        $region34: #{tpu_custom_call.1} parent=11 // pred_check_branch
          %385 = sbr.rel (%p383) target = $region36
        $region35: #{tpu_custom_call.1} parent=11 // pred_region
          %s387 = ssub.s32 1024, 1024
          %388 = vsyncadd [#allocation16], %s387
          %s389 = sshll.u32 [#allocation15], 4
          %s390 = int_to_ptr.vmem [resolvable:$true] %s389
          %395 = dma.hbm_to_vmem [thread:$0]  %s7, 1024, %s390, [#allocation16], 64, 64, 4
        $region36: #{tpu_custom_call.1} parent=11 // pred_fallthru
          _
        // Predicated region
        $region37: #{tpu_custom_call.1} parent=11 // pred_check
          %p396 = pneg %p241
        $region38: #{tpu_custom_call.1} parent=11 // pred_check_branch
          %398 = sbr.rel (%p396) target = $region40
        $region39: #{tpu_custom_call.1} parent=11 // pred_region
          %s400 = ssub.s32 16, 16
          %401 = vsyncadd [#allocation16], %s400
          %s403 = sshll.u32 [#allocation17], 4
          %s404 = int_to_ptr.vmem [resolvable:$true] %s403
          %406 = dma.hbm_to_vmem [thread:$0]  %s8, 16, %s404, [#allocation16]
        $region40: #{tpu_custom_call.1} parent=11 // pred_fallthru
          _
        // Predicated region
        $region41: #{tpu_custom_call.1} parent=11 // pred_check
          %p407 = pneg %p262
        $region42: #{tpu_custom_call.1} parent=11 // pred_check_branch
          %409 = sbr.rel (%p407) target = $region44
        $region43: #{tpu_custom_call.1} parent=11 // pred_region
          %s411 = ssub.s32 1024, 1024
          %412 = vsyncadd [#allocation19], %s411
          %s413 = sshll.u32 [#allocation18], 4
          %s414 = int_to_ptr.vmem [resolvable:$true] %s413
          %419 = dma.hbm_to_vmem [thread:$0]  %s9, 1024, %s414, [#allocation19], 64, 64, 4
        $region44: #{tpu_custom_call.1} parent=11 // pred_fallthru
          _
        // Predicated region
        $region45: #{tpu_custom_call.1} parent=11 // pred_check
          %p420 = pneg %p283
        $region46: #{tpu_custom_call.1} parent=11 // pred_check_branch
          %422 = sbr.rel (%p420) target = $region48
        $region47: #{tpu_custom_call.1} parent=11 // pred_region
          %s424 = ssub.s32 16, 16
          %425 = vsyncadd [#allocation19], %s424
          %s427 = sshll.u32 [#allocation20], 4
          %s428 = int_to_ptr.vmem [resolvable:$true] %s427
          %430 = dma.hbm_to_vmem [thread:$0]  %s10, 16, %s428, [#allocation19]
        $region48: #{tpu_custom_call.1} parent=11 // pred_fallthru
          _
      $region12: #{tpu_custom_call.1} parent=5 // pred_fallthru
        _
      %p431 = scmp.lt.s32.totalorder %s28, 3
      // Predicated region
      $region49: #{tpu_custom_call.1} parent=5 // pred_check
        %p432 = pneg %p431
      $region50: #{tpu_custom_call.1} parent=5 // pred_check_branch
        %434 = sbr.rel (%p432) target = $region52
      $region51: #{tpu_custom_call.1} parent=5 // pred_region
        // Predicated region
        $region53: #{tpu_custom_call.1} parent=51 // pred_check
          %p435 = pneg %p62
        $region54: #{tpu_custom_call.1} parent=51 // pred_check_branch
          %437 = sbr.rel (%p435) target = $region56
        $region55: #{tpu_custom_call.1} parent=51 // pred_region
          %s438 = sand.u32 %s52, 1
          %s439 = scalar_lea.sflag [#allocation4], %s438
          %s440 = sand.u32 %s52, 1
          %s441 = smul.addr %s440, 48
          %s442 = scalar_lea.vmem [#allocation3], %s441
          %s443 = smul.u32 2, %s35
          %s445 = ssub.s32 768, 768
          %446 = vsyncadd %s439, %s445
          %s447 = smul.addr %s443, 6
          %s448 = smul.addr %s36, 12
          %s449 = sadd.s32 %s447, %s448
          %s450 = smul.addr %s449, 64
          %s451 = scalar_lea.hbm %s0, %s450
          %s452 = sshll.u32 %s442, 4
          %s453 = int_to_ptr.vmem [resolvable:$true] %s452
          %458 = dma.hbm_to_vmem [thread:$0]  %s451, 768, %s453, %s439, 384, 384, 24
        $region56: #{tpu_custom_call.1} parent=51 // pred_fallthru
          _
        // Predicated region
        $region57: #{tpu_custom_call.1} parent=51 // pred_check
          %p459 = pneg %p88
        $region58: #{tpu_custom_call.1} parent=51 // pred_check_branch
          %461 = sbr.rel (%p459) target = $region60
        $region59: #{tpu_custom_call.1} parent=51 // pred_region
          %s462 = sand.u32 %s28, 1
          %s463 = scalar_lea.sflag [#allocation7], %s462
          %s464 = sand.u32 %s78, 1
          %s465 = smul.addr %s464, 2304
          %s466 = scalar_lea.vmem [#allocation6], %s465
          %s467 = smul.u32 96, %s36
          %s469 = ssub.s32 36864, 36864
          %470 = vsyncadd %s463, %s469
          %s471 = smul.addr %s467, 6
          %s472 = smul.addr %s471, 64
          %s473 = scalar_lea.hbm %s1, %s472
          %s474 = sshll.u32 %s466, 4
          %s475 = int_to_ptr.vmem [resolvable:$true] %s474
          %480 = dma.hbm_to_vmem [thread:$0]  %s473, 36864, %s475, %s463, 384, 384, 24
        $region60: #{tpu_custom_call.1} parent=51 // pred_fallthru
          _
      $region52: #{tpu_custom_call.1} parent=5 // pred_fallthru
        _
      %p481 = scmp.le.s32.totalorder 1, %s28
      %p482 = scmp.lt.s32.totalorder %s28, 4
      %p483 = pnand %p481, %p482
      %p484 = pneg %p483
      // Predicated region
      $region61: #{tpu_custom_call.1} parent=5 // pred_check
        _
      $region62: #{tpu_custom_call.1} parent=5 // pred_check_branch
        %486 = sbr.rel (%p483) target = $region64
      $region63: #{tpu_custom_call.1} parent=5 // pred_region
        %s487 = ssub.s32 %s28, 1
        %s488 = sand.u32 %s55, 1
        %s489 = scalar_lea.sflag [#allocation4], %s488
        %s490 = sand.u32 %s55, 1
        %s491 = smul.addr %s490, 48
        %s492 = scalar_lea.vmem [#allocation3], %s491
        // Predicated region
        $region65: #{tpu_custom_call.1} parent=63 // pred_check
          %p493 = pneg %p68
        $region66: #{tpu_custom_call.1} parent=63 // pred_check_branch
          %495 = sbr.rel (%p493) target = $region68
        $region67: #{tpu_custom_call.1} parent=63 // pred_region
          %496 = dma.done %s489, 768
        $region68: #{tpu_custom_call.1} parent=63 // pred_fallthru
          _
        %s497 = sand.u32 %s33, 1
        %s498 = scalar_lea.sflag [#allocation7], %s497
        %s499 = sand.u32 %s81, 1
        %s500 = smul.addr %s499, 2304
        %s501 = scalar_lea.vmem [#allocation6], %s500
        // Predicated region
        $region69: #{tpu_custom_call.1} parent=63 // pred_check
          %p502 = pneg %p94
        $region70: #{tpu_custom_call.1} parent=63 // pred_check_branch
          %504 = sbr.rel (%p502) target = $region72
        $region71: #{tpu_custom_call.1} parent=63 // pred_region
          %505 = dma.done %s498, 36864
        $region72: #{tpu_custom_call.1} parent=63 // pred_fallthru
          _
        // Predicated region
        $region73: #{tpu_custom_call.1} parent=63 // pred_check
          %p506 = pneg %p115
        $region74: #{tpu_custom_call.1} parent=63 // pred_check_branch
          %508 = sbr.rel (%p506) target = $region76
        $region75: #{tpu_custom_call.1} parent=63 // pred_region
          %509 = dma.done [#allocation7], 96
        $region76: #{tpu_custom_call.1} parent=63 // pred_fallthru
          _
        // Predicated region
        $region77: #{tpu_custom_call.1} parent=63 // pred_check
          %p510 = pneg %p136
        $region78: #{tpu_custom_call.1} parent=63 // pred_check_branch
          %512 = sbr.rel (%p510) target = $region80
        $region79: #{tpu_custom_call.1} parent=63 // pred_region
          %513 = dma.done [#allocation10], 12288
        $region80: #{tpu_custom_call.1} parent=63 // pred_fallthru
          _
        // Predicated region
        $region81: #{tpu_custom_call.1} parent=63 // pred_check
          %p514 = pneg %p157
        $region82: #{tpu_custom_call.1} parent=63 // pred_check_branch
          %516 = sbr.rel (%p514) target = $region84
        $region83: #{tpu_custom_call.1} parent=63 // pred_region
          %517 = dma.done [#allocation10], 32
        $region84: #{tpu_custom_call.1} parent=63 // pred_fallthru
          _
        // Predicated region
        $region85: #{tpu_custom_call.1} parent=63 // pred_check
          %p518 = pneg %p178
        $region86: #{tpu_custom_call.1} parent=63 // pred_check_branch
          %520 = sbr.rel (%p518) target = $region88
        $region87: #{tpu_custom_call.1} parent=63 // pred_region
          %521 = dma.done [#allocation13], 2048
        $region88: #{tpu_custom_call.1} parent=63 // pred_fallthru
          _
        // Predicated region
        $region89: #{tpu_custom_call.1} parent=63 // pred_check
          %p522 = pneg %p199
        $region90: #{tpu_custom_call.1} parent=63 // pred_check_branch
          %524 = sbr.rel (%p522) target = $region92
        $region91: #{tpu_custom_call.1} parent=63 // pred_region
          %525 = dma.done [#allocation13], 16
        $region92: #{tpu_custom_call.1} parent=63 // pred_fallthru
          _
        // Predicated region
        $region93: #{tpu_custom_call.1} parent=63 // pred_check
          %p526 = pneg %p220
        $region94: #{tpu_custom_call.1} parent=63 // pred_check_branch
          %528 = sbr.rel (%p526) target = $region96
        $region95: #{tpu_custom_call.1} parent=63 // pred_region
          %529 = dma.done [#allocation16], 1024
        $region96: #{tpu_custom_call.1} parent=63 // pred_fallthru
          _
        // Predicated region
        $region97: #{tpu_custom_call.1} parent=63 // pred_check
          %p530 = pneg %p241
        $region98: #{tpu_custom_call.1} parent=63 // pred_check_branch
          %532 = sbr.rel (%p530) target = $region100
        $region99: #{tpu_custom_call.1} parent=63 // pred_region
          %533 = dma.done [#allocation16], 16
        $region100: #{tpu_custom_call.1} parent=63 // pred_fallthru
          _
        // Predicated region
        $region101: #{tpu_custom_call.1} parent=63 // pred_check
          %p534 = pneg %p262
        $region102: #{tpu_custom_call.1} parent=63 // pred_check_branch
          %536 = sbr.rel (%p534) target = $region104
        $region103: #{tpu_custom_call.1} parent=63 // pred_region
          %537 = dma.done [#allocation19], 1024
        $region104: #{tpu_custom_call.1} parent=63 // pred_fallthru
          _
        // Predicated region
        $region105: #{tpu_custom_call.1} parent=63 // pred_check
          %p538 = pneg %p283
        $region106: #{tpu_custom_call.1} parent=63 // pred_check_branch
          %540 = sbr.rel (%p538) target = $region108
        $region107: #{tpu_custom_call.1} parent=63 // pred_region
          %541 = dma.done [#allocation19], 16
        $region108: #{tpu_custom_call.1} parent=63 // pred_fallthru
          _
        %s542 = sand.u32 %s55, 1
        %s543 = scalar_lea.sflag [#allocation4], %s542
        %s544 = sand.u32 %s55, 1
        %s545 = smul.addr %s544, 48
        %s546 = scalar_lea.vmem [#allocation3], %s545
        %p547 = pneg %p68
        %p548 = pneg %p65
        %s549 = sand.u32 %s33, 1
        %s550 = scalar_lea.sflag [#allocation7], %s549
        %s551 = sand.u32 %s81, 1
        %s552 = smul.addr %s551, 2304
        %s553 = scalar_lea.vmem [#allocation6], %s552
        %p554 = pneg %p94
        %p555 = pneg %p91
        %p556 = pneg %p115
        %p557 = pneg %p112
        %p558 = pneg %p136
        %p559 = pneg %p133
        %p560 = pneg %p157
        %p561 = pneg %p154
        %p562 = pneg %p178
        %p563 = pneg %p175
        %p564 = pneg %p199
        %p565 = pneg %p196
        %p566 = pneg %p220
        %p567 = pneg %p217
        %p568 = pneg %p241
        %p569 = pneg %p238
        %p570 = pneg %p262
        %p571 = pneg %p259
        %p572 = pneg %p283
        %p573 = pneg %p280
        %p574 = pneg %p309
        %p575 = pneg %p306
        %s576 = smul.u32 2, %s37
        %s577 = smul.u32 96, %s38
        %s578 = smul.u32 2, %s37
        %p580 = scmp.eq.s32.totalorder %s38, 0
        // Predicated region
        $region109: #{tpu_custom_call.1} parent=63 // pred_check
          %p581 = pneg %p580
        $region110: #{tpu_custom_call.1} parent=63 // pred_check_branch
          %583 = sbr.rel (%p581) target = $region112
        $region111: #{tpu_custom_call.1} parent=63 // pred_region
          %584 = vst [vmem:[#allocation2] sm:$0xff] 0.0
          %585 = vst [vmem:[#allocation2 + $0x8] sm:$0xff] 0.0
          %586 = vst [vmem:[#allocation2 + $0x10] sm:$0xff] 0.0
          %587 = vst [vmem:[#allocation2 + $0x18] sm:$0xff] 0.0
          %588 = vst [vmem:[#allocation2 + $0x20] sm:$0xff] 0.0
          %589 = vst [vmem:[#allocation2 + $0x28] sm:$0xff] 0.0
          %590 = vst [vmem:[#allocation2 + $0x30] sm:$0xff] 0.0
          %591 = vst [vmem:[#allocation2 + $0x38] sm:$0xff] 0.0
          %592 = vst [vmem:[#allocation2 + $0x40] sm:$0xff] 0.0
          %593 = vst [vmem:[#allocation2 + $0x48] sm:$0xff] 0.0
          %594 = vst [vmem:[#allocation2 + $0x50] sm:$0xff] 0.0
          %595 = vst [vmem:[#allocation2 + $0x58] sm:$0xff] 0.0
        $region112: #{tpu_custom_call.1} parent=63 // pred_fallthru
          _
        %v596 = vld [vmem:[#allocation2] sm:$0xff]
        %v597 = vld [vmem:[#allocation2 + $0x8] sm:$0xff]
        %v598 = vld [vmem:[#allocation2 + $0x10] sm:$0xff]
        %v599 = vld [vmem:[#allocation2 + $0x18] sm:$0xff]
        %v600 = vld [vmem:[#allocation2 + $0x20] sm:$0xff]
        %v601 = vld [vmem:[#allocation2 + $0x28] sm:$0xff]
        %v602 = vld [vmem:[#allocation2 + $0x30] sm:$0xff]
        %v603 = vld [vmem:[#allocation2 + $0x38] sm:$0xff]
        %v604 = vld [vmem:[#allocation2 + $0x40] sm:$0xff]
        %v605 = vld [vmem:[#allocation2 + $0x48] sm:$0xff]
        %v606 = vld [vmem:[#allocation2 + $0x50] sm:$0xff]
        %v607 = vld [vmem:[#allocation2 + $0x58] sm:$0xff]
        %v608 = vld [vmem:[%s492] sm:$0xff]
        %v609 = vld [vmem:[%s492 + $0x8] sm:$0xff]
        %v610 = vld [vmem:[%s492 + $0x10] sm:$0xff]
        %v611 = vld [vmem:[%s492 + $0x18] sm:$0xff]
        %v612 = vld [vmem:[%s492 + $0x20] sm:$0xff]
        %v613 = vld [vmem:[%s492 + $0x28] sm:$0xff]
        %v614 = vld [vmem:[%s501] sm:$0xff]
        %v615 = vld [vmem:[%s501 + $0x8] sm:$0xff]
        %v616 = vld [vmem:[%s501 + $0x10] sm:$0xff]
        %v617 = vld [vmem:[%s501 + $0x18] sm:$0xff]
        %v618 = vld [vmem:[%s501 + $0x20] sm:$0xff]
        %v619 = vld [vmem:[%s501 + $0x28] sm:$0xff]
        %v620 = vld [vmem:[%s501 + $0x30] sm:$0xff]
        %v621 = vld [vmem:[%s501 + $0x38] sm:$0xff]
        %v622 = vld [vmem:[%s501 + $0x40] sm:$0xff]
        %v623 = vld [vmem:[%s501 + $0x48] sm:$0xff]
        %v624 = vld [vmem:[%s501 + $0x50] sm:$0xff]
        %v625 = vld [vmem:[%s501 + $0x58] sm:$0xff]
        %v626 = vld [vmem:[%s501 + $0x60] sm:$0xff]
        %v627 = vld [vmem:[%s501 + $0x68] sm:$0xff]
        %v628 = vld [vmem:[%s501 + $0x70] sm:$0xff]
        %v629 = vld [vmem:[%s501 + $0x78] sm:$0xff]
        %v630 = vld [vmem:[%s501 + $0x80] sm:$0xff]
        %v631 = vld [vmem:[%s501 + $0x88] sm:$0xff]
        %v632 = vld [vmem:[%s501 + $0x90] sm:$0xff]
        %v633 = vld [vmem:[%s501 + $0x98] sm:$0xff]
        %v634 = vld [vmem:[%s501 + $0xa0] sm:$0xff]
        %v635 = vld [vmem:[%s501 + $0xa8] sm:$0xff]
        %v636 = vld [vmem:[%s501 + $0xb0] sm:$0xff]
        %v637 = vld [vmem:[%s501 + $0xb8] sm:$0xff]
        %v638 = vld [vmem:[%s501 + $0xc0] sm:$0xff]
        %v639 = vld [vmem:[%s501 + $0xc8] sm:$0xff]
        %v640 = vld [vmem:[%s501 + $0xd0] sm:$0xff]
        %v641 = vld [vmem:[%s501 + $0xd8] sm:$0xff]
        %v642 = vld [vmem:[%s501 + $0xe0] sm:$0xff]
        %v643 = vld [vmem:[%s501 + $0xe8] sm:$0xff]
        %v644 = vld [vmem:[%s501 + $0xf0] sm:$0xff]
        %v645 = vld [vmem:[%s501 + $0xf8] sm:$0xff]
        %v646 = vld [vmem:[%s501 + $0x100] sm:$0xff]
        %v647 = vld [vmem:[%s501 + $0x108] sm:$0xff]
        %v648 = vld [vmem:[%s501 + $0x110] sm:$0xff]
        %v649 = vld [vmem:[%s501 + $0x118] sm:$0xff]
        %v650 = vld [vmem:[%s501 + $0x120] sm:$0xff]
        %v651 = vld [vmem:[%s501 + $0x128] sm:$0xff]
        %v652 = vld [vmem:[%s501 + $0x130] sm:$0xff]
        %v653 = vld [vmem:[%s501 + $0x138] sm:$0xff]
        %v654 = vld [vmem:[%s501 + $0x140] sm:$0xff]
        %v655 = vld [vmem:[%s501 + $0x148] sm:$0xff]
        %v656 = vld [vmem:[%s501 + $0x150] sm:$0xff]
        %v657 = vld [vmem:[%s501 + $0x158] sm:$0xff]
        %v658 = vld [vmem:[%s501 + $0x160] sm:$0xff]
        %v659 = vld [vmem:[%s501 + $0x168] sm:$0xff]
        %v660 = vld [vmem:[%s501 + $0x170] sm:$0xff]
        %v661 = vld [vmem:[%s501 + $0x178] sm:$0xff]
        %v662 = vld [vmem:[%s501 + $0x180] sm:$0xff]
        %v663 = vld [vmem:[%s501 + $0x188] sm:$0xff]
        %v664 = vld [vmem:[%s501 + $0x190] sm:$0xff]
        %v665 = vld [vmem:[%s501 + $0x198] sm:$0xff]
        %v666 = vld [vmem:[%s501 + $0x1a0] sm:$0xff]
        %v667 = vld [vmem:[%s501 + $0x1a8] sm:$0xff]
        %v668 = vld [vmem:[%s501 + $0x1b0] sm:$0xff]
        %v669 = vld [vmem:[%s501 + $0x1b8] sm:$0xff]
        %v670 = vld [vmem:[%s501 + $0x1c0] sm:$0xff]
        %v671 = vld [vmem:[%s501 + $0x1c8] sm:$0xff]
        %v672 = vld [vmem:[%s501 + $0x1d0] sm:$0xff]
        %v673 = vld [vmem:[%s501 + $0x1d8] sm:$0xff]
        %v674 = vld [vmem:[%s501 + $0x1e0] sm:$0xff]
        %v675 = vld [vmem:[%s501 + $0x1e8] sm:$0xff]
        %v676 = vld [vmem:[%s501 + $0x1f0] sm:$0xff]
        %v677 = vld [vmem:[%s501 + $0x1f8] sm:$0xff]
        %v678 = vld [vmem:[%s501 + $0x200] sm:$0xff]
        %v679 = vld [vmem:[%s501 + $0x208] sm:$0xff]
        %v680 = vld [vmem:[%s501 + $0x210] sm:$0xff]
        %v681 = vld [vmem:[%s501 + $0x218] sm:$0xff]
        %v682 = vld [vmem:[%s501 + $0x220] sm:$0xff]
        %v683 = vld [vmem:[%s501 + $0x228] sm:$0xff]
        %v684 = vld [vmem:[%s501 + $0x230] sm:$0xff]
        %v685 = vld [vmem:[%s501 + $0x238] sm:$0xff]
        %v686 = vld [vmem:[%s501 + $0x240] sm:$0xff]
        %v687 = vld [vmem:[%s501 + $0x248] sm:$0xff]
        %v688 = vld [vmem:[%s501 + $0x250] sm:$0xff]
        %v689 = vld [vmem:[%s501 + $0x258] sm:$0xff]
        %v690 = vld [vmem:[%s501 + $0x260] sm:$0xff]
        %v691 = vld [vmem:[%s501 + $0x268] sm:$0xff]
        %v692 = vld [vmem:[%s501 + $0x270] sm:$0xff]
        %v693 = vld [vmem:[%s501 + $0x278] sm:$0xff]
        %v694 = vld [vmem:[%s501 + $0x280] sm:$0xff]
        %v695 = vld [vmem:[%s501 + $0x288] sm:$0xff]
        %v696 = vld [vmem:[%s501 + $0x290] sm:$0xff]
        %v697 = vld [vmem:[%s501 + $0x298] sm:$0xff]
        %v698 = vld [vmem:[%s501 + $0x2a0] sm:$0xff]
        %v699 = vld [vmem:[%s501 + $0x2a8] sm:$0xff]
        %v700 = vld [vmem:[%s501 + $0x2b0] sm:$0xff]
        %v701 = vld [vmem:[%s501 + $0x2b8] sm:$0xff]
        %v702 = vld [vmem:[%s501 + $0x2c0] sm:$0xff]
        %v703 = vld [vmem:[%s501 + $0x2c8] sm:$0xff]
        %v704 = vld [vmem:[%s501 + $0x2d0] sm:$0xff]
        %v705 = vld [vmem:[%s501 + $0x2d8] sm:$0xff]
        %v706 = vld [vmem:[%s501 + $0x2e0] sm:$0xff]
        %v707 = vld [vmem:[%s501 + $0x2e8] sm:$0xff]
        %v708 = vld [vmem:[%s501 + $0x2f0] sm:$0xff]
        %v709 = vld [vmem:[%s501 + $0x2f8] sm:$0xff]
        %v710 = vld [vmem:[%s501 + $0x300] sm:$0xff]
        %v711 = vld [vmem:[%s501 + $0x308] sm:$0xff]
        %v712 = vld [vmem:[%s501 + $0x310] sm:$0xff]
        %v713 = vld [vmem:[%s501 + $0x318] sm:$0xff]
        %v714 = vld [vmem:[%s501 + $0x320] sm:$0xff]
        %v715 = vld [vmem:[%s501 + $0x328] sm:$0xff]
        %v716 = vld [vmem:[%s501 + $0x330] sm:$0xff]
        %v717 = vld [vmem:[%s501 + $0x338] sm:$0xff]
        %v718 = vld [vmem:[%s501 + $0x340] sm:$0xff]
        %v719 = vld [vmem:[%s501 + $0x348] sm:$0xff]
        %v720 = vld [vmem:[%s501 + $0x350] sm:$0xff]
        %v721 = vld [vmem:[%s501 + $0x358] sm:$0xff]
        %v722 = vld [vmem:[%s501 + $0x360] sm:$0xff]
        %v723 = vld [vmem:[%s501 + $0x368] sm:$0xff]
        %v724 = vld [vmem:[%s501 + $0x370] sm:$0xff]
        %v725 = vld [vmem:[%s501 + $0x378] sm:$0xff]
        %v726 = vld [vmem:[%s501 + $0x380] sm:$0xff]
        %v727 = vld [vmem:[%s501 + $0x388] sm:$0xff]
        %v728 = vld [vmem:[%s501 + $0x390] sm:$0xff]
        %v729 = vld [vmem:[%s501 + $0x398] sm:$0xff]
        %v730 = vld [vmem:[%s501 + $0x3a0] sm:$0xff]
        %v731 = vld [vmem:[%s501 + $0x3a8] sm:$0xff]
        %v732 = vld [vmem:[%s501 + $0x3b0] sm:$0xff]
        %v733 = vld [vmem:[%s501 + $0x3b8] sm:$0xff]
        %v734 = vld [vmem:[%s501 + $0x3c0] sm:$0xff]
        %v735 = vld [vmem:[%s501 + $0x3c8] sm:$0xff]
        %v736 = vld [vmem:[%s501 + $0x3d0] sm:$0xff]
        %v737 = vld [vmem:[%s501 + $0x3d8] sm:$0xff]
        %v738 = vld [vmem:[%s501 + $0x3e0] sm:$0xff]
        %v739 = vld [vmem:[%s501 + $0x3e8] sm:$0xff]
        %v740 = vld [vmem:[%s501 + $0x3f0] sm:$0xff]
        %v741 = vld [vmem:[%s501 + $0x3f8] sm:$0xff]
        %v742 = vld [vmem:[%s501 + $0x400] sm:$0xff]
        %v743 = vld [vmem:[%s501 + $0x408] sm:$0xff]
        %v744 = vld [vmem:[%s501 + $0x410] sm:$0xff]
        %v745 = vld [vmem:[%s501 + $0x418] sm:$0xff]
        %v746 = vld [vmem:[%s501 + $0x420] sm:$0xff]
        %v747 = vld [vmem:[%s501 + $0x428] sm:$0xff]
        %v748 = vld [vmem:[%s501 + $0x430] sm:$0xff]
        %v749 = vld [vmem:[%s501 + $0x438] sm:$0xff]
        %v750 = vld [vmem:[%s501 + $0x440] sm:$0xff]
        %v751 = vld [vmem:[%s501 + $0x448] sm:$0xff]
        %v752 = vld [vmem:[%s501 + $0x450] sm:$0xff]
        %v753 = vld [vmem:[%s501 + $0x458] sm:$0xff]
        %v754 = vld [vmem:[%s501 + $0x460] sm:$0xff]
        %v755 = vld [vmem:[%s501 + $0x468] sm:$0xff]
        %v756 = vld [vmem:[%s501 + $0x470] sm:$0xff]
        %v757 = vld [vmem:[%s501 + $0x478] sm:$0xff]
        %v758 = vld [vmem:[%s501 + $0x480] sm:$0xff]
        %v759 = vld [vmem:[%s501 + $0x488] sm:$0xff]
        %v760 = vld [vmem:[%s501 + $0x490] sm:$0xff]
        %v761 = vld [vmem:[%s501 + $0x498] sm:$0xff]
        %v762 = vld [vmem:[%s501 + $0x4a0] sm:$0xff]
        %v763 = vld [vmem:[%s501 + $0x4a8] sm:$0xff]
        %v764 = vld [vmem:[%s501 + $0x4b0] sm:$0xff]
        %v765 = vld [vmem:[%s501 + $0x4b8] sm:$0xff]
        %v766 = vld [vmem:[%s501 + $0x4c0] sm:$0xff]
        %v767 = vld [vmem:[%s501 + $0x4c8] sm:$0xff]
        %v768 = vld [vmem:[%s501 + $0x4d0] sm:$0xff]
        %v769 = vld [vmem:[%s501 + $0x4d8] sm:$0xff]
        %v770 = vld [vmem:[%s501 + $0x4e0] sm:$0xff]
        %v771 = vld [vmem:[%s501 + $0x4e8] sm:$0xff]
        %v772 = vld [vmem:[%s501 + $0x4f0] sm:$0xff]
        %v773 = vld [vmem:[%s501 + $0x4f8] sm:$0xff]
        %v774 = vld [vmem:[%s501 + $0x500] sm:$0xff]
        %v775 = vld [vmem:[%s501 + $0x508] sm:$0xff]
        %v776 = vld [vmem:[%s501 + $0x510] sm:$0xff]
        %v777 = vld [vmem:[%s501 + $0x518] sm:$0xff]
        %v778 = vld [vmem:[%s501 + $0x520] sm:$0xff]
        %v779 = vld [vmem:[%s501 + $0x528] sm:$0xff]
        %v780 = vld [vmem:[%s501 + $0x530] sm:$0xff]
        %v781 = vld [vmem:[%s501 + $0x538] sm:$0xff]
        %v782 = vld [vmem:[%s501 + $0x540] sm:$0xff]
        %v783 = vld [vmem:[%s501 + $0x548] sm:$0xff]
        %v784 = vld [vmem:[%s501 + $0x550] sm:$0xff]
        %v785 = vld [vmem:[%s501 + $0x558] sm:$0xff]
        %v786 = vld [vmem:[%s501 + $0x560] sm:$0xff]
        %v787 = vld [vmem:[%s501 + $0x568] sm:$0xff]
        %v788 = vld [vmem:[%s501 + $0x570] sm:$0xff]
        %v789 = vld [vmem:[%s501 + $0x578] sm:$0xff]
        %v790 = vld [vmem:[%s501 + $0x580] sm:$0xff]
        %v791 = vld [vmem:[%s501 + $0x588] sm:$0xff]
        %v792 = vld [vmem:[%s501 + $0x590] sm:$0xff]
        %v793 = vld [vmem:[%s501 + $0x598] sm:$0xff]
        %v794 = vld [vmem:[%s501 + $0x5a0] sm:$0xff]
        %v795 = vld [vmem:[%s501 + $0x5a8] sm:$0xff]
        %v796 = vld [vmem:[%s501 + $0x5b0] sm:$0xff]
        %v797 = vld [vmem:[%s501 + $0x5b8] sm:$0xff]
        %v798 = vld [vmem:[%s501 + $0x5c0] sm:$0xff]
        %v799 = vld [vmem:[%s501 + $0x5c8] sm:$0xff]
        %v800 = vld [vmem:[%s501 + $0x5d0] sm:$0xff]
        %v801 = vld [vmem:[%s501 + $0x5d8] sm:$0xff]
        %v802 = vld [vmem:[%s501 + $0x5e0] sm:$0xff]
        %v803 = vld [vmem:[%s501 + $0x5e8] sm:$0xff]
        %v804 = vld [vmem:[%s501 + $0x5f0] sm:$0xff]
        %v805 = vld [vmem:[%s501 + $0x5f8] sm:$0xff]
        %v806 = vld [vmem:[%s501 + $0x600] sm:$0xff]
        %v807 = vld [vmem:[%s501 + $0x608] sm:$0xff]
        %v808 = vld [vmem:[%s501 + $0x610] sm:$0xff]
        %v809 = vld [vmem:[%s501 + $0x618] sm:$0xff]
        %v810 = vld [vmem:[%s501 + $0x620] sm:$0xff]
        %v811 = vld [vmem:[%s501 + $0x628] sm:$0xff]
        %v812 = vld [vmem:[%s501 + $0x630] sm:$0xff]
        %v813 = vld [vmem:[%s501 + $0x638] sm:$0xff]
        %v814 = vld [vmem:[%s501 + $0x640] sm:$0xff]
        %v815 = vld [vmem:[%s501 + $0x648] sm:$0xff]
        %v816 = vld [vmem:[%s501 + $0x650] sm:$0xff]
        %v817 = vld [vmem:[%s501 + $0x658] sm:$0xff]
        %v818 = vld [vmem:[%s501 + $0x660] sm:$0xff]
        %v819 = vld [vmem:[%s501 + $0x668] sm:$0xff]
        %v820 = vld [vmem:[%s501 + $0x670] sm:$0xff]
        %v821 = vld [vmem:[%s501 + $0x678] sm:$0xff]
        %v822 = vld [vmem:[%s501 + $0x680] sm:$0xff]
        %v823 = vld [vmem:[%s501 + $0x688] sm:$0xff]
        %v824 = vld [vmem:[%s501 + $0x690] sm:$0xff]
        %v825 = vld [vmem:[%s501 + $0x698] sm:$0xff]
        %v826 = vld [vmem:[%s501 + $0x6a0] sm:$0xff]
        %v827 = vld [vmem:[%s501 + $0x6a8] sm:$0xff]
        %v828 = vld [vmem:[%s501 + $0x6b0] sm:$0xff]
        %v829 = vld [vmem:[%s501 + $0x6b8] sm:$0xff]
        %v830 = vld [vmem:[%s501 + $0x6c0] sm:$0xff]
        %v831 = vld [vmem:[%s501 + $0x6c8] sm:$0xff]
        %v832 = vld [vmem:[%s501 + $0x6d0] sm:$0xff]
        %v833 = vld [vmem:[%s501 + $0x6d8] sm:$0xff]
        %v834 = vld [vmem:[%s501 + $0x6e0] sm:$0xff]
        %v835 = vld [vmem:[%s501 + $0x6e8] sm:$0xff]
        %v836 = vld [vmem:[%s501 + $0x6f0] sm:$0xff]
        %v837 = vld [vmem:[%s501 + $0x6f8] sm:$0xff]
        %v838 = vld [vmem:[%s501 + $0x700] sm:$0xff]
        %v839 = vld [vmem:[%s501 + $0x708] sm:$0xff]
        %v840 = vld [vmem:[%s501 + $0x710] sm:$0xff]
        %v841 = vld [vmem:[%s501 + $0x718] sm:$0xff]
        %v842 = vld [vmem:[%s501 + $0x720] sm:$0xff]
        %v843 = vld [vmem:[%s501 + $0x728] sm:$0xff]
        %v844 = vld [vmem:[%s501 + $0x730] sm:$0xff]
        %v845 = vld [vmem:[%s501 + $0x738] sm:$0xff]
        %v846 = vld [vmem:[%s501 + $0x740] sm:$0xff]
        %v847 = vld [vmem:[%s501 + $0x748] sm:$0xff]
        %v848 = vld [vmem:[%s501 + $0x750] sm:$0xff]
        %v849 = vld [vmem:[%s501 + $0x758] sm:$0xff]
        %v850 = vld [vmem:[%s501 + $0x760] sm:$0xff]
        %v851 = vld [vmem:[%s501 + $0x768] sm:$0xff]
        %v852 = vld [vmem:[%s501 + $0x770] sm:$0xff]
        %v853 = vld [vmem:[%s501 + $0x778] sm:$0xff]
        %v854 = vld [vmem:[%s501 + $0x780] sm:$0xff]
        %v855 = vld [vmem:[%s501 + $0x788] sm:$0xff]
        %v856 = vld [vmem:[%s501 + $0x790] sm:$0xff]
        %v857 = vld [vmem:[%s501 + $0x798] sm:$0xff]
        %v858 = vld [vmem:[%s501 + $0x7a0] sm:$0xff]
        %v859 = vld [vmem:[%s501 + $0x7a8] sm:$0xff]
        %v860 = vld [vmem:[%s501 + $0x7b0] sm:$0xff]
        %v861 = vld [vmem:[%s501 + $0x7b8] sm:$0xff]
        %v862 = vld [vmem:[%s501 + $0x7c0] sm:$0xff]
        %v863 = vld [vmem:[%s501 + $0x7c8] sm:$0xff]
        %v864 = vld [vmem:[%s501 + $0x7d0] sm:$0xff]
        %v865 = vld [vmem:[%s501 + $0x7d8] sm:$0xff]
        %v866 = vld [vmem:[%s501 + $0x7e0] sm:$0xff]
        %v867 = vld [vmem:[%s501 + $0x7e8] sm:$0xff]
        %v868 = vld [vmem:[%s501 + $0x7f0] sm:$0xff]
        %v869 = vld [vmem:[%s501 + $0x7f8] sm:$0xff]
        %v870 = vld [vmem:[%s501 + $0x800] sm:$0xff]
        %v871 = vld [vmem:[%s501 + $0x808] sm:$0xff]
        %v872 = vld [vmem:[%s501 + $0x810] sm:$0xff]
        %v873 = vld [vmem:[%s501 + $0x818] sm:$0xff]
        %v874 = vld [vmem:[%s501 + $0x820] sm:$0xff]
        %v875 = vld [vmem:[%s501 + $0x828] sm:$0xff]
        %v876 = vld [vmem:[%s501 + $0x830] sm:$0xff]
        %v877 = vld [vmem:[%s501 + $0x838] sm:$0xff]
        %v878 = vld [vmem:[%s501 + $0x840] sm:$0xff]
        %v879 = vld [vmem:[%s501 + $0x848] sm:$0xff]
        %v880 = vld [vmem:[%s501 + $0x850] sm:$0xff]
        %v881 = vld [vmem:[%s501 + $0x858] sm:$0xff]
        %v882 = vld [vmem:[%s501 + $0x860] sm:$0xff]
        %v883 = vld [vmem:[%s501 + $0x868] sm:$0xff]
        %v884 = vld [vmem:[%s501 + $0x870] sm:$0xff]
        %v885 = vld [vmem:[%s501 + $0x878] sm:$0xff]
        %v886 = vld [vmem:[%s501 + $0x880] sm:$0xff]
        %v887 = vld [vmem:[%s501 + $0x888] sm:$0xff]
        %v888 = vld [vmem:[%s501 + $0x890] sm:$0xff]
        %v889 = vld [vmem:[%s501 + $0x898] sm:$0xff]
        %v890 = vld [vmem:[%s501 + $0x8a0] sm:$0xff]
        %v891 = vld [vmem:[%s501 + $0x8a8] sm:$0xff]
        %v892 = vld [vmem:[%s501 + $0x8b0] sm:$0xff]
        %v893 = vld [vmem:[%s501 + $0x8b8] sm:$0xff]
        %v894 = vld [vmem:[%s501 + $0x8c0] sm:$0xff]
        %v895 = vld [vmem:[%s501 + $0x8c8] sm:$0xff]
        %v896 = vld [vmem:[%s501 + $0x8d0] sm:$0xff]
        %v897 = vld [vmem:[%s501 + $0x8d8] sm:$0xff]
        %v898 = vld [vmem:[%s501 + $0x8e0] sm:$0xff]
        %v899 = vld [vmem:[%s501 + $0x8e8] sm:$0xff]
        %v900 = vld [vmem:[%s501 + $0x8f0] sm:$0xff]
        %v901 = vld [vmem:[%s501 + $0x8f8] sm:$0xff]
        %v908 = vunpack.c.l.b16 %v608
        %v909 = vunpack.c.h.b16 %v608
        %v910 = vunpack.c.l.b16 %v609
        %v911 = vunpack.c.h.b16 %v609
        %v912 = vunpack.c.l.b16 %v610
        %v913 = vunpack.c.h.b16 %v610
        %v914 = vunpack.c.l.b16 %v611
        %v915 = vunpack.c.h.b16 %v611
        %v916 = vunpack.c.l.b16 %v612
        %v917 = vunpack.c.h.b16 %v612
        %v918 = vunpack.c.l.b16 %v613
        %v919 = vunpack.c.h.b16 %v613
        %v920 = vpack.c.b16 %v914, %v908
        %v921 = vpack.c.b16 %v915, %v909
        %v922 = vpack.c.b16 %v916, %v910
        %v923 = vpack.c.b16 %v917, %v911
        %v924 = vpack.c.b16 %v918, %v912
        %v925 = vpack.c.b16 %v919, %v913
        %v1220 = vunpack.c.l.b16 %v614
        %v1221 = vunpack.c.h.b16 %v614
        %v1222 = vunpack.c.l.b16 %v615
        %v1223 = vunpack.c.h.b16 %v615
        %v1224 = vunpack.c.l.b16 %v616
        %v1225 = vunpack.c.h.b16 %v616
        %v1226 = vunpack.c.l.b16 %v617
        %v1227 = vunpack.c.h.b16 %v617
        %v1228 = vunpack.c.l.b16 %v618
        %v1229 = vunpack.c.h.b16 %v618
        %v1230 = vunpack.c.l.b16 %v619
        %v1231 = vunpack.c.h.b16 %v619
        %v1232 = vunpack.c.l.b16 %v620
        %v1233 = vunpack.c.h.b16 %v620
        %v1234 = vunpack.c.l.b16 %v621
        %v1235 = vunpack.c.h.b16 %v621
        %v1236 = vunpack.c.l.b16 %v622
        %v1237 = vunpack.c.h.b16 %v622
        %v1238 = vunpack.c.l.b16 %v623
        %v1239 = vunpack.c.h.b16 %v623
        %v1240 = vunpack.c.l.b16 %v624
        %v1241 = vunpack.c.h.b16 %v624
        %v1242 = vunpack.c.l.b16 %v625
        %v1243 = vunpack.c.h.b16 %v625
        %v1244 = vunpack.c.l.b16 %v626
        %v1245 = vunpack.c.h.b16 %v626
        %v1246 = vunpack.c.l.b16 %v627
        %v1247 = vunpack.c.h.b16 %v627
        %v1248 = vunpack.c.l.b16 %v628
        %v1249 = vunpack.c.h.b16 %v628
        %v1250 = vunpack.c.l.b16 %v629
        %v1251 = vunpack.c.h.b16 %v629
        %v1252 = vunpack.c.l.b16 %v630
        %v1253 = vunpack.c.h.b16 %v630
        %v1254 = vunpack.c.l.b16 %v631
        %v1255 = vunpack.c.h.b16 %v631
        %v1256 = vunpack.c.l.b16 %v632
        %v1257 = vunpack.c.h.b16 %v632
        %v1258 = vunpack.c.l.b16 %v633
        %v1259 = vunpack.c.h.b16 %v633
        %v1260 = vunpack.c.l.b16 %v634
        %v1261 = vunpack.c.h.b16 %v634
        %v1262 = vunpack.c.l.b16 %v635
        %v1263 = vunpack.c.h.b16 %v635
        %v1264 = vunpack.c.l.b16 %v636
        %v1265 = vunpack.c.h.b16 %v636
        %v1266 = vunpack.c.l.b16 %v637
        %v1267 = vunpack.c.h.b16 %v637
        %v1268 = vunpack.c.l.b16 %v638
        %v1269 = vunpack.c.h.b16 %v638
        %v1270 = vunpack.c.l.b16 %v639
        %v1271 = vunpack.c.h.b16 %v639
        %v1272 = vunpack.c.l.b16 %v640
        %v1273 = vunpack.c.h.b16 %v640
        %v1274 = vunpack.c.l.b16 %v641
        %v1275 = vunpack.c.h.b16 %v641
        %v1276 = vunpack.c.l.b16 %v642
        %v1277 = vunpack.c.h.b16 %v642
        %v1278 = vunpack.c.l.b16 %v643
        %v1279 = vunpack.c.h.b16 %v643
        %v1280 = vunpack.c.l.b16 %v644
        %v1281 = vunpack.c.h.b16 %v644
        %v1282 = vunpack.c.l.b16 %v645
        %v1283 = vunpack.c.h.b16 %v645
        %v1284 = vunpack.c.l.b16 %v646
        %v1285 = vunpack.c.h.b16 %v646
        %v1286 = vunpack.c.l.b16 %v647
        %v1287 = vunpack.c.h.b16 %v647
        %v1288 = vunpack.c.l.b16 %v648
        %v1289 = vunpack.c.h.b16 %v648
        %v1290 = vunpack.c.l.b16 %v649
        %v1291 = vunpack.c.h.b16 %v649
        %v1292 = vunpack.c.l.b16 %v650
        %v1293 = vunpack.c.h.b16 %v650
        %v1294 = vunpack.c.l.b16 %v651
        %v1295 = vunpack.c.h.b16 %v651
        %v1296 = vunpack.c.l.b16 %v652
        %v1297 = vunpack.c.h.b16 %v652
        %v1298 = vunpack.c.l.b16 %v653
        %v1299 = vunpack.c.h.b16 %v653
        %v1300 = vunpack.c.l.b16 %v654
        %v1301 = vunpack.c.h.b16 %v654
        %v1302 = vunpack.c.l.b16 %v655
        %v1303 = vunpack.c.h.b16 %v655
        %v1304 = vunpack.c.l.b16 %v656
        %v1305 = vunpack.c.h.b16 %v656
        %v1306 = vunpack.c.l.b16 %v657
        %v1307 = vunpack.c.h.b16 %v657
        %v1308 = vunpack.c.l.b16 %v658
        %v1309 = vunpack.c.h.b16 %v658
        %v1310 = vunpack.c.l.b16 %v659
        %v1311 = vunpack.c.h.b16 %v659
        %v1312 = vunpack.c.l.b16 %v660
        %v1313 = vunpack.c.h.b16 %v660
        %v1314 = vunpack.c.l.b16 %v661
        %v1315 = vunpack.c.h.b16 %v661
        %v1316 = vunpack.c.l.b16 %v662
        %v1317 = vunpack.c.h.b16 %v662
        %v1318 = vunpack.c.l.b16 %v663
        %v1319 = vunpack.c.h.b16 %v663
        %v1320 = vunpack.c.l.b16 %v664
        %v1321 = vunpack.c.h.b16 %v664
        %v1322 = vunpack.c.l.b16 %v665
        %v1323 = vunpack.c.h.b16 %v665
        %v1324 = vunpack.c.l.b16 %v666
        %v1325 = vunpack.c.h.b16 %v666
        %v1326 = vunpack.c.l.b16 %v667
        %v1327 = vunpack.c.h.b16 %v667
        %v1328 = vunpack.c.l.b16 %v668
        %v1329 = vunpack.c.h.b16 %v668
        %v1330 = vunpack.c.l.b16 %v669
        %v1331 = vunpack.c.h.b16 %v669
        %v1332 = vunpack.c.l.b16 %v670
        %v1333 = vunpack.c.h.b16 %v670
        %v1334 = vunpack.c.l.b16 %v671
        %v1335 = vunpack.c.h.b16 %v671
        %v1336 = vunpack.c.l.b16 %v672
        %v1337 = vunpack.c.h.b16 %v672
        %v1338 = vunpack.c.l.b16 %v673
        %v1339 = vunpack.c.h.b16 %v673
        %v1340 = vunpack.c.l.b16 %v674
        %v1341 = vunpack.c.h.b16 %v674
        %v1342 = vunpack.c.l.b16 %v675
        %v1343 = vunpack.c.h.b16 %v675
        %v1344 = vunpack.c.l.b16 %v676
        %v1345 = vunpack.c.h.b16 %v676
        %v1346 = vunpack.c.l.b16 %v677
        %v1347 = vunpack.c.h.b16 %v677
        %v1348 = vunpack.c.l.b16 %v678
        %v1349 = vunpack.c.h.b16 %v678
        %v1350 = vunpack.c.l.b16 %v679
        %v1351 = vunpack.c.h.b16 %v679
        %v1352 = vunpack.c.l.b16 %v680
        %v1353 = vunpack.c.h.b16 %v680
        %v1354 = vunpack.c.l.b16 %v681
        %v1355 = vunpack.c.h.b16 %v681
        %v1356 = vunpack.c.l.b16 %v682
        %v1357 = vunpack.c.h.b16 %v682
        %v1358 = vunpack.c.l.b16 %v683
        %v1359 = vunpack.c.h.b16 %v683
        %v1360 = vunpack.c.l.b16 %v684
        %v1361 = vunpack.c.h.b16 %v684
        %v1362 = vunpack.c.l.b16 %v685
        %v1363 = vunpack.c.h.b16 %v685
        %v1364 = vunpack.c.l.b16 %v686
        %v1365 = vunpack.c.h.b16 %v686
        %v1366 = vunpack.c.l.b16 %v687
        %v1367 = vunpack.c.h.b16 %v687
        %v1368 = vunpack.c.l.b16 %v688
        %v1369 = vunpack.c.h.b16 %v688
        %v1370 = vunpack.c.l.b16 %v689
        %v1371 = vunpack.c.h.b16 %v689
        %v1372 = vunpack.c.l.b16 %v690
        %v1373 = vunpack.c.h.b16 %v690
        %v1374 = vunpack.c.l.b16 %v691
        %v1375 = vunpack.c.h.b16 %v691
        %v1376 = vunpack.c.l.b16 %v692
        %v1377 = vunpack.c.h.b16 %v692
        %v1378 = vunpack.c.l.b16 %v693
        %v1379 = vunpack.c.h.b16 %v693
        %v1380 = vunpack.c.l.b16 %v694
        %v1381 = vunpack.c.h.b16 %v694
        %v1382 = vunpack.c.l.b16 %v695
        %v1383 = vunpack.c.h.b16 %v695
        %v1384 = vunpack.c.l.b16 %v696
        %v1385 = vunpack.c.h.b16 %v696
        %v1386 = vunpack.c.l.b16 %v697
        %v1387 = vunpack.c.h.b16 %v697
        %v1388 = vunpack.c.l.b16 %v698
        %v1389 = vunpack.c.h.b16 %v698
        %v1390 = vunpack.c.l.b16 %v699
        %v1391 = vunpack.c.h.b16 %v699
        %v1392 = vunpack.c.l.b16 %v700
        %v1393 = vunpack.c.h.b16 %v700
        %v1394 = vunpack.c.l.b16 %v701
        %v1395 = vunpack.c.h.b16 %v701
        %v1396 = vunpack.c.l.b16 %v702
        %v1397 = vunpack.c.h.b16 %v702
        %v1398 = vunpack.c.l.b16 %v703
        %v1399 = vunpack.c.h.b16 %v703
        %v1400 = vunpack.c.l.b16 %v704
        %v1401 = vunpack.c.h.b16 %v704
        %v1402 = vunpack.c.l.b16 %v705
        %v1403 = vunpack.c.h.b16 %v705
        %v1404 = vunpack.c.l.b16 %v706
        %v1405 = vunpack.c.h.b16 %v706
        %v1406 = vunpack.c.l.b16 %v707
        %v1407 = vunpack.c.h.b16 %v707
        %v1408 = vunpack.c.l.b16 %v708
        %v1409 = vunpack.c.h.b16 %v708
        %v1410 = vunpack.c.l.b16 %v709
        %v1411 = vunpack.c.h.b16 %v709
        %v1412 = vunpack.c.l.b16 %v710
        %v1413 = vunpack.c.h.b16 %v710
        %v1414 = vunpack.c.l.b16 %v711
        %v1415 = vunpack.c.h.b16 %v711
        %v1416 = vunpack.c.l.b16 %v712
        %v1417 = vunpack.c.h.b16 %v712
        %v1418 = vunpack.c.l.b16 %v713
        %v1419 = vunpack.c.h.b16 %v713
        %v1420 = vunpack.c.l.b16 %v714
        %v1421 = vunpack.c.h.b16 %v714
        %v1422 = vunpack.c.l.b16 %v715
        %v1423 = vunpack.c.h.b16 %v715
        %v1424 = vunpack.c.l.b16 %v716
        %v1425 = vunpack.c.h.b16 %v716
        %v1426 = vunpack.c.l.b16 %v717
        %v1427 = vunpack.c.h.b16 %v717
        %v1428 = vunpack.c.l.b16 %v718
        %v1429 = vunpack.c.h.b16 %v718
        %v1430 = vunpack.c.l.b16 %v719
        %v1431 = vunpack.c.h.b16 %v719
        %v1432 = vunpack.c.l.b16 %v720
        %v1433 = vunpack.c.h.b16 %v720
        %v1434 = vunpack.c.l.b16 %v721
        %v1435 = vunpack.c.h.b16 %v721
        %v1436 = vunpack.c.l.b16 %v722
        %v1437 = vunpack.c.h.b16 %v722
        %v1438 = vunpack.c.l.b16 %v723
        %v1439 = vunpack.c.h.b16 %v723
        %v1440 = vunpack.c.l.b16 %v724
        %v1441 = vunpack.c.h.b16 %v724
        %v1442 = vunpack.c.l.b16 %v725
        %v1443 = vunpack.c.h.b16 %v725
        %v1444 = vunpack.c.l.b16 %v726
        %v1445 = vunpack.c.h.b16 %v726
        %v1446 = vunpack.c.l.b16 %v727
        %v1447 = vunpack.c.h.b16 %v727
        %v1448 = vunpack.c.l.b16 %v728
        %v1449 = vunpack.c.h.b16 %v728
        %v1450 = vunpack.c.l.b16 %v729
        %v1451 = vunpack.c.h.b16 %v729
        %v1452 = vunpack.c.l.b16 %v730
        %v1453 = vunpack.c.h.b16 %v730
        %v1454 = vunpack.c.l.b16 %v731
        %v1455 = vunpack.c.h.b16 %v731
        %v1456 = vunpack.c.l.b16 %v732
        %v1457 = vunpack.c.h.b16 %v732
        %v1458 = vunpack.c.l.b16 %v733
        %v1459 = vunpack.c.h.b16 %v733
        %v1460 = vunpack.c.l.b16 %v734
        %v1461 = vunpack.c.h.b16 %v734
        %v1462 = vunpack.c.l.b16 %v735
        %v1463 = vunpack.c.h.b16 %v735
        %v1464 = vunpack.c.l.b16 %v736
        %v1465 = vunpack.c.h.b16 %v736
        %v1466 = vunpack.c.l.b16 %v737
        %v1467 = vunpack.c.h.b16 %v737
        %v1468 = vunpack.c.l.b16 %v738
        %v1469 = vunpack.c.h.b16 %v738
        %v1470 = vunpack.c.l.b16 %v739
        %v1471 = vunpack.c.h.b16 %v739
        %v1472 = vunpack.c.l.b16 %v740
        %v1473 = vunpack.c.h.b16 %v740
        %v1474 = vunpack.c.l.b16 %v741
        %v1475 = vunpack.c.h.b16 %v741
        %v1476 = vunpack.c.l.b16 %v742
        %v1477 = vunpack.c.h.b16 %v742
        %v1478 = vunpack.c.l.b16 %v743
        %v1479 = vunpack.c.h.b16 %v743
        %v1480 = vunpack.c.l.b16 %v744
        %v1481 = vunpack.c.h.b16 %v744
        %v1482 = vunpack.c.l.b16 %v745
        %v1483 = vunpack.c.h.b16 %v745
        %v1484 = vunpack.c.l.b16 %v746
        %v1485 = vunpack.c.h.b16 %v746
        %v1486 = vunpack.c.l.b16 %v747
        %v1487 = vunpack.c.h.b16 %v747
        %v1488 = vunpack.c.l.b16 %v748
        %v1489 = vunpack.c.h.b16 %v748
        %v1490 = vunpack.c.l.b16 %v749
        %v1491 = vunpack.c.h.b16 %v749
        %v1492 = vunpack.c.l.b16 %v750
        %v1493 = vunpack.c.h.b16 %v750
        %v1494 = vunpack.c.l.b16 %v751
        %v1495 = vunpack.c.h.b16 %v751
        %v1496 = vunpack.c.l.b16 %v752
        %v1497 = vunpack.c.h.b16 %v752
        %v1498 = vunpack.c.l.b16 %v753
        %v1499 = vunpack.c.h.b16 %v753
        %v1500 = vunpack.c.l.b16 %v754
        %v1501 = vunpack.c.h.b16 %v754
        %v1502 = vunpack.c.l.b16 %v755
        %v1503 = vunpack.c.h.b16 %v755
        %v1504 = vunpack.c.l.b16 %v756
        %v1505 = vunpack.c.h.b16 %v756
        %v1506 = vunpack.c.l.b16 %v757
        %v1507 = vunpack.c.h.b16 %v757
        %v1508 = vunpack.c.l.b16 %v758
        %v1509 = vunpack.c.h.b16 %v758
        %v1510 = vunpack.c.l.b16 %v759
        %v1511 = vunpack.c.h.b16 %v759
        %v1512 = vunpack.c.l.b16 %v760
        %v1513 = vunpack.c.h.b16 %v760
        %v1514 = vunpack.c.l.b16 %v761
        %v1515 = vunpack.c.h.b16 %v761
        %v1516 = vunpack.c.l.b16 %v762
        %v1517 = vunpack.c.h.b16 %v762
        %v1518 = vunpack.c.l.b16 %v763
        %v1519 = vunpack.c.h.b16 %v763
        %v1520 = vunpack.c.l.b16 %v764
        %v1521 = vunpack.c.h.b16 %v764
        %v1522 = vunpack.c.l.b16 %v765
        %v1523 = vunpack.c.h.b16 %v765
        %v1524 = vunpack.c.l.b16 %v766
        %v1525 = vunpack.c.h.b16 %v766
        %v1526 = vunpack.c.l.b16 %v767
        %v1527 = vunpack.c.h.b16 %v767
        %v1528 = vunpack.c.l.b16 %v768
        %v1529 = vunpack.c.h.b16 %v768
        %v1530 = vunpack.c.l.b16 %v769
        %v1531 = vunpack.c.h.b16 %v769
        %v1532 = vunpack.c.l.b16 %v770
        %v1533 = vunpack.c.h.b16 %v770
        %v1534 = vunpack.c.l.b16 %v771
        %v1535 = vunpack.c.h.b16 %v771
        %v1536 = vunpack.c.l.b16 %v772
        %v1537 = vunpack.c.h.b16 %v772
        %v1538 = vunpack.c.l.b16 %v773
        %v1539 = vunpack.c.h.b16 %v773
        %v1540 = vunpack.c.l.b16 %v774
        %v1541 = vunpack.c.h.b16 %v774
        %v1542 = vunpack.c.l.b16 %v775
        %v1543 = vunpack.c.h.b16 %v775
        %v1544 = vunpack.c.l.b16 %v776
        %v1545 = vunpack.c.h.b16 %v776
        %v1546 = vunpack.c.l.b16 %v777
        %v1547 = vunpack.c.h.b16 %v777
        %v1548 = vunpack.c.l.b16 %v778
        %v1549 = vunpack.c.h.b16 %v778
        %v1550 = vunpack.c.l.b16 %v779
        %v1551 = vunpack.c.h.b16 %v779
        %v1552 = vunpack.c.l.b16 %v780
        %v1553 = vunpack.c.h.b16 %v780
        %v1554 = vunpack.c.l.b16 %v781
        %v1555 = vunpack.c.h.b16 %v781
        %v1556 = vunpack.c.l.b16 %v782
        %v1557 = vunpack.c.h.b16 %v782
        %v1558 = vunpack.c.l.b16 %v783
        %v1559 = vunpack.c.h.b16 %v783
        %v1560 = vunpack.c.l.b16 %v784
        %v1561 = vunpack.c.h.b16 %v784
        %v1562 = vunpack.c.l.b16 %v785
        %v1563 = vunpack.c.h.b16 %v785
        %v1564 = vunpack.c.l.b16 %v786
        %v1565 = vunpack.c.h.b16 %v786
        %v1566 = vunpack.c.l.b16 %v787
        %v1567 = vunpack.c.h.b16 %v787
        %v1568 = vunpack.c.l.b16 %v788
        %v1569 = vunpack.c.h.b16 %v788
        %v1570 = vunpack.c.l.b16 %v789
        %v1571 = vunpack.c.h.b16 %v789
        %v1572 = vunpack.c.l.b16 %v790
        %v1573 = vunpack.c.h.b16 %v790
        %v1574 = vunpack.c.l.b16 %v791
        %v1575 = vunpack.c.h.b16 %v791
        %v1576 = vunpack.c.l.b16 %v792
        %v1577 = vunpack.c.h.b16 %v792
        %v1578 = vunpack.c.l.b16 %v793
        %v1579 = vunpack.c.h.b16 %v793
        %v1580 = vunpack.c.l.b16 %v794
        %v1581 = vunpack.c.h.b16 %v794
        %v1582 = vunpack.c.l.b16 %v795
        %v1583 = vunpack.c.h.b16 %v795
        %v1584 = vunpack.c.l.b16 %v796
        %v1585 = vunpack.c.h.b16 %v796
        %v1586 = vunpack.c.l.b16 %v797
        %v1587 = vunpack.c.h.b16 %v797
        %v1588 = vunpack.c.l.b16 %v798
        %v1589 = vunpack.c.h.b16 %v798
        %v1590 = vunpack.c.l.b16 %v799
        %v1591 = vunpack.c.h.b16 %v799
        %v1592 = vunpack.c.l.b16 %v800
        %v1593 = vunpack.c.h.b16 %v800
        %v1594 = vunpack.c.l.b16 %v801
        %v1595 = vunpack.c.h.b16 %v801
        %v1596 = vunpack.c.l.b16 %v802
        %v1597 = vunpack.c.h.b16 %v802
        %v1598 = vunpack.c.l.b16 %v803
        %v1599 = vunpack.c.h.b16 %v803
        %v1600 = vunpack.c.l.b16 %v804
        %v1601 = vunpack.c.h.b16 %v804
        %v1602 = vunpack.c.l.b16 %v805
        %v1603 = vunpack.c.h.b16 %v805
        %v1604 = vunpack.c.l.b16 %v806
        %v1605 = vunpack.c.h.b16 %v806
        %v1606 = vunpack.c.l.b16 %v807
        %v1607 = vunpack.c.h.b16 %v807
        %v1608 = vunpack.c.l.b16 %v808
        %v1609 = vunpack.c.h.b16 %v808
        %v1610 = vunpack.c.l.b16 %v809
        %v1611 = vunpack.c.h.b16 %v809
        %v1612 = vunpack.c.l.b16 %v810
        %v1613 = vunpack.c.h.b16 %v810
        %v1614 = vunpack.c.l.b16 %v811
        %v1615 = vunpack.c.h.b16 %v811
        %v1616 = vunpack.c.l.b16 %v812
        %v1617 = vunpack.c.h.b16 %v812
        %v1618 = vunpack.c.l.b16 %v813
        %v1619 = vunpack.c.h.b16 %v813
        %v1620 = vunpack.c.l.b16 %v814
        %v1621 = vunpack.c.h.b16 %v814
        %v1622 = vunpack.c.l.b16 %v815
        %v1623 = vunpack.c.h.b16 %v815
        %v1624 = vunpack.c.l.b16 %v816
        %v1625 = vunpack.c.h.b16 %v816
        %v1626 = vunpack.c.l.b16 %v817
        %v1627 = vunpack.c.h.b16 %v817
        %v1628 = vunpack.c.l.b16 %v818
        %v1629 = vunpack.c.h.b16 %v818
        %v1630 = vunpack.c.l.b16 %v819
        %v1631 = vunpack.c.h.b16 %v819
        %v1632 = vunpack.c.l.b16 %v820
        %v1633 = vunpack.c.h.b16 %v820
        %v1634 = vunpack.c.l.b16 %v821
        %v1635 = vunpack.c.h.b16 %v821
        %v1636 = vunpack.c.l.b16 %v822
        %v1637 = vunpack.c.h.b16 %v822
        %v1638 = vunpack.c.l.b16 %v823
        %v1639 = vunpack.c.h.b16 %v823
        %v1640 = vunpack.c.l.b16 %v824
        %v1641 = vunpack.c.h.b16 %v824
        %v1642 = vunpack.c.l.b16 %v825
        %v1643 = vunpack.c.h.b16 %v825
        %v1644 = vunpack.c.l.b16 %v826
        %v1645 = vunpack.c.h.b16 %v826
        %v1646 = vunpack.c.l.b16 %v827
        %v1647 = vunpack.c.h.b16 %v827
        %v1648 = vunpack.c.l.b16 %v828
        %v1649 = vunpack.c.h.b16 %v828
        %v1650 = vunpack.c.l.b16 %v829
        %v1651 = vunpack.c.h.b16 %v829
        %v1652 = vunpack.c.l.b16 %v830
        %v1653 = vunpack.c.h.b16 %v830
        %v1654 = vunpack.c.l.b16 %v831
        %v1655 = vunpack.c.h.b16 %v831
        %v1656 = vunpack.c.l.b16 %v832
        %v1657 = vunpack.c.h.b16 %v832
        %v1658 = vunpack.c.l.b16 %v833
        %v1659 = vunpack.c.h.b16 %v833
        %v1660 = vunpack.c.l.b16 %v834
        %v1661 = vunpack.c.h.b16 %v834
        %v1662 = vunpack.c.l.b16 %v835
        %v1663 = vunpack.c.h.b16 %v835
        %v1664 = vunpack.c.l.b16 %v836
        %v1665 = vunpack.c.h.b16 %v836
        %v1666 = vunpack.c.l.b16 %v837
        %v1667 = vunpack.c.h.b16 %v837
        %v1668 = vunpack.c.l.b16 %v838
        %v1669 = vunpack.c.h.b16 %v838
        %v1670 = vunpack.c.l.b16 %v839
        %v1671 = vunpack.c.h.b16 %v839
        %v1672 = vunpack.c.l.b16 %v840
        %v1673 = vunpack.c.h.b16 %v840
        %v1674 = vunpack.c.l.b16 %v841
        %v1675 = vunpack.c.h.b16 %v841
        %v1676 = vunpack.c.l.b16 %v842
        %v1677 = vunpack.c.h.b16 %v842
        %v1678 = vunpack.c.l.b16 %v843
        %v1679 = vunpack.c.h.b16 %v843
        %v1680 = vunpack.c.l.b16 %v844
        %v1681 = vunpack.c.h.b16 %v844
        %v1682 = vunpack.c.l.b16 %v845
        %v1683 = vunpack.c.h.b16 %v845
        %v1684 = vunpack.c.l.b16 %v846
        %v1685 = vunpack.c.h.b16 %v846
        %v1686 = vunpack.c.l.b16 %v847
        %v1687 = vunpack.c.h.b16 %v847
        %v1688 = vunpack.c.l.b16 %v848
        %v1689 = vunpack.c.h.b16 %v848
        %v1690 = vunpack.c.l.b16 %v849
        %v1691 = vunpack.c.h.b16 %v849
        %v1692 = vunpack.c.l.b16 %v850
        %v1693 = vunpack.c.h.b16 %v850
        %v1694 = vunpack.c.l.b16 %v851
        %v1695 = vunpack.c.h.b16 %v851
        %v1696 = vunpack.c.l.b16 %v852
        %v1697 = vunpack.c.h.b16 %v852
        %v1698 = vunpack.c.l.b16 %v853
        %v1699 = vunpack.c.h.b16 %v853
        %v1700 = vunpack.c.l.b16 %v854
        %v1701 = vunpack.c.h.b16 %v854
        %v1702 = vunpack.c.l.b16 %v855
        %v1703 = vunpack.c.h.b16 %v855
        %v1704 = vunpack.c.l.b16 %v856
        %v1705 = vunpack.c.h.b16 %v856
        %v1706 = vunpack.c.l.b16 %v857
        %v1707 = vunpack.c.h.b16 %v857
        %v1708 = vunpack.c.l.b16 %v858
        %v1709 = vunpack.c.h.b16 %v858
        %v1710 = vunpack.c.l.b16 %v859
        %v1711 = vunpack.c.h.b16 %v859
        %v1712 = vunpack.c.l.b16 %v860
        %v1713 = vunpack.c.h.b16 %v860
        %v1714 = vunpack.c.l.b16 %v861
        %v1715 = vunpack.c.h.b16 %v861
        %v1716 = vunpack.c.l.b16 %v862
        %v1717 = vunpack.c.h.b16 %v862
        %v1718 = vunpack.c.l.b16 %v863
        %v1719 = vunpack.c.h.b16 %v863
        %v1720 = vunpack.c.l.b16 %v864
        %v1721 = vunpack.c.h.b16 %v864
        %v1722 = vunpack.c.l.b16 %v865
        %v1723 = vunpack.c.h.b16 %v865
        %v1724 = vunpack.c.l.b16 %v866
        %v1725 = vunpack.c.h.b16 %v866
        %v1726 = vunpack.c.l.b16 %v867
        %v1727 = vunpack.c.h.b16 %v867
        %v1728 = vunpack.c.l.b16 %v868
        %v1729 = vunpack.c.h.b16 %v868
        %v1730 = vunpack.c.l.b16 %v869
        %v1731 = vunpack.c.h.b16 %v869
        %v1732 = vunpack.c.l.b16 %v870
        %v1733 = vunpack.c.h.b16 %v870
        %v1734 = vunpack.c.l.b16 %v871
        %v1735 = vunpack.c.h.b16 %v871
        %v1736 = vunpack.c.l.b16 %v872
        %v1737 = vunpack.c.h.b16 %v872
        %v1738 = vunpack.c.l.b16 %v873
        %v1739 = vunpack.c.h.b16 %v873
        %v1740 = vunpack.c.l.b16 %v874
        %v1741 = vunpack.c.h.b16 %v874
        %v1742 = vunpack.c.l.b16 %v875
        %v1743 = vunpack.c.h.b16 %v875
        %v1744 = vunpack.c.l.b16 %v876
        %v1745 = vunpack.c.h.b16 %v876
        %v1746 = vunpack.c.l.b16 %v877
        %v1747 = vunpack.c.h.b16 %v877
        %v1748 = vunpack.c.l.b16 %v878
        %v1749 = vunpack.c.h.b16 %v878
        %v1750 = vunpack.c.l.b16 %v879
        %v1751 = vunpack.c.h.b16 %v879
        %v1752 = vunpack.c.l.b16 %v880
        %v1753 = vunpack.c.h.b16 %v880
        %v1754 = vunpack.c.l.b16 %v881
        %v1755 = vunpack.c.h.b16 %v881
        %v1756 = vunpack.c.l.b16 %v882
        %v1757 = vunpack.c.h.b16 %v882
        %v1758 = vunpack.c.l.b16 %v883
        %v1759 = vunpack.c.h.b16 %v883
        %v1760 = vunpack.c.l.b16 %v884
        %v1761 = vunpack.c.h.b16 %v884
        %v1762 = vunpack.c.l.b16 %v885
        %v1763 = vunpack.c.h.b16 %v885
        %v1764 = vunpack.c.l.b16 %v886
        %v1765 = vunpack.c.h.b16 %v886
        %v1766 = vunpack.c.l.b16 %v887
        %v1767 = vunpack.c.h.b16 %v887
        %v1768 = vunpack.c.l.b16 %v888
        %v1769 = vunpack.c.h.b16 %v888
        %v1770 = vunpack.c.l.b16 %v889
        %v1771 = vunpack.c.h.b16 %v889
        %v1772 = vunpack.c.l.b16 %v890
        %v1773 = vunpack.c.h.b16 %v890
        %v1774 = vunpack.c.l.b16 %v891
        %v1775 = vunpack.c.h.b16 %v891
        %v1776 = vunpack.c.l.b16 %v892
        %v1777 = vunpack.c.h.b16 %v892
        %v1778 = vunpack.c.l.b16 %v893
        %v1779 = vunpack.c.h.b16 %v893
        %v1780 = vunpack.c.l.b16 %v894
        %v1781 = vunpack.c.h.b16 %v894
        %v1782 = vunpack.c.l.b16 %v895
        %v1783 = vunpack.c.h.b16 %v895
        %v1784 = vunpack.c.l.b16 %v896
        %v1785 = vunpack.c.h.b16 %v896
        %v1786 = vunpack.c.l.b16 %v897
        %v1787 = vunpack.c.h.b16 %v897
        %v1788 = vunpack.c.l.b16 %v898
        %v1789 = vunpack.c.h.b16 %v898
        %v1790 = vunpack.c.l.b16 %v899
        %v1791 = vunpack.c.h.b16 %v899
        %v1792 = vunpack.c.l.b16 %v900
        %v1793 = vunpack.c.h.b16 %v900
        %v1794 = vunpack.c.l.b16 %v901
        %v1795 = vunpack.c.h.b16 %v901
        %v1796 = vpack.c.b16 %v1226, %v1220
        %v1797 = vpack.c.b16 %v1227, %v1221
        %v1798 = vpack.c.b16 %v1228, %v1222
        %v1799 = vpack.c.b16 %v1229, %v1223
        %v1800 = vpack.c.b16 %v1230, %v1224
        %v1801 = vpack.c.b16 %v1231, %v1225
        %v1802 = vpack.c.b16 %v1238, %v1232
        %v1803 = vpack.c.b16 %v1239, %v1233
        %v1804 = vpack.c.b16 %v1240, %v1234
        %v1805 = vpack.c.b16 %v1241, %v1235
        %v1806 = vpack.c.b16 %v1242, %v1236
        %v1807 = vpack.c.b16 %v1243, %v1237
        %v1808 = vpack.c.b16 %v1250, %v1244
        %v1809 = vpack.c.b16 %v1251, %v1245
        %v1810 = vpack.c.b16 %v1252, %v1246
        %v1811 = vpack.c.b16 %v1253, %v1247
        %v1812 = vpack.c.b16 %v1254, %v1248
        %v1813 = vpack.c.b16 %v1255, %v1249
        %v1814 = vpack.c.b16 %v1262, %v1256
        %v1815 = vpack.c.b16 %v1263, %v1257
        %v1816 = vpack.c.b16 %v1264, %v1258
        %v1817 = vpack.c.b16 %v1265, %v1259
        %v1818 = vpack.c.b16 %v1266, %v1260
        %v1819 = vpack.c.b16 %v1267, %v1261
        %v1820 = vpack.c.b16 %v1274, %v1268
        %v1821 = vpack.c.b16 %v1275, %v1269
        %v1822 = vpack.c.b16 %v1276, %v1270
        %v1823 = vpack.c.b16 %v1277, %v1271
        %v1824 = vpack.c.b16 %v1278, %v1272
        %v1825 = vpack.c.b16 %v1279, %v1273
        %v1826 = vpack.c.b16 %v1286, %v1280
        %v1827 = vpack.c.b16 %v1287, %v1281
        %v1828 = vpack.c.b16 %v1288, %v1282
        %v1829 = vpack.c.b16 %v1289, %v1283
        %v1830 = vpack.c.b16 %v1290, %v1284
        %v1831 = vpack.c.b16 %v1291, %v1285
        %v1832 = vpack.c.b16 %v1298, %v1292
        %v1833 = vpack.c.b16 %v1299, %v1293
        %v1834 = vpack.c.b16 %v1300, %v1294
        %v1835 = vpack.c.b16 %v1301, %v1295
        %v1836 = vpack.c.b16 %v1302, %v1296
        %v1837 = vpack.c.b16 %v1303, %v1297
        %v1838 = vpack.c.b16 %v1310, %v1304
        %v1839 = vpack.c.b16 %v1311, %v1305
        %v1840 = vpack.c.b16 %v1312, %v1306
        %v1841 = vpack.c.b16 %v1313, %v1307
        %v1842 = vpack.c.b16 %v1314, %v1308
        %v1843 = vpack.c.b16 %v1315, %v1309
        %v1844 = vpack.c.b16 %v1322, %v1316
        %v1845 = vpack.c.b16 %v1323, %v1317
        %v1846 = vpack.c.b16 %v1324, %v1318
        %v1847 = vpack.c.b16 %v1325, %v1319
        %v1848 = vpack.c.b16 %v1326, %v1320
        %v1849 = vpack.c.b16 %v1327, %v1321
        %v1850 = vpack.c.b16 %v1334, %v1328
        %v1851 = vpack.c.b16 %v1335, %v1329
        %v1852 = vpack.c.b16 %v1336, %v1330
        %v1853 = vpack.c.b16 %v1337, %v1331
        %v1854 = vpack.c.b16 %v1338, %v1332
        %v1855 = vpack.c.b16 %v1339, %v1333
        %v1856 = vpack.c.b16 %v1346, %v1340
        %v1857 = vpack.c.b16 %v1347, %v1341
        %v1858 = vpack.c.b16 %v1348, %v1342
        %v1859 = vpack.c.b16 %v1349, %v1343
        %v1860 = vpack.c.b16 %v1350, %v1344
        %v1861 = vpack.c.b16 %v1351, %v1345
        %v1862 = vpack.c.b16 %v1358, %v1352
        %v1863 = vpack.c.b16 %v1359, %v1353
        %v1864 = vpack.c.b16 %v1360, %v1354
        %v1865 = vpack.c.b16 %v1361, %v1355
        %v1866 = vpack.c.b16 %v1362, %v1356
        %v1867 = vpack.c.b16 %v1363, %v1357
        %v1868 = vpack.c.b16 %v1370, %v1364
        %v1869 = vpack.c.b16 %v1371, %v1365
        %v1870 = vpack.c.b16 %v1372, %v1366
        %v1871 = vpack.c.b16 %v1373, %v1367
        %v1872 = vpack.c.b16 %v1374, %v1368
        %v1873 = vpack.c.b16 %v1375, %v1369
        %v1874 = vpack.c.b16 %v1382, %v1376
        %v1875 = vpack.c.b16 %v1383, %v1377
        %v1876 = vpack.c.b16 %v1384, %v1378
        %v1877 = vpack.c.b16 %v1385, %v1379
        %v1878 = vpack.c.b16 %v1386, %v1380
        %v1879 = vpack.c.b16 %v1387, %v1381
        %v1880 = vpack.c.b16 %v1394, %v1388
        %v1881 = vpack.c.b16 %v1395, %v1389
        %v1882 = vpack.c.b16 %v1396, %v1390
        %v1883 = vpack.c.b16 %v1397, %v1391
        %v1884 = vpack.c.b16 %v1398, %v1392
        %v1885 = vpack.c.b16 %v1399, %v1393
        %v1886 = vpack.c.b16 %v1406, %v1400
        %v1887 = vpack.c.b16 %v1407, %v1401
        %v1888 = vpack.c.b16 %v1408, %v1402
        %v1889 = vpack.c.b16 %v1409, %v1403
        %v1890 = vpack.c.b16 %v1410, %v1404
        %v1891 = vpack.c.b16 %v1411, %v1405
        %v1892 = vpack.c.b16 %v1418, %v1412
        %v1893 = vpack.c.b16 %v1419, %v1413
        %v1894 = vpack.c.b16 %v1420, %v1414
        %v1895 = vpack.c.b16 %v1421, %v1415
        %v1896 = vpack.c.b16 %v1422, %v1416
        %v1897 = vpack.c.b16 %v1423, %v1417
        %v1898 = vpack.c.b16 %v1430, %v1424
        %v1899 = vpack.c.b16 %v1431, %v1425
        %v1900 = vpack.c.b16 %v1432, %v1426
        %v1901 = vpack.c.b16 %v1433, %v1427
        %v1902 = vpack.c.b16 %v1434, %v1428
        %v1903 = vpack.c.b16 %v1435, %v1429
        %v1904 = vpack.c.b16 %v1442, %v1436
        %v1905 = vpack.c.b16 %v1443, %v1437
        %v1906 = vpack.c.b16 %v1444, %v1438
        %v1907 = vpack.c.b16 %v1445, %v1439
        %v1908 = vpack.c.b16 %v1446, %v1440
        %v1909 = vpack.c.b16 %v1447, %v1441
        %v1910 = vpack.c.b16 %v1454, %v1448
        %v1911 = vpack.c.b16 %v1455, %v1449
        %v1912 = vpack.c.b16 %v1456, %v1450
        %v1913 = vpack.c.b16 %v1457, %v1451
        %v1914 = vpack.c.b16 %v1458, %v1452
        %v1915 = vpack.c.b16 %v1459, %v1453
        %v1916 = vpack.c.b16 %v1466, %v1460
        %v1917 = vpack.c.b16 %v1467, %v1461
        %v1918 = vpack.c.b16 %v1468, %v1462
        %v1919 = vpack.c.b16 %v1469, %v1463
        %v1920 = vpack.c.b16 %v1470, %v1464
        %v1921 = vpack.c.b16 %v1471, %v1465
        %v1922 = vpack.c.b16 %v1478, %v1472
        %v1923 = vpack.c.b16 %v1479, %v1473
        %v1924 = vpack.c.b16 %v1480, %v1474
        %v1925 = vpack.c.b16 %v1481, %v1475
        %v1926 = vpack.c.b16 %v1482, %v1476
        %v1927 = vpack.c.b16 %v1483, %v1477
        %v1928 = vpack.c.b16 %v1490, %v1484
        %v1929 = vpack.c.b16 %v1491, %v1485
        %v1930 = vpack.c.b16 %v1492, %v1486
        %v1931 = vpack.c.b16 %v1493, %v1487
        %v1932 = vpack.c.b16 %v1494, %v1488
        %v1933 = vpack.c.b16 %v1495, %v1489
        %v1934 = vpack.c.b16 %v1502, %v1496
        %v1935 = vpack.c.b16 %v1503, %v1497
        %v1936 = vpack.c.b16 %v1504, %v1498
        %v1937 = vpack.c.b16 %v1505, %v1499
        %v1938 = vpack.c.b16 %v1506, %v1500
        %v1939 = vpack.c.b16 %v1507, %v1501
        %v1940 = vpack.c.b16 %v1514, %v1508
        %v1941 = vpack.c.b16 %v1515, %v1509
        %v1942 = vpack.c.b16 %v1516, %v1510
        %v1943 = vpack.c.b16 %v1517, %v1511
        %v1944 = vpack.c.b16 %v1518, %v1512
        %v1945 = vpack.c.b16 %v1519, %v1513
        %v1946 = vpack.c.b16 %v1526, %v1520
        %v1947 = vpack.c.b16 %v1527, %v1521
        %v1948 = vpack.c.b16 %v1528, %v1522
        %v1949 = vpack.c.b16 %v1529, %v1523
        %v1950 = vpack.c.b16 %v1530, %v1524
        %v1951 = vpack.c.b16 %v1531, %v1525
        %v1952 = vpack.c.b16 %v1538, %v1532
        %v1953 = vpack.c.b16 %v1539, %v1533
        %v1954 = vpack.c.b16 %v1540, %v1534
        %v1955 = vpack.c.b16 %v1541, %v1535
        %v1956 = vpack.c.b16 %v1542, %v1536
        %v1957 = vpack.c.b16 %v1543, %v1537
        %v1958 = vpack.c.b16 %v1550, %v1544
        %v1959 = vpack.c.b16 %v1551, %v1545
        %v1960 = vpack.c.b16 %v1552, %v1546
        %v1961 = vpack.c.b16 %v1553, %v1547
        %v1962 = vpack.c.b16 %v1554, %v1548
        %v1963 = vpack.c.b16 %v1555, %v1549
        %v1964 = vpack.c.b16 %v1562, %v1556
        %v1965 = vpack.c.b16 %v1563, %v1557
        %v1966 = vpack.c.b16 %v1564, %v1558
        %v1967 = vpack.c.b16 %v1565, %v1559
        %v1968 = vpack.c.b16 %v1566, %v1560
        %v1969 = vpack.c.b16 %v1567, %v1561
        %v1970 = vpack.c.b16 %v1574, %v1568
        %v1971 = vpack.c.b16 %v1575, %v1569
        %v1972 = vpack.c.b16 %v1576, %v1570
        %v1973 = vpack.c.b16 %v1577, %v1571
        %v1974 = vpack.c.b16 %v1578, %v1572
        %v1975 = vpack.c.b16 %v1579, %v1573
        %v1976 = vpack.c.b16 %v1586, %v1580
        %v1977 = vpack.c.b16 %v1587, %v1581
        %v1978 = vpack.c.b16 %v1588, %v1582
        %v1979 = vpack.c.b16 %v1589, %v1583
        %v1980 = vpack.c.b16 %v1590, %v1584
        %v1981 = vpack.c.b16 %v1591, %v1585
        %v1982 = vpack.c.b16 %v1598, %v1592
        %v1983 = vpack.c.b16 %v1599, %v1593
        %v1984 = vpack.c.b16 %v1600, %v1594
        %v1985 = vpack.c.b16 %v1601, %v1595
        %v1986 = vpack.c.b16 %v1602, %v1596
        %v1987 = vpack.c.b16 %v1603, %v1597
        %v1988 = vpack.c.b16 %v1610, %v1604
        %v1989 = vpack.c.b16 %v1611, %v1605
        %v1990 = vpack.c.b16 %v1612, %v1606
        %v1991 = vpack.c.b16 %v1613, %v1607
        %v1992 = vpack.c.b16 %v1614, %v1608
        %v1993 = vpack.c.b16 %v1615, %v1609
        %v1994 = vpack.c.b16 %v1622, %v1616
        %v1995 = vpack.c.b16 %v1623, %v1617
        %v1996 = vpack.c.b16 %v1624, %v1618
        %v1997 = vpack.c.b16 %v1625, %v1619
        %v1998 = vpack.c.b16 %v1626, %v1620
        %v1999 = vpack.c.b16 %v1627, %v1621
        %v2000 = vpack.c.b16 %v1634, %v1628
        %v2001 = vpack.c.b16 %v1635, %v1629
        %v2002 = vpack.c.b16 %v1636, %v1630
        %v2003 = vpack.c.b16 %v1637, %v1631
        %v2004 = vpack.c.b16 %v1638, %v1632
        %v2005 = vpack.c.b16 %v1639, %v1633
        %v2006 = vpack.c.b16 %v1646, %v1640
        %v2007 = vpack.c.b16 %v1647, %v1641
        %v2008 = vpack.c.b16 %v1648, %v1642
        %v2009 = vpack.c.b16 %v1649, %v1643
        %v2010 = vpack.c.b16 %v1650, %v1644
        %v2011 = vpack.c.b16 %v1651, %v1645
        %v2012 = vpack.c.b16 %v1658, %v1652
        %v2013 = vpack.c.b16 %v1659, %v1653
        %v2014 = vpack.c.b16 %v1660, %v1654
        %v2015 = vpack.c.b16 %v1661, %v1655
        %v2016 = vpack.c.b16 %v1662, %v1656
        %v2017 = vpack.c.b16 %v1663, %v1657
        %v2018 = vpack.c.b16 %v1670, %v1664
        %v2019 = vpack.c.b16 %v1671, %v1665
        %v2020 = vpack.c.b16 %v1672, %v1666
        %v2021 = vpack.c.b16 %v1673, %v1667
        %v2022 = vpack.c.b16 %v1674, %v1668
        %v2023 = vpack.c.b16 %v1675, %v1669
        %v2024 = vpack.c.b16 %v1682, %v1676
        %v2025 = vpack.c.b16 %v1683, %v1677
        %v2026 = vpack.c.b16 %v1684, %v1678
        %v2027 = vpack.c.b16 %v1685, %v1679
        %v2028 = vpack.c.b16 %v1686, %v1680
        %v2029 = vpack.c.b16 %v1687, %v1681
        %v2030 = vpack.c.b16 %v1694, %v1688
        %v2031 = vpack.c.b16 %v1695, %v1689
        %v2032 = vpack.c.b16 %v1696, %v1690
        %v2033 = vpack.c.b16 %v1697, %v1691
        %v2034 = vpack.c.b16 %v1698, %v1692
        %v2035 = vpack.c.b16 %v1699, %v1693
        %v2036 = vpack.c.b16 %v1706, %v1700
        %v2037 = vpack.c.b16 %v1707, %v1701
        %v2038 = vpack.c.b16 %v1708, %v1702
        %v2039 = vpack.c.b16 %v1709, %v1703
        %v2040 = vpack.c.b16 %v1710, %v1704
        %v2041 = vpack.c.b16 %v1711, %v1705
        %v2042 = vpack.c.b16 %v1718, %v1712
        %v2043 = vpack.c.b16 %v1719, %v1713
        %v2044 = vpack.c.b16 %v1720, %v1714
        %v2045 = vpack.c.b16 %v1721, %v1715
        %v2046 = vpack.c.b16 %v1722, %v1716
        %v2047 = vpack.c.b16 %v1723, %v1717
        %v2048 = vpack.c.b16 %v1730, %v1724
        %v2049 = vpack.c.b16 %v1731, %v1725
        %v2050 = vpack.c.b16 %v1732, %v1726
        %v2051 = vpack.c.b16 %v1733, %v1727
        %v2052 = vpack.c.b16 %v1734, %v1728
        %v2053 = vpack.c.b16 %v1735, %v1729
        %v2054 = vpack.c.b16 %v1742, %v1736
        %v2055 = vpack.c.b16 %v1743, %v1737
        %v2056 = vpack.c.b16 %v1744, %v1738
        %v2057 = vpack.c.b16 %v1745, %v1739
        %v2058 = vpack.c.b16 %v1746, %v1740
        %v2059 = vpack.c.b16 %v1747, %v1741
        %v2060 = vpack.c.b16 %v1754, %v1748
        %v2061 = vpack.c.b16 %v1755, %v1749
        %v2062 = vpack.c.b16 %v1756, %v1750
        %v2063 = vpack.c.b16 %v1757, %v1751
        %v2064 = vpack.c.b16 %v1758, %v1752
        %v2065 = vpack.c.b16 %v1759, %v1753
        %v2066 = vpack.c.b16 %v1766, %v1760
        %v2067 = vpack.c.b16 %v1767, %v1761
        %v2068 = vpack.c.b16 %v1768, %v1762
        %v2069 = vpack.c.b16 %v1769, %v1763
        %v2070 = vpack.c.b16 %v1770, %v1764
        %v2071 = vpack.c.b16 %v1771, %v1765
        %v2072 = vpack.c.b16 %v1778, %v1772
        %v2073 = vpack.c.b16 %v1779, %v1773
        %v2074 = vpack.c.b16 %v1780, %v1774
        %v2075 = vpack.c.b16 %v1781, %v1775
        %v2076 = vpack.c.b16 %v1782, %v1776
        %v2077 = vpack.c.b16 %v1783, %v1777
        %v2078 = vpack.c.b16 %v1790, %v1784
        %v2079 = vpack.c.b16 %v1791, %v1785
        %v2080 = vpack.c.b16 %v1792, %v1786
        %v2081 = vpack.c.b16 %v1793, %v1787
        %v2082 = vpack.c.b16 %v1794, %v1788
        %v2083 = vpack.c.b16 %v1795, %v1789
        %2372 = vmatprep.subr.bf16.mxu0 %v1797
        %2373 = vmatpush1.bf16.msra.mxu0 %v1796
        %2374 = vmatprep.subr.bf16.mxu0 %v1803
        %2375 = vmatpush1.bf16.msra.mxu0 %v1802
        %2376 = vmatprep.subr.bf16.mxu0 %v1809
        %2377 = vmatpush1.bf16.msra.mxu0 %v1808
        %2378 = vmatprep.subr.bf16.mxu0 %v1815
        %2379 = vmatpush1.bf16.msra.mxu0 %v1814
        %2380 = vmatprep.subr.bf16.mxu0 %v1821
        %2381 = vmatpush1.bf16.msra.mxu0 %v1820
        %2382 = vmatprep.subr.bf16.mxu0 %v1827
        %2383 = vmatpush1.bf16.msra.mxu0 %v1826
        %2384 = vmatprep.subr.bf16.mxu0 %v1833
        %2385 = vmatpush1.bf16.msra.mxu0 %v1832
        %2386 = vmatprep.subr.bf16.mxu0 %v1839
        %2387 = vmatpush1.bf16.msra.mxu0 %v1838
        %2388 = vmatprep.subr.bf16.mxu0 %v1845
        %2389 = vmatpush1.bf16.msra.mxu0 %v1844
        %2390 = vmatprep.subr.bf16.mxu0 %v1851
        %2391 = vmatpush1.bf16.msra.mxu0 %v1850
        %2392 = vmatprep.subr.bf16.mxu0 %v1857
        %2393 = vmatpush1.bf16.msra.mxu0 %v1856
        %2394 = vmatprep.subr.bf16.mxu0 %v1863
        %2395 = vmatpush1.bf16.msra.mxu0 %v1862
        %2396 = vmatprep.subr.bf16.mxu0 %v1869
        %2397 = vmatpush1.bf16.msra.mxu0 %v1868
        %2398 = vmatprep.subr.bf16.mxu0 %v1875
        %2399 = vmatpush1.bf16.msra.mxu0 %v1874
        %2400 = vmatprep.subr.bf16.mxu0 %v1881
        %2401 = vmatpush1.bf16.msra.mxu0 %v1880
        %2402 = vmatprep.subr.bf16.mxu0 %v1887
        %2403 = vmatpush1.bf16.msra.mxu0 %v1886
        %2404 = vmatprep.mubr.bf16.mxu0 %v921
        %2405 = vmatmul.mubr.bf16.gmra.mrb[0].mxu0 %v920
        %v2406 = vpop.f32.mrb[0].mxu0
        %v2407 = vadd.f32 0.0, %v2406
        %v2408 = vpop.f32.mrb[0].mxu0
        %v2409 = vadd.f32 0.0, %v2408
        %v2410 = vpop.f32.mrb[0].mxu0
        %v2411 = vadd.f32 0.0, %v2410
        %v2412 = vpop.f32.mrb[0].mxu0
        %v2413 = vadd.f32 0.0, %v2412
        %2414 = vdwg.mxu0
        %2415 = vmatprep.subr.bf16.mxu0 %v1893
        %2416 = vmatpush1.bf16.msra.mxu0 %v1892
        %2417 = vmatprep.subr.bf16.mxu0 %v1899
        %2418 = vmatpush1.bf16.msra.mxu0 %v1898
        %2419 = vmatprep.subr.bf16.mxu0 %v1905
        %2420 = vmatpush1.bf16.msra.mxu0 %v1904
        %2421 = vmatprep.subr.bf16.mxu0 %v1911
        %2422 = vmatpush1.bf16.msra.mxu0 %v1910
        %2423 = vmatprep.subr.bf16.mxu0 %v1917
        %2424 = vmatpush1.bf16.msra.mxu0 %v1916
        %2425 = vmatprep.subr.bf16.mxu0 %v1923
        %2426 = vmatpush1.bf16.msra.mxu0 %v1922
        %2427 = vmatprep.subr.bf16.mxu0 %v1929
        %2428 = vmatpush1.bf16.msra.mxu0 %v1928
        %2429 = vmatprep.subr.bf16.mxu0 %v1935
        %2430 = vmatpush1.bf16.msra.mxu0 %v1934
        %2431 = vmatprep.subr.bf16.mxu0 %v1941
        %2432 = vmatpush1.bf16.msra.mxu0 %v1940
        %2433 = vmatprep.subr.bf16.mxu0 %v1947
        %2434 = vmatpush1.bf16.msra.mxu0 %v1946
        %2435 = vmatprep.subr.bf16.mxu0 %v1953
        %2436 = vmatpush1.bf16.msra.mxu0 %v1952
        %2437 = vmatprep.subr.bf16.mxu0 %v1959
        %2438 = vmatpush1.bf16.msra.mxu0 %v1958
        %2439 = vmatprep.subr.bf16.mxu0 %v1965
        %2440 = vmatpush1.bf16.msra.mxu0 %v1964
        %2441 = vmatprep.subr.bf16.mxu0 %v1971
        %2442 = vmatpush1.bf16.msra.mxu0 %v1970
        %2443 = vmatprep.subr.bf16.mxu0 %v1977
        %2444 = vmatpush1.bf16.msra.mxu0 %v1976
        %2445 = vmatprep.subr.bf16.mxu0 %v1983
        %2446 = vmatpush1.bf16.msra.mxu0 %v1982
        %2447 = vmatprep.mubr.bf16.mxu0 %v923
        %2448 = vmatmul.mubr.bf16.gmra.mrb[0].mxu0 %v922
        %v2449 = vpop.f32.mrb[0].mxu0
        %v2450 = vadd.f32 %v2407, %v2449
        %v2451 = vpop.f32.mrb[0].mxu0
        %v2452 = vadd.f32 %v2409, %v2451
        %v2453 = vpop.f32.mrb[0].mxu0
        %v2454 = vadd.f32 %v2411, %v2453
        %v2455 = vpop.f32.mrb[0].mxu0
        %v2456 = vadd.f32 %v2413, %v2455
        %2457 = vdwg.mxu0
        %2458 = vmatprep.subr.bf16.mxu0 %v1989
        %2459 = vmatpush1.bf16.msra.mxu0 %v1988
        %2460 = vmatprep.subr.bf16.mxu0 %v1995
        %2461 = vmatpush1.bf16.msra.mxu0 %v1994
        %2462 = vmatprep.subr.bf16.mxu0 %v2001
        %2463 = vmatpush1.bf16.msra.mxu0 %v2000
        %2464 = vmatprep.subr.bf16.mxu0 %v2007
        %2465 = vmatpush1.bf16.msra.mxu0 %v2006
        %2466 = vmatprep.subr.bf16.mxu0 %v2013
        %2467 = vmatpush1.bf16.msra.mxu0 %v2012
        %2468 = vmatprep.subr.bf16.mxu0 %v2019
        %2469 = vmatpush1.bf16.msra.mxu0 %v2018
        %2470 = vmatprep.subr.bf16.mxu0 %v2025
        %2471 = vmatpush1.bf16.msra.mxu0 %v2024
        %2472 = vmatprep.subr.bf16.mxu0 %v2031
        %2473 = vmatpush1.bf16.msra.mxu0 %v2030
        %2474 = vmatprep.subr.bf16.mxu0 %v2037
        %2475 = vmatpush1.bf16.msra.mxu0 %v2036
        %2476 = vmatprep.subr.bf16.mxu0 %v2043
        %2477 = vmatpush1.bf16.msra.mxu0 %v2042
        %2478 = vmatprep.subr.bf16.mxu0 %v2049
        %2479 = vmatpush1.bf16.msra.mxu0 %v2048
        %2480 = vmatprep.subr.bf16.mxu0 %v2055
        %2481 = vmatpush1.bf16.msra.mxu0 %v2054
        %2482 = vmatprep.subr.bf16.mxu0 %v2061
        %2483 = vmatpush1.bf16.msra.mxu0 %v2060
        %2484 = vmatprep.subr.bf16.mxu0 %v2067
        %2485 = vmatpush1.bf16.msra.mxu0 %v2066
        %2486 = vmatprep.subr.bf16.mxu0 %v2073
        %2487 = vmatpush1.bf16.msra.mxu0 %v2072
        %2488 = vmatprep.subr.bf16.mxu0 %v2079
        %2489 = vmatpush1.bf16.msra.mxu0 %v2078
        %2490 = vmatprep.mubr.bf16.mxu0 %v925
        %2491 = vmatmul.mubr.bf16.gmra.mrb[0].mxu0 %v924
        %v2492 = vpop.f32.mrb[0].mxu0
        %v2493 = vadd.f32 %v2450, %v2492
        %v2494 = vpop.f32.mrb[0].mxu0
        %v2495 = vadd.f32 %v2452, %v2494
        %v2496 = vpop.f32.mrb[0].mxu0
        %v2497 = vadd.f32 %v2454, %v2496
        %v2498 = vpop.f32.mrb[0].mxu0
        %v2499 = vadd.f32 %v2456, %v2498
        %2500 = vdwg.mxu0
        %2501 = vmatprep.subr.bf16.mxu0 %v1799
        %2502 = vmatpush1.bf16.msra.mxu0 %v1798
        %2503 = vmatprep.subr.bf16.mxu0 %v1805
        %2504 = vmatpush1.bf16.msra.mxu0 %v1804
        %2505 = vmatprep.subr.bf16.mxu0 %v1811
        %2506 = vmatpush1.bf16.msra.mxu0 %v1810
        %2507 = vmatprep.subr.bf16.mxu0 %v1817
        %2508 = vmatpush1.bf16.msra.mxu0 %v1816
        %2509 = vmatprep.subr.bf16.mxu0 %v1823
        %2510 = vmatpush1.bf16.msra.mxu0 %v1822
        %2511 = vmatprep.subr.bf16.mxu0 %v1829
        %2512 = vmatpush1.bf16.msra.mxu0 %v1828
        %2513 = vmatprep.subr.bf16.mxu0 %v1835
        %2514 = vmatpush1.bf16.msra.mxu0 %v1834
        %2515 = vmatprep.subr.bf16.mxu0 %v1841
        %2516 = vmatpush1.bf16.msra.mxu0 %v1840
        %2517 = vmatprep.subr.bf16.mxu0 %v1847
        %2518 = vmatpush1.bf16.msra.mxu0 %v1846
        %2519 = vmatprep.subr.bf16.mxu0 %v1853
        %2520 = vmatpush1.bf16.msra.mxu0 %v1852
        %2521 = vmatprep.subr.bf16.mxu0 %v1859
        %2522 = vmatpush1.bf16.msra.mxu0 %v1858
        %2523 = vmatprep.subr.bf16.mxu0 %v1865
        %2524 = vmatpush1.bf16.msra.mxu0 %v1864
        %2525 = vmatprep.subr.bf16.mxu0 %v1871
        %2526 = vmatpush1.bf16.msra.mxu0 %v1870
        %2527 = vmatprep.subr.bf16.mxu0 %v1877
        %2528 = vmatpush1.bf16.msra.mxu0 %v1876
        %2529 = vmatprep.subr.bf16.mxu0 %v1883
        %2530 = vmatpush1.bf16.msra.mxu0 %v1882
        %2531 = vmatprep.subr.bf16.mxu0 %v1889
        %2532 = vmatpush1.bf16.msra.mxu0 %v1888
        %2533 = vmatprep.mubr.bf16.mxu0 %v921
        %2534 = vmatmul.mubr.bf16.gmra.mrb[0].mxu0 %v920
        %v2535 = vpop.f32.mrb[0].mxu0
        %v2536 = vadd.f32 0.0, %v2535
        %v2537 = vpop.f32.mrb[0].mxu0
        %v2538 = vadd.f32 0.0, %v2537
        %v2539 = vpop.f32.mrb[0].mxu0
        %v2540 = vadd.f32 0.0, %v2539
        %v2541 = vpop.f32.mrb[0].mxu0
        %v2542 = vadd.f32 0.0, %v2541
        %2543 = vdwg.mxu0
        %2544 = vmatprep.subr.bf16.mxu0 %v1895
        %2545 = vmatpush1.bf16.msra.mxu0 %v1894
        %2546 = vmatprep.subr.bf16.mxu0 %v1901
        %2547 = vmatpush1.bf16.msra.mxu0 %v1900
        %2548 = vmatprep.subr.bf16.mxu0 %v1907
        %2549 = vmatpush1.bf16.msra.mxu0 %v1906
        %2550 = vmatprep.subr.bf16.mxu0 %v1913
        %2551 = vmatpush1.bf16.msra.mxu0 %v1912
        %2552 = vmatprep.subr.bf16.mxu0 %v1919
        %2553 = vmatpush1.bf16.msra.mxu0 %v1918
        %2554 = vmatprep.subr.bf16.mxu0 %v1925
        %2555 = vmatpush1.bf16.msra.mxu0 %v1924
        %2556 = vmatprep.subr.bf16.mxu0 %v1931
        %2557 = vmatpush1.bf16.msra.mxu0 %v1930
        %2558 = vmatprep.subr.bf16.mxu0 %v1937
        %2559 = vmatpush1.bf16.msra.mxu0 %v1936
        %2560 = vmatprep.subr.bf16.mxu0 %v1943
        %2561 = vmatpush1.bf16.msra.mxu0 %v1942
        %2562 = vmatprep.subr.bf16.mxu0 %v1949
        %2563 = vmatpush1.bf16.msra.mxu0 %v1948
        %2564 = vmatprep.subr.bf16.mxu0 %v1955
        %2565 = vmatpush1.bf16.msra.mxu0 %v1954
        %2566 = vmatprep.subr.bf16.mxu0 %v1961
        %2567 = vmatpush1.bf16.msra.mxu0 %v1960
        %2568 = vmatprep.subr.bf16.mxu0 %v1967
        %2569 = vmatpush1.bf16.msra.mxu0 %v1966
        %2570 = vmatprep.subr.bf16.mxu0 %v1973
        %2571 = vmatpush1.bf16.msra.mxu0 %v1972
        %2572 = vmatprep.subr.bf16.mxu0 %v1979
        %2573 = vmatpush1.bf16.msra.mxu0 %v1978
        %2574 = vmatprep.subr.bf16.mxu0 %v1985
        %2575 = vmatpush1.bf16.msra.mxu0 %v1984
        %2576 = vmatprep.mubr.bf16.mxu0 %v923
        %2577 = vmatmul.mubr.bf16.gmra.mrb[0].mxu0 %v922
        %v2578 = vpop.f32.mrb[0].mxu0
        %v2579 = vadd.f32 %v2536, %v2578
        %v2580 = vpop.f32.mrb[0].mxu0
        %v2581 = vadd.f32 %v2538, %v2580
        %v2582 = vpop.f32.mrb[0].mxu0
        %v2583 = vadd.f32 %v2540, %v2582
        %v2584 = vpop.f32.mrb[0].mxu0
        %v2585 = vadd.f32 %v2542, %v2584
        %2586 = vdwg.mxu0
        %2587 = vmatprep.subr.bf16.mxu0 %v1991
        %2588 = vmatpush1.bf16.msra.mxu0 %v1990
        %2589 = vmatprep.subr.bf16.mxu0 %v1997
        %2590 = vmatpush1.bf16.msra.mxu0 %v1996
        %2591 = vmatprep.subr.bf16.mxu0 %v2003
        %2592 = vmatpush1.bf16.msra.mxu0 %v2002
        %2593 = vmatprep.subr.bf16.mxu0 %v2009
        %2594 = vmatpush1.bf16.msra.mxu0 %v2008
        %2595 = vmatprep.subr.bf16.mxu0 %v2015
        %2596 = vmatpush1.bf16.msra.mxu0 %v2014
        %2597 = vmatprep.subr.bf16.mxu0 %v2021
        %2598 = vmatpush1.bf16.msra.mxu0 %v2020
        %2599 = vmatprep.subr.bf16.mxu0 %v2027
        %2600 = vmatpush1.bf16.msra.mxu0 %v2026
        %2601 = vmatprep.subr.bf16.mxu0 %v2033
        %2602 = vmatpush1.bf16.msra.mxu0 %v2032
        %2603 = vmatprep.subr.bf16.mxu0 %v2039
        %2604 = vmatpush1.bf16.msra.mxu0 %v2038
        %2605 = vmatprep.subr.bf16.mxu0 %v2045
        %2606 = vmatpush1.bf16.msra.mxu0 %v2044
        %2607 = vmatprep.subr.bf16.mxu0 %v2051
        %2608 = vmatpush1.bf16.msra.mxu0 %v2050
        %2609 = vmatprep.subr.bf16.mxu0 %v2057
        %2610 = vmatpush1.bf16.msra.mxu0 %v2056
        %2611 = vmatprep.subr.bf16.mxu0 %v2063
        %2612 = vmatpush1.bf16.msra.mxu0 %v2062
        %2613 = vmatprep.subr.bf16.mxu0 %v2069
        %2614 = vmatpush1.bf16.msra.mxu0 %v2068
        %2615 = vmatprep.subr.bf16.mxu0 %v2075
        %2616 = vmatpush1.bf16.msra.mxu0 %v2074
        %2617 = vmatprep.subr.bf16.mxu0 %v2081
        %2618 = vmatpush1.bf16.msra.mxu0 %v2080
        %2619 = vmatprep.mubr.bf16.mxu0 %v925
        %2620 = vmatmul.mubr.bf16.gmra.mrb[0].mxu0 %v924
        %v2621 = vpop.f32.mrb[0].mxu0
        %v2622 = vadd.f32 %v2579, %v2621
        %v2623 = vpop.f32.mrb[0].mxu0
        %v2624 = vadd.f32 %v2581, %v2623
        %v2625 = vpop.f32.mrb[0].mxu0
        %v2626 = vadd.f32 %v2583, %v2625
        %v2627 = vpop.f32.mrb[0].mxu0
        %v2628 = vadd.f32 %v2585, %v2627
        %2629 = vdwg.mxu0
        %2630 = vmatprep.subr.bf16.mxu0 %v1801
        %2631 = vmatpush1.bf16.msra.mxu0 %v1800
        %2632 = vmatprep.subr.bf16.mxu0 %v1807
        %2633 = vmatpush1.bf16.msra.mxu0 %v1806
        %2634 = vmatprep.subr.bf16.mxu0 %v1813
        %2635 = vmatpush1.bf16.msra.mxu0 %v1812
        %2636 = vmatprep.subr.bf16.mxu0 %v1819
        %2637 = vmatpush1.bf16.msra.mxu0 %v1818
        %2638 = vmatprep.subr.bf16.mxu0 %v1825
        %2639 = vmatpush1.bf16.msra.mxu0 %v1824
        %2640 = vmatprep.subr.bf16.mxu0 %v1831
        %2641 = vmatpush1.bf16.msra.mxu0 %v1830
        %2642 = vmatprep.subr.bf16.mxu0 %v1837
        %2643 = vmatpush1.bf16.msra.mxu0 %v1836
        %2644 = vmatprep.subr.bf16.mxu0 %v1843
        %2645 = vmatpush1.bf16.msra.mxu0 %v1842
        %2646 = vmatprep.subr.bf16.mxu0 %v1849
        %2647 = vmatpush1.bf16.msra.mxu0 %v1848
        %2648 = vmatprep.subr.bf16.mxu0 %v1855
        %2649 = vmatpush1.bf16.msra.mxu0 %v1854
        %2650 = vmatprep.subr.bf16.mxu0 %v1861
        %2651 = vmatpush1.bf16.msra.mxu0 %v1860
        %2652 = vmatprep.subr.bf16.mxu0 %v1867
        %2653 = vmatpush1.bf16.msra.mxu0 %v1866
        %2654 = vmatprep.subr.bf16.mxu0 %v1873
        %2655 = vmatpush1.bf16.msra.mxu0 %v1872
        %2656 = vmatprep.subr.bf16.mxu0 %v1879
        %2657 = vmatpush1.bf16.msra.mxu0 %v1878
        %2658 = vmatprep.subr.bf16.mxu0 %v1885
        %2659 = vmatpush1.bf16.msra.mxu0 %v1884
        %2660 = vmatprep.subr.bf16.mxu0 %v1891
        %2661 = vmatpush1.bf16.msra.mxu0 %v1890
        %2662 = vmatprep.mubr.bf16.mxu0 %v921
        %2663 = vmatmul.mubr.bf16.gmra.mrb[0].mxu0 %v920
        %v2664 = vpop.f32.mrb[0].mxu0
        %v2665 = vadd.f32 0.0, %v2664
        %v2666 = vpop.f32.mrb[0].mxu0
        %v2667 = vadd.f32 0.0, %v2666
        %v2668 = vpop.f32.mrb[0].mxu0
        %v2669 = vadd.f32 0.0, %v2668
        %v2670 = vpop.f32.mrb[0].mxu0
        %v2671 = vadd.f32 0.0, %v2670
        %2672 = vdwg.mxu0
        %2673 = vmatprep.subr.bf16.mxu0 %v1897
        %2674 = vmatpush1.bf16.msra.mxu0 %v1896
        %2675 = vmatprep.subr.bf16.mxu0 %v1903
        %2676 = vmatpush1.bf16.msra.mxu0 %v1902
        %2677 = vmatprep.subr.bf16.mxu0 %v1909
        %2678 = vmatpush1.bf16.msra.mxu0 %v1908
        %2679 = vmatprep.subr.bf16.mxu0 %v1915
        %2680 = vmatpush1.bf16.msra.mxu0 %v1914
        %2681 = vmatprep.subr.bf16.mxu0 %v1921
        %2682 = vmatpush1.bf16.msra.mxu0 %v1920
        %2683 = vmatprep.subr.bf16.mxu0 %v1927
        %2684 = vmatpush1.bf16.msra.mxu0 %v1926
        %2685 = vmatprep.subr.bf16.mxu0 %v1933
        %2686 = vmatpush1.bf16.msra.mxu0 %v1932
        %2687 = vmatprep.subr.bf16.mxu0 %v1939
        %2688 = vmatpush1.bf16.msra.mxu0 %v1938
        %2689 = vmatprep.subr.bf16.mxu0 %v1945
        %2690 = vmatpush1.bf16.msra.mxu0 %v1944
        %2691 = vmatprep.subr.bf16.mxu0 %v1951
        %2692 = vmatpush1.bf16.msra.mxu0 %v1950
        %2693 = vmatprep.subr.bf16.mxu0 %v1957
        %2694 = vmatpush1.bf16.msra.mxu0 %v1956
        %2695 = vmatprep.subr.bf16.mxu0 %v1963
        %2696 = vmatpush1.bf16.msra.mxu0 %v1962
        %2697 = vmatprep.subr.bf16.mxu0 %v1969
        %2698 = vmatpush1.bf16.msra.mxu0 %v1968
        %2699 = vmatprep.subr.bf16.mxu0 %v1975
        %2700 = vmatpush1.bf16.msra.mxu0 %v1974
        %2701 = vmatprep.subr.bf16.mxu0 %v1981
        %2702 = vmatpush1.bf16.msra.mxu0 %v1980
        %2703 = vmatprep.subr.bf16.mxu0 %v1987
        %2704 = vmatpush1.bf16.msra.mxu0 %v1986
        %2705 = vmatprep.mubr.bf16.mxu0 %v923
        %2706 = vmatmul.mubr.bf16.gmra.mrb[0].mxu0 %v922
        %v2707 = vpop.f32.mrb[0].mxu0
        %v2708 = vadd.f32 %v2665, %v2707
        %v2709 = vpop.f32.mrb[0].mxu0
        %v2710 = vadd.f32 %v2667, %v2709
        %v2711 = vpop.f32.mrb[0].mxu0
        %v2712 = vadd.f32 %v2669, %v2711
        %v2713 = vpop.f32.mrb[0].mxu0
        %v2714 = vadd.f32 %v2671, %v2713
        %2715 = vdwg.mxu0
        %2716 = vmatprep.subr.bf16.mxu0 %v1993
        %2717 = vmatpush1.bf16.msra.mxu0 %v1992
        %2718 = vmatprep.subr.bf16.mxu0 %v1999
        %2719 = vmatpush1.bf16.msra.mxu0 %v1998
        %2720 = vmatprep.subr.bf16.mxu0 %v2005
        %2721 = vmatpush1.bf16.msra.mxu0 %v2004
        %2722 = vmatprep.subr.bf16.mxu0 %v2011
        %2723 = vmatpush1.bf16.msra.mxu0 %v2010
        %2724 = vmatprep.subr.bf16.mxu0 %v2017
        %2725 = vmatpush1.bf16.msra.mxu0 %v2016
        %2726 = vmatprep.subr.bf16.mxu0 %v2023
        %2727 = vmatpush1.bf16.msra.mxu0 %v2022
        %2728 = vmatprep.subr.bf16.mxu0 %v2029
        %2729 = vmatpush1.bf16.msra.mxu0 %v2028
        %2730 = vmatprep.subr.bf16.mxu0 %v2035
        %2731 = vmatpush1.bf16.msra.mxu0 %v2034
        %2732 = vmatprep.subr.bf16.mxu0 %v2041
        %2733 = vmatpush1.bf16.msra.mxu0 %v2040
        %2734 = vmatprep.subr.bf16.mxu0 %v2047
        %2735 = vmatpush1.bf16.msra.mxu0 %v2046
        %2736 = vmatprep.subr.bf16.mxu0 %v2053
        %2737 = vmatpush1.bf16.msra.mxu0 %v2052
        %2738 = vmatprep.subr.bf16.mxu0 %v2059
        %2739 = vmatpush1.bf16.msra.mxu0 %v2058
        %2740 = vmatprep.subr.bf16.mxu0 %v2065
        %2741 = vmatpush1.bf16.msra.mxu0 %v2064
        %2742 = vmatprep.subr.bf16.mxu0 %v2071
        %2743 = vmatpush1.bf16.msra.mxu0 %v2070
        %2744 = vmatprep.subr.bf16.mxu0 %v2077
        %2745 = vmatpush1.bf16.msra.mxu0 %v2076
        %2746 = vmatprep.subr.bf16.mxu0 %v2083
        %2747 = vmatpush1.bf16.msra.mxu0 %v2082
        %2748 = vmatprep.mubr.bf16.mxu0 %v925
        %2749 = vmatmul.mubr.bf16.gmra.mrb[0].mxu0 %v924
        %v2750 = vpop.f32.mrb[0].mxu0
        %v2751 = vadd.f32 %v2708, %v2750
        %v2752 = vpop.f32.mrb[0].mxu0
        %v2753 = vadd.f32 %v2710, %v2752
        %v2754 = vpop.f32.mrb[0].mxu0
        %v2755 = vadd.f32 %v2712, %v2754
        %v2756 = vpop.f32.mrb[0].mxu0
        %v2757 = vadd.f32 %v2714, %v2756
        %2758 = vdwg.mxu0
        %v2759 = vadd.f32 %v596, %v2493
        %v2760 = vadd.f32 %v597, %v2495
        %v2761 = vadd.f32 %v598, %v2622
        %v2762 = vadd.f32 %v599, %v2624
        %v2763 = vadd.f32 %v600, %v2751
        %v2764 = vadd.f32 %v601, %v2753
        %v2765 = vadd.f32 %v602, %v2497
        %v2766 = vadd.f32 %v603, %v2499
        %v2767 = vadd.f32 %v604, %v2626
        %v2768 = vadd.f32 %v605, %v2628
        %v2769 = vadd.f32 %v606, %v2755
        %v2770 = vadd.f32 %v607, %v2757
        %2771 = vst [vmem:[#allocation2] sm:$0xff] %v2759
        %2772 = vst [vmem:[#allocation2 + $0x8] sm:$0xff] %v2760
        %2773 = vst [vmem:[#allocation2 + $0x10] sm:$0xff] %v2761
        %2774 = vst [vmem:[#allocation2 + $0x18] sm:$0xff] %v2762
        %2775 = vst [vmem:[#allocation2 + $0x20] sm:$0xff] %v2763
        %2776 = vst [vmem:[#allocation2 + $0x28] sm:$0xff] %v2764
        %2777 = vst [vmem:[#allocation2 + $0x30] sm:$0xff] %v2765
        %2778 = vst [vmem:[#allocation2 + $0x38] sm:$0xff] %v2766
        %2779 = vst [vmem:[#allocation2 + $0x40] sm:$0xff] %v2767
        %2780 = vst [vmem:[#allocation2 + $0x48] sm:$0xff] %v2768
        %2781 = vst [vmem:[#allocation2 + $0x50] sm:$0xff] %v2769
        %2782 = vst [vmem:[#allocation2 + $0x58] sm:$0xff] %v2770
        %p2783 = scmp.eq.s32.totalorder %s38, 2
        // Predicated region
        $region113: #{tpu_custom_call.1} parent=63 // pred_check
          %p2784 = pneg %p2783
        $region114: #{tpu_custom_call.1} parent=63 // pred_check_branch
          %2786 = sbr.rel (%p2784) target = $region116
        $region115: #{tpu_custom_call.1} parent=63 // pred_region
          %v2787 = vld [vmem:[#allocation2] sm:$0xff]
          %v2788 = vld [vmem:[#allocation2 + $0x8] sm:$0xff]
          %v2789 = vld [vmem:[#allocation2 + $0x10] sm:$0xff]
          %v2790 = vld [vmem:[#allocation2 + $0x18] sm:$0xff]
          %v2791 = vld [vmem:[#allocation2 + $0x20] sm:$0xff]
          %v2792 = vld [vmem:[#allocation2 + $0x28] sm:$0xff]
          %v2793 = vld [vmem:[#allocation2 + $0x30] sm:$0xff]
          %v2794 = vld [vmem:[#allocation2 + $0x38] sm:$0xff]
          %v2795 = vld [vmem:[#allocation2 + $0x40] sm:$0xff]
          %v2796 = vld [vmem:[#allocation2 + $0x48] sm:$0xff]
          %v2797 = vld [vmem:[#allocation2 + $0x50] sm:$0xff]
          %v2798 = vld [vmem:[#allocation2 + $0x58] sm:$0xff]
          %v2799 = vld [vmem:[#allocation8] sm:$0x3f]
          %v2801 = vlaneseq
          %v2802 = vshrl.u32 %v2801, 7
          %v2803 = vsub.s32 0, %v2802
          %v2804 = vrot.slane %v2799, %v2803
          %v2805 = vlaneseq
          %v2806 = vshrl.u32 %v2805, 7
          %v2807 = vsub.s32 1, %v2806
          %v2808 = vrot.slane %v2799, %v2807
          %v2809 = vlaneseq
          %v2810 = vshrl.u32 %v2809, 7
          %v2811 = vsub.s32 2, %v2810
          %v2812 = vrot.slane %v2799, %v2811
          %v2813 = vlaneseq
          %v2814 = vshrl.u32 %v2813, 7
          %v2815 = vsub.s32 3, %v2814
          %v2816 = vrot.slane %v2799, %v2815
          %v2817 = vlaneseq
          %v2818 = vshrl.u32 %v2817, 7
          %v2819 = vsub.s32 4, %v2818
          %v2820 = vrot.slane %v2799, %v2819
          %v2821 = vlaneseq
          %v2822 = vshrl.u32 %v2821, 7
          %v2823 = vsub.s32 5, %v2822
          %v2824 = vrot.slane %v2799, %v2823
          %v2831 = vadd.f32 %v2787, %v2804
          %v2832 = vadd.f32 %v2788, %v2808
          %v2833 = vadd.f32 %v2789, %v2812
          %v2834 = vadd.f32 %v2790, %v2816
          %v2835 = vadd.f32 %v2791, %v2820
          %v2836 = vadd.f32 %v2792, %v2824
          %v2837 = vadd.f32 %v2793, %v2804
          %v2838 = vadd.f32 %v2794, %v2808
          %v2839 = vadd.f32 %v2795, %v2812
          %v2840 = vadd.f32 %v2796, %v2816
          %v2841 = vadd.f32 %v2797, %v2820
          %v2842 = vadd.f32 %v2798, %v2824
          %v2843 = vmax.f32 %v2831, 0.0
          %v2844 = vmax.f32 %v2832, 0.0
          %v2845 = vmax.f32 %v2833, 0.0
          %v2846 = vmax.f32 %v2834, 0.0
          %v2847 = vmax.f32 %v2835, 0.0
          %v2848 = vmax.f32 %v2836, 0.0
          %v2849 = vmax.f32 %v2837, 0.0
          %v2850 = vmax.f32 %v2838, 0.0
          %v2851 = vmax.f32 %v2839, 0.0
          %v2852 = vmax.f32 %v2840, 0.0
          %v2853 = vmax.f32 %v2841, 0.0
          %v2854 = vmax.f32 %v2842, 0.0
          %v2855 = vpack.c.bf16 %v2849, %v2843
          %v2856 = vpack.c.bf16 %v2850, %v2844
          %v2857 = vpack.c.bf16 %v2851, %v2845
          %v2858 = vpack.c.bf16 %v2852, %v2846
          %v2859 = vpack.c.bf16 %v2853, %v2847
          %v2860 = vpack.c.bf16 %v2854, %v2848
          %v2861 = vld [vmem:[#allocation9] sm:$0xff]
          %v2862 = vld [vmem:[#allocation9 + $0x8] sm:$0xff]
          %v2863 = vld [vmem:[#allocation9 + $0x10] sm:$0xff]
          %v2864 = vld [vmem:[#allocation9 + $0x18] sm:$0xff]
          %v2865 = vld [vmem:[#allocation9 + $0x20] sm:$0xff]
          %v2866 = vld [vmem:[#allocation9 + $0x28] sm:$0xff]
          %v2867 = vld [vmem:[#allocation9 + $0x30] sm:$0xff]
          %v2868 = vld [vmem:[#allocation9 + $0x38] sm:$0xff]
          %v2869 = vld [vmem:[#allocation9 + $0x40] sm:$0xff]
          %v2870 = vld [vmem:[#allocation9 + $0x48] sm:$0xff]
          %v2871 = vld [vmem:[#allocation9 + $0x50] sm:$0xff]
          %v2872 = vld [vmem:[#allocation9 + $0x58] sm:$0xff]
          %v2873 = vld [vmem:[#allocation9 + $0x60] sm:$0xff]
          %v2874 = vld [vmem:[#allocation9 + $0x68] sm:$0xff]
          %v2875 = vld [vmem:[#allocation9 + $0x70] sm:$0xff]
          %v2876 = vld [vmem:[#allocation9 + $0x78] sm:$0xff]
          %v2877 = vld [vmem:[#allocation9 + $0x80] sm:$0xff]
          %v2878 = vld [vmem:[#allocation9 + $0x88] sm:$0xff]
          %v2879 = vld [vmem:[#allocation9 + $0x90] sm:$0xff]
          %v2880 = vld [vmem:[#allocation9 + $0x98] sm:$0xff]
          %v2881 = vld [vmem:[#allocation9 + $0xa0] sm:$0xff]
          %v2882 = vld [vmem:[#allocation9 + $0xa8] sm:$0xff]
          %v2883 = vld [vmem:[#allocation9 + $0xb0] sm:$0xff]
          %v2884 = vld [vmem:[#allocation9 + $0xb8] sm:$0xff]
          %v2885 = vld [vmem:[#allocation9 + $0xc0] sm:$0xff]
          %v2886 = vld [vmem:[#allocation9 + $0xc8] sm:$0xff]
          %v2887 = vld [vmem:[#allocation9 + $0xd0] sm:$0xff]
          %v2888 = vld [vmem:[#allocation9 + $0xd8] sm:$0xff]
          %v2889 = vld [vmem:[#allocation9 + $0xe0] sm:$0xff]
          %v2890 = vld [vmem:[#allocation9 + $0xe8] sm:$0xff]
          %v2891 = vld [vmem:[#allocation9 + $0xf0] sm:$0xff]
          %v2892 = vld [vmem:[#allocation9 + $0xf8] sm:$0xff]
          %v2893 = vld [vmem:[#allocation9 + $0x100] sm:$0xff]
          %v2894 = vld [vmem:[#allocation9 + $0x108] sm:$0xff]
          %v2895 = vld [vmem:[#allocation9 + $0x110] sm:$0xff]
          %v2896 = vld [vmem:[#allocation9 + $0x118] sm:$0xff]
          %v2897 = vld [vmem:[#allocation9 + $0x120] sm:$0xff]
          %v2898 = vld [vmem:[#allocation9 + $0x128] sm:$0xff]
          %v2899 = vld [vmem:[#allocation9 + $0x130] sm:$0xff]
          %v2900 = vld [vmem:[#allocation9 + $0x138] sm:$0xff]
          %v2901 = vld [vmem:[#allocation9 + $0x140] sm:$0xff]
          %v2902 = vld [vmem:[#allocation9 + $0x148] sm:$0xff]
          %v2903 = vld [vmem:[#allocation9 + $0x150] sm:$0xff]
          %v2904 = vld [vmem:[#allocation9 + $0x158] sm:$0xff]
          %v2905 = vld [vmem:[#allocation9 + $0x160] sm:$0xff]
          %v2906 = vld [vmem:[#allocation9 + $0x168] sm:$0xff]
          %v2907 = vld [vmem:[#allocation9 + $0x170] sm:$0xff]
          %v2908 = vld [vmem:[#allocation9 + $0x178] sm:$0xff]
          %v2909 = vld [vmem:[#allocation9 + $0x180] sm:$0xff]
          %v2910 = vld [vmem:[#allocation9 + $0x188] sm:$0xff]
          %v2911 = vld [vmem:[#allocation9 + $0x190] sm:$0xff]
          %v2912 = vld [vmem:[#allocation9 + $0x198] sm:$0xff]
          %v2913 = vld [vmem:[#allocation9 + $0x1a0] sm:$0xff]
          %v2914 = vld [vmem:[#allocation9 + $0x1a8] sm:$0xff]
          %v2915 = vld [vmem:[#allocation9 + $0x1b0] sm:$0xff]
          %v2916 = vld [vmem:[#allocation9 + $0x1b8] sm:$0xff]
          %v2917 = vld [vmem:[#allocation9 + $0x1c0] sm:$0xff]
          %v2918 = vld [vmem:[#allocation9 + $0x1c8] sm:$0xff]
          %v2919 = vld [vmem:[#allocation9 + $0x1d0] sm:$0xff]
          %v2920 = vld [vmem:[#allocation9 + $0x1d8] sm:$0xff]
          %v2921 = vld [vmem:[#allocation9 + $0x1e0] sm:$0xff]
          %v2922 = vld [vmem:[#allocation9 + $0x1e8] sm:$0xff]
          %v2923 = vld [vmem:[#allocation9 + $0x1f0] sm:$0xff]
          %v2924 = vld [vmem:[#allocation9 + $0x1f8] sm:$0xff]
          %v2925 = vld [vmem:[#allocation9 + $0x200] sm:$0xff]
          %v2926 = vld [vmem:[#allocation9 + $0x208] sm:$0xff]
          %v2927 = vld [vmem:[#allocation9 + $0x210] sm:$0xff]
          %v2928 = vld [vmem:[#allocation9 + $0x218] sm:$0xff]
          %v2929 = vld [vmem:[#allocation9 + $0x220] sm:$0xff]
          %v2930 = vld [vmem:[#allocation9 + $0x228] sm:$0xff]
          %v2931 = vld [vmem:[#allocation9 + $0x230] sm:$0xff]
          %v2932 = vld [vmem:[#allocation9 + $0x238] sm:$0xff]
          %v2933 = vld [vmem:[#allocation9 + $0x240] sm:$0xff]
          %v2934 = vld [vmem:[#allocation9 + $0x248] sm:$0xff]
          %v2935 = vld [vmem:[#allocation9 + $0x250] sm:$0xff]
          %v2936 = vld [vmem:[#allocation9 + $0x258] sm:$0xff]
          %v2937 = vld [vmem:[#allocation9 + $0x260] sm:$0xff]
          %v2938 = vld [vmem:[#allocation9 + $0x268] sm:$0xff]
          %v2939 = vld [vmem:[#allocation9 + $0x270] sm:$0xff]
          %v2940 = vld [vmem:[#allocation9 + $0x278] sm:$0xff]
          %v2941 = vld [vmem:[#allocation9 + $0x280] sm:$0xff]
          %v2942 = vld [vmem:[#allocation9 + $0x288] sm:$0xff]
          %v2943 = vld [vmem:[#allocation9 + $0x290] sm:$0xff]
          %v2944 = vld [vmem:[#allocation9 + $0x298] sm:$0xff]
          %v2945 = vld [vmem:[#allocation9 + $0x2a0] sm:$0xff]
          %v2946 = vld [vmem:[#allocation9 + $0x2a8] sm:$0xff]
          %v2947 = vld [vmem:[#allocation9 + $0x2b0] sm:$0xff]
          %v2948 = vld [vmem:[#allocation9 + $0x2b8] sm:$0xff]
          %v2949 = vld [vmem:[#allocation9 + $0x2c0] sm:$0xff]
          %v2950 = vld [vmem:[#allocation9 + $0x2c8] sm:$0xff]
          %v2951 = vld [vmem:[#allocation9 + $0x2d0] sm:$0xff]
          %v2952 = vld [vmem:[#allocation9 + $0x2d8] sm:$0xff]
          %v2953 = vld [vmem:[#allocation9 + $0x2e0] sm:$0xff]
          %v2954 = vld [vmem:[#allocation9 + $0x2e8] sm:$0xff]
          %v2955 = vld [vmem:[#allocation9 + $0x2f0] sm:$0xff]
          %v2956 = vld [vmem:[#allocation9 + $0x2f8] sm:$0xff]
          %v2957 = vld [vmem:[#allocation11] sm:$0x3]
          %v2959 = vlaneseq
          %v2960 = vshrl.u32 %v2959, 7
          %v2961 = vsub.s32 0, %v2960
          %v2962 = vrot.slane %v2957, %v2961
          %v2963 = vlaneseq
          %v2964 = vshrl.u32 %v2963, 7
          %v2965 = vsub.s32 1, %v2964
          %v2966 = vrot.slane %v2957, %v2965
          %v3065 = vunpack.c.l.b16 %v2861
          %v3066 = vunpack.c.h.b16 %v2861
          %v3067 = vunpack.c.l.b16 %v2862
          %v3068 = vunpack.c.h.b16 %v2862
          %v3069 = vunpack.c.l.b16 %v2863
          %v3070 = vunpack.c.h.b16 %v2863
          %v3071 = vunpack.c.l.b16 %v2864
          %v3072 = vunpack.c.h.b16 %v2864
          %v3073 = vunpack.c.l.b16 %v2865
          %v3074 = vunpack.c.h.b16 %v2865
          %v3075 = vunpack.c.l.b16 %v2866
          %v3076 = vunpack.c.h.b16 %v2866
          %v3077 = vunpack.c.l.b16 %v2867
          %v3078 = vunpack.c.h.b16 %v2867
          %v3079 = vunpack.c.l.b16 %v2868
          %v3080 = vunpack.c.h.b16 %v2868
          %v3081 = vunpack.c.l.b16 %v2869
          %v3082 = vunpack.c.h.b16 %v2869
          %v3083 = vunpack.c.l.b16 %v2870
          %v3084 = vunpack.c.h.b16 %v2870
          %v3085 = vunpack.c.l.b16 %v2871
          %v3086 = vunpack.c.h.b16 %v2871
          %v3087 = vunpack.c.l.b16 %v2872
          %v3088 = vunpack.c.h.b16 %v2872
          %v3089 = vunpack.c.l.b16 %v2873
          %v3090 = vunpack.c.h.b16 %v2873
          %v3091 = vunpack.c.l.b16 %v2874
          %v3092 = vunpack.c.h.b16 %v2874
          %v3093 = vunpack.c.l.b16 %v2875
          %v3094 = vunpack.c.h.b16 %v2875
          %v3095 = vunpack.c.l.b16 %v2876
          %v3096 = vunpack.c.h.b16 %v2876
          %v3097 = vunpack.c.l.b16 %v2877
          %v3098 = vunpack.c.h.b16 %v2877
          %v3099 = vunpack.c.l.b16 %v2878
          %v3100 = vunpack.c.h.b16 %v2878
          %v3101 = vunpack.c.l.b16 %v2879
          %v3102 = vunpack.c.h.b16 %v2879
          %v3103 = vunpack.c.l.b16 %v2880
          %v3104 = vunpack.c.h.b16 %v2880
          %v3105 = vunpack.c.l.b16 %v2881
          %v3106 = vunpack.c.h.b16 %v2881
          %v3107 = vunpack.c.l.b16 %v2882
          %v3108 = vunpack.c.h.b16 %v2882
          %v3109 = vunpack.c.l.b16 %v2883
          %v3110 = vunpack.c.h.b16 %v2883
          %v3111 = vunpack.c.l.b16 %v2884
          %v3112 = vunpack.c.h.b16 %v2884
          %v3113 = vunpack.c.l.b16 %v2885
          %v3114 = vunpack.c.h.b16 %v2885
          %v3115 = vunpack.c.l.b16 %v2886
          %v3116 = vunpack.c.h.b16 %v2886
          %v3117 = vunpack.c.l.b16 %v2887
          %v3118 = vunpack.c.h.b16 %v2887
          %v3119 = vunpack.c.l.b16 %v2888
          %v3120 = vunpack.c.h.b16 %v2888
          %v3121 = vunpack.c.l.b16 %v2889
          %v3122 = vunpack.c.h.b16 %v2889
          %v3123 = vunpack.c.l.b16 %v2890
          %v3124 = vunpack.c.h.b16 %v2890
          %v3125 = vunpack.c.l.b16 %v2891
          %v3126 = vunpack.c.h.b16 %v2891
          %v3127 = vunpack.c.l.b16 %v2892
          %v3128 = vunpack.c.h.b16 %v2892
          %v3129 = vunpack.c.l.b16 %v2893
          %v3130 = vunpack.c.h.b16 %v2893
          %v3131 = vunpack.c.l.b16 %v2894
          %v3132 = vunpack.c.h.b16 %v2894
          %v3133 = vunpack.c.l.b16 %v2895
          %v3134 = vunpack.c.h.b16 %v2895
          %v3135 = vunpack.c.l.b16 %v2896
          %v3136 = vunpack.c.h.b16 %v2896
          %v3137 = vunpack.c.l.b16 %v2897
          %v3138 = vunpack.c.h.b16 %v2897
          %v3139 = vunpack.c.l.b16 %v2898
          %v3140 = vunpack.c.h.b16 %v2898
          %v3141 = vunpack.c.l.b16 %v2899
          %v3142 = vunpack.c.h.b16 %v2899
          %v3143 = vunpack.c.l.b16 %v2900
          %v3144 = vunpack.c.h.b16 %v2900
          %v3145 = vunpack.c.l.b16 %v2901
          %v3146 = vunpack.c.h.b16 %v2901
          %v3147 = vunpack.c.l.b16 %v2902
          %v3148 = vunpack.c.h.b16 %v2902
          %v3149 = vunpack.c.l.b16 %v2903
          %v3150 = vunpack.c.h.b16 %v2903
          %v3151 = vunpack.c.l.b16 %v2904
          %v3152 = vunpack.c.h.b16 %v2904
          %v3153 = vunpack.c.l.b16 %v2905
          %v3154 = vunpack.c.h.b16 %v2905
          %v3155 = vunpack.c.l.b16 %v2906
          %v3156 = vunpack.c.h.b16 %v2906
          %v3157 = vunpack.c.l.b16 %v2907
          %v3158 = vunpack.c.h.b16 %v2907
          %v3159 = vunpack.c.l.b16 %v2908
          %v3160 = vunpack.c.h.b16 %v2908
          %v3161 = vunpack.c.l.b16 %v2909
          %v3162 = vunpack.c.h.b16 %v2909
          %v3163 = vunpack.c.l.b16 %v2910
          %v3164 = vunpack.c.h.b16 %v2910
          %v3165 = vunpack.c.l.b16 %v2911
          %v3166 = vunpack.c.h.b16 %v2911
          %v3167 = vunpack.c.l.b16 %v2912
          %v3168 = vunpack.c.h.b16 %v2912
          %v3169 = vunpack.c.l.b16 %v2913
          %v3170 = vunpack.c.h.b16 %v2913
          %v3171 = vunpack.c.l.b16 %v2914
          %v3172 = vunpack.c.h.b16 %v2914
          %v3173 = vunpack.c.l.b16 %v2915
          %v3174 = vunpack.c.h.b16 %v2915
          %v3175 = vunpack.c.l.b16 %v2916
          %v3176 = vunpack.c.h.b16 %v2916
          %v3177 = vunpack.c.l.b16 %v2917
          %v3178 = vunpack.c.h.b16 %v2917
          %v3179 = vunpack.c.l.b16 %v2918
          %v3180 = vunpack.c.h.b16 %v2918
          %v3181 = vunpack.c.l.b16 %v2919
          %v3182 = vunpack.c.h.b16 %v2919
          %v3183 = vunpack.c.l.b16 %v2920
          %v3184 = vunpack.c.h.b16 %v2920
          %v3185 = vunpack.c.l.b16 %v2921
          %v3186 = vunpack.c.h.b16 %v2921
          %v3187 = vunpack.c.l.b16 %v2922
          %v3188 = vunpack.c.h.b16 %v2922
          %v3189 = vunpack.c.l.b16 %v2923
          %v3190 = vunpack.c.h.b16 %v2923
          %v3191 = vunpack.c.l.b16 %v2924
          %v3192 = vunpack.c.h.b16 %v2924
          %v3193 = vunpack.c.l.b16 %v2925
          %v3194 = vunpack.c.h.b16 %v2925
          %v3195 = vunpack.c.l.b16 %v2926
          %v3196 = vunpack.c.h.b16 %v2926
          %v3197 = vunpack.c.l.b16 %v2927
          %v3198 = vunpack.c.h.b16 %v2927
          %v3199 = vunpack.c.l.b16 %v2928
          %v3200 = vunpack.c.h.b16 %v2928
          %v3201 = vunpack.c.l.b16 %v2929
          %v3202 = vunpack.c.h.b16 %v2929
          %v3203 = vunpack.c.l.b16 %v2930
          %v3204 = vunpack.c.h.b16 %v2930
          %v3205 = vunpack.c.l.b16 %v2931
          %v3206 = vunpack.c.h.b16 %v2931
          %v3207 = vunpack.c.l.b16 %v2932
          %v3208 = vunpack.c.h.b16 %v2932
          %v3209 = vunpack.c.l.b16 %v2933
          %v3210 = vunpack.c.h.b16 %v2933
          %v3211 = vunpack.c.l.b16 %v2934
          %v3212 = vunpack.c.h.b16 %v2934
          %v3213 = vunpack.c.l.b16 %v2935
          %v3214 = vunpack.c.h.b16 %v2935
          %v3215 = vunpack.c.l.b16 %v2936
          %v3216 = vunpack.c.h.b16 %v2936
          %v3217 = vunpack.c.l.b16 %v2937
          %v3218 = vunpack.c.h.b16 %v2937
          %v3219 = vunpack.c.l.b16 %v2938
          %v3220 = vunpack.c.h.b16 %v2938
          %v3221 = vunpack.c.l.b16 %v2939
          %v3222 = vunpack.c.h.b16 %v2939
          %v3223 = vunpack.c.l.b16 %v2940
          %v3224 = vunpack.c.h.b16 %v2940
          %v3225 = vunpack.c.l.b16 %v2941
          %v3226 = vunpack.c.h.b16 %v2941
          %v3227 = vunpack.c.l.b16 %v2942
          %v3228 = vunpack.c.h.b16 %v2942
          %v3229 = vunpack.c.l.b16 %v2943
          %v3230 = vunpack.c.h.b16 %v2943
          %v3231 = vunpack.c.l.b16 %v2944
          %v3232 = vunpack.c.h.b16 %v2944
          %v3233 = vunpack.c.l.b16 %v2945
          %v3234 = vunpack.c.h.b16 %v2945
          %v3235 = vunpack.c.l.b16 %v2946
          %v3236 = vunpack.c.h.b16 %v2946
          %v3237 = vunpack.c.l.b16 %v2947
          %v3238 = vunpack.c.h.b16 %v2947
          %v3239 = vunpack.c.l.b16 %v2948
          %v3240 = vunpack.c.h.b16 %v2948
          %v3241 = vunpack.c.l.b16 %v2949
          %v3242 = vunpack.c.h.b16 %v2949
          %v3243 = vunpack.c.l.b16 %v2950
          %v3244 = vunpack.c.h.b16 %v2950
          %v3245 = vunpack.c.l.b16 %v2951
          %v3246 = vunpack.c.h.b16 %v2951
          %v3247 = vunpack.c.l.b16 %v2952
          %v3248 = vunpack.c.h.b16 %v2952
          %v3249 = vunpack.c.l.b16 %v2953
          %v3250 = vunpack.c.h.b16 %v2953
          %v3251 = vunpack.c.l.b16 %v2954
          %v3252 = vunpack.c.h.b16 %v2954
          %v3253 = vunpack.c.l.b16 %v2955
          %v3254 = vunpack.c.h.b16 %v2955
          %v3255 = vunpack.c.l.b16 %v2956
          %v3256 = vunpack.c.h.b16 %v2956
          %v3257 = vpack.c.b16 %v3067, %v3065
          %v3258 = vpack.c.b16 %v3068, %v3066
          %v3259 = vpack.c.b16 %v3071, %v3069
          %v3260 = vpack.c.b16 %v3072, %v3070
          %v3261 = vpack.c.b16 %v3075, %v3073
          %v3262 = vpack.c.b16 %v3076, %v3074
          %v3263 = vpack.c.b16 %v3079, %v3077
          %v3264 = vpack.c.b16 %v3080, %v3078
          %v3265 = vpack.c.b16 %v3083, %v3081
          %v3266 = vpack.c.b16 %v3084, %v3082
          %v3267 = vpack.c.b16 %v3087, %v3085
          %v3268 = vpack.c.b16 %v3088, %v3086
          %v3269 = vpack.c.b16 %v3091, %v3089
          %v3270 = vpack.c.b16 %v3092, %v3090
          %v3271 = vpack.c.b16 %v3095, %v3093
          %v3272 = vpack.c.b16 %v3096, %v3094
          %v3273 = vpack.c.b16 %v3099, %v3097
          %v3274 = vpack.c.b16 %v3100, %v3098
          %v3275 = vpack.c.b16 %v3103, %v3101
          %v3276 = vpack.c.b16 %v3104, %v3102
          %v3277 = vpack.c.b16 %v3107, %v3105
          %v3278 = vpack.c.b16 %v3108, %v3106
          %v3279 = vpack.c.b16 %v3111, %v3109
          %v3280 = vpack.c.b16 %v3112, %v3110
          %v3281 = vpack.c.b16 %v3115, %v3113
          %v3282 = vpack.c.b16 %v3116, %v3114
          %v3283 = vpack.c.b16 %v3119, %v3117
          %v3284 = vpack.c.b16 %v3120, %v3118
          %v3285 = vpack.c.b16 %v3123, %v3121
          %v3286 = vpack.c.b16 %v3124, %v3122
          %v3287 = vpack.c.b16 %v3127, %v3125
          %v3288 = vpack.c.b16 %v3128, %v3126
          %v3289 = vpack.c.b16 %v3131, %v3129
          %v3290 = vpack.c.b16 %v3132, %v3130
          %v3291 = vpack.c.b16 %v3135, %v3133
          %v3292 = vpack.c.b16 %v3136, %v3134
          %v3293 = vpack.c.b16 %v3139, %v3137
          %v3294 = vpack.c.b16 %v3140, %v3138
          %v3295 = vpack.c.b16 %v3143, %v3141
          %v3296 = vpack.c.b16 %v3144, %v3142
          %v3297 = vpack.c.b16 %v3147, %v3145
          %v3298 = vpack.c.b16 %v3148, %v3146
          %v3299 = vpack.c.b16 %v3151, %v3149
          %v3300 = vpack.c.b16 %v3152, %v3150
          %v3301 = vpack.c.b16 %v3155, %v3153
          %v3302 = vpack.c.b16 %v3156, %v3154
          %v3303 = vpack.c.b16 %v3159, %v3157
          %v3304 = vpack.c.b16 %v3160, %v3158
          %v3305 = vpack.c.b16 %v3163, %v3161
          %v3306 = vpack.c.b16 %v3164, %v3162
          %v3307 = vpack.c.b16 %v3167, %v3165
          %v3308 = vpack.c.b16 %v3168, %v3166
          %v3309 = vpack.c.b16 %v3171, %v3169
          %v3310 = vpack.c.b16 %v3172, %v3170
          %v3311 = vpack.c.b16 %v3175, %v3173
          %v3312 = vpack.c.b16 %v3176, %v3174
          %v3313 = vpack.c.b16 %v3179, %v3177
          %v3314 = vpack.c.b16 %v3180, %v3178
          %v3315 = vpack.c.b16 %v3183, %v3181
          %v3316 = vpack.c.b16 %v3184, %v3182
          %v3317 = vpack.c.b16 %v3187, %v3185
          %v3318 = vpack.c.b16 %v3188, %v3186
          %v3319 = vpack.c.b16 %v3191, %v3189
          %v3320 = vpack.c.b16 %v3192, %v3190
          %v3321 = vpack.c.b16 %v3195, %v3193
          %v3322 = vpack.c.b16 %v3196, %v3194
          %v3323 = vpack.c.b16 %v3199, %v3197
          %v3324 = vpack.c.b16 %v3200, %v3198
          %v3325 = vpack.c.b16 %v3203, %v3201
          %v3326 = vpack.c.b16 %v3204, %v3202
          %v3327 = vpack.c.b16 %v3207, %v3205
          %v3328 = vpack.c.b16 %v3208, %v3206
          %v3329 = vpack.c.b16 %v3211, %v3209
          %v3330 = vpack.c.b16 %v3212, %v3210
          %v3331 = vpack.c.b16 %v3215, %v3213
          %v3332 = vpack.c.b16 %v3216, %v3214
          %v3333 = vpack.c.b16 %v3219, %v3217
          %v3334 = vpack.c.b16 %v3220, %v3218
          %v3335 = vpack.c.b16 %v3223, %v3221
          %v3336 = vpack.c.b16 %v3224, %v3222
          %v3337 = vpack.c.b16 %v3227, %v3225
          %v3338 = vpack.c.b16 %v3228, %v3226
          %v3339 = vpack.c.b16 %v3231, %v3229
          %v3340 = vpack.c.b16 %v3232, %v3230
          %v3341 = vpack.c.b16 %v3235, %v3233
          %v3342 = vpack.c.b16 %v3236, %v3234
          %v3343 = vpack.c.b16 %v3239, %v3237
          %v3344 = vpack.c.b16 %v3240, %v3238
          %v3345 = vpack.c.b16 %v3243, %v3241
          %v3346 = vpack.c.b16 %v3244, %v3242
          %v3347 = vpack.c.b16 %v3247, %v3245
          %v3348 = vpack.c.b16 %v3248, %v3246
          %v3349 = vpack.c.b16 %v3251, %v3249
          %v3350 = vpack.c.b16 %v3252, %v3250
          %v3351 = vpack.c.b16 %v3255, %v3253
          %v3352 = vpack.c.b16 %v3256, %v3254
          %3449 = vmatprep.subr.bf16.mxu0 %v3258
          %3450 = vmatpush1.bf16.msra.mxu0 %v3257
          %3451 = vmatprep.subr.bf16.mxu0 %v3260
          %3452 = vmatpush1.bf16.msra.mxu0 %v3259
          %3453 = vmatprep.subr.bf16.mxu0 %v3262
          %3454 = vmatpush1.bf16.msra.mxu0 %v3261
          %3455 = vmatprep.subr.bf16.mxu0 %v3264
          %3456 = vmatpush1.bf16.msra.mxu0 %v3263
          %3457 = vmatprep.subr.bf16.mxu0 %v3266
          %3458 = vmatpush1.bf16.msra.mxu0 %v3265
          %3459 = vmatprep.subr.bf16.mxu0 %v3268
          %3460 = vmatpush1.bf16.msra.mxu0 %v3267
          %3461 = vmatprep.subr.bf16.mxu0 %v3270
          %3462 = vmatpush1.bf16.msra.mxu0 %v3269
          %3463 = vmatprep.subr.bf16.mxu0 %v3272
          %3464 = vmatpush1.bf16.msra.mxu0 %v3271
          %3465 = vmatprep.subr.bf16.mxu0 %v3274
          %3466 = vmatpush1.bf16.msra.mxu0 %v3273
          %3467 = vmatprep.subr.bf16.mxu0 %v3276
          %3468 = vmatpush1.bf16.msra.mxu0 %v3275
          %3469 = vmatprep.subr.bf16.mxu0 %v3278
          %3470 = vmatpush1.bf16.msra.mxu0 %v3277
          %3471 = vmatprep.subr.bf16.mxu0 %v3280
          %3472 = vmatpush1.bf16.msra.mxu0 %v3279
          %3473 = vmatprep.subr.bf16.mxu0 %v3282
          %3474 = vmatpush1.bf16.msra.mxu0 %v3281
          %3475 = vmatprep.subr.bf16.mxu0 %v3284
          %3476 = vmatpush1.bf16.msra.mxu0 %v3283
          %3477 = vmatprep.subr.bf16.mxu0 %v3286
          %3478 = vmatpush1.bf16.msra.mxu0 %v3285
          %3479 = vmatprep.subr.bf16.mxu0 %v3288
          %3480 = vmatpush1.bf16.msra.mxu0 %v3287
          %3481 = vmatprep.mubr.bf16.mxu0 %v2856
          %3482 = vmatmul.mubr.bf16.gmra.mrb[0].mxu0 %v2855
          %v3483 = vpop.f32.mrb[0].mxu0
          %v3484 = vadd.f32 %v2962, %v3483
          %v3485 = vpop.f32.mrb[0].mxu0
          %v3486 = vadd.f32 %v2966, %v3485
          %v3487 = vpop.f32.mrb[0].mxu0
          %v3488 = vadd.f32 %v2962, %v3487
          %v3489 = vpop.f32.mrb[0].mxu0
          %v3490 = vadd.f32 %v2966, %v3489
          %3491 = vdwg.mxu0
          %3492 = vmatprep.subr.bf16.mxu0 %v3290
          %3493 = vmatpush1.bf16.msra.mxu0 %v3289
          %3494 = vmatprep.subr.bf16.mxu0 %v3292
          %3495 = vmatpush1.bf16.msra.mxu0 %v3291
          %3496 = vmatprep.subr.bf16.mxu0 %v3294
          %3497 = vmatpush1.bf16.msra.mxu0 %v3293
          %3498 = vmatprep.subr.bf16.mxu0 %v3296
          %3499 = vmatpush1.bf16.msra.mxu0 %v3295
          %3500 = vmatprep.subr.bf16.mxu0 %v3298
          %3501 = vmatpush1.bf16.msra.mxu0 %v3297
          %3502 = vmatprep.subr.bf16.mxu0 %v3300
          %3503 = vmatpush1.bf16.msra.mxu0 %v3299
          %3504 = vmatprep.subr.bf16.mxu0 %v3302
          %3505 = vmatpush1.bf16.msra.mxu0 %v3301
          %3506 = vmatprep.subr.bf16.mxu0 %v3304
          %3507 = vmatpush1.bf16.msra.mxu0 %v3303
          %3508 = vmatprep.subr.bf16.mxu0 %v3306
          %3509 = vmatpush1.bf16.msra.mxu0 %v3305
          %3510 = vmatprep.subr.bf16.mxu0 %v3308
          %3511 = vmatpush1.bf16.msra.mxu0 %v3307
          %3512 = vmatprep.subr.bf16.mxu0 %v3310
          %3513 = vmatpush1.bf16.msra.mxu0 %v3309
          %3514 = vmatprep.subr.bf16.mxu0 %v3312
          %3515 = vmatpush1.bf16.msra.mxu0 %v3311
          %3516 = vmatprep.subr.bf16.mxu0 %v3314
          %3517 = vmatpush1.bf16.msra.mxu0 %v3313
          %3518 = vmatprep.subr.bf16.mxu0 %v3316
          %3519 = vmatpush1.bf16.msra.mxu0 %v3315
          %3520 = vmatprep.subr.bf16.mxu0 %v3318
          %3521 = vmatpush1.bf16.msra.mxu0 %v3317
          %3522 = vmatprep.subr.bf16.mxu0 %v3320
          %3523 = vmatpush1.bf16.msra.mxu0 %v3319
          %3524 = vmatprep.mubr.bf16.mxu0 %v2858
          %3525 = vmatmul.mubr.bf16.gmra.mrb[0].mxu0 %v2857
          %v3526 = vpop.f32.mrb[0].mxu0
          %v3527 = vadd.f32 %v3484, %v3526
          %v3528 = vpop.f32.mrb[0].mxu0
          %v3529 = vadd.f32 %v3486, %v3528
          %v3530 = vpop.f32.mrb[0].mxu0
          %v3531 = vadd.f32 %v3488, %v3530
          %v3532 = vpop.f32.mrb[0].mxu0
          %v3533 = vadd.f32 %v3490, %v3532
          %3534 = vdwg.mxu0
          %3535 = vmatprep.subr.bf16.mxu0 %v3322
          %3536 = vmatpush1.bf16.msra.mxu0 %v3321
          %3537 = vmatprep.subr.bf16.mxu0 %v3324
          %3538 = vmatpush1.bf16.msra.mxu0 %v3323
          %3539 = vmatprep.subr.bf16.mxu0 %v3326
          %3540 = vmatpush1.bf16.msra.mxu0 %v3325
          %3541 = vmatprep.subr.bf16.mxu0 %v3328
          %3542 = vmatpush1.bf16.msra.mxu0 %v3327
          %3543 = vmatprep.subr.bf16.mxu0 %v3330
          %3544 = vmatpush1.bf16.msra.mxu0 %v3329
          %3545 = vmatprep.subr.bf16.mxu0 %v3332
          %3546 = vmatpush1.bf16.msra.mxu0 %v3331
          %3547 = vmatprep.subr.bf16.mxu0 %v3334
          %3548 = vmatpush1.bf16.msra.mxu0 %v3333
          %3549 = vmatprep.subr.bf16.mxu0 %v3336
          %3550 = vmatpush1.bf16.msra.mxu0 %v3335
          %3551 = vmatprep.subr.bf16.mxu0 %v3338
          %3552 = vmatpush1.bf16.msra.mxu0 %v3337
          %3553 = vmatprep.subr.bf16.mxu0 %v3340
          %3554 = vmatpush1.bf16.msra.mxu0 %v3339
          %3555 = vmatprep.subr.bf16.mxu0 %v3342
          %3556 = vmatpush1.bf16.msra.mxu0 %v3341
          %3557 = vmatprep.subr.bf16.mxu0 %v3344
          %3558 = vmatpush1.bf16.msra.mxu0 %v3343
          %3559 = vmatprep.subr.bf16.mxu0 %v3346
          %3560 = vmatpush1.bf16.msra.mxu0 %v3345
          %3561 = vmatprep.subr.bf16.mxu0 %v3348
          %3562 = vmatpush1.bf16.msra.mxu0 %v3347
          %3563 = vmatprep.subr.bf16.mxu0 %v3350
          %3564 = vmatpush1.bf16.msra.mxu0 %v3349
          %3565 = vmatprep.subr.bf16.mxu0 %v3352
          %3566 = vmatpush1.bf16.msra.mxu0 %v3351
          %3567 = vmatprep.mubr.bf16.mxu0 %v2860
          %3568 = vmatmul.mubr.bf16.gmra.mrb[0].mxu0 %v2859
          %v3569 = vpop.f32.mrb[0].mxu0
          %v3570 = vadd.f32 %v3527, %v3569
          %v3571 = vpop.f32.mrb[0].mxu0
          %v3572 = vadd.f32 %v3529, %v3571
          %v3573 = vpop.f32.mrb[0].mxu0
          %v3574 = vadd.f32 %v3531, %v3573
          %v3575 = vpop.f32.mrb[0].mxu0
          %v3576 = vadd.f32 %v3533, %v3575
          %3577 = vdwg.mxu0
          %v3578 = vmax.f32 %v3570, 0.0
          %v3579 = vmax.f32 %v3572, 0.0
          %v3580 = vmax.f32 %v3574, 0.0
          %v3581 = vmax.f32 %v3576, 0.0
          %v3582 = vpack.c.bf16 %v3580, %v3578
          %v3583 = vpack.c.bf16 %v3581, %v3579
          %v3584 = vld [vmem:[#allocation12] sm:$0xf]
          %v3585 = vld [vmem:[#allocation12 + $0x4] sm:$0xf]
          %v3586 = vld [vmem:[#allocation12 + $0x8] sm:$0xf]
          %v3587 = vld [vmem:[#allocation12 + $0xc] sm:$0xf]
          %v3588 = vld [vmem:[#allocation12 + $0x10] sm:$0xf]
          %v3589 = vld [vmem:[#allocation12 + $0x14] sm:$0xf]
          %v3590 = vld [vmem:[#allocation12 + $0x18] sm:$0xf]
          %v3591 = vld [vmem:[#allocation12 + $0x1c] sm:$0xf]
          %v3592 = vld [vmem:[#allocation12 + $0x20] sm:$0xf]
          %v3593 = vld [vmem:[#allocation12 + $0x24] sm:$0xf]
          %v3594 = vld [vmem:[#allocation12 + $0x28] sm:$0xf]
          %v3595 = vld [vmem:[#allocation12 + $0x2c] sm:$0xf]
          %v3596 = vld [vmem:[#allocation12 + $0x30] sm:$0xf]
          %v3597 = vld [vmem:[#allocation12 + $0x34] sm:$0xf]
          %v3598 = vld [vmem:[#allocation12 + $0x38] sm:$0xf]
          %v3599 = vld [vmem:[#allocation12 + $0x3c] sm:$0xf]
          %v3600 = vld [vmem:[#allocation12 + $0x40] sm:$0xf]
          %v3601 = vld [vmem:[#allocation12 + $0x44] sm:$0xf]
          %v3602 = vld [vmem:[#allocation12 + $0x48] sm:$0xf]
          %v3603 = vld [vmem:[#allocation12 + $0x4c] sm:$0xf]
          %v3604 = vld [vmem:[#allocation12 + $0x50] sm:$0xf]
          %v3605 = vld [vmem:[#allocation12 + $0x54] sm:$0xf]
          %v3606 = vld [vmem:[#allocation12 + $0x58] sm:$0xf]
          %v3607 = vld [vmem:[#allocation12 + $0x5c] sm:$0xf]
          %v3608 = vld [vmem:[#allocation12 + $0x60] sm:$0xf]
          %v3609 = vld [vmem:[#allocation12 + $0x64] sm:$0xf]
          %v3610 = vld [vmem:[#allocation12 + $0x68] sm:$0xf]
          %v3611 = vld [vmem:[#allocation12 + $0x6c] sm:$0xf]
          %v3612 = vld [vmem:[#allocation12 + $0x70] sm:$0xf]
          %v3613 = vld [vmem:[#allocation12 + $0x74] sm:$0xf]
          %v3614 = vld [vmem:[#allocation12 + $0x78] sm:$0xf]
          %v3615 = vld [vmem:[#allocation12 + $0x7c] sm:$0xf]
          %v3616 = vld [vmem:[#allocation14] sm:$0x1]
          %v3618 = vlaneseq
          %v3619 = vshrl.u32 %v3618, 7
          %v3620 = vsub.s32 0, %v3619
          %v3621 = vrot.slane %v3616, %v3620
          %v3655 = vunpack.c.l.b16 %v3584
          %v3656 = vunpack.c.l.b16 %v3585
          %v3657 = vunpack.c.l.b16 %v3586
          %v3658 = vunpack.c.l.b16 %v3587
          %v3659 = vunpack.c.l.b16 %v3588
          %v3660 = vunpack.c.l.b16 %v3589
          %v3661 = vunpack.c.l.b16 %v3590
          %v3662 = vunpack.c.l.b16 %v3591
          %v3663 = vunpack.c.l.b16 %v3592
          %v3664 = vunpack.c.l.b16 %v3593
          %v3665 = vunpack.c.l.b16 %v3594
          %v3666 = vunpack.c.l.b16 %v3595
          %v3667 = vunpack.c.l.b16 %v3596
          %v3668 = vunpack.c.l.b16 %v3597
          %v3669 = vunpack.c.l.b16 %v3598
          %v3670 = vunpack.c.l.b16 %v3599
          %v3671 = vunpack.c.l.b16 %v3600
          %v3672 = vunpack.c.l.b16 %v3601
          %v3673 = vunpack.c.l.b16 %v3602
          %v3674 = vunpack.c.l.b16 %v3603
          %v3675 = vunpack.c.l.b16 %v3604
          %v3676 = vunpack.c.l.b16 %v3605
          %v3677 = vunpack.c.l.b16 %v3606
          %v3678 = vunpack.c.l.b16 %v3607
          %v3679 = vunpack.c.l.b16 %v3608
          %v3680 = vunpack.c.l.b16 %v3609
          %v3681 = vunpack.c.l.b16 %v3610
          %v3682 = vunpack.c.l.b16 %v3611
          %v3683 = vunpack.c.l.b16 %v3612
          %v3684 = vunpack.c.l.b16 %v3613
          %v3685 = vunpack.c.l.b16 %v3614
          %v3686 = vunpack.c.l.b16 %v3615
          %v3687 = vpack.c.b16 %v3656, %v3655
          %v3688 = vpack.c.b16 %v3658, %v3657
          %v3689 = vpack.c.b16 %v3660, %v3659
          %v3690 = vpack.c.b16 %v3662, %v3661
          %v3691 = vpack.c.b16 %v3664, %v3663
          %v3692 = vpack.c.b16 %v3666, %v3665
          %v3693 = vpack.c.b16 %v3668, %v3667
          %v3694 = vpack.c.b16 %v3670, %v3669
          %v3695 = vpack.c.b16 %v3672, %v3671
          %v3696 = vpack.c.b16 %v3674, %v3673
          %v3697 = vpack.c.b16 %v3676, %v3675
          %v3698 = vpack.c.b16 %v3678, %v3677
          %v3699 = vpack.c.b16 %v3680, %v3679
          %v3700 = vpack.c.b16 %v3682, %v3681
          %v3701 = vpack.c.b16 %v3684, %v3683
          %v3702 = vpack.c.b16 %v3686, %v3685
          %3719 = vmatprep.subr.bf16.mxu0 0
          %3720 = vmatpush1.bf16.msra.mxu0 %v3687
          %3721 = vmatprep.subr.bf16.mxu0 0
          %3722 = vmatpush1.bf16.msra.mxu0 %v3688
          %3723 = vmatprep.subr.bf16.mxu0 0
          %3724 = vmatpush1.bf16.msra.mxu0 %v3689
          %3725 = vmatprep.subr.bf16.mxu0 0
          %3726 = vmatpush1.bf16.msra.mxu0 %v3690
          %3727 = vmatprep.subr.bf16.mxu0 0
          %3728 = vmatpush1.bf16.msra.mxu0 %v3691
          %3729 = vmatprep.subr.bf16.mxu0 0
          %3730 = vmatpush1.bf16.msra.mxu0 %v3692
          %3731 = vmatprep.subr.bf16.mxu0 0
          %3732 = vmatpush1.bf16.msra.mxu0 %v3693
          %3733 = vmatprep.subr.bf16.mxu0 0
          %3734 = vmatpush1.bf16.msra.mxu0 %v3694
          %3735 = vmatprep.subr.bf16.mxu0 0
          %3736 = vmatpush1.bf16.msra.mxu0 %v3695
          %3737 = vmatprep.subr.bf16.mxu0 0
          %3738 = vmatpush1.bf16.msra.mxu0 %v3696
          %3739 = vmatprep.subr.bf16.mxu0 0
          %3740 = vmatpush1.bf16.msra.mxu0 %v3697
          %3741 = vmatprep.subr.bf16.mxu0 0
          %3742 = vmatpush1.bf16.msra.mxu0 %v3698
          %3743 = vmatprep.subr.bf16.mxu0 0
          %3744 = vmatpush1.bf16.msra.mxu0 %v3699
          %3745 = vmatprep.subr.bf16.mxu0 0
          %3746 = vmatpush1.bf16.msra.mxu0 %v3700
          %3747 = vmatprep.subr.bf16.mxu0 0
          %3748 = vmatpush1.bf16.msra.mxu0 %v3701
          %3749 = vmatprep.subr.bf16.mxu0 0
          %3750 = vmatpush1.bf16.msra.mxu0 %v3702
          %3751 = vmatprep.mubr.bf16.mxu0 %v3583
          %3752 = vmatmul.mubr.bf16.gmra.mrb[0].mxu0 %v3582
          %v3753 = vpop.f32.mrb[0].mxu0
          %v3754 = vadd.f32 %v3621, %v3753
          %v3755 = vpop.f32.mrb[0].mxu0
          %v3756 = vpop.f32.mrb[0].mxu0
          %v3757 = vadd.f32 %v3621, %v3756
          %v3758 = vpop.f32.mrb[0].mxu0
          %3759 = vdwg.mxu0
          %v3760 = vmax.f32 %v3754, 0.0
          %v3761 = vmax.f32 %v3757, 0.0
          %v3762 = vpack.c.bf16 %v3761, %v3760
          %v3763 = vld [vmem:[#allocation15] sm:$0xf]
          %v3764 = vld [vmem:[#allocation15 + $0x4] sm:$0xf]
          %v3765 = vld [vmem:[#allocation15 + $0x8] sm:$0xf]
          %v3766 = vld [vmem:[#allocation15 + $0xc] sm:$0xf]
          %v3767 = vld [vmem:[#allocation15 + $0x10] sm:$0xf]
          %v3768 = vld [vmem:[#allocation15 + $0x14] sm:$0xf]
          %v3769 = vld [vmem:[#allocation15 + $0x18] sm:$0xf]
          %v3770 = vld [vmem:[#allocation15 + $0x1c] sm:$0xf]
          %v3771 = vld [vmem:[#allocation15 + $0x20] sm:$0xf]
          %v3772 = vld [vmem:[#allocation15 + $0x24] sm:$0xf]
          %v3773 = vld [vmem:[#allocation15 + $0x28] sm:$0xf]
          %v3774 = vld [vmem:[#allocation15 + $0x2c] sm:$0xf]
          %v3775 = vld [vmem:[#allocation15 + $0x30] sm:$0xf]
          %v3776 = vld [vmem:[#allocation15 + $0x34] sm:$0xf]
          %v3777 = vld [vmem:[#allocation15 + $0x38] sm:$0xf]
          %v3778 = vld [vmem:[#allocation15 + $0x3c] sm:$0xf]
          %v3779 = vld [vmem:[#allocation17] sm:$0x1]
          %v3781 = vlaneseq
          %v3782 = vshrl.u32 %v3781, 7
          %v3783 = vsub.s32 0, %v3782
          %v3784 = vrot.slane %v3779, %v3783
          %v3802 = vunpack.c.l.b16 %v3763
          %v3803 = vunpack.c.l.b16 %v3764
          %v3804 = vunpack.c.l.b16 %v3765
          %v3805 = vunpack.c.l.b16 %v3766
          %v3806 = vunpack.c.l.b16 %v3767
          %v3807 = vunpack.c.l.b16 %v3768
          %v3808 = vunpack.c.l.b16 %v3769
          %v3809 = vunpack.c.l.b16 %v3770
          %v3810 = vunpack.c.l.b16 %v3771
          %v3811 = vunpack.c.l.b16 %v3772
          %v3812 = vunpack.c.l.b16 %v3773
          %v3813 = vunpack.c.l.b16 %v3774
          %v3814 = vunpack.c.l.b16 %v3775
          %v3815 = vunpack.c.l.b16 %v3776
          %v3816 = vunpack.c.l.b16 %v3777
          %v3817 = vunpack.c.l.b16 %v3778
          %v3818 = vpack.c.b16 %v3803, %v3802
          %v3819 = vpack.c.b16 %v3805, %v3804
          %v3820 = vpack.c.b16 %v3807, %v3806
          %v3821 = vpack.c.b16 %v3809, %v3808
          %v3822 = vpack.c.b16 %v3811, %v3810
          %v3823 = vpack.c.b16 %v3813, %v3812
          %v3824 = vpack.c.b16 %v3815, %v3814
          %v3825 = vpack.c.b16 %v3817, %v3816
          %3834 = vmatprep.subr.bf16.mxu0 0
          %3835 = vmatpush1.bf16.msra.mxu0 %v3818
          %3836 = vmatprep.subr.bf16.mxu0 0
          %3837 = vmatpush1.bf16.msra.mxu0 %v3819
          %3838 = vmatprep.subr.bf16.mxu0 0
          %3839 = vmatpush1.bf16.msra.mxu0 %v3820
          %3840 = vmatprep.subr.bf16.mxu0 0
          %3841 = vmatpush1.bf16.msra.mxu0 %v3821
          %3842 = vmatprep.subr.bf16.mxu0 0
          %3843 = vmatpush1.bf16.msra.mxu0 %v3822
          %3844 = vmatprep.subr.bf16.mxu0 0
          %3845 = vmatpush1.bf16.msra.mxu0 %v3823
          %3846 = vmatprep.subr.bf16.mxu0 0
          %3847 = vmatpush1.bf16.msra.mxu0 %v3824
          %3848 = vmatprep.subr.bf16.mxu0 0
          %3849 = vmatpush1.bf16.msra.mxu0 %v3825
          %3850 = vmatprep.subr.bf16.mxu0 0
          %3851 = vmatpush1.bf16.msra.mxu0 0
          %3852 = vmatprep.subr.bf16.mxu0 0
          %3853 = vmatpush1.bf16.msra.mxu0 0
          %3854 = vmatprep.subr.bf16.mxu0 0
          %3855 = vmatpush1.bf16.msra.mxu0 0
          %3856 = vmatprep.subr.bf16.mxu0 0
          %3857 = vmatpush1.bf16.msra.mxu0 0
          %3858 = vmatprep.subr.bf16.mxu0 0
          %3859 = vmatpush1.bf16.msra.mxu0 0
          %3860 = vmatprep.subr.bf16.mxu0 0
          %3861 = vmatpush1.bf16.msra.mxu0 0
          %3862 = vmatprep.subr.bf16.mxu0 0
          %3863 = vmatpush1.bf16.msra.mxu0 0
          %3864 = vmatprep.subr.bf16.mxu0 0
          %3865 = vmatpush1.bf16.msra.mxu0 0
          %3866 = vmatprep.mubr.bf16.mxu0 0
          %3867 = vmatmul.mubr.bf16.gmra.mrb[0].mxu0 %v3762
          %v3868 = vpop.f32.mrb[0].mxu0
          %v3869 = vadd.f32 %v3784, %v3868
          %v3870 = vpop.f32.mrb[0].mxu0
          %v3871 = vpop.f32.mrb[0].mxu0
          %v3872 = vadd.f32 %v3784, %v3871
          %v3873 = vpop.f32.mrb[0].mxu0
          %3874 = vdwg.mxu0
          %v3875 = vmax.f32 %v3869, 0.0
          %v3876 = vmax.f32 %v3872, 0.0
          %v3877 = vpack.c.bf16 %v3876, %v3875
          %v3878 = vld [vmem:[#allocation18] sm:$0xf]
          %v3879 = vld [vmem:[#allocation18 + $0x4] sm:$0xf]
          %v3880 = vld [vmem:[#allocation18 + $0x8] sm:$0xf]
          %v3881 = vld [vmem:[#allocation18 + $0xc] sm:$0xf]
          %v3882 = vld [vmem:[#allocation18 + $0x10] sm:$0xf]
          %v3883 = vld [vmem:[#allocation18 + $0x14] sm:$0xf]
          %v3884 = vld [vmem:[#allocation18 + $0x18] sm:$0xf]
          %v3885 = vld [vmem:[#allocation18 + $0x1c] sm:$0xf]
          %v3886 = vld [vmem:[#allocation18 + $0x20] sm:$0xf]
          %v3887 = vld [vmem:[#allocation18 + $0x24] sm:$0xf]
          %v3888 = vld [vmem:[#allocation18 + $0x28] sm:$0xf]
          %v3889 = vld [vmem:[#allocation18 + $0x2c] sm:$0xf]
          %v3890 = vld [vmem:[#allocation18 + $0x30] sm:$0xf]
          %v3891 = vld [vmem:[#allocation18 + $0x34] sm:$0xf]
          %v3892 = vld [vmem:[#allocation18 + $0x38] sm:$0xf]
          %v3893 = vld [vmem:[#allocation18 + $0x3c] sm:$0xf]
          %v3894 = vld [vmem:[#allocation20] sm:$0x1]
          %v3896 = vlaneseq
          %v3897 = vshrl.u32 %v3896, 7
          %v3898 = vsub.s32 0, %v3897
          %v3899 = vrot.slane %v3894, %v3898
          %v3917 = vunpack.c.l.b16 %v3878
          %v3918 = vunpack.c.l.b16 %v3879
          %v3919 = vunpack.c.l.b16 %v3880
          %v3920 = vunpack.c.l.b16 %v3881
          %v3921 = vunpack.c.l.b16 %v3882
          %v3922 = vunpack.c.l.b16 %v3883
          %v3923 = vunpack.c.l.b16 %v3884
          %v3924 = vunpack.c.l.b16 %v3885
          %v3925 = vunpack.c.l.b16 %v3886
          %v3926 = vunpack.c.l.b16 %v3887
          %v3927 = vunpack.c.l.b16 %v3888
          %v3928 = vunpack.c.l.b16 %v3889
          %v3929 = vunpack.c.l.b16 %v3890
          %v3930 = vunpack.c.l.b16 %v3891
          %v3931 = vunpack.c.l.b16 %v3892
          %v3932 = vunpack.c.l.b16 %v3893
          %v3933 = vpack.c.b16 %v3918, %v3917
          %v3934 = vpack.c.b16 %v3920, %v3919
          %v3935 = vpack.c.b16 %v3922, %v3921
          %v3936 = vpack.c.b16 %v3924, %v3923
          %v3937 = vpack.c.b16 %v3926, %v3925
          %v3938 = vpack.c.b16 %v3928, %v3927
          %v3939 = vpack.c.b16 %v3930, %v3929
          %v3940 = vpack.c.b16 %v3932, %v3931
          %3949 = vmatprep.subr.bf16.mxu0 0
          %3950 = vmatpush1.bf16.msra.mxu0 %v3933
          %3951 = vmatprep.subr.bf16.mxu0 0
          %3952 = vmatpush1.bf16.msra.mxu0 %v3934
          %3953 = vmatprep.subr.bf16.mxu0 0
          %3954 = vmatpush1.bf16.msra.mxu0 %v3935
          %3955 = vmatprep.subr.bf16.mxu0 0
          %3956 = vmatpush1.bf16.msra.mxu0 %v3936
          %3957 = vmatprep.subr.bf16.mxu0 0
          %3958 = vmatpush1.bf16.msra.mxu0 %v3937
          %3959 = vmatprep.subr.bf16.mxu0 0
          %3960 = vmatpush1.bf16.msra.mxu0 %v3938
          %3961 = vmatprep.subr.bf16.mxu0 0
          %3962 = vmatpush1.bf16.msra.mxu0 %v3939
          %3963 = vmatprep.subr.bf16.mxu0 0
          %3964 = vmatpush1.bf16.msra.mxu0 %v3940
          %3965 = vmatprep.subr.bf16.mxu0 0
          %3966 = vmatpush1.bf16.msra.mxu0 0
          %3967 = vmatprep.subr.bf16.mxu0 0
          %3968 = vmatpush1.bf16.msra.mxu0 0
          %3969 = vmatprep.subr.bf16.mxu0 0
          %3970 = vmatpush1.bf16.msra.mxu0 0
          %3971 = vmatprep.subr.bf16.mxu0 0
          %3972 = vmatpush1.bf16.msra.mxu0 0
          %3973 = vmatprep.subr.bf16.mxu0 0
          %3974 = vmatpush1.bf16.msra.mxu0 0
          %3975 = vmatprep.subr.bf16.mxu0 0
          %3976 = vmatpush1.bf16.msra.mxu0 0
          %3977 = vmatprep.subr.bf16.mxu0 0
          %3978 = vmatpush1.bf16.msra.mxu0 0
          %3979 = vmatprep.subr.bf16.mxu0 0
          %3980 = vmatpush1.bf16.msra.mxu0 0
          %3981 = vmatprep.mubr.bf16.mxu0 0
          %3982 = vmatmul.mubr.bf16.gmra.mrb[0].mxu0 %v3877
          %v3983 = vpop.f32.mrb[0].mxu0
          %v3984 = vadd.f32 %v3899, %v3983
          %v3985 = vpop.f32.mrb[0].mxu0
          %v3986 = vpop.f32.mrb[0].mxu0
          %v3987 = vadd.f32 %v3899, %v3986
          %v3988 = vpop.f32.mrb[0].mxu0
          %3989 = vdwg.mxu0
          %v3990 = vmax.f32 %v3984, 0.0
          %v3991 = vmax.f32 %v3987, 0.0
          %3992 = vst [vmem:[#allocation21] sm:$0xff] %v3990
          %3993 = vst [vmem:[#allocation21 + $0x8] sm:$0xff] %v3991
        $region116: #{tpu_custom_call.1} parent=63 // pred_fallthru
          _
        // Predicated region
        $region117: #{tpu_custom_call.1} parent=63 // pred_check
          %p3994 = pneg %p306
        $region118: #{tpu_custom_call.1} parent=63 // pred_check_branch
          %3996 = sbr.rel (%p3994) target = $region120
        $region119: #{tpu_custom_call.1} parent=63 // pred_region
          %s3997 = smul.u32 2, %s37
          %s3999 = ssub.s32 256, 256
          %4000 = vsyncadd [#allocation5], %s3999
          %s4001 = smul.addr %s3997, 128
          %s4002 = scalar_lea.hbm %s11, %s4001
          %s4003 = sshll.u32 [#allocation21], 4
          %s4004 = int_to_ptr.vmem [resolvable:$true] %s4003
          %4009 = dma.vmem_to_hbm [thread:$0]  %s4004, 256, %s4002, [#allocation5], 128, 128, 8
        $region120: #{tpu_custom_call.1} parent=63 // pred_fallthru
          _
        // Predicated region
        $region121: #{tpu_custom_call.1} parent=63 // pred_check
          %p4010 = pneg %p306
        $region122: #{tpu_custom_call.1} parent=63 // pred_check_branch
          %4012 = sbr.rel (%p4010) target = $region124
        $region123: #{tpu_custom_call.1} parent=63 // pred_region
          %4013 = dma.done [#allocation5], 256
        $region124: #{tpu_custom_call.1} parent=63 // pred_fallthru
          _
      $region64: #{tpu_custom_call.1} parent=5 // pred_fallthru
        _
      %p4014 = scmp.le.s32.totalorder 2, %s28
      // Predicated region
      $region125: #{tpu_custom_call.1} parent=5 // pred_check
        %p4015 = pneg %p4014
      $region126: #{tpu_custom_call.1} parent=5 // pred_check_branch
        %4017 = sbr.rel (%p4015) target = $region128
      $region127: #{tpu_custom_call.1} parent=5 // pred_region
        %s4018 = ssub.s32 %s28, 2
      $region128: #{tpu_custom_call.1} parent=5 // pred_fallthru
        _
    $region6: #{tpu_custom_call.1} parent=1 // loop_footer
      %s32 = sadd.s32 1, %s28
    $region7: #{tpu_custom_call.1} parent=1 // loop_footer_branch
      %27 = sbr.rel target = $region3
    $region8: #{tpu_custom_call.1} parent=1 // loop_exit
      _
    %4019 = vsyncpa [#allocation4], 1
    %s4020 = scalar_lea.sflag [#allocation4], 1
    %4021 = vsyncpa %s4020, 1
    %4022 = vsyncpa [#allocation7], 1
    %s4023 = scalar_lea.sflag [#allocation7], 1
    %4024 = vsyncpa %s4023, 1
    %4025 = vsyncpa [#allocation10], 1
    %4026 = vsyncpa [#allocation13], 1
    %4027 = vsyncpa [#allocation16], 1
    %4028 = vsyncpa [#allocation19], 1
    %4029 = vsyncpa [#allocation5], 1
    %s4030 = scalar_lea.sflag [#allocation5], 1
    %4031 = vsyncpa %s4030, 1

// kernel: tpu_custom_call.1
$region0: #{tpu_custom_call.1}
  #allocation0 [shape = 'u32[]', space=smem, size = 0x4, offset = 0x4, fixed_abs, tag = 'smem constant byte address 0x4 - core index']
  #allocation1 [shape = 'u32[144,128]{1,0:T(1,128)}', space=vmem, size = 0x12000, scoped, tag = 'internal scratch']
  #allocation2 [shape = 'f32[16,768]{1,0:T(8,128)}', space=vmem, size = 0xc000, scoped, tag = 'scratch operand']
  %s0 = inlined_call_operand.hbm [shape: bf16[3,16,768], index: 0, kind: input, shape index: {}]
  %s1 = inlined_call_operand.hbm [shape: bf16[2304,768], index: 1, kind: input, shape index: {}]
  %s2 = inlined_call_operand.hbm [shape: f32[1,768], index: 2, kind: input, shape index: {}]
  %s3 = inlined_call_operand.hbm [shape: bf16[768,256], index: 3, kind: input, shape index: {}]
  %s4 = inlined_call_operand.hbm [shape: f32[1,256], index: 4, kind: input, shape index: {}]
  %s5 = inlined_call_operand.hbm [shape: bf16[256,128], index: 5, kind: input, shape index: {}]
  %s6 = inlined_call_operand.hbm [shape: f32[1,128], index: 6, kind: input, shape index: {}]
  %s7 = inlined_call_operand.hbm [shape: bf16[128,128], index: 7, kind: input, shape index: {}]
  %s8 = inlined_call_operand.hbm [shape: f32[1,128], index: 8, kind: input, shape index: {}]
  %s9 = inlined_call_operand.hbm [shape: bf16[128,128], index: 9, kind: input, shape index: {}]
  %s10 = inlined_call_operand.hbm [shape: f32[1,128], index: 10, kind: input, shape index: {}]
  %s11 = inlined_call_operand.hbm [shape: f32[16,128], index: 11, kind: output, shape index: {}]
  %s12 = sld [smem:[#allocation0]]
  $region129: #{tpu_custom_call.1} parent=0
    _
  %s14 = ssub.s32 1, %s12
  %s15 = scalar_select 0, %s14, %s12
  $region1: #{tpu_custom_call.1} parent=0
    #allocation3 [shape = 'u8[49152]{0}', space=vmem, size = 0xc000, scoped, tag = 'input window, operand 0']
    #allocation4 [shape = 's32[2]{0}', space=sflag, size = 0x8, scoped, tag = 'scoped memory for tpu_custom_call.1']
    #allocation5 [shape = 's32[2]{0}', space=sflag, size = 0x8, scoped, tag = 'scoped memory for tpu_custom_call.1']
    #allocation6 [shape = 'u8[2359296]{0}', space=vmem, size = 0x240000, scoped, tag = 'input window, operand 1']
    #allocation7 [shape = 's32[2]{0}', space=sflag, size = 0x8, scoped, tag = 'scoped memory for tpu_custom_call.1']
    #allocation8 [shape = 'u8[3072]{0}', space=vmem, size = 0xc00, scoped, tag = 'input window, operand 2, single buffered']
    #allocation9 [shape = 'u8[393216]{0}', space=vmem, size = 0x60000, scoped, tag = 'input window, operand 3, single buffered']
    #allocation10 [shape = 's32[1]{0}', space=sflag, size = 0x4, scoped, tag = 'scoped memory for tpu_custom_call.1']
    #allocation11 [shape = 'u8[1024]{0}', space=vmem, size = 0x400, scoped, tag = 'input window, operand 4, single buffered']
    #allocation12 [shape = 'u8[65536]{0}', space=vmem, size = 0x10000, scoped, tag = 'input window, operand 5, single buffered']
    #allocation13 [shape = 's32[1]{0}', space=sflag, size = 0x4, scoped, tag = 'scoped memory for tpu_custom_call.1']
    #allocation14 [shape = 'u8[512]{0}', space=vmem, size = 0x400, scoped, tag = 'input window, operand 6, single buffered']
    #allocation15 [shape = 'u8[32768]{0}', space=vmem, size = 0x8000, scoped, tag = 'input window, operand 7, single buffered']
    #allocation16 [shape = 's32[1]{0}', space=sflag, size = 0x4, scoped, tag = 'scoped memory for tpu_custom_call.1']
    #allocation17 [shape = 'u8[512]{0}', space=vmem, size = 0x400, scoped, tag = 'input window, operand 8, single buffered']
    #allocation18 [shape = 'u8[32768]{0}', space=vmem, size = 0x8000, scoped, tag = 'input window, operand 9, single buffered']
    #allocation19 [shape = 's32[1]{0}', space=sflag, size = 0x4, scoped, tag = 'scoped memory for tpu_custom_call.1']
    #allocation20 [shape = 'u8[512]{0}', space=vmem, size = 0x400, scoped, tag = 'input window, operand 10, single buffered']
    #allocation21 [shape = 'u8[8192]{0}', space=vmem, size = 0x2000, scoped, tag = 'output window, operand 0, single buffered']
    %16 = vsyncpa [#allocation4], 0
    %s17 = scalar_lea.sflag [#allocation4], 1
    %18 = vsyncpa %s17, 0
    %19 = vsyncpa [#allocation7], 0
    %s20 = scalar_lea.sflag [#allocation7], 1
    %21 = vsyncpa %s20, 0
    %22 = vsyncpa [#allocation10], 0
    %23 = vsyncpa [#allocation13], 0
    %24 = vsyncpa [#allocation16], 0
    %25 = vsyncpa [#allocation19], 0
    %26 = vsyncpa [#allocation5], 0
    loop: start=0, step=1, limit=5
    $region2: #{tpu_custom_call.1} parent=1 // loop_pre_header
      _
    $region3: #{tpu_custom_call.1} parent=1 // loop_header
      %s28 = sphi 0, %s32
      %p29 = scmp.ge.s32.totalorder %s28, 5
      %s35 = sphi 0, %s47
      %s36 = sphi 0, %s43
      %s37 = sphi 0, %s35
      %s38 = sphi 0, %s36
      %s39 = sphi 0, %s37
      %s40 = sphi 0, %s38
      %s52 = sphi 0, %s54
      %s55 = sphi 0, %s52
      %s56 = sphi 0, %s55
      %s72 = sphi 0, %s56
      %s78 = sphi 0, %s80
      %s81 = sphi 0, %s78
      %s82 = sphi 0, %s81
      %s98 = sphi 0, %s82
      %s102 = sphi 0, %s102
      %s104 = sphi 0, %s102
      %s105 = sphi 0, %s104
      %s119 = sphi 0, %s105
      %s123 = sphi 0, %s123
      %s125 = sphi 0, %s123
      %s126 = sphi 0, %s125
      %s140 = sphi 0, %s126
      %s144 = sphi 0, %s144
      %s146 = sphi 0, %s144
      %s147 = sphi 0, %s146
      %s161 = sphi 0, %s147
      %s165 = sphi 0, %s165
      %s167 = sphi 0, %s165
      %s168 = sphi 0, %s167
      %s182 = sphi 0, %s168
      %s186 = sphi 0, %s186
      %s188 = sphi 0, %s186
      %s189 = sphi 0, %s188
      %s203 = sphi 0, %s189
      %s207 = sphi 0, %s207
      %s209 = sphi 0, %s207
      %s210 = sphi 0, %s209
      %s224 = sphi 0, %s210
      %s228 = sphi 0, %s228
      %s230 = sphi 0, %s228
      %s231 = sphi 0, %s230
      %s245 = sphi 0, %s231
      %s249 = sphi 0, %s249
      %s251 = sphi 0, %s249
      %s252 = sphi 0, %s251
      %s266 = sphi 0, %s252
      %s270 = sphi 0, %s270
      %s272 = sphi 0, %s270
      %s273 = sphi 0, %s272
      %s287 = sphi 0, %s273
      %s293 = sphi 0, %s295
      %s296 = sphi 0, %s293
      %s297 = sphi 0, %s296
      %s313 = sphi 0, %s297
    $region4: #{tpu_custom_call.1} parent=1 // loop_header_branch
      %31 = sbr.rel (%p29) target = $region8
    $region5: #{tpu_custom_call.1} parent=1 // loop_body
      %s33 = ssub.s32 %s28, 1
      %s34 = ssub.s32 %s28, 2
      %s41 = sadd.s32 1, %s36
      %p42 = scmp.ge.s32.totalorder %s41, 3
      %s43 = scalar_select %p42, 0, %s41
      %s44 = sadd.s32 1, %s35
      %s45 = scalar_select %p42, %s44, %s35
      %p46 = scmp.ge.s32.totalorder %s45, 1
      %s47 = scalar_select %p46, 0, %s45
      %s48 = ssub.s32 %s36, %s43
      %s49 = ssub.s32 %s35, %s47
      %s50 = sor.u32 %s48, %s49
      %p51 = scmp.eq.s32.totalorder %s50, 0
      %s53 = sadd.s32 %s52, 1
      %s54 = scalar_select %p51, %s52, %s53
      %p57 = pneg %p51
      %p58 = scmp.eq.s32.totalorder %s28, 2
      %p59 = por %p57, %p58
      %p60 = scmp.ne.s32.totalorder %s52, %s55
      %p61 = scmp.eq.s32.totalorder %s28, 0
      %p62 = por %p60, %p61
      %p63 = scmp.ne.s32.totalorder %s52, %s55
      %p64 = scmp.eq.s32.totalorder %s33, 2
      %p65 = por %p63, %p64
      %p66 = scmp.ne.s32.totalorder %s55, %s56
      %p67 = scmp.eq.s32.totalorder %s33, 0
      %p68 = por %p66, %p67
      %p69 = scmp.ne.s32.totalorder %s55, %s56
      %p70 = scmp.eq.s32.totalorder %s34, 2
      %p71 = por %p69, %p70
      %p73 = scmp.ne.s32.totalorder %s56, %s72
      %p74 = scmp.eq.s32.totalorder %s34, 0
      %p75 = por %p73, %p74
      %s76 = ssub.s32 %s36, %s43
      %p77 = scmp.eq.s32.totalorder %s76, 0
      %s79 = sadd.s32 %s78, 1
      %s80 = scalar_select %p77, %s78, %s79
      %p83 = pneg %p77
      %p84 = scmp.eq.s32.totalorder %s28, 2
      %p85 = por %p83, %p84
      %p86 = scmp.ne.s32.totalorder %s78, %s81
      %p87 = scmp.eq.s32.totalorder %s28, 0
      %p88 = por %p86, %p87
      %p89 = scmp.ne.s32.totalorder %s78, %s81
      %p90 = scmp.eq.s32.totalorder %s33, 2
      %p91 = por %p89, %p90
      %p92 = scmp.ne.s32.totalorder %s81, %s82
      %p93 = scmp.eq.s32.totalorder %s33, 0
      %p94 = por %p92, %p93
      %p95 = scmp.ne.s32.totalorder %s81, %s82
      %p96 = scmp.eq.s32.totalorder %s34, 2
      %p97 = por %p95, %p96
      %p99 = scmp.ne.s32.totalorder %s82, %s98
      %p100 = scmp.eq.s32.totalorder %s34, 0
      %p101 = por %p99, %p100
      %s103 = sadd.s32 %s102, 1
      %p106 = scmp.eq.s32.totalorder %s28, 2
      %p107 = scmp.ne.s32.totalorder %s102, %s104
      %p108 = scmp.eq.s32.totalorder %s28, 0
      %p109 = por %p107, %p108
      %p110 = scmp.ne.s32.totalorder %s102, %s104
      %p111 = scmp.eq.s32.totalorder %s33, 2
      %p112 = por %p110, %p111
      %p113 = scmp.ne.s32.totalorder %s104, %s105
      %p114 = scmp.eq.s32.totalorder %s33, 0
      %p115 = por %p113, %p114
      %p116 = scmp.ne.s32.totalorder %s104, %s105
      %p117 = scmp.eq.s32.totalorder %s34, 2
      %p118 = por %p116, %p117
      %p120 = scmp.ne.s32.totalorder %s105, %s119
      %p121 = scmp.eq.s32.totalorder %s34, 0
      %p122 = por %p120, %p121
      %s124 = sadd.s32 %s123, 1
      %p127 = scmp.eq.s32.totalorder %s28, 2
      %p128 = scmp.ne.s32.totalorder %s123, %s125
      %p129 = scmp.eq.s32.totalorder %s28, 0
      %p130 = por %p128, %p129
      %p131 = scmp.ne.s32.totalorder %s123, %s125
      %p132 = scmp.eq.s32.totalorder %s33, 2
      %p133 = por %p131, %p132
      %p134 = scmp.ne.s32.totalorder %s125, %s126
      %p135 = scmp.eq.s32.totalorder %s33, 0
      %p136 = por %p134, %p135
      %p137 = scmp.ne.s32.totalorder %s125, %s126
      %p138 = scmp.eq.s32.totalorder %s34, 2
      %p139 = por %p137, %p138
      %p141 = scmp.ne.s32.totalorder %s126, %s140
      %p142 = scmp.eq.s32.totalorder %s34, 0
      %p143 = por %p141, %p142
      %s145 = sadd.s32 %s144, 1
      %p148 = scmp.eq.s32.totalorder %s28, 2
      %p149 = scmp.ne.s32.totalorder %s144, %s146
      %p150 = scmp.eq.s32.totalorder %s28, 0
      %p151 = por %p149, %p150
      %p152 = scmp.ne.s32.totalorder %s144, %s146
      %p153 = scmp.eq.s32.totalorder %s33, 2
      %p154 = por %p152, %p153
      %p155 = scmp.ne.s32.totalorder %s146, %s147
      %p156 = scmp.eq.s32.totalorder %s33, 0
      %p157 = por %p155, %p156
      %p158 = scmp.ne.s32.totalorder %s146, %s147
      %p159 = scmp.eq.s32.totalorder %s34, 2
      %p160 = por %p158, %p159
      %p162 = scmp.ne.s32.totalorder %s147, %s161
      %p163 = scmp.eq.s32.totalorder %s34, 0
      %p164 = por %p162, %p163
      %s166 = sadd.s32 %s165, 1
      %p169 = scmp.eq.s32.totalorder %s28, 2
      %p170 = scmp.ne.s32.totalorder %s165, %s167
      %p171 = scmp.eq.s32.totalorder %s28, 0
      %p172 = por %p170, %p171
      %p173 = scmp.ne.s32.totalorder %s165, %s167
      %p174 = scmp.eq.s32.totalorder %s33, 2
      %p175 = por %p173, %p174
      %p176 = scmp.ne.s32.totalorder %s167, %s168
      %p177 = scmp.eq.s32.totalorder %s33, 0
      %p178 = por %p176, %p177
      %p179 = scmp.ne.s32.totalorder %s167, %s168
      %p180 = scmp.eq.s32.totalorder %s34, 2
      %p181 = por %p179, %p180
      %p183 = scmp.ne.s32.totalorder %s168, %s182
      %p184 = scmp.eq.s32.totalorder %s34, 0
      %p185 = por %p183, %p184
      %s187 = sadd.s32 %s186, 1
      %p190 = scmp.eq.s32.totalorder %s28, 2
      %p191 = scmp.ne.s32.totalorder %s186, %s188
      %p192 = scmp.eq.s32.totalorder %s28, 0
      %p193 = por %p191, %p192
      %p194 = scmp.ne.s32.totalorder %s186, %s188
      %p195 = scmp.eq.s32.totalorder %s33, 2
      %p196 = por %p194, %p195
      %p197 = scmp.ne.s32.totalorder %s188, %s189
      %p198 = scmp.eq.s32.totalorder %s33, 0
      %p199 = por %p197, %p198
      %p200 = scmp.ne.s32.totalorder %s188, %s189
      %p201 = scmp.eq.s32.totalorder %s34, 2
      %p202 = por %p200, %p201
      %p204 = scmp.ne.s32.totalorder %s189, %s203
      %p205 = scmp.eq.s32.totalorder %s34, 0
      %p206 = por %p204, %p205
      %s208 = sadd.s32 %s207, 1
      %p211 = scmp.eq.s32.totalorder %s28, 2
      %p212 = scmp.ne.s32.totalorder %s207, %s209
      %p213 = scmp.eq.s32.totalorder %s28, 0
      %p214 = por %p212, %p213
      %p215 = scmp.ne.s32.totalorder %s207, %s209
      %p216 = scmp.eq.s32.totalorder %s33, 2
      %p217 = por %p215, %p216
      %p218 = scmp.ne.s32.totalorder %s209, %s210
      %p219 = scmp.eq.s32.totalorder %s33, 0
      %p220 = por %p218, %p219
      %p221 = scmp.ne.s32.totalorder %s209, %s210
      %p222 = scmp.eq.s32.totalorder %s34, 2
      %p223 = por %p221, %p222
      %p225 = scmp.ne.s32.totalorder %s210, %s224
      %p226 = scmp.eq.s32.totalorder %s34, 0
      %p227 = por %p225, %p226
      %s229 = sadd.s32 %s228, 1
      %p232 = scmp.eq.s32.totalorder %s28, 2
      %p233 = scmp.ne.s32.totalorder %s228, %s230
      %p234 = scmp.eq.s32.totalorder %s28, 0
      %p235 = por %p233, %p234
      %p236 = scmp.ne.s32.totalorder %s228, %s230
      %p237 = scmp.eq.s32.totalorder %s33, 2
      %p238 = por %p236, %p237
      %p239 = scmp.ne.s32.totalorder %s230, %s231
      %p240 = scmp.eq.s32.totalorder %s33, 0
      %p241 = por %p239, %p240
      %p242 = scmp.ne.s32.totalorder %s230, %s231
      %p243 = scmp.eq.s32.totalorder %s34, 2
      %p244 = por %p242, %p243
      %p246 = scmp.ne.s32.totalorder %s231, %s245
      %p247 = scmp.eq.s32.totalorder %s34, 0
      %p248 = por %p246, %p247
      %s250 = sadd.s32 %s249, 1
      %p253 = scmp.eq.s32.totalorder %s28, 2
      %p254 = scmp.ne.s32.totalorder %s249, %s251
      %p255 = scmp.eq.s32.totalorder %s28, 0
      %p256 = por %p254, %p255
      %p257 = scmp.ne.s32.totalorder %s249, %s251
      %p258 = scmp.eq.s32.totalorder %s33, 2
      %p259 = por %p257, %p258
      %p260 = scmp.ne.s32.totalorder %s251, %s252
      %p261 = scmp.eq.s32.totalorder %s33, 0
      %p262 = por %p260, %p261
      %p263 = scmp.ne.s32.totalorder %s251, %s252
      %p264 = scmp.eq.s32.totalorder %s34, 2
      %p265 = por %p263, %p264
      %p267 = scmp.ne.s32.totalorder %s252, %s266
      %p268 = scmp.eq.s32.totalorder %s34, 0
      %p269 = por %p267, %p268
      %s271 = sadd.s32 %s270, 1
      %p274 = scmp.eq.s32.totalorder %s28, 2
      %p275 = scmp.ne.s32.totalorder %s270, %s272
      %p276 = scmp.eq.s32.totalorder %s28, 0
      %p277 = por %p275, %p276
      %p278 = scmp.ne.s32.totalorder %s270, %s272
      %p279 = scmp.eq.s32.totalorder %s33, 2
      %p280 = por %p278, %p279
      %p281 = scmp.ne.s32.totalorder %s272, %s273
      %p282 = scmp.eq.s32.totalorder %s33, 0
      %p283 = por %p281, %p282
      %p284 = scmp.ne.s32.totalorder %s272, %s273
      %p285 = scmp.eq.s32.totalorder %s34, 2
      %p286 = por %p284, %p285
      %p288 = scmp.ne.s32.totalorder %s273, %s287
      %p289 = scmp.eq.s32.totalorder %s34, 0
      %p290 = por %p288, %p289
      %s291 = ssub.s32 %s35, %s47
      %p292 = scmp.eq.s32.totalorder %s291, 0
      %s294 = sadd.s32 %s293, 1
      %s295 = scalar_select %p292, %s293, %s294
      %p298 = pneg %p292
      %p299 = scmp.eq.s32.totalorder %s28, 2
      %p300 = por %p298, %p299
      %p301 = scmp.ne.s32.totalorder %s293, %s296
      %p302 = scmp.eq.s32.totalorder %s28, 0
      %p303 = por %p301, %p302
      %p304 = scmp.ne.s32.totalorder %s293, %s296
      %p305 = scmp.eq.s32.totalorder %s33, 2
      %p306 = por %p304, %p305
      %p307 = scmp.ne.s32.totalorder %s296, %s297
      %p308 = scmp.eq.s32.totalorder %s33, 0
      %p309 = por %p307, %p308
      %p310 = scmp.ne.s32.totalorder %s296, %s297
      %p311 = scmp.eq.s32.totalorder %s34, 2
      %p312 = por %p310, %p311
      %p314 = scmp.ne.s32.totalorder %s297, %s313
      %p315 = scmp.eq.s32.totalorder %s34, 0
      %p316 = por %p314, %p315
      %p317 = scmp.le.s32.totalorder 1, %s28
      %p318 = scmp.lt.s32.totalorder %s28, 4
      %p319 = pnand %p317, %p318
      %p320 = pneg %p319
      // Predicated region
      $region9: #{tpu_custom_call.1} parent=5 // pred_check
        _
      $region10: #{tpu_custom_call.1} parent=5 // pred_check_branch
        %322 = sbr.rel (%p319) target = $region12
      $region11: #{tpu_custom_call.1} parent=5 // pred_region
        %s323 = ssub.s32 %s28, 1
        // Predicated region
        $region13: #{tpu_custom_call.1} parent=11 // pred_check
          %p324 = pneg %p115
        $region14: #{tpu_custom_call.1} parent=11 // pred_check_branch
          %326 = sbr.rel (%p324) target = $region16
        $region15: #{tpu_custom_call.1} parent=11 // pred_region
          %s328 = ssub.s32 96, 96
          %329 = vsyncadd [#allocation7], %s328
          %s331 = sshll.u32 [#allocation8], 4
          %s332 = int_to_ptr.vmem [resolvable:$true] %s331
          %334 = dma.hbm_to_vmem [thread:$0]  %s2, 96, %s332, [#allocation7]
        $region16: #{tpu_custom_call.1} parent=11 // pred_fallthru
          _
        // Predicated region
        $region17: #{tpu_custom_call.1} parent=11 // pred_check
          %p335 = pneg %p136
        $region18: #{tpu_custom_call.1} parent=11 // pred_check_branch
          %337 = sbr.rel (%p335) target = $region20
        $region19: #{tpu_custom_call.1} parent=11 // pred_region
          %s339 = ssub.s32 12288, 12288
          %340 = vsyncadd [#allocation10], %s339
          %s341 = sshll.u32 [#allocation9], 4
          %s342 = int_to_ptr.vmem [resolvable:$true] %s341
          %347 = dma.hbm_to_vmem [thread:$0]  %s3, 12288, %s342, [#allocation10], 128, 128, 8
        $region20: #{tpu_custom_call.1} parent=11 // pred_fallthru
          _
        // Predicated region
        $region21: #{tpu_custom_call.1} parent=11 // pred_check
          %p348 = pneg %p157
        $region22: #{tpu_custom_call.1} parent=11 // pred_check_branch
          %350 = sbr.rel (%p348) target = $region24
        $region23: #{tpu_custom_call.1} parent=11 // pred_region
          %s352 = ssub.s32 32, 32
          %353 = vsyncadd [#allocation10], %s352
          %s355 = sshll.u32 [#allocation11], 4
          %s356 = int_to_ptr.vmem [resolvable:$true] %s355
          %358 = dma.hbm_to_vmem [thread:$0]  %s4, 32, %s356, [#allocation10]
        $region24: #{tpu_custom_call.1} parent=11 // pred_fallthru
          _
        // Predicated region
        $region25: #{tpu_custom_call.1} parent=11 // pred_check
          %p359 = pneg %p178
        $region26: #{tpu_custom_call.1} parent=11 // pred_check_branch
          %361 = sbr.rel (%p359) target = $region28
        $region27: #{tpu_custom_call.1} parent=11 // pred_region
          %s363 = ssub.s32 2048, 2048
          %364 = vsyncadd [#allocation13], %s363
          %s365 = sshll.u32 [#allocation12], 4
          %s366 = int_to_ptr.vmem [resolvable:$true] %s365
          %371 = dma.hbm_to_vmem [thread:$0]  %s5, 2048, %s366, [#allocation13], 64, 64, 4
        $region28: #{tpu_custom_call.1} parent=11 // pred_fallthru
          _
        // Predicated region
        $region29: #{tpu_custom_call.1} parent=11 // pred_check
          %p372 = pneg %p199
        $region30: #{tpu_custom_call.1} parent=11 // pred_check_branch
          %374 = sbr.rel (%p372) target = $region32
        $region31: #{tpu_custom_call.1} parent=11 // pred_region
          %s376 = ssub.s32 16, 16
          %377 = vsyncadd [#allocation13], %s376
          %s379 = sshll.u32 [#allocation14], 4
          %s380 = int_to_ptr.vmem [resolvable:$true] %s379
          %382 = dma.hbm_to_vmem [thread:$0]  %s6, 16, %s380, [#allocation13]
        $region32: #{tpu_custom_call.1} parent=11 // pred_fallthru
          _
        // Predicated region
        $region33: #{tpu_custom_call.1} parent=11 // pred_check
          %p383 = pneg %p220
        $region34: #{tpu_custom_call.1} parent=11 // pred_check_branch
          %385 = sbr.rel (%p383) target = $region36
        $region35: #{tpu_custom_call.1} parent=11 // pred_region
          %s387 = ssub.s32 1024, 1024
          %388 = vsyncadd [#allocation16], %s387
          %s389 = sshll.u32 [#allocation15], 4
          %s390 = int_to_ptr.vmem [resolvable:$true] %s389
          %395 = dma.hbm_to_vmem [thread:$0]  %s7, 1024, %s390, [#allocation16], 64, 64, 4
        $region36: #{tpu_custom_call.1} parent=11 // pred_fallthru
          _
        // Predicated region
        $region37: #{tpu_custom_call.1} parent=11 // pred_check
          %p396 = pneg %p241
        $region38: #{tpu_custom_call.1} parent=11 // pred_check_branch
          %398 = sbr.rel (%p396) target = $region40
        $region39: #{tpu_custom_call.1} parent=11 // pred_region
          %s400 = ssub.s32 16, 16
          %401 = vsyncadd [#allocation16], %s400
          %s403 = sshll.u32 [#allocation17], 4
          %s404 = int_to_ptr.vmem [resolvable:$true] %s403
          %406 = dma.hbm_to_vmem [thread:$0]  %s8, 16, %s404, [#allocation16]
        $region40: #{tpu_custom_call.1} parent=11 // pred_fallthru
          _
        // Predicated region
        $region41: #{tpu_custom_call.1} parent=11 // pred_check
          %p407 = pneg %p262
        $region42: #{tpu_custom_call.1} parent=11 // pred_check_branch
          %409 = sbr.rel (%p407) target = $region44
        $region43: #{tpu_custom_call.1} parent=11 // pred_region
          %s411 = ssub.s32 1024, 1024
          %412 = vsyncadd [#allocation19], %s411
          %s413 = sshll.u32 [#allocation18], 4
          %s414 = int_to_ptr.vmem [resolvable:$true] %s413
          %419 = dma.hbm_to_vmem [thread:$0]  %s9, 1024, %s414, [#allocation19], 64, 64, 4
        $region44: #{tpu_custom_call.1} parent=11 // pred_fallthru
          _
        // Predicated region
        $region45: #{tpu_custom_call.1} parent=11 // pred_check
          %p420 = pneg %p283
        $region46: #{tpu_custom_call.1} parent=11 // pred_check_branch
          %422 = sbr.rel (%p420) target = $region48
        $region47: #{tpu_custom_call.1} parent=11 // pred_region
          %s424 = ssub.s32 16, 16
          %425 = vsyncadd [#allocation19], %s424
          %s427 = sshll.u32 [#allocation20], 4
          %s428 = int_to_ptr.vmem [resolvable:$true] %s427
          %430 = dma.hbm_to_vmem [thread:$0]  %s10, 16, %s428, [#allocation19]
        $region48: #{tpu_custom_call.1} parent=11 // pred_fallthru
          _
      $region12: #{tpu_custom_call.1} parent=5 // pred_fallthru
        _
      %p431 = scmp.lt.s32.totalorder %s28, 3
      // Predicated region
      $region49: #{tpu_custom_call.1} parent=5 // pred_check
        %p432 = pneg %p431
      $region50: #{tpu_custom_call.1} parent=5 // pred_check_branch
        %434 = sbr.rel (%p432) target = $region52
      $region51: #{tpu_custom_call.1} parent=5 // pred_region
        // Predicated region
        $region53: #{tpu_custom_call.1} parent=51 // pred_check
          %p435 = pneg %p62
        $region54: #{tpu_custom_call.1} parent=51 // pred_check_branch
          %437 = sbr.rel (%p435) target = $region56
        $region55: #{tpu_custom_call.1} parent=51 // pred_region
          %s438 = sand.u32 %s52, 1
          %s439 = scalar_lea.sflag [#allocation4], %s438
          %s440 = sand.u32 %s52, 1
          %s441 = smul.addr %s440, 48
          %s442 = scalar_lea.vmem [#allocation3], %s441
          %s443 = smul.u32 2, %s35
          %s445 = ssub.s32 768, 768
          %446 = vsyncadd %s439, %s445
          %s447 = smul.addr %s443, 6
          %s448 = smul.addr %s36, 12
          %s449 = sadd.s32 %s447, %s448
          %s450 = smul.addr %s449, 64
          %s451 = scalar_lea.hbm %s0, %s450
          %s452 = sshll.u32 %s442, 4
          %s453 = int_to_ptr.vmem [resolvable:$true] %s452
          %458 = dma.hbm_to_vmem [thread:$0]  %s451, 768, %s453, %s439, 384, 384, 24
        $region56: #{tpu_custom_call.1} parent=51 // pred_fallthru
          _
        // Predicated region
        $region57: #{tpu_custom_call.1} parent=51 // pred_check
          %p459 = pneg %p88
        $region58: #{tpu_custom_call.1} parent=51 // pred_check_branch
          %461 = sbr.rel (%p459) target = $region60
        $region59: #{tpu_custom_call.1} parent=51 // pred_region
          %s462 = sand.u32 %s28, 1
          %s463 = scalar_lea.sflag [#allocation7], %s462
          %s464 = sand.u32 %s78, 1
          %s465 = smul.addr %s464, 2304
          %s466 = scalar_lea.vmem [#allocation6], %s465
          %s467 = smul.u32 96, %s36
          %s469 = ssub.s32 36864, 36864
          %470 = vsyncadd %s463, %s469
          %s471 = smul.addr %s467, 6
          %s472 = smul.addr %s471, 64
          %s473 = scalar_lea.hbm %s1, %s472
          %s474 = sshll.u32 %s466, 4
          %s475 = int_to_ptr.vmem [resolvable:$true] %s474
          %480 = dma.hbm_to_vmem [thread:$0]  %s473, 36864, %s475, %s463, 384, 384, 24
        $region60: #{tpu_custom_call.1} parent=51 // pred_fallthru
          _
      $region52: #{tpu_custom_call.1} parent=5 // pred_fallthru
        _
      %p481 = scmp.le.s32.totalorder 1, %s28
      %p482 = scmp.lt.s32.totalorder %s28, 4
      %p483 = pnand %p481, %p482
      %p484 = pneg %p483
      // Predicated region
      $region61: #{tpu_custom_call.1} parent=5 // pred_check
        _
      $region62: #{tpu_custom_call.1} parent=5 // pred_check_branch
        %486 = sbr.rel (%p483) target = $region64
      $region63: #{tpu_custom_call.1} parent=5 // pred_region
        %s487 = ssub.s32 %s28, 1
        %s488 = sand.u32 %s55, 1
        %s489 = scalar_lea.sflag [#allocation4], %s488
        %s490 = sand.u32 %s55, 1
        %s491 = smul.addr %s490, 48
        %s492 = scalar_lea.vmem [#allocation3], %s491
        // Predicated region
        $region65: #{tpu_custom_call.1} parent=63 // pred_check
          %p493 = pneg %p68
        $region66: #{tpu_custom_call.1} parent=63 // pred_check_branch
          %495 = sbr.rel (%p493) target = $region68
        $region67: #{tpu_custom_call.1} parent=63 // pred_region
          %496 = dma.done %s489, 768
        $region68: #{tpu_custom_call.1} parent=63 // pred_fallthru
          _
        %s497 = sand.u32 %s33, 1
        %s498 = scalar_lea.sflag [#allocation7], %s497
        %s499 = sand.u32 %s81, 1
        %s500 = smul.addr %s499, 2304
        %s501 = scalar_lea.vmem [#allocation6], %s500
        // Predicated region
        $region69: #{tpu_custom_call.1} parent=63 // pred_check
          %p502 = pneg %p94
        $region70: #{tpu_custom_call.1} parent=63 // pred_check_branch
          %504 = sbr.rel (%p502) target = $region72
        $region71: #{tpu_custom_call.1} parent=63 // pred_region
          %505 = dma.done %s498, 36864
        $region72: #{tpu_custom_call.1} parent=63 // pred_fallthru
          _
        // Predicated region
        $region73: #{tpu_custom_call.1} parent=63 // pred_check
          %p506 = pneg %p115
        $region74: #{tpu_custom_call.1} parent=63 // pred_check_branch
          %508 = sbr.rel (%p506) target = $region76
        $region75: #{tpu_custom_call.1} parent=63 // pred_region
          %509 = dma.done [#allocation7], 96
        $region76: #{tpu_custom_call.1} parent=63 // pred_fallthru
          _
        // Predicated region
        $region77: #{tpu_custom_call.1} parent=63 // pred_check
          %p510 = pneg %p136
        $region78: #{tpu_custom_call.1} parent=63 // pred_check_branch
          %512 = sbr.rel (%p510) target = $region80
        $region79: #{tpu_custom_call.1} parent=63 // pred_region
          %513 = dma.done [#allocation10], 12288
        $region80: #{tpu_custom_call.1} parent=63 // pred_fallthru
          _
        // Predicated region
        $region81: #{tpu_custom_call.1} parent=63 // pred_check
          %p514 = pneg %p157
        $region82: #{tpu_custom_call.1} parent=63 // pred_check_branch
          %516 = sbr.rel (%p514) target = $region84
        $region83: #{tpu_custom_call.1} parent=63 // pred_region
          %517 = dma.done [#allocation10], 32
        $region84: #{tpu_custom_call.1} parent=63 // pred_fallthru
          _
        // Predicated region
        $region85: #{tpu_custom_call.1} parent=63 // pred_check
          %p518 = pneg %p178
        $region86: #{tpu_custom_call.1} parent=63 // pred_check_branch
          %520 = sbr.rel (%p518) target = $region88
        $region87: #{tpu_custom_call.1} parent=63 // pred_region
          %521 = dma.done [#allocation13], 2048
        $region88: #{tpu_custom_call.1} parent=63 // pred_fallthru
          _
        // Predicated region
        $region89: #{tpu_custom_call.1} parent=63 // pred_check
          %p522 = pneg %p199
        $region90: #{tpu_custom_call.1} parent=63 // pred_check_branch
          %524 = sbr.rel (%p522) target = $region92
        $region91: #{tpu_custom_call.1} parent=63 // pred_region
          %525 = dma.done [#allocation13], 16
        $region92: #{tpu_custom_call.1} parent=63 // pred_fallthru
          _
        // Predicated region
        $region93: #{tpu_custom_call.1} parent=63 // pred_check
          %p526 = pneg %p220
        $region94: #{tpu_custom_call.1} parent=63 // pred_check_branch
          %528 = sbr.rel (%p526) target = $region96
        $region95: #{tpu_custom_call.1} parent=63 // pred_region
          %529 = dma.done [#allocation16], 1024
        $region96: #{tpu_custom_call.1} parent=63 // pred_fallthru
          _
        // Predicated region
        $region97: #{tpu_custom_call.1} parent=63 // pred_check
          %p530 = pneg %p241
        $region98: #{tpu_custom_call.1} parent=63 // pred_check_branch
          %532 = sbr.rel (%p530) target = $region100
        $region99: #{tpu_custom_call.1} parent=63 // pred_region
          %533 = dma.done [#allocation16], 16
        $region100: #{tpu_custom_call.1} parent=63 // pred_fallthru
          _
        // Predicated region
        $region101: #{tpu_custom_call.1} parent=63 // pred_check
          %p534 = pneg %p262
        $region102: #{tpu_custom_call.1} parent=63 // pred_check_branch
          %536 = sbr.rel (%p534) target = $region104
        $region103: #{tpu_custom_call.1} parent=63 // pred_region
          %537 = dma.done [#allocation19], 1024
        $region104: #{tpu_custom_call.1} parent=63 // pred_fallthru
          _
        // Predicated region
        $region105: #{tpu_custom_call.1} parent=63 // pred_check
          %p538 = pneg %p283
        $region106: #{tpu_custom_call.1} parent=63 // pred_check_branch
          %540 = sbr.rel (%p538) target = $region108
        $region107: #{tpu_custom_call.1} parent=63 // pred_region
          %541 = dma.done [#allocation19], 16
        $region108: #{tpu_custom_call.1} parent=63 // pred_fallthru
          _
        %s542 = sand.u32 %s55, 1
        %s543 = scalar_lea.sflag [#allocation4], %s542
        %s544 = sand.u32 %s55, 1
        %s545 = smul.addr %s544, 48
        %s546 = scalar_lea.vmem [#allocation3], %s545
        %p547 = pneg %p68
        %p548 = pneg %p65
        %s549 = sand.u32 %s33, 1
        %s550 = scalar_lea.sflag [#allocation7], %s549
        %s551 = sand.u32 %s81, 1
        %s552 = smul.addr %s551, 2304
        %s553 = scalar_lea.vmem [#allocation6], %s552
        %p554 = pneg %p94
        %p555 = pneg %p91
        %p556 = pneg %p115
        %p557 = pneg %p112
        %p558 = pneg %p136
        %p559 = pneg %p133
        %p560 = pneg %p157
        %p561 = pneg %p154
        %p562 = pneg %p178
        %p563 = pneg %p175
        %p564 = pneg %p199
        %p565 = pneg %p196
        %p566 = pneg %p220
        %p567 = pneg %p217
        %p568 = pneg %p241
        %p569 = pneg %p238
        %p570 = pneg %p262
        %p571 = pneg %p259
        %p572 = pneg %p283
        %p573 = pneg %p280
        %p574 = pneg %p309
        %p575 = pneg %p306
        %s576 = smul.u32 2, %s37
        %s577 = smul.u32 96, %s38
        %s578 = smul.u32 2, %s37
        %p580 = scmp.eq.s32.totalorder %s38, 0
        // Predicated region
        $region109: #{tpu_custom_call.1} parent=63 // pred_check
          %p581 = pneg %p580
        $region110: #{tpu_custom_call.1} parent=63 // pred_check_branch
          %583 = sbr.rel (%p581) target = $region112
        $region111: #{tpu_custom_call.1} parent=63 // pred_region
          %584 = vst [vmem:[#allocation2] sm:$0xff] 0.0
          %585 = vst [vmem:[#allocation2 + $0x8] sm:$0xff] 0.0
          %586 = vst [vmem:[#allocation2 + $0x10] sm:$0xff] 0.0
          %587 = vst [vmem:[#allocation2 + $0x18] sm:$0xff] 0.0
          %588 = vst [vmem:[#allocation2 + $0x20] sm:$0xff] 0.0
          %589 = vst [vmem:[#allocation2 + $0x28] sm:$0xff] 0.0
          %590 = vst [vmem:[#allocation2 + $0x30] sm:$0xff] 0.0
          %591 = vst [vmem:[#allocation2 + $0x38] sm:$0xff] 0.0
          %592 = vst [vmem:[#allocation2 + $0x40] sm:$0xff] 0.0
          %593 = vst [vmem:[#allocation2 + $0x48] sm:$0xff] 0.0
          %594 = vst [vmem:[#allocation2 + $0x50] sm:$0xff] 0.0
          %595 = vst [vmem:[#allocation2 + $0x58] sm:$0xff] 0.0
        $region112: #{tpu_custom_call.1} parent=63 // pred_fallthru
          _
        %v596 = vld [vmem:[#allocation2] sm:$0xff]
        %v597 = vld [vmem:[#allocation2 + $0x8] sm:$0xff]
        %v598 = vld [vmem:[#allocation2 + $0x10] sm:$0xff]
        %v599 = vld [vmem:[#allocation2 + $0x18] sm:$0xff]
        %v600 = vld [vmem:[#allocation2 + $0x20] sm:$0xff]
        %v601 = vld [vmem:[#allocation2 + $0x28] sm:$0xff]
        %v602 = vld [vmem:[#allocation2 + $0x30] sm:$0xff]
        %v603 = vld [vmem:[#allocation2 + $0x38] sm:$0xff]
        %v604 = vld [vmem:[#allocation2 + $0x40] sm:$0xff]
        %v605 = vld [vmem:[#allocation2 + $0x48] sm:$0xff]
        %v606 = vld [vmem:[#allocation2 + $0x50] sm:$0xff]
        %v607 = vld [vmem:[#allocation2 + $0x58] sm:$0xff]
        %v608 = vld [vmem:[%s492] sm:$0xff]
        %v609 = vld [vmem:[%s492 + $0x8] sm:$0xff]
        %v610 = vld [vmem:[%s492 + $0x10] sm:$0xff]
        %v611 = vld [vmem:[%s492 + $0x18] sm:$0xff]
        %v612 = vld [vmem:[%s492 + $0x20] sm:$0xff]
        %v613 = vld [vmem:[%s492 + $0x28] sm:$0xff]
        %v614 = vld [vmem:[%s501] sm:$0xff]
        %v615 = vld [vmem:[%s501 + $0x8] sm:$0xff]
        %v616 = vld [vmem:[%s501 + $0x10] sm:$0xff]
        %v617 = vld [vmem:[%s501 + $0x18] sm:$0xff]
        %v618 = vld [vmem:[%s501 + $0x20] sm:$0xff]
        %v619 = vld [vmem:[%s501 + $0x28] sm:$0xff]
        %v620 = vld [vmem:[%s501 + $0x30] sm:$0xff]
        %v621 = vld [vmem:[%s501 + $0x38] sm:$0xff]
        %v622 = vld [vmem:[%s501 + $0x40] sm:$0xff]
        %v623 = vld [vmem:[%s501 + $0x48] sm:$0xff]
        %v624 = vld [vmem:[%s501 + $0x50] sm:$0xff]
        %v625 = vld [vmem:[%s501 + $0x58] sm:$0xff]
        %v626 = vld [vmem:[%s501 + $0x60] sm:$0xff]
        %v627 = vld [vmem:[%s501 + $0x68] sm:$0xff]
        %v628 = vld [vmem:[%s501 + $0x70] sm:$0xff]
        %v629 = vld [vmem:[%s501 + $0x78] sm:$0xff]
        %v630 = vld [vmem:[%s501 + $0x80] sm:$0xff]
        %v631 = vld [vmem:[%s501 + $0x88] sm:$0xff]
        %v632 = vld [vmem:[%s501 + $0x90] sm:$0xff]
        %v633 = vld [vmem:[%s501 + $0x98] sm:$0xff]
        %v634 = vld [vmem:[%s501 + $0xa0] sm:$0xff]
        %v635 = vld [vmem:[%s501 + $0xa8] sm:$0xff]
        %v636 = vld [vmem:[%s501 + $0xb0] sm:$0xff]
        %v637 = vld [vmem:[%s501 + $0xb8] sm:$0xff]
        %v638 = vld [vmem:[%s501 + $0xc0] sm:$0xff]
        %v639 = vld [vmem:[%s501 + $0xc8] sm:$0xff]
        %v640 = vld [vmem:[%s501 + $0xd0] sm:$0xff]
        %v641 = vld [vmem:[%s501 + $0xd8] sm:$0xff]
        %v642 = vld [vmem:[%s501 + $0xe0] sm:$0xff]
        %v643 = vld [vmem:[%s501 + $0xe8] sm:$0xff]
        %v644 = vld [vmem:[%s501 + $0xf0] sm:$0xff]
        %v645 = vld [vmem:[%s501 + $0xf8] sm:$0xff]
        %v646 = vld [vmem:[%s501 + $0x100] sm:$0xff]
        %v647 = vld [vmem:[%s501 + $0x108] sm:$0xff]
        %v648 = vld [vmem:[%s501 + $0x110] sm:$0xff]
        %v649 = vld [vmem:[%s501 + $0x118] sm:$0xff]
        %v650 = vld [vmem:[%s501 + $0x120] sm:$0xff]
        %v651 = vld [vmem:[%s501 + $0x128] sm:$0xff]
        %v652 = vld [vmem:[%s501 + $0x130] sm:$0xff]
        %v653 = vld [vmem:[%s501 + $0x138] sm:$0xff]
        %v654 = vld [vmem:[%s501 + $0x140] sm:$0xff]
        %v655 = vld [vmem:[%s501 + $0x148] sm:$0xff]
        %v656 = vld [vmem:[%s501 + $0x150] sm:$0xff]
        %v657 = vld [vmem:[%s501 + $0x158] sm:$0xff]
        %v658 = vld [vmem:[%s501 + $0x160] sm:$0xff]
        %v659 = vld [vmem:[%s501 + $0x168] sm:$0xff]
        %v660 = vld [vmem:[%s501 + $0x170] sm:$0xff]
        %v661 = vld [vmem:[%s501 + $0x178] sm:$0xff]
        %v662 = vld [vmem:[%s501 + $0x180] sm:$0xff]
        %v663 = vld [vmem:[%s501 + $0x188] sm:$0xff]
        %v664 = vld [vmem:[%s501 + $0x190] sm:$0xff]
        %v665 = vld [vmem:[%s501 + $0x198] sm:$0xff]
        %v666 = vld [vmem:[%s501 + $0x1a0] sm:$0xff]
        %v667 = vld [vmem:[%s501 + $0x1a8] sm:$0xff]
        %v668 = vld [vmem:[%s501 + $0x1b0] sm:$0xff]
        %v669 = vld [vmem:[%s501 + $0x1b8] sm:$0xff]
        %v670 = vld [vmem:[%s501 + $0x1c0] sm:$0xff]
        %v671 = vld [vmem:[%s501 + $0x1c8] sm:$0xff]
        %v672 = vld [vmem:[%s501 + $0x1d0] sm:$0xff]
        %v673 = vld [vmem:[%s501 + $0x1d8] sm:$0xff]
        %v674 = vld [vmem:[%s501 + $0x1e0] sm:$0xff]
        %v675 = vld [vmem:[%s501 + $0x1e8] sm:$0xff]
        %v676 = vld [vmem:[%s501 + $0x1f0] sm:$0xff]
        %v677 = vld [vmem:[%s501 + $0x1f8] sm:$0xff]
        %v678 = vld [vmem:[%s501 + $0x200] sm:$0xff]
        %v679 = vld [vmem:[%s501 + $0x208] sm:$0xff]
        %v680 = vld [vmem:[%s501 + $0x210] sm:$0xff]
        %v681 = vld [vmem:[%s501 + $0x218] sm:$0xff]
        %v682 = vld [vmem:[%s501 + $0x220] sm:$0xff]
        %v683 = vld [vmem:[%s501 + $0x228] sm:$0xff]
        %v684 = vld [vmem:[%s501 + $0x230] sm:$0xff]
        %v685 = vld [vmem:[%s501 + $0x238] sm:$0xff]
        %v686 = vld [vmem:[%s501 + $0x240] sm:$0xff]
        %v687 = vld [vmem:[%s501 + $0x248] sm:$0xff]
        %v688 = vld [vmem:[%s501 + $0x250] sm:$0xff]
        %v689 = vld [vmem:[%s501 + $0x258] sm:$0xff]
        %v690 = vld [vmem:[%s501 + $0x260] sm:$0xff]
        %v691 = vld [vmem:[%s501 + $0x268] sm:$0xff]
        %v692 = vld [vmem:[%s501 + $0x270] sm:$0xff]
        %v693 = vld [vmem:[%s501 + $0x278] sm:$0xff]
        %v694 = vld [vmem:[%s501 + $0x280] sm:$0xff]
        %v695 = vld [vmem:[%s501 + $0x288] sm:$0xff]
        %v696 = vld [vmem:[%s501 + $0x290] sm:$0xff]
        %v697 = vld [vmem:[%s501 + $0x298] sm:$0xff]
        %v698 = vld [vmem:[%s501 + $0x2a0] sm:$0xff]
        %v699 = vld [vmem:[%s501 + $0x2a8] sm:$0xff]
        %v700 = vld [vmem:[%s501 + $0x2b0] sm:$0xff]
        %v701 = vld [vmem:[%s501 + $0x2b8] sm:$0xff]
        %v702 = vld [vmem:[%s501 + $0x2c0] sm:$0xff]
        %v703 = vld [vmem:[%s501 + $0x2c8] sm:$0xff]
        %v704 = vld [vmem:[%s501 + $0x2d0] sm:$0xff]
        %v705 = vld [vmem:[%s501 + $0x2d8] sm:$0xff]
        %v706 = vld [vmem:[%s501 + $0x2e0] sm:$0xff]
        %v707 = vld [vmem:[%s501 + $0x2e8] sm:$0xff]
        %v708 = vld [vmem:[%s501 + $0x2f0] sm:$0xff]
        %v709 = vld [vmem:[%s501 + $0x2f8] sm:$0xff]
        %v710 = vld [vmem:[%s501 + $0x300] sm:$0xff]
        %v711 = vld [vmem:[%s501 + $0x308] sm:$0xff]
        %v712 = vld [vmem:[%s501 + $0x310] sm:$0xff]
        %v713 = vld [vmem:[%s501 + $0x318] sm:$0xff]
        %v714 = vld [vmem:[%s501 + $0x320] sm:$0xff]
        %v715 = vld [vmem:[%s501 + $0x328] sm:$0xff]
        %v716 = vld [vmem:[%s501 + $0x330] sm:$0xff]
        %v717 = vld [vmem:[%s501 + $0x338] sm:$0xff]
        %v718 = vld [vmem:[%s501 + $0x340] sm:$0xff]
        %v719 = vld [vmem:[%s501 + $0x348] sm:$0xff]
        %v720 = vld [vmem:[%s501 + $0x350] sm:$0xff]
        %v721 = vld [vmem:[%s501 + $0x358] sm:$0xff]
        %v722 = vld [vmem:[%s501 + $0x360] sm:$0xff]
        %v723 = vld [vmem:[%s501 + $0x368] sm:$0xff]
        %v724 = vld [vmem:[%s501 + $0x370] sm:$0xff]
        %v725 = vld [vmem:[%s501 + $0x378] sm:$0xff]
        %v726 = vld [vmem:[%s501 + $0x380] sm:$0xff]
        %v727 = vld [vmem:[%s501 + $0x388] sm:$0xff]
        %v728 = vld [vmem:[%s501 + $0x390] sm:$0xff]
        %v729 = vld [vmem:[%s501 + $0x398] sm:$0xff]
        %v730 = vld [vmem:[%s501 + $0x3a0] sm:$0xff]
        %v731 = vld [vmem:[%s501 + $0x3a8] sm:$0xff]
        %v732 = vld [vmem:[%s501 + $0x3b0] sm:$0xff]
        %v733 = vld [vmem:[%s501 + $0x3b8] sm:$0xff]
        %v734 = vld [vmem:[%s501 + $0x3c0] sm:$0xff]
        %v735 = vld [vmem:[%s501 + $0x3c8] sm:$0xff]
        %v736 = vld [vmem:[%s501 + $0x3d0] sm:$0xff]
        %v737 = vld [vmem:[%s501 + $0x3d8] sm:$0xff]
        %v738 = vld [vmem:[%s501 + $0x3e0] sm:$0xff]
        %v739 = vld [vmem:[%s501 + $0x3e8] sm:$0xff]
        %v740 = vld [vmem:[%s501 + $0x3f0] sm:$0xff]
        %v741 = vld [vmem:[%s501 + $0x3f8] sm:$0xff]
        %v742 = vld [vmem:[%s501 + $0x400] sm:$0xff]
        %v743 = vld [vmem:[%s501 + $0x408] sm:$0xff]
        %v744 = vld [vmem:[%s501 + $0x410] sm:$0xff]
        %v745 = vld [vmem:[%s501 + $0x418] sm:$0xff]
        %v746 = vld [vmem:[%s501 + $0x420] sm:$0xff]
        %v747 = vld [vmem:[%s501 + $0x428] sm:$0xff]
        %v748 = vld [vmem:[%s501 + $0x430] sm:$0xff]
        %v749 = vld [vmem:[%s501 + $0x438] sm:$0xff]
        %v750 = vld [vmem:[%s501 + $0x440] sm:$0xff]
        %v751 = vld [vmem:[%s501 + $0x448] sm:$0xff]
        %v752 = vld [vmem:[%s501 + $0x450] sm:$0xff]
        %v753 = vld [vmem:[%s501 + $0x458] sm:$0xff]
        %v754 = vld [vmem:[%s501 + $0x460] sm:$0xff]
        %v755 = vld [vmem:[%s501 + $0x468] sm:$0xff]
        %v756 = vld [vmem:[%s501 + $0x470] sm:$0xff]
        %v757 = vld [vmem:[%s501 + $0x478] sm:$0xff]
        %v758 = vld [vmem:[%s501 + $0x480] sm:$0xff]
        %v759 = vld [vmem:[%s501 + $0x488] sm:$0xff]
        %v760 = vld [vmem:[%s501 + $0x490] sm:$0xff]
        %v761 = vld [vmem:[%s501 + $0x498] sm:$0xff]
        %v762 = vld [vmem:[%s501 + $0x4a0] sm:$0xff]
        %v763 = vld [vmem:[%s501 + $0x4a8] sm:$0xff]
        %v764 = vld [vmem:[%s501 + $0x4b0] sm:$0xff]
        %v765 = vld [vmem:[%s501 + $0x4b8] sm:$0xff]
        %v766 = vld [vmem:[%s501 + $0x4c0] sm:$0xff]
        %v767 = vld [vmem:[%s501 + $0x4c8] sm:$0xff]
        %v768 = vld [vmem:[%s501 + $0x4d0] sm:$0xff]
        %v769 = vld [vmem:[%s501 + $0x4d8] sm:$0xff]
        %v770 = vld [vmem:[%s501 + $0x4e0] sm:$0xff]
        %v771 = vld [vmem:[%s501 + $0x4e8] sm:$0xff]
        %v772 = vld [vmem:[%s501 + $0x4f0] sm:$0xff]
        %v773 = vld [vmem:[%s501 + $0x4f8] sm:$0xff]
        %v774 = vld [vmem:[%s501 + $0x500] sm:$0xff]
        %v775 = vld [vmem:[%s501 + $0x508] sm:$0xff]
        %v776 = vld [vmem:[%s501 + $0x510] sm:$0xff]
        %v777 = vld [vmem:[%s501 + $0x518] sm:$0xff]
        %v778 = vld [vmem:[%s501 + $0x520] sm:$0xff]
        %v779 = vld [vmem:[%s501 + $0x528] sm:$0xff]
        %v780 = vld [vmem:[%s501 + $0x530] sm:$0xff]
        %v781 = vld [vmem:[%s501 + $0x538] sm:$0xff]
        %v782 = vld [vmem:[%s501 + $0x540] sm:$0xff]
        %v783 = vld [vmem:[%s501 + $0x548] sm:$0xff]
        %v784 = vld [vmem:[%s501 + $0x550] sm:$0xff]
        %v785 = vld [vmem:[%s501 + $0x558] sm:$0xff]
        %v786 = vld [vmem:[%s501 + $0x560] sm:$0xff]
        %v787 = vld [vmem:[%s501 + $0x568] sm:$0xff]
        %v788 = vld [vmem:[%s501 + $0x570] sm:$0xff]
        %v789 = vld [vmem:[%s501 + $0x578] sm:$0xff]
        %v790 = vld [vmem:[%s501 + $0x580] sm:$0xff]
        %v791 = vld [vmem:[%s501 + $0x588] sm:$0xff]
        %v792 = vld [vmem:[%s501 + $0x590] sm:$0xff]
        %v793 = vld [vmem:[%s501 + $0x598] sm:$0xff]
        %v794 = vld [vmem:[%s501 + $0x5a0] sm:$0xff]
        %v795 = vld [vmem:[%s501 + $0x5a8] sm:$0xff]
        %v796 = vld [vmem:[%s501 + $0x5b0] sm:$0xff]
        %v797 = vld [vmem:[%s501 + $0x5b8] sm:$0xff]
        %v798 = vld [vmem:[%s501 + $0x5c0] sm:$0xff]
        %v799 = vld [vmem:[%s501 + $0x5c8] sm:$0xff]
        %v800 = vld [vmem:[%s501 + $0x5d0] sm:$0xff]
        %v801 = vld [vmem:[%s501 + $0x5d8] sm:$0xff]
        %v802 = vld [vmem:[%s501 + $0x5e0] sm:$0xff]
        %v803 = vld [vmem:[%s501 + $0x5e8] sm:$0xff]
        %v804 = vld [vmem:[%s501 + $0x5f0] sm:$0xff]
        %v805 = vld [vmem:[%s501 + $0x5f8] sm:$0xff]
        %v806 = vld [vmem:[%s501 + $0x600] sm:$0xff]
        %v807 = vld [vmem:[%s501 + $0x608] sm:$0xff]
        %v808 = vld [vmem:[%s501 + $0x610] sm:$0xff]
        %v809 = vld [vmem:[%s501 + $0x618] sm:$0xff]
        %v810 = vld [vmem:[%s501 + $0x620] sm:$0xff]
        %v811 = vld [vmem:[%s501 + $0x628] sm:$0xff]
        %v812 = vld [vmem:[%s501 + $0x630] sm:$0xff]
        %v813 = vld [vmem:[%s501 + $0x638] sm:$0xff]
        %v814 = vld [vmem:[%s501 + $0x640] sm:$0xff]
        %v815 = vld [vmem:[%s501 + $0x648] sm:$0xff]
        %v816 = vld [vmem:[%s501 + $0x650] sm:$0xff]
        %v817 = vld [vmem:[%s501 + $0x658] sm:$0xff]
        %v818 = vld [vmem:[%s501 + $0x660] sm:$0xff]
        %v819 = vld [vmem:[%s501 + $0x668] sm:$0xff]
        %v820 = vld [vmem:[%s501 + $0x670] sm:$0xff]
        %v821 = vld [vmem:[%s501 + $0x678] sm:$0xff]
        %v822 = vld [vmem:[%s501 + $0x680] sm:$0xff]
        %v823 = vld [vmem:[%s501 + $0x688] sm:$0xff]
        %v824 = vld [vmem:[%s501 + $0x690] sm:$0xff]
        %v825 = vld [vmem:[%s501 + $0x698] sm:$0xff]
        %v826 = vld [vmem:[%s501 + $0x6a0] sm:$0xff]
        %v827 = vld [vmem:[%s501 + $0x6a8] sm:$0xff]
        %v828 = vld [vmem:[%s501 + $0x6b0] sm:$0xff]
        %v829 = vld [vmem:[%s501 + $0x6b8] sm:$0xff]
        %v830 = vld [vmem:[%s501 + $0x6c0] sm:$0xff]
        %v831 = vld [vmem:[%s501 + $0x6c8] sm:$0xff]
        %v832 = vld [vmem:[%s501 + $0x6d0] sm:$0xff]
        %v833 = vld [vmem:[%s501 + $0x6d8] sm:$0xff]
        %v834 = vld [vmem:[%s501 + $0x6e0] sm:$0xff]
        %v835 = vld [vmem:[%s501 + $0x6e8] sm:$0xff]
        %v836 = vld [vmem:[%s501 + $0x6f0] sm:$0xff]
        %v837 = vld [vmem:[%s501 + $0x6f8] sm:$0xff]
        %v838 = vld [vmem:[%s501 + $0x700] sm:$0xff]
        %v839 = vld [vmem:[%s501 + $0x708] sm:$0xff]
        %v840 = vld [vmem:[%s501 + $0x710] sm:$0xff]
        %v841 = vld [vmem:[%s501 + $0x718] sm:$0xff]
        %v842 = vld [vmem:[%s501 + $0x720] sm:$0xff]
        %v843 = vld [vmem:[%s501 + $0x728] sm:$0xff]
        %v844 = vld [vmem:[%s501 + $0x730] sm:$0xff]
        %v845 = vld [vmem:[%s501 + $0x738] sm:$0xff]
        %v846 = vld [vmem:[%s501 + $0x740] sm:$0xff]
        %v847 = vld [vmem:[%s501 + $0x748] sm:$0xff]
        %v848 = vld [vmem:[%s501 + $0x750] sm:$0xff]
        %v849 = vld [vmem:[%s501 + $0x758] sm:$0xff]
        %v850 = vld [vmem:[%s501 + $0x760] sm:$0xff]
        %v851 = vld [vmem:[%s501 + $0x768] sm:$0xff]
        %v852 = vld [vmem:[%s501 + $0x770] sm:$0xff]
        %v853 = vld [vmem:[%s501 + $0x778] sm:$0xff]
        %v854 = vld [vmem:[%s501 + $0x780] sm:$0xff]
        %v855 = vld [vmem:[%s501 + $0x788] sm:$0xff]
        %v856 = vld [vmem:[%s501 + $0x790] sm:$0xff]
        %v857 = vld [vmem:[%s501 + $0x798] sm:$0xff]
        %v858 = vld [vmem:[%s501 + $0x7a0] sm:$0xff]
        %v859 = vld [vmem:[%s501 + $0x7a8] sm:$0xff]
        %v860 = vld [vmem:[%s501 + $0x7b0] sm:$0xff]
        %v861 = vld [vmem:[%s501 + $0x7b8] sm:$0xff]
        %v862 = vld [vmem:[%s501 + $0x7c0] sm:$0xff]
        %v863 = vld [vmem:[%s501 + $0x7c8] sm:$0xff]
        %v864 = vld [vmem:[%s501 + $0x7d0] sm:$0xff]
        %v865 = vld [vmem:[%s501 + $0x7d8] sm:$0xff]
        %v866 = vld [vmem:[%s501 + $0x7e0] sm:$0xff]
        %v867 = vld [vmem:[%s501 + $0x7e8] sm:$0xff]
        %v868 = vld [vmem:[%s501 + $0x7f0] sm:$0xff]
        %v869 = vld [vmem:[%s501 + $0x7f8] sm:$0xff]
        %v870 = vld [vmem:[%s501 + $0x800] sm:$0xff]
        %v871 = vld [vmem:[%s501 + $0x808] sm:$0xff]
        %v872 = vld [vmem:[%s501 + $0x810] sm:$0xff]
        %v873 = vld [vmem:[%s501 + $0x818] sm:$0xff]
        %v874 = vld [vmem:[%s501 + $0x820] sm:$0xff]
        %v875 = vld [vmem:[%s501 + $0x828] sm:$0xff]
        %v876 = vld [vmem:[%s501 + $0x830] sm:$0xff]
        %v877 = vld [vmem:[%s501 + $0x838] sm:$0xff]
        %v878 = vld [vmem:[%s501 + $0x840] sm:$0xff]
        %v879 = vld [vmem:[%s501 + $0x848] sm:$0xff]
        %v880 = vld [vmem:[%s501 + $0x850] sm:$0xff]
        %v881 = vld [vmem:[%s501 + $0x858] sm:$0xff]
        %v882 = vld [vmem:[%s501 + $0x860] sm:$0xff]
        %v883 = vld [vmem:[%s501 + $0x868] sm:$0xff]
        %v884 = vld [vmem:[%s501 + $0x870] sm:$0xff]
        %v885 = vld [vmem:[%s501 + $0x878] sm:$0xff]
        %v886 = vld [vmem:[%s501 + $0x880] sm:$0xff]
        %v887 = vld [vmem:[%s501 + $0x888] sm:$0xff]
        %v888 = vld [vmem:[%s501 + $0x890] sm:$0xff]
        %v889 = vld [vmem:[%s501 + $0x898] sm:$0xff]
        %v890 = vld [vmem:[%s501 + $0x8a0] sm:$0xff]
        %v891 = vld [vmem:[%s501 + $0x8a8] sm:$0xff]
        %v892 = vld [vmem:[%s501 + $0x8b0] sm:$0xff]
        %v893 = vld [vmem:[%s501 + $0x8b8] sm:$0xff]
        %v894 = vld [vmem:[%s501 + $0x8c0] sm:$0xff]
        %v895 = vld [vmem:[%s501 + $0x8c8] sm:$0xff]
        %v896 = vld [vmem:[%s501 + $0x8d0] sm:$0xff]
        %v897 = vld [vmem:[%s501 + $0x8d8] sm:$0xff]
        %v898 = vld [vmem:[%s501 + $0x8e0] sm:$0xff]
        %v899 = vld [vmem:[%s501 + $0x8e8] sm:$0xff]
        %v900 = vld [vmem:[%s501 + $0x8f0] sm:$0xff]
        %v901 = vld [vmem:[%s501 + $0x8f8] sm:$0xff]
        %v908 = vunpack.c.l.b16 %v608
        %v909 = vunpack.c.h.b16 %v608
        %v910 = vunpack.c.l.b16 %v609
        %v911 = vunpack.c.h.b16 %v609
        %v912 = vunpack.c.l.b16 %v610
        %v913 = vunpack.c.h.b16 %v610
        %v914 = vunpack.c.l.b16 %v611
        %v915 = vunpack.c.h.b16 %v611
        %v916 = vunpack.c.l.b16 %v612
        %v917 = vunpack.c.h.b16 %v612
        %v918 = vunpack.c.l.b16 %v613
        %v919 = vunpack.c.h.b16 %v613
        %v920 = vpack.c.b16 %v914, %v908
        %v921 = vpack.c.b16 %v915, %v909
        %v922 = vpack.c.b16 %v916, %v910
        %v923 = vpack.c.b16 %v917, %v911
        %v924 = vpack.c.b16 %v918, %v912
        %v925 = vpack.c.b16 %v919, %v913
        %v1220 = vunpack.c.l.b16 %v614
        %v1221 = vunpack.c.h.b16 %v614
        %v1222 = vunpack.c.l.b16 %v615
        %v1223 = vunpack.c.h.b16 %v615
        %v1224 = vunpack.c.l.b16 %v616
        %v1225 = vunpack.c.h.b16 %v616
        %v1226 = vunpack.c.l.b16 %v617
        %v1227 = vunpack.c.h.b16 %v617
        %v1228 = vunpack.c.l.b16 %v618
        %v1229 = vunpack.c.h.b16 %v618
        %v1230 = vunpack.c.l.b16 %v619
        %v1231 = vunpack.c.h.b16 %v619
        %v1232 = vunpack.c.l.b16 %v620
        %v1233 = vunpack.c.h.b16 %v620
        %v1234 = vunpack.c.l.b16 %v621
        %v1235 = vunpack.c.h.b16 %v621
        %v1236 = vunpack.c.l.b16 %v622
        %v1237 = vunpack.c.h.b16 %v622
        %v1238 = vunpack.c.l.b16 %v623
        %v1239 = vunpack.c.h.b16 %v623
        %v1240 = vunpack.c.l.b16 %v624
        %v1241 = vunpack.c.h.b16 %v624
        %v1242 = vunpack.c.l.b16 %v625
        %v1243 = vunpack.c.h.b16 %v625
        %v1244 = vunpack.c.l.b16 %v626
        %v1245 = vunpack.c.h.b16 %v626
        %v1246 = vunpack.c.l.b16 %v627
        %v1247 = vunpack.c.h.b16 %v627
        %v1248 = vunpack.c.l.b16 %v628
        %v1249 = vunpack.c.h.b16 %v628
        %v1250 = vunpack.c.l.b16 %v629
        %v1251 = vunpack.c.h.b16 %v629
        %v1252 = vunpack.c.l.b16 %v630
        %v1253 = vunpack.c.h.b16 %v630
        %v1254 = vunpack.c.l.b16 %v631
        %v1255 = vunpack.c.h.b16 %v631
        %v1256 = vunpack.c.l.b16 %v632
        %v1257 = vunpack.c.h.b16 %v632
        %v1258 = vunpack.c.l.b16 %v633
        %v1259 = vunpack.c.h.b16 %v633
        %v1260 = vunpack.c.l.b16 %v634
        %v1261 = vunpack.c.h.b16 %v634
        %v1262 = vunpack.c.l.b16 %v635
        %v1263 = vunpack.c.h.b16 %v635
        %v1264 = vunpack.c.l.b16 %v636
        %v1265 = vunpack.c.h.b16 %v636
        %v1266 = vunpack.c.l.b16 %v637
        %v1267 = vunpack.c.h.b16 %v637
        %v1268 = vunpack.c.l.b16 %v638
        %v1269 = vunpack.c.h.b16 %v638
        %v1270 = vunpack.c.l.b16 %v639
        %v1271 = vunpack.c.h.b16 %v639
        %v1272 = vunpack.c.l.b16 %v640
        %v1273 = vunpack.c.h.b16 %v640
        %v1274 = vunpack.c.l.b16 %v641
        %v1275 = vunpack.c.h.b16 %v641
        %v1276 = vunpack.c.l.b16 %v642
        %v1277 = vunpack.c.h.b16 %v642
        %v1278 = vunpack.c.l.b16 %v643
        %v1279 = vunpack.c.h.b16 %v643
        %v1280 = vunpack.c.l.b16 %v644
        %v1281 = vunpack.c.h.b16 %v644
        %v1282 = vunpack.c.l.b16 %v645
        %v1283 = vunpack.c.h.b16 %v645
        %v1284 = vunpack.c.l.b16 %v646
        %v1285 = vunpack.c.h.b16 %v646
        %v1286 = vunpack.c.l.b16 %v647
        %v1287 = vunpack.c.h.b16 %v647
        %v1288 = vunpack.c.l.b16 %v648
        %v1289 = vunpack.c.h.b16 %v648
        %v1290 = vunpack.c.l.b16 %v649
        %v1291 = vunpack.c.h.b16 %v649
        %v1292 = vunpack.c.l.b16 %v650
        %v1293 = vunpack.c.h.b16 %v650
        %v1294 = vunpack.c.l.b16 %v651
        %v1295 = vunpack.c.h.b16 %v651
        %v1296 = vunpack.c.l.b16 %v652
        %v1297 = vunpack.c.h.b16 %v652
        %v1298 = vunpack.c.l.b16 %v653
        %v1299 = vunpack.c.h.b16 %v653
        %v1300 = vunpack.c.l.b16 %v654
        %v1301 = vunpack.c.h.b16 %v654
        %v1302 = vunpack.c.l.b16 %v655
        %v1303 = vunpack.c.h.b16 %v655
        %v1304 = vunpack.c.l.b16 %v656
        %v1305 = vunpack.c.h.b16 %v656
        %v1306 = vunpack.c.l.b16 %v657
        %v1307 = vunpack.c.h.b16 %v657
        %v1308 = vunpack.c.l.b16 %v658
        %v1309 = vunpack.c.h.b16 %v658
        %v1310 = vunpack.c.l.b16 %v659
        %v1311 = vunpack.c.h.b16 %v659
        %v1312 = vunpack.c.l.b16 %v660
        %v1313 = vunpack.c.h.b16 %v660
        %v1314 = vunpack.c.l.b16 %v661
        %v1315 = vunpack.c.h.b16 %v661
        %v1316 = vunpack.c.l.b16 %v662
        %v1317 = vunpack.c.h.b16 %v662
        %v1318 = vunpack.c.l.b16 %v663
        %v1319 = vunpack.c.h.b16 %v663
        %v1320 = vunpack.c.l.b16 %v664
        %v1321 = vunpack.c.h.b16 %v664
        %v1322 = vunpack.c.l.b16 %v665
        %v1323 = vunpack.c.h.b16 %v665
        %v1324 = vunpack.c.l.b16 %v666
        %v1325 = vunpack.c.h.b16 %v666
        %v1326 = vunpack.c.l.b16 %v667
        %v1327 = vunpack.c.h.b16 %v667
        %v1328 = vunpack.c.l.b16 %v668
        %v1329 = vunpack.c.h.b16 %v668
        %v1330 = vunpack.c.l.b16 %v669
        %v1331 = vunpack.c.h.b16 %v669
        %v1332 = vunpack.c.l.b16 %v670
        %v1333 = vunpack.c.h.b16 %v670
        %v1334 = vunpack.c.l.b16 %v671
        %v1335 = vunpack.c.h.b16 %v671
        %v1336 = vunpack.c.l.b16 %v672
        %v1337 = vunpack.c.h.b16 %v672
        %v1338 = vunpack.c.l.b16 %v673
        %v1339 = vunpack.c.h.b16 %v673
        %v1340 = vunpack.c.l.b16 %v674
        %v1341 = vunpack.c.h.b16 %v674
        %v1342 = vunpack.c.l.b16 %v675
        %v1343 = vunpack.c.h.b16 %v675
        %v1344 = vunpack.c.l.b16 %v676
        %v1345 = vunpack.c.h.b16 %v676
        %v1346 = vunpack.c.l.b16 %v677
        %v1347 = vunpack.c.h.b16 %v677
        %v1348 = vunpack.c.l.b16 %v678
        %v1349 = vunpack.c.h.b16 %v678
        %v1350 = vunpack.c.l.b16 %v679
        %v1351 = vunpack.c.h.b16 %v679
        %v1352 = vunpack.c.l.b16 %v680
        %v1353 = vunpack.c.h.b16 %v680
        %v1354 = vunpack.c.l.b16 %v681
        %v1355 = vunpack.c.h.b16 %v681
        %v1356 = vunpack.c.l.b16 %v682
        %v1357 = vunpack.c.h.b16 %v682
        %v1358 = vunpack.c.l.b16 %v683
        %v1359 = vunpack.c.h.b16 %v683
        %v1360 = vunpack.c.l.b16 %v684
        %v1361 = vunpack.c.h.b16 %v684
        %v1362 = vunpack.c.l.b16 %v685
        %v1363 = vunpack.c.h.b16 %v685
        %v1364 = vunpack.c.l.b16 %v686
        %v1365 = vunpack.c.h.b16 %v686
        %v1366 = vunpack.c.l.b16 %v687
        %v1367 = vunpack.c.h.b16 %v687
        %v1368 = vunpack.c.l.b16 %v688
        %v1369 = vunpack.c.h.b16 %v688
        %v1370 = vunpack.c.l.b16 %v689
        %v1371 = vunpack.c.h.b16 %v689
        %v1372 = vunpack.c.l.b16 %v690
        %v1373 = vunpack.c.h.b16 %v690
        %v1374 = vunpack.c.l.b16 %v691
        %v1375 = vunpack.c.h.b16 %v691
        %v1376 = vunpack.c.l.b16 %v692
        %v1377 = vunpack.c.h.b16 %v692
        %v1378 = vunpack.c.l.b16 %v693
        %v1379 = vunpack.c.h.b16 %v693
        %v1380 = vunpack.c.l.b16 %v694
        %v1381 = vunpack.c.h.b16 %v694
        %v1382 = vunpack.c.l.b16 %v695
        %v1383 = vunpack.c.h.b16 %v695
        %v1384 = vunpack.c.l.b16 %v696
        %v1385 = vunpack.c.h.b16 %v696
        %v1386 = vunpack.c.l.b16 %v697
        %v1387 = vunpack.c.h.b16 %v697
        %v1388 = vunpack.c.l.b16 %v698
        %v1389 = vunpack.c.h.b16 %v698
        %v1390 = vunpack.c.l.b16 %v699
        %v1391 = vunpack.c.h.b16 %v699
        %v1392 = vunpack.c.l.b16 %v700
        %v1393 = vunpack.c.h.b16 %v700
        %v1394 = vunpack.c.l.b16 %v701
        %v1395 = vunpack.c.h.b16 %v701
        %v1396 = vunpack.c.l.b16 %v702
        %v1397 = vunpack.c.h.b16 %v702
        %v1398 = vunpack.c.l.b16 %v703
        %v1399 = vunpack.c.h.b16 %v703
        %v1400 = vunpack.c.l.b16 %v704
        %v1401 = vunpack.c.h.b16 %v704
        %v1402 = vunpack.c.l.b16 %v705
        %v1403 = vunpack.c.h.b16 %v705
        %v1404 = vunpack.c.l.b16 %v706
        %v1405 = vunpack.c.h.b16 %v706
        %v1406 = vunpack.c.l.b16 %v707
        %v1407 = vunpack.c.h.b16 %v707
        %v1408 = vunpack.c.l.b16 %v708
        %v1409 = vunpack.c.h.b16 %v708
        %v1410 = vunpack.c.l.b16 %v709
        %v1411 = vunpack.c.h.b16 %v709
        %v1412 = vunpack.c.l.b16 %v710
        %v1413 = vunpack.c.h.b16 %v710
        %v1414 = vunpack.c.l.b16 %v711
        %v1415 = vunpack.c.h.b16 %v711
        %v1416 = vunpack.c.l.b16 %v712
        %v1417 = vunpack.c.h.b16 %v712
        %v1418 = vunpack.c.l.b16 %v713
        %v1419 = vunpack.c.h.b16 %v713
        %v1420 = vunpack.c.l.b16 %v714
        %v1421 = vunpack.c.h.b16 %v714
        %v1422 = vunpack.c.l.b16 %v715
        %v1423 = vunpack.c.h.b16 %v715
        %v1424 = vunpack.c.l.b16 %v716
        %v1425 = vunpack.c.h.b16 %v716
        %v1426 = vunpack.c.l.b16 %v717
        %v1427 = vunpack.c.h.b16 %v717
        %v1428 = vunpack.c.l.b16 %v718
        %v1429 = vunpack.c.h.b16 %v718
        %v1430 = vunpack.c.l.b16 %v719
        %v1431 = vunpack.c.h.b16 %v719
        %v1432 = vunpack.c.l.b16 %v720
        %v1433 = vunpack.c.h.b16 %v720
        %v1434 = vunpack.c.l.b16 %v721
        %v1435 = vunpack.c.h.b16 %v721
        %v1436 = vunpack.c.l.b16 %v722
        %v1437 = vunpack.c.h.b16 %v722
        %v1438 = vunpack.c.l.b16 %v723
        %v1439 = vunpack.c.h.b16 %v723
        %v1440 = vunpack.c.l.b16 %v724
        %v1441 = vunpack.c.h.b16 %v724
        %v1442 = vunpack.c.l.b16 %v725
        %v1443 = vunpack.c.h.b16 %v725
        %v1444 = vunpack.c.l.b16 %v726
        %v1445 = vunpack.c.h.b16 %v726
        %v1446 = vunpack.c.l.b16 %v727
        %v1447 = vunpack.c.h.b16 %v727
        %v1448 = vunpack.c.l.b16 %v728
        %v1449 = vunpack.c.h.b16 %v728
        %v1450 = vunpack.c.l.b16 %v729
        %v1451 = vunpack.c.h.b16 %v729
        %v1452 = vunpack.c.l.b16 %v730
        %v1453 = vunpack.c.h.b16 %v730
        %v1454 = vunpack.c.l.b16 %v731
        %v1455 = vunpack.c.h.b16 %v731
        %v1456 = vunpack.c.l.b16 %v732
        %v1457 = vunpack.c.h.b16 %v732
        %v1458 = vunpack.c.l.b16 %v733
        %v1459 = vunpack.c.h.b16 %v733
        %v1460 = vunpack.c.l.b16 %v734
        %v1461 = vunpack.c.h.b16 %v734
        %v1462 = vunpack.c.l.b16 %v735
        %v1463 = vunpack.c.h.b16 %v735
        %v1464 = vunpack.c.l.b16 %v736
        %v1465 = vunpack.c.h.b16 %v736
        %v1466 = vunpack.c.l.b16 %v737
        %v1467 = vunpack.c.h.b16 %v737
        %v1468 = vunpack.c.l.b16 %v738
        %v1469 = vunpack.c.h.b16 %v738
        %v1470 = vunpack.c.l.b16 %v739
        %v1471 = vunpack.c.h.b16 %v739
        %v1472 = vunpack.c.l.b16 %v740
        %v1473 = vunpack.c.h.b16 %v740
        %v1474 = vunpack.c.l.b16 %v741
        %v1475 = vunpack.c.h.b16 %v741
        %v1476 = vunpack.c.l.b16 %v742
        %v1477 = vunpack.c.h.b16 %v742
        %v1478 = vunpack.c.l.b16 %v743
        %v1479 = vunpack.c.h.b16 %v743
        %v1480 = vunpack.c.l.b16 %v744
        %v1481 = vunpack.c.h.b16 %v744
        %v1482 = vunpack.c.l.b16 %v745
        %v1483 = vunpack.c.h.b16 %v745
        %v1484 = vunpack.c.l.b16 %v746
        %v1485 = vunpack.c.h.b16 %v746
        %v1486 = vunpack.c.l.b16 %v747
        %v1487 = vunpack.c.h.b16 %v747
        %v1488 = vunpack.c.l.b16 %v748
        %v1489 = vunpack.c.h.b16 %v748
        %v1490 = vunpack.c.l.b16 %v749
        %v1491 = vunpack.c.h.b16 %v749
        %v1492 = vunpack.c.l.b16 %v750
        %v1493 = vunpack.c.h.b16 %v750
        %v1494 = vunpack.c.l.b16 %v751
        %v1495 = vunpack.c.h.b16 %v751
        %v1496 = vunpack.c.l.b16 %v752
        %v1497 = vunpack.c.h.b16 %v752
        %v1498 = vunpack.c.l.b16 %v753
        %v1499 = vunpack.c.h.b16 %v753
        %v1500 = vunpack.c.l.b16 %v754
        %v1501 = vunpack.c.h.b16 %v754
        %v1502 = vunpack.c.l.b16 %v755
        %v1503 = vunpack.c.h.b16 %v755
        %v1504 = vunpack.c.l.b16 %v756
        %v1505 = vunpack.c.h.b16 %v756
        %v1506 = vunpack.c.l.b16 %v757
        %v1507 = vunpack.c.h.b16 %v757
        %v1508 = vunpack.c.l.b16 %v758
        %v1509 = vunpack.c.h.b16 %v758
        %v1510 = vunpack.c.l.b16 %v759
        %v1511 = vunpack.c.h.b16 %v759
        %v1512 = vunpack.c.l.b16 %v760
        %v1513 = vunpack.c.h.b16 %v760
        %v1514 = vunpack.c.l.b16 %v761
        %v1515 = vunpack.c.h.b16 %v761
        %v1516 = vunpack.c.l.b16 %v762
        %v1517 = vunpack.c.h.b16 %v762
        %v1518 = vunpack.c.l.b16 %v763
        %v1519 = vunpack.c.h.b16 %v763
        %v1520 = vunpack.c.l.b16 %v764
        %v1521 = vunpack.c.h.b16 %v764
        %v1522 = vunpack.c.l.b16 %v765
        %v1523 = vunpack.c.h.b16 %v765
        %v1524 = vunpack.c.l.b16 %v766
        %v1525 = vunpack.c.h.b16 %v766
        %v1526 = vunpack.c.l.b16 %v767
        %v1527 = vunpack.c.h.b16 %v767
        %v1528 = vunpack.c.l.b16 %v768
        %v1529 = vunpack.c.h.b16 %v768
        %v1530 = vunpack.c.l.b16 %v769
        %v1531 = vunpack.c.h.b16 %v769
        %v1532 = vunpack.c.l.b16 %v770
        %v1533 = vunpack.c.h.b16 %v770
        %v1534 = vunpack.c.l.b16 %v771
        %v1535 = vunpack.c.h.b16 %v771
        %v1536 = vunpack.c.l.b16 %v772
        %v1537 = vunpack.c.h.b16 %v772
        %v1538 = vunpack.c.l.b16 %v773
        %v1539 = vunpack.c.h.b16 %v773
        %v1540 = vunpack.c.l.b16 %v774
        %v1541 = vunpack.c.h.b16 %v774
        %v1542 = vunpack.c.l.b16 %v775
        %v1543 = vunpack.c.h.b16 %v775
        %v1544 = vunpack.c.l.b16 %v776
        %v1545 = vunpack.c.h.b16 %v776
        %v1546 = vunpack.c.l.b16 %v777
        %v1547 = vunpack.c.h.b16 %v777
        %v1548 = vunpack.c.l.b16 %v778
        %v1549 = vunpack.c.h.b16 %v778
        %v1550 = vunpack.c.l.b16 %v779
        %v1551 = vunpack.c.h.b16 %v779
        %v1552 = vunpack.c.l.b16 %v780
        %v1553 = vunpack.c.h.b16 %v780
        %v1554 = vunpack.c.l.b16 %v781
        %v1555 = vunpack.c.h.b16 %v781
        %v1556 = vunpack.c.l.b16 %v782
        %v1557 = vunpack.c.h.b16 %v782
        %v1558 = vunpack.c.l.b16 %v783
        %v1559 = vunpack.c.h.b16 %v783
        %v1560 = vunpack.c.l.b16 %v784
        %v1561 = vunpack.c.h.b16 %v784
        %v1562 = vunpack.c.l.b16 %v785
        %v1563 = vunpack.c.h.b16 %v785
        %v1564 = vunpack.c.l.b16 %v786
        %v1565 = vunpack.c.h.b16 %v786
        %v1566 = vunpack.c.l.b16 %v787
        %v1567 = vunpack.c.h.b16 %v787
        %v1568 = vunpack.c.l.b16 %v788
        %v1569 = vunpack.c.h.b16 %v788
        %v1570 = vunpack.c.l.b16 %v789
        %v1571 = vunpack.c.h.b16 %v789
        %v1572 = vunpack.c.l.b16 %v790
        %v1573 = vunpack.c.h.b16 %v790
        %v1574 = vunpack.c.l.b16 %v791
        %v1575 = vunpack.c.h.b16 %v791
        %v1576 = vunpack.c.l.b16 %v792
        %v1577 = vunpack.c.h.b16 %v792
        %v1578 = vunpack.c.l.b16 %v793
        %v1579 = vunpack.c.h.b16 %v793
        %v1580 = vunpack.c.l.b16 %v794
        %v1581 = vunpack.c.h.b16 %v794
        %v1582 = vunpack.c.l.b16 %v795
        %v1583 = vunpack.c.h.b16 %v795
        %v1584 = vunpack.c.l.b16 %v796
        %v1585 = vunpack.c.h.b16 %v796
        %v1586 = vunpack.c.l.b16 %v797
        %v1587 = vunpack.c.h.b16 %v797
        %v1588 = vunpack.c.l.b16 %v798
        %v1589 = vunpack.c.h.b16 %v798
        %v1590 = vunpack.c.l.b16 %v799
        %v1591 = vunpack.c.h.b16 %v799
        %v1592 = vunpack.c.l.b16 %v800
        %v1593 = vunpack.c.h.b16 %v800
        %v1594 = vunpack.c.l.b16 %v801
        %v1595 = vunpack.c.h.b16 %v801
        %v1596 = vunpack.c.l.b16 %v802
        %v1597 = vunpack.c.h.b16 %v802
        %v1598 = vunpack.c.l.b16 %v803
        %v1599 = vunpack.c.h.b16 %v803
        %v1600 = vunpack.c.l.b16 %v804
        %v1601 = vunpack.c.h.b16 %v804
        %v1602 = vunpack.c.l.b16 %v805
        %v1603 = vunpack.c.h.b16 %v805
        %v1604 = vunpack.c.l.b16 %v806
        %v1605 = vunpack.c.h.b16 %v806
        %v1606 = vunpack.c.l.b16 %v807
        %v1607 = vunpack.c.h.b16 %v807
        %v1608 = vunpack.c.l.b16 %v808
        %v1609 = vunpack.c.h.b16 %v808
        %v1610 = vunpack.c.l.b16 %v809
        %v1611 = vunpack.c.h.b16 %v809
        %v1612 = vunpack.c.l.b16 %v810
        %v1613 = vunpack.c.h.b16 %v810
        %v1614 = vunpack.c.l.b16 %v811
        %v1615 = vunpack.c.h.b16 %v811
        %v1616 = vunpack.c.l.b16 %v812
        %v1617 = vunpack.c.h.b16 %v812
        %v1618 = vunpack.c.l.b16 %v813
        %v1619 = vunpack.c.h.b16 %v813
        %v1620 = vunpack.c.l.b16 %v814
        %v1621 = vunpack.c.h.b16 %v814
        %v1622 = vunpack.c.l.b16 %v815
        %v1623 = vunpack.c.h.b16 %v815
        %v1624 = vunpack.c.l.b16 %v816
        %v1625 = vunpack.c.h.b16 %v816
        %v1626 = vunpack.c.l.b16 %v817
        %v1627 = vunpack.c.h.b16 %v817
        %v1628 = vunpack.c.l.b16 %v818
        %v1629 = vunpack.c.h.b16 %v818
        %v1630 = vunpack.c.l.b16 %v819
        %v1631 = vunpack.c.h.b16 %v819
        %v1632 = vunpack.c.l.b16 %v820
        %v1633 = vunpack.c.h.b16 %v820
        %v1634 = vunpack.c.l.b16 %v821
        %v1635 = vunpack.c.h.b16 %v821
        %v1636 = vunpack.c.l.b16 %v822
        %v1637 = vunpack.c.h.b16 %v822
        %v1638 = vunpack.c.l.b16 %v823
        %v1639 = vunpack.c.h.b16 %v823
        %v1640 = vunpack.c.l.b16 %v824
        %v1641 = vunpack.c.h.b16 %v824
        %v1642 = vunpack.c.l.b16 %v825
        %v1643 = vunpack.c.h.b16 %v825
        %v1644 = vunpack.c.l.b16 %v826
        %v1645 = vunpack.c.h.b16 %v826
        %v1646 = vunpack.c.l.b16 %v827
        %v1647 = vunpack.c.h.b16 %v827
        %v1648 = vunpack.c.l.b16 %v828
        %v1649 = vunpack.c.h.b16 %v828
        %v1650 = vunpack.c.l.b16 %v829
        %v1651 = vunpack.c.h.b16 %v829
        %v1652 = vunpack.c.l.b16 %v830
        %v1653 = vunpack.c.h.b16 %v830
        %v1654 = vunpack.c.l.b16 %v831
        %v1655 = vunpack.c.h.b16 %v831
        %v1656 = vunpack.c.l.b16 %v832
        %v1657 = vunpack.c.h.b16 %v832
        %v1658 = vunpack.c.l.b16 %v833
        %v1659 = vunpack.c.h.b16 %v833
        %v1660 = vunpack.c.l.b16 %v834
        %v1661 = vunpack.c.h.b16 %v834
        %v1662 = vunpack.c.l.b16 %v835
        %v1663 = vunpack.c.h.b16 %v835
        %v1664 = vunpack.c.l.b16 %v836
        %v1665 = vunpack.c.h.b16 %v836
        %v1666 = vunpack.c.l.b16 %v837
        %v1667 = vunpack.c.h.b16 %v837
        %v1668 = vunpack.c.l.b16 %v838
        %v1669 = vunpack.c.h.b16 %v838
        %v1670 = vunpack.c.l.b16 %v839
        %v1671 = vunpack.c.h.b16 %v839
        %v1672 = vunpack.c.l.b16 %v840
        %v1673 = vunpack.c.h.b16 %v840
        %v1674 = vunpack.c.l.b16 %v841
        %v1675 = vunpack.c.h.b16 %v841
        %v1676 = vunpack.c.l.b16 %v842
        %v1677 = vunpack.c.h.b16 %v842
        %v1678 = vunpack.c.l.b16 %v843
        %v1679 = vunpack.c.h.b16 %v843
        %v1680 = vunpack.c.l.b16 %v844
        %v1681 = vunpack.c.h.b16 %v844
        %v1682 = vunpack.c.l.b16 %v845
        %v1683 = vunpack.c.h.b16 %v845
        %v1684 = vunpack.c.l.b16 %v846
        %v1685 = vunpack.c.h.b16 %v846
        %v1686 = vunpack.c.l.b16 %v847
        %v1687 = vunpack.c.h.b16 %v847
        %v1688 = vunpack.c.l.b16 %v848
        %v1689 = vunpack.c.h.b16 %v848
        %v1690 = vunpack.c.l.b16 %v849
        %v1691 = vunpack.c.h.b16 %v849
        %v1692 = vunpack.c.l.b16 %v850
        %v1693 = vunpack.c.h.b16 %v850
        %v1694 = vunpack.c.l.b16 %v851
        %v1695 = vunpack.c.h.b16 %v851
        %v1696 = vunpack.c.l.b16 %v852
        %v1697 = vunpack.c.h.b16 %v852
        %v1698 = vunpack.c.l.b16 %v853
        %v1699 = vunpack.c.h.b16 %v853
        %v1700 = vunpack.c.l.b16 %v854
        %v1701 = vunpack.c.h.b16 %v854
        %v1702 = vunpack.c.l.b16 %v855
        %v1703 = vunpack.c.h.b16 %v855
        %v1704 = vunpack.c.l.b16 %v856
        %v1705 = vunpack.c.h.b16 %v856
        %v1706 = vunpack.c.l.b16 %v857
        %v1707 = vunpack.c.h.b16 %v857
        %v1708 = vunpack.c.l.b16 %v858
        %v1709 = vunpack.c.h.b16 %v858
        %v1710 = vunpack.c.l.b16 %v859
        %v1711 = vunpack.c.h.b16 %v859
        %v1712 = vunpack.c.l.b16 %v860
        %v1713 = vunpack.c.h.b16 %v860
        %v1714 = vunpack.c.l.b16 %v861
        %v1715 = vunpack.c.h.b16 %v861
        %v1716 = vunpack.c.l.b16 %v862
        %v1717 = vunpack.c.h.b16 %v862
        %v1718 = vunpack.c.l.b16 %v863
        %v1719 = vunpack.c.h.b16 %v863
        %v1720 = vunpack.c.l.b16 %v864
        %v1721 = vunpack.c.h.b16 %v864
        %v1722 = vunpack.c.l.b16 %v865
        %v1723 = vunpack.c.h.b16 %v865
        %v1724 = vunpack.c.l.b16 %v866
        %v1725 = vunpack.c.h.b16 %v866
        %v1726 = vunpack.c.l.b16 %v867
        %v1727 = vunpack.c.h.b16 %v867
        %v1728 = vunpack.c.l.b16 %v868
        %v1729 = vunpack.c.h.b16 %v868
        %v1730 = vunpack.c.l.b16 %v869
        %v1731 = vunpack.c.h.b16 %v869
        %v1732 = vunpack.c.l.b16 %v870
        %v1733 = vunpack.c.h.b16 %v870
        %v1734 = vunpack.c.l.b16 %v871
        %v1735 = vunpack.c.h.b16 %v871
        %v1736 = vunpack.c.l.b16 %v872
        %v1737 = vunpack.c.h.b16 %v872
        %v1738 = vunpack.c.l.b16 %v873
        %v1739 = vunpack.c.h.b16 %v873
        %v1740 = vunpack.c.l.b16 %v874
        %v1741 = vunpack.c.h.b16 %v874
        %v1742 = vunpack.c.l.b16 %v875
        %v1743 = vunpack.c.h.b16 %v875
        %v1744 = vunpack.c.l.b16 %v876
        %v1745 = vunpack.c.h.b16 %v876
        %v1746 = vunpack.c.l.b16 %v877
        %v1747 = vunpack.c.h.b16 %v877
        %v1748 = vunpack.c.l.b16 %v878
        %v1749 = vunpack.c.h.b16 %v878
        %v1750 = vunpack.c.l.b16 %v879
        %v1751 = vunpack.c.h.b16 %v879
        %v1752 = vunpack.c.l.b16 %v880
        %v1753 = vunpack.c.h.b16 %v880
        %v1754 = vunpack.c.l.b16 %v881
        %v1755 = vunpack.c.h.b16 %v881
        %v1756 = vunpack.c.l.b16 %v882
        %v1757 = vunpack.c.h.b16 %v882
        %v1758 = vunpack.c.l.b16 %v883
        %v1759 = vunpack.c.h.b16 %v883
        %v1760 = vunpack.c.l.b16 %v884
        %v1761 = vunpack.c.h.b16 %v884
        %v1762 = vunpack.c.l.b16 %v885
        %v1763 = vunpack.c.h.b16 %v885
        %v1764 = vunpack.c.l.b16 %v886
        %v1765 = vunpack.c.h.b16 %v886
        %v1766 = vunpack.c.l.b16 %v887
        %v1767 = vunpack.c.h.b16 %v887
        %v1768 = vunpack.c.l.b16 %v888
        %v1769 = vunpack.c.h.b16 %v888
        %v1770 = vunpack.c.l.b16 %v889
        %v1771 = vunpack.c.h.b16 %v889
        %v1772 = vunpack.c.l.b16 %v890
        %v1773 = vunpack.c.h.b16 %v890
        %v1774 = vunpack.c.l.b16 %v891
        %v1775 = vunpack.c.h.b16 %v891
        %v1776 = vunpack.c.l.b16 %v892
        %v1777 = vunpack.c.h.b16 %v892
        %v1778 = vunpack.c.l.b16 %v893
        %v1779 = vunpack.c.h.b16 %v893
        %v1780 = vunpack.c.l.b16 %v894
        %v1781 = vunpack.c.h.b16 %v894
        %v1782 = vunpack.c.l.b16 %v895
        %v1783 = vunpack.c.h.b16 %v895
        %v1784 = vunpack.c.l.b16 %v896
        %v1785 = vunpack.c.h.b16 %v896
        %v1786 = vunpack.c.l.b16 %v897
        %v1787 = vunpack.c.h.b16 %v897
        %v1788 = vunpack.c.l.b16 %v898
        %v1789 = vunpack.c.h.b16 %v898
        %v1790 = vunpack.c.l.b16 %v899
        %v1791 = vunpack.c.h.b16 %v899
        %v1792 = vunpack.c.l.b16 %v900
        %v1793 = vunpack.c.h.b16 %v900
        %v1794 = vunpack.c.l.b16 %v901
        %v1795 = vunpack.c.h.b16 %v901
        %v1796 = vpack.c.b16 %v1226, %v1220
        %v1797 = vpack.c.b16 %v1227, %v1221
        %v1798 = vpack.c.b16 %v1228, %v1222
        %v1799 = vpack.c.b16 %v1229, %v1223
        %v1800 = vpack.c.b16 %v1230, %v1224
        %v1801 = vpack.c.b16 %v1231, %v1225
        %v1802 = vpack.c.b16 %v1238, %v1232
        %v1803 = vpack.c.b16 %v1239, %v1233
        %v1804 = vpack.c.b16 %v1240, %v1234
        %v1805 = vpack.c.b16 %v1241, %v1235
        %v1806 = vpack.c.b16 %v1242, %v1236
        %v1807 = vpack.c.b16 %v1243, %v1237
        %v1808 = vpack.c.b16 %v1250, %v1244
        %v1809 = vpack.c.b16 %v1251, %v1245
        %v1810 = vpack.c.b16 %v1252, %v1246
        %v1811 = vpack.c.b16 %v1253, %v1247
        %v1812 = vpack.c.b16 %v1254, %v1248
        %v1813 = vpack.c.b16 %v1255, %v1249
        %v1814 = vpack.c.b16 %v1262, %v1256
        %v1815 = vpack.c.b16 %v1263, %v1257
        %v1816 = vpack.c.b16 %v1264, %v1258
        %v1817 = vpack.c.b16 %v1265, %v1259
        %v1818 = vpack.c.b16 %v1266, %v1260
        %v1819 = vpack.c.b16 %v1267, %v1261
        %v1820 = vpack.c.b16 %v1274, %v1268
        %v1821 = vpack.c.b16 %v1275, %v1269
        %v1822 = vpack.c.b16 %v1276, %v1270
        %v1823 = vpack.c.b16 %v1277, %v1271
        %v1824 = vpack.c.b16 %v1278, %v1272
        %v1825 = vpack.c.b16 %v1279, %v1273
        %v1826 = vpack.c.b16 %v1286, %v1280
        %v1827 = vpack.c.b16 %v1287, %v1281
        %v1828 = vpack.c.b16 %v1288, %v1282
        %v1829 = vpack.c.b16 %v1289, %v1283
        %v1830 = vpack.c.b16 %v1290, %v1284
        %v1831 = vpack.c.b16 %v1291, %v1285
        %v1832 = vpack.c.b16 %v1298, %v1292
        %v1833 = vpack.c.b16 %v1299, %v1293
        %v1834 = vpack.c.b16 %v1300, %v1294
        %v1835 = vpack.c.b16 %v1301, %v1295
        %v1836 = vpack.c.b16 %v1302, %v1296
        %v1837 = vpack.c.b16 %v1303, %v1297
        %v1838 = vpack.c.b16 %v1310, %v1304
        %v1839 = vpack.c.b16 %v1311, %v1305
        %v1840 = vpack.c.b16 %v1312, %v1306
        %v1841 = vpack.c.b16 %v1313, %v1307
        %v1842 = vpack.c.b16 %v1314, %v1308
        %v1843 = vpack.c.b16 %v1315, %v1309
        %v1844 = vpack.c.b16 %v1322, %v1316
        %v1845 = vpack.c.b16 %v1323, %v1317
        %v1846 = vpack.c.b16 %v1324, %v1318
        %v1847 = vpack.c.b16 %v1325, %v1319
        %v1848 = vpack.c.b16 %v1326, %v1320
        %v1849 = vpack.c.b16 %v1327, %v1321
        %v1850 = vpack.c.b16 %v1334, %v1328
        %v1851 = vpack.c.b16 %v1335, %v1329
        %v1852 = vpack.c.b16 %v1336, %v1330
        %v1853 = vpack.c.b16 %v1337, %v1331
        %v1854 = vpack.c.b16 %v1338, %v1332
        %v1855 = vpack.c.b16 %v1339, %v1333
        %v1856 = vpack.c.b16 %v1346, %v1340
        %v1857 = vpack.c.b16 %v1347, %v1341
        %v1858 = vpack.c.b16 %v1348, %v1342
        %v1859 = vpack.c.b16 %v1349, %v1343
        %v1860 = vpack.c.b16 %v1350, %v1344
        %v1861 = vpack.c.b16 %v1351, %v1345
        %v1862 = vpack.c.b16 %v1358, %v1352
        %v1863 = vpack.c.b16 %v1359, %v1353
        %v1864 = vpack.c.b16 %v1360, %v1354
        %v1865 = vpack.c.b16 %v1361, %v1355
        %v1866 = vpack.c.b16 %v1362, %v1356
        %v1867 = vpack.c.b16 %v1363, %v1357
        %v1868 = vpack.c.b16 %v1370, %v1364
        %v1869 = vpack.c.b16 %v1371, %v1365
        %v1870 = vpack.c.b16 %v1372, %v1366
        %v1871 = vpack.c.b16 %v1373, %v1367
        %v1872 = vpack.c.b16 %v1374, %v1368
        %v1873 = vpack.c.b16 %v1375, %v1369
        %v1874 = vpack.c.b16 %v1382, %v1376
        %v1875 = vpack.c.b16 %v1383, %v1377
        %v1876 = vpack.c.b16 %v1384, %v1378
        %v1877 = vpack.c.b16 %v1385, %v1379
        %v1878 = vpack.c.b16 %v1386, %v1380
        %v1879 = vpack.c.b16 %v1387, %v1381
        %v1880 = vpack.c.b16 %v1394, %v1388
        %v1881 = vpack.c.b16 %v1395, %v1389
        %v1882 = vpack.c.b16 %v1396, %v1390
        %v1883 = vpack.c.b16 %v1397, %v1391
        %v1884 = vpack.c.b16 %v1398, %v1392
        %v1885 = vpack.c.b16 %v1399, %v1393
        %v1886 = vpack.c.b16 %v1406, %v1400
        %v1887 = vpack.c.b16 %v1407, %v1401
        %v1888 = vpack.c.b16 %v1408, %v1402
        %v1889 = vpack.c.b16 %v1409, %v1403
        %v1890 = vpack.c.b16 %v1410, %v1404
        %v1891 = vpack.c.b16 %v1411, %v1405
        %v1892 = vpack.c.b16 %v1418, %v1412
        %v1893 = vpack.c.b16 %v1419, %v1413
        %v1894 = vpack.c.b16 %v1420, %v1414
        %v1895 = vpack.c.b16 %v1421, %v1415
        %v1896 = vpack.c.b16 %v1422, %v1416
        %v1897 = vpack.c.b16 %v1423, %v1417
        %v1898 = vpack.c.b16 %v1430, %v1424
        %v1899 = vpack.c.b16 %v1431, %v1425
        %v1900 = vpack.c.b16 %v1432, %v1426
        %v1901 = vpack.c.b16 %v1433, %v1427
        %v1902 = vpack.c.b16 %v1434, %v1428
        %v1903 = vpack.c.b16 %v1435, %v1429
        %v1904 = vpack.c.b16 %v1442, %v1436
        %v1905 = vpack.c.b16 %v1443, %v1437
        %v1906 = vpack.c.b16 %v1444, %v1438
        %v1907 = vpack.c.b16 %v1445, %v1439
        %v1908 = vpack.c.b16 %v1446, %v1440
        %v1909 = vpack.c.b16 %v1447, %v1441
        %v1910 = vpack.c.b16 %v1454, %v1448
        %v1911 = vpack.c.b16 %v1455, %v1449
        %v1912 = vpack.c.b16 %v1456, %v1450
        %v1913 = vpack.c.b16 %v1457, %v1451
        %v1914 = vpack.c.b16 %v1458, %v1452
        %v1915 = vpack.c.b16 %v1459, %v1453
        %v1916 = vpack.c.b16 %v1466, %v1460
        %v1917 = vpack.c.b16 %v1467, %v1461
        %v1918 = vpack.c.b16 %v1468, %v1462
        %v1919 = vpack.c.b16 %v1469, %v1463
        %v1920 = vpack.c.b16 %v1470, %v1464
        %v1921 = vpack.c.b16 %v1471, %v1465
        %v1922 = vpack.c.b16 %v1478, %v1472
        %v1923 = vpack.c.b16 %v1479, %v1473
        %v1924 = vpack.c.b16 %v1480, %v1474
        %v1925 = vpack.c.b16 %v1481, %v1475
        %v1926 = vpack.c.b16 %v1482, %v1476
        %v1927 = vpack.c.b16 %v1483, %v1477
        %v1928 = vpack.c.b16 %v1490, %v1484
        %v1929 = vpack.c.b16 %v1491, %v1485
        %v1930 = vpack.c.b16 %v1492, %v1486
        %v1931 = vpack.c.b16 %v1493, %v1487
        %v1932 = vpack.c.b16 %v1494, %v1488
        %v1933 = vpack.c.b16 %v1495, %v1489
        %v1934 = vpack.c.b16 %v1502, %v1496
        %v1935 = vpack.c.b16 %v1503, %v1497
        %v1936 = vpack.c.b16 %v1504, %v1498
        %v1937 = vpack.c.b16 %v1505, %v1499
        %v1938 = vpack.c.b16 %v1506, %v1500
        %v1939 = vpack.c.b16 %v1507, %v1501
        %v1940 = vpack.c.b16 %v1514, %v1508
        %v1941 = vpack.c.b16 %v1515, %v1509
        %v1942 = vpack.c.b16 %v1516, %v1510
        %v1943 = vpack.c.b16 %v1517, %v1511
        %v1944 = vpack.c.b16 %v1518, %v1512
        %v1945 = vpack.c.b16 %v1519, %v1513
        %v1946 = vpack.c.b16 %v1526, %v1520
        %v1947 = vpack.c.b16 %v1527, %v1521
        %v1948 = vpack.c.b16 %v1528, %v1522
        %v1949 = vpack.c.b16 %v1529, %v1523
        %v1950 = vpack.c.b16 %v1530, %v1524
        %v1951 = vpack.c.b16 %v1531, %v1525
        %v1952 = vpack.c.b16 %v1538, %v1532
        %v1953 = vpack.c.b16 %v1539, %v1533
        %v1954 = vpack.c.b16 %v1540, %v1534
        %v1955 = vpack.c.b16 %v1541, %v1535
        %v1956 = vpack.c.b16 %v1542, %v1536
        %v1957 = vpack.c.b16 %v1543, %v1537
        %v1958 = vpack.c.b16 %v1550, %v1544
        %v1959 = vpack.c.b16 %v1551, %v1545
        %v1960 = vpack.c.b16 %v1552, %v1546
        %v1961 = vpack.c.b16 %v1553, %v1547
        %v1962 = vpack.c.b16 %v1554, %v1548
        %v1963 = vpack.c.b16 %v1555, %v1549
        %v1964 = vpack.c.b16 %v1562, %v1556
        %v1965 = vpack.c.b16 %v1563, %v1557
        %v1966 = vpack.c.b16 %v1564, %v1558
        %v1967 = vpack.c.b16 %v1565, %v1559
        %v1968 = vpack.c.b16 %v1566, %v1560
        %v1969 = vpack.c.b16 %v1567, %v1561
        %v1970 = vpack.c.b16 %v1574, %v1568
        %v1971 = vpack.c.b16 %v1575, %v1569
        %v1972 = vpack.c.b16 %v1576, %v1570
        %v1973 = vpack.c.b16 %v1577, %v1571
        %v1974 = vpack.c.b16 %v1578, %v1572
        %v1975 = vpack.c.b16 %v1579, %v1573
        %v1976 = vpack.c.b16 %v1586, %v1580
        %v1977 = vpack.c.b16 %v1587, %v1581
        %v1978 = vpack.c.b16 %v1588, %v1582
        %v1979 = vpack.c.b16 %v1589, %v1583
        %v1980 = vpack.c.b16 %v1590, %v1584
        %v1981 = vpack.c.b16 %v1591, %v1585
        %v1982 = vpack.c.b16 %v1598, %v1592
        %v1983 = vpack.c.b16 %v1599, %v1593
        %v1984 = vpack.c.b16 %v1600, %v1594
        %v1985 = vpack.c.b16 %v1601, %v1595
        %v1986 = vpack.c.b16 %v1602, %v1596
        %v1987 = vpack.c.b16 %v1603, %v1597
        %v1988 = vpack.c.b16 %v1610, %v1604
        %v1989 = vpack.c.b16 %v1611, %v1605
        %v1990 = vpack.c.b16 %v1612, %v1606
        %v1991 = vpack.c.b16 %v1613, %v1607
        %v1992 = vpack.c.b16 %v1614, %v1608
        %v1993 = vpack.c.b16 %v1615, %v1609
        %v1994 = vpack.c.b16 %v1622, %v1616
        %v1995 = vpack.c.b16 %v1623, %v1617
        %v1996 = vpack.c.b16 %v1624, %v1618
        %v1997 = vpack.c.b16 %v1625, %v1619
        %v1998 = vpack.c.b16 %v1626, %v1620
        %v1999 = vpack.c.b16 %v1627, %v1621
        %v2000 = vpack.c.b16 %v1634, %v1628
        %v2001 = vpack.c.b16 %v1635, %v1629
        %v2002 = vpack.c.b16 %v1636, %v1630
        %v2003 = vpack.c.b16 %v1637, %v1631
        %v2004 = vpack.c.b16 %v1638, %v1632
        %v2005 = vpack.c.b16 %v1639, %v1633
        %v2006 = vpack.c.b16 %v1646, %v1640
        %v2007 = vpack.c.b16 %v1647, %v1641
        %v2008 = vpack.c.b16 %v1648, %v1642
        %v2009 = vpack.c.b16 %v1649, %v1643
        %v2010 = vpack.c.b16 %v1650, %v1644
        %v2011 = vpack.c.b16 %v1651, %v1645
        %v2012 = vpack.c.b16 %v1658, %v1652
        %v2013 = vpack.c.b16 %v1659, %v1653
        %v2014 = vpack.c.b16 %v1660, %v1654
        %v2015 = vpack.c.b16 %v1661, %v1655
        %v2016 = vpack.c.b16 %v1662, %v1656
        %v2017 = vpack.c.b16 %v1663, %v1657
        %v2018 = vpack.c.b16 %v1670, %v1664
        %v2019 = vpack.c.b16 %v1671, %v1665
        %v2020 = vpack.c.b16 %v1672, %v1666
        %v2021 = vpack.c.b16 %v1673, %v1667
        %v2022 = vpack.c.b16 %v1674, %v1668
        %v2023 = vpack.c.b16 %v1675, %v1669
        %v2024 = vpack.c.b16 %v1682, %v1676
        %v2025 = vpack.c.b16 %v1683, %v1677
        %v2026 = vpack.c.b16 %v1684, %v1678
        %v2027 = vpack.c.b16 %v1685, %v1679
        %v2028 = vpack.c.b16 %v1686, %v1680
        %v2029 = vpack.c.b16 %v1687, %v1681
        %v2030 = vpack.c.b16 %v1694, %v1688
        %v2031 = vpack.c.b16 %v1695, %v1689
        %v2032 = vpack.c.b16 %v1696, %v1690
        %v2033 = vpack.c.b16 %v1697, %v1691
        %v2034 = vpack.c.b16 %v1698, %v1692
        %v2035 = vpack.c.b16 %v1699, %v1693
        %v2036 = vpack.c.b16 %v1706, %v1700
        %v2037 = vpack.c.b16 %v1707, %v1701
        %v2038 = vpack.c.b16 %v1708, %v1702
        %v2039 = vpack.c.b16 %v1709, %v1703
        %v2040 = vpack.c.b16 %v1710, %v1704
        %v2041 = vpack.c.b16 %v1711, %v1705
        %v2042 = vpack.c.b16 %v1718, %v1712
        %v2043 = vpack.c.b16 %v1719, %v1713
        %v2044 = vpack.c.b16 %v1720, %v1714
        %v2045 = vpack.c.b16 %v1721, %v1715
        %v2046 = vpack.c.b16 %v1722, %v1716
        %v2047 = vpack.c.b16 %v1723, %v1717
        %v2048 = vpack.c.b16 %v1730, %v1724
        %v2049 = vpack.c.b16 %v1731, %v1725
        %v2050 = vpack.c.b16 %v1732, %v1726
        %v2051 = vpack.c.b16 %v1733, %v1727
        %v2052 = vpack.c.b16 %v1734, %v1728
        %v2053 = vpack.c.b16 %v1735, %v1729
        %v2054 = vpack.c.b16 %v1742, %v1736
        %v2055 = vpack.c.b16 %v1743, %v1737
        %v2056 = vpack.c.b16 %v1744, %v1738
        %v2057 = vpack.c.b16 %v1745, %v1739
        %v2058 = vpack.c.b16 %v1746, %v1740
        %v2059 = vpack.c.b16 %v1747, %v1741
        %v2060 = vpack.c.b16 %v1754, %v1748
        %v2061 = vpack.c.b16 %v1755, %v1749
        %v2062 = vpack.c.b16 %v1756, %v1750
        %v2063 = vpack.c.b16 %v1757, %v1751
        %v2064 = vpack.c.b16 %v1758, %v1752
        %v2065 = vpack.c.b16 %v1759, %v1753
        %v2066 = vpack.c.b16 %v1766, %v1760
        %v2067 = vpack.c.b16 %v1767, %v1761
        %v2068 = vpack.c.b16 %v1768, %v1762
        %v2069 = vpack.c.b16 %v1769, %v1763
        %v2070 = vpack.c.b16 %v1770, %v1764
        %v2071 = vpack.c.b16 %v1771, %v1765
        %v2072 = vpack.c.b16 %v1778, %v1772
        %v2073 = vpack.c.b16 %v1779, %v1773
        %v2074 = vpack.c.b16 %v1780, %v1774
        %v2075 = vpack.c.b16 %v1781, %v1775
        %v2076 = vpack.c.b16 %v1782, %v1776
        %v2077 = vpack.c.b16 %v1783, %v1777
        %v2078 = vpack.c.b16 %v1790, %v1784
        %v2079 = vpack.c.b16 %v1791, %v1785
        %v2080 = vpack.c.b16 %v1792, %v1786
        %v2081 = vpack.c.b16 %v1793, %v1787
        %v2082 = vpack.c.b16 %v1794, %v1788
        %v2083 = vpack.c.b16 %v1795, %v1789
        %2372 = vmatprep.subr.bf16.mxu0 %v1797
        %2373 = vmatpush1.bf16.msra.mxu0 %v1796
        %2374 = vmatprep.subr.bf16.mxu0 %v1803
        %2375 = vmatpush1.bf16.msra.mxu0 %v1802
        %2376 = vmatprep.subr.bf16.mxu0 %v1809
        %2377 = vmatpush1.bf16.msra.mxu0 %v1808
        %2378 = vmatprep.subr.bf16.mxu0 %v1815
        %2379 = vmatpush1.bf16.msra.mxu0 %v1814
        %2380 = vmatprep.subr.bf16.mxu0 %v1821
        %2381 = vmatpush1.bf16.msra.mxu0 %v1820
        %2382 = vmatprep.subr.bf16.mxu0 %v1827
        %2383 = vmatpush1.bf16.msra.mxu0 %v1826
        %2384 = vmatprep.subr.bf16.mxu0 %v1833
        %2385 = vmatpush1.bf16.msra.mxu0 %v1832
        %2386 = vmatprep.subr.bf16.mxu0 %v1839
        %2387 = vmatpush1.bf16.msra.mxu0 %v1838
        %2388 = vmatprep.subr.bf16.mxu0 %v1845
        %2389 = vmatpush1.bf16.msra.mxu0 %v1844
        %2390 = vmatprep.subr.bf16.mxu0 %v1851
        %2391 = vmatpush1.bf16.msra.mxu0 %v1850
        %2392 = vmatprep.subr.bf16.mxu0 %v1857
        %2393 = vmatpush1.bf16.msra.mxu0 %v1856
        %2394 = vmatprep.subr.bf16.mxu0 %v1863
        %2395 = vmatpush1.bf16.msra.mxu0 %v1862
        %2396 = vmatprep.subr.bf16.mxu0 %v1869
        %2397 = vmatpush1.bf16.msra.mxu0 %v1868
        %2398 = vmatprep.subr.bf16.mxu0 %v1875
        %2399 = vmatpush1.bf16.msra.mxu0 %v1874
        %2400 = vmatprep.subr.bf16.mxu0 %v1881
        %2401 = vmatpush1.bf16.msra.mxu0 %v1880
        %2402 = vmatprep.subr.bf16.mxu0 %v1887
        %2403 = vmatpush1.bf16.msra.mxu0 %v1886
        %2404 = vmatprep.mubr.bf16.mxu0 %v921
        %2405 = vmatmul.mubr.bf16.gmra.mrb[0].mxu0 %v920
        %v2406 = vpop.f32.mrb[0].mxu0
        %v2407 = vadd.f32 0.0, %v2406
        %v2408 = vpop.f32.mrb[0].mxu0
        %v2409 = vadd.f32 0.0, %v2408
        %v2410 = vpop.f32.mrb[0].mxu0
        %v2411 = vadd.f32 0.0, %v2410
        %v2412 = vpop.f32.mrb[0].mxu0
        %v2413 = vadd.f32 0.0, %v2412
        %2414 = vdwg.mxu0
        %2415 = vmatprep.subr.bf16.mxu0 %v1893
        %2416 = vmatpush1.bf16.msra.mxu0 %v1892
        %2417 = vmatprep.subr.bf16.mxu0 %v1899
        %2418 = vmatpush1.bf16.msra.mxu0 %v1898
        %2419 = vmatprep.subr.bf16.mxu0 %v1905
        %2420 = vmatpush1.bf16.msra.mxu0 %v1904
        %2421 = vmatprep.subr.bf16.mxu0 %v1911
        %2422 = vmatpush1.bf16.msra.mxu0 %v1910
        %2423 = vmatprep.subr.bf16.mxu0 %v1917
        %2424 = vmatpush1.bf16.msra.mxu0 %v1916
        %2425 = vmatprep.subr.bf16.mxu0 %v1923
        %2426 = vmatpush1.bf16.msra.mxu0 %v1922
        %2427 = vmatprep.subr.bf16.mxu0 %v1929
        %2428 = vmatpush1.bf16.msra.mxu0 %v1928
        %2429 = vmatprep.subr.bf16.mxu0 %v1935
        %2430 = vmatpush1.bf16.msra.mxu0 %v1934
        %2431 = vmatprep.subr.bf16.mxu0 %v1941
        %2432 = vmatpush1.bf16.msra.mxu0 %v1940
        %2433 = vmatprep.subr.bf16.mxu0 %v1947
        %2434 = vmatpush1.bf16.msra.mxu0 %v1946
        %2435 = vmatprep.subr.bf16.mxu0 %v1953
        %2436 = vmatpush1.bf16.msra.mxu0 %v1952
        %2437 = vmatprep.subr.bf16.mxu0 %v1959
        %2438 = vmatpush1.bf16.msra.mxu0 %v1958
        %2439 = vmatprep.subr.bf16.mxu0 %v1965
        %2440 = vmatpush1.bf16.msra.mxu0 %v1964
        %2441 = vmatprep.subr.bf16.mxu0 %v1971
        %2442 = vmatpush1.bf16.msra.mxu0 %v1970
        %2443 = vmatprep.subr.bf16.mxu0 %v1977
        %2444 = vmatpush1.bf16.msra.mxu0 %v1976
        %2445 = vmatprep.subr.bf16.mxu0 %v1983
        %2446 = vmatpush1.bf16.msra.mxu0 %v1982
        %2447 = vmatprep.mubr.bf16.mxu0 %v923
        %2448 = vmatmul.mubr.bf16.gmra.mrb[0].mxu0 %v922
        %v2449 = vpop.f32.mrb[0].mxu0
        %v2450 = vadd.f32 %v2407, %v2449
        %v2451 = vpop.f32.mrb[0].mxu0
        %v2452 = vadd.f32 %v2409, %v2451
        %v2453 = vpop.f32.mrb[0].mxu0
        %v2454 = vadd.f32 %v2411, %v2453
        %v2455 = vpop.f32.mrb[0].mxu0
        %v2456 = vadd.f32 %v2413, %v2455
        %2457 = vdwg.mxu0
        %2458 = vmatprep.subr.bf16.mxu0 %v1989
        %2459 = vmatpush1.bf16.msra.mxu0 %v1988
        %2460 = vmatprep.subr.bf16.mxu0 %v1995
        %2461 = vmatpush1.bf16.msra.mxu0 %v1994
        %2462 = vmatprep.subr.bf16.mxu0 %v2001
        %2463 = vmatpush1.bf16.msra.mxu0 %v2000
        %2464 = vmatprep.subr.bf16.mxu0 %v2007
        %2465 = vmatpush1.bf16.msra.mxu0 %v2006
        %2466 = vmatprep.subr.bf16.mxu0 %v2013
        %2467 = vmatpush1.bf16.msra.mxu0 %v2012
        %2468 = vmatprep.subr.bf16.mxu0 %v2019
        %2469 = vmatpush1.bf16.msra.mxu0 %v2018
        %2470 = vmatprep.subr.bf16.mxu0 %v2025
        %2471 = vmatpush1.bf16.msra.mxu0 %v2024
        %2472 = vmatprep.subr.bf16.mxu0 %v2031
        %2473 = vmatpush1.bf16.msra.mxu0 %v2030
        %2474 = vmatprep.subr.bf16.mxu0 %v2037
        %2475 = vmatpush1.bf16.msra.mxu0 %v2036
        %2476 = vmatprep.subr.bf16.mxu0 %v2043
        %2477 = vmatpush1.bf16.msra.mxu0 %v2042
        %2478 = vmatprep.subr.bf16.mxu0 %v2049
        %2479 = vmatpush1.bf16.msra.mxu0 %v2048
        %2480 = vmatprep.subr.bf16.mxu0 %v2055
        %2481 = vmatpush1.bf16.msra.mxu0 %v2054
        %2482 = vmatprep.subr.bf16.mxu0 %v2061
        %2483 = vmatpush1.bf16.msra.mxu0 %v2060
        %2484 = vmatprep.subr.bf16.mxu0 %v2067
        %2485 = vmatpush1.bf16.msra.mxu0 %v2066
        %2486 = vmatprep.subr.bf16.mxu0 %v2073
        %2487 = vmatpush1.bf16.msra.mxu0 %v2072
        %2488 = vmatprep.subr.bf16.mxu0 %v2079
        %2489 = vmatpush1.bf16.msra.mxu0 %v2078
        %2490 = vmatprep.mubr.bf16.mxu0 %v925
        %2491 = vmatmul.mubr.bf16.gmra.mrb[0].mxu0 %v924
        %v2492 = vpop.f32.mrb[0].mxu0
        %v2493 = vadd.f32 %v2450, %v2492
        %v2494 = vpop.f32.mrb[0].mxu0
        %v2495 = vadd.f32 %v2452, %v2494
        %v2496 = vpop.f32.mrb[0].mxu0
        %v2497 = vadd.f32 %v2454, %v2496
        %v2498 = vpop.f32.mrb[0].mxu0
        %v2499 = vadd.f32 %v2456, %v2498
        %2500 = vdwg.mxu0
        %2501 = vmatprep.subr.bf16.mxu0 %v1799
        %2502 = vmatpush1.bf16.msra.mxu0 %v1798
        %2503 = vmatprep.subr.bf16.mxu0 %v1805
        %2504 = vmatpush1.bf16.msra.mxu0 %v1804
        %2505 = vmatprep.subr.bf16.mxu0 %v1811
        %2506 = vmatpush1.bf16.msra.mxu0 %v1810
        %2507 = vmatprep.subr.bf16.mxu0 %v1817
        %2508 = vmatpush1.bf16.msra.mxu0 %v1816
        %2509 = vmatprep.subr.bf16.mxu0 %v1823
        %2510 = vmatpush1.bf16.msra.mxu0 %v1822
        %2511 = vmatprep.subr.bf16.mxu0 %v1829
        %2512 = vmatpush1.bf16.msra.mxu0 %v1828
        %2513 = vmatprep.subr.bf16.mxu0 %v1835
        %2514 = vmatpush1.bf16.msra.mxu0 %v1834
        %2515 = vmatprep.subr.bf16.mxu0 %v1841
        %2516 = vmatpush1.bf16.msra.mxu0 %v1840
        %2517 = vmatprep.subr.bf16.mxu0 %v1847
        %2518 = vmatpush1.bf16.msra.mxu0 %v1846
        %2519 = vmatprep.subr.bf16.mxu0 %v1853
        %2520 = vmatpush1.bf16.msra.mxu0 %v1852
        %2521 = vmatprep.subr.bf16.mxu0 %v1859
        %2522 = vmatpush1.bf16.msra.mxu0 %v1858
        %2523 = vmatprep.subr.bf16.mxu0 %v1865
        %2524 = vmatpush1.bf16.msra.mxu0 %v1864
        %2525 = vmatprep.subr.bf16.mxu0 %v1871
        %2526 = vmatpush1.bf16.msra.mxu0 %v1870
        %2527 = vmatprep.subr.bf16.mxu0 %v1877
        %2528 = vmatpush1.bf16.msra.mxu0 %v1876
        %2529 = vmatprep.subr.bf16.mxu0 %v1883
        %2530 = vmatpush1.bf16.msra.mxu0 %v1882
        %2531 = vmatprep.subr.bf16.mxu0 %v1889
        %2532 = vmatpush1.bf16.msra.mxu0 %v1888
        %2533 = vmatprep.mubr.bf16.mxu0 %v921
        %2534 = vmatmul.mubr.bf16.gmra.mrb[0].mxu0 %v920
        %v2535 = vpop.f32.mrb[0].mxu0
        %v2536 = vadd.f32 0.0, %v2535
        %v2537 = vpop.f32.mrb[0].mxu0
        %v2538 = vadd.f32 0.0, %v2537
        %v2539 = vpop.f32.mrb[0].mxu0
        %v2540 = vadd.f32 0.0, %v2539
        %v2541 = vpop.f32.mrb[0].mxu0
        %v2542 = vadd.f32 0.0, %v2541
        %2543 = vdwg.mxu0
        %2544 = vmatprep.subr.bf16.mxu0 %v1895
        %2545 = vmatpush1.bf16.msra.mxu0 %v1894
        %2546 = vmatprep.subr.bf16.mxu0 %v1901
        %2547 = vmatpush1.bf16.msra.mxu0 %v1900
        %2548 = vmatprep.subr.bf16.mxu0 %v1907
        %2549 = vmatpush1.bf16.msra.mxu0 %v1906
        %2550 = vmatprep.subr.bf16.mxu0 %v1913
        %2551 = vmatpush1.bf16.msra.mxu0 %v1912
        %2552 = vmatprep.subr.bf16.mxu0 %v1919
        %2553 = vmatpush1.bf16.msra.mxu0 %v1918
        %2554 = vmatprep.subr.bf16.mxu0 %v1925
        %2555 = vmatpush1.bf16.msra.mxu0 %v1924
        %2556 = vmatprep.subr.bf16.mxu0 %v1931
        %2557 = vmatpush1.bf16.msra.mxu0 %v1930
        %2558 = vmatprep.subr.bf16.mxu0 %v1937
        %2559 = vmatpush1.bf16.msra.mxu0 %v1936
        %2560 = vmatprep.subr.bf16.mxu0 %v1943
        %2561 = vmatpush1.bf16.msra.mxu0 %v1942
        %2562 = vmatprep.subr.bf16.mxu0 %v1949
        %2563 = vmatpush1.bf16.msra.mxu0 %v1948
        %2564 = vmatprep.subr.bf16.mxu0 %v1955
        %2565 = vmatpush1.bf16.msra.mxu0 %v1954
        %2566 = vmatprep.subr.bf16.mxu0 %v1961
        %2567 = vmatpush1.bf16.msra.mxu0 %v1960
        %2568 = vmatprep.subr.bf16.mxu0 %v1967
        %2569 = vmatpush1.bf16.msra.mxu0 %v1966
        %2570 = vmatprep.subr.bf16.mxu0 %v1973
        %2571 = vmatpush1.bf16.msra.mxu0 %v1972
        %2572 = vmatprep.subr.bf16.mxu0 %v1979
        %2573 = vmatpush1.bf16.msra.mxu0 %v1978
        %2574 = vmatprep.subr.bf16.mxu0 %v1985
        %2575 = vmatpush1.bf16.msra.mxu0 %v1984
        %2576 = vmatprep.mubr.bf16.mxu0 %v923
        %2577 = vmatmul.mubr.bf16.gmra.mrb[0].mxu0 %v922
        %v2578 = vpop.f32.mrb[0].mxu0
        %v2579 = vadd.f32 %v2536, %v2578
        %v2580 = vpop.f32.mrb[0].mxu0
        %v2581 = vadd.f32 %v2538, %v2580
        %v2582 = vpop.f32.mrb[0].mxu0
        %v2583 = vadd.f32 %v2540, %v2582
        %v2584 = vpop.f32.mrb[0].mxu0
        %v2585 = vadd.f32 %v2542, %v2584
        %2586 = vdwg.mxu0
        %2587 = vmatprep.subr.bf16.mxu0 %v1991
        %2588 = vmatpush1.bf16.msra.mxu0 %v1990
        %2589 = vmatprep.subr.bf16.mxu0 %v1997
        %2590 = vmatpush1.bf16.msra.mxu0 %v1996
        %2591 = vmatprep.subr.bf16.mxu0 %v2003
        %2592 = vmatpush1.bf16.msra.mxu0 %v2002
        %2593 = vmatprep.subr.bf16.mxu0 %v2009
        %2594 = vmatpush1.bf16.msra.mxu0 %v2008
        %2595 = vmatprep.subr.bf16.mxu0 %v2015
        %2596 = vmatpush1.bf16.msra.mxu0 %v2014
        %2597 = vmatprep.subr.bf16.mxu0 %v2021
        %2598 = vmatpush1.bf16.msra.mxu0 %v2020
        %2599 = vmatprep.subr.bf16.mxu0 %v2027
        %2600 = vmatpush1.bf16.msra.mxu0 %v2026
        %2601 = vmatprep.subr.bf16.mxu0 %v2033
        %2602 = vmatpush1.bf16.msra.mxu0 %v2032
        %2603 = vmatprep.subr.bf16.mxu0 %v2039
        %2604 = vmatpush1.bf16.msra.mxu0 %v2038
        %2605 = vmatprep.subr.bf16.mxu0 %v2045
        %2606 = vmatpush1.bf16.msra.mxu0 %v2044
        %2607 = vmatprep.subr.bf16.mxu0 %v2051
        %2608 = vmatpush1.bf16.msra.mxu0 %v2050
        %2609 = vmatprep.subr.bf16.mxu0 %v2057
        %2610 = vmatpush1.bf16.msra.mxu0 %v2056
        %2611 = vmatprep.subr.bf16.mxu0 %v2063
        %2612 = vmatpush1.bf16.msra.mxu0 %v2062
        %2613 = vmatprep.subr.bf16.mxu0 %v2069
        %2614 = vmatpush1.bf16.msra.mxu0 %v2068
        %2615 = vmatprep.subr.bf16.mxu0 %v2075
        %2616 = vmatpush1.bf16.msra.mxu0 %v2074
        %2617 = vmatprep.subr.bf16.mxu0 %v2081
        %2618 = vmatpush1.bf16.msra.mxu0 %v2080
        %2619 = vmatprep.mubr.bf16.mxu0 %v925
        %2620 = vmatmul.mubr.bf16.gmra.mrb[0].mxu0 %v924
        %v2621 = vpop.f32.mrb[0].mxu0
        %v2622 = vadd.f32 %v2579, %v2621
        %v2623 = vpop.f32.mrb[0].mxu0
        %v2624 = vadd.f32 %v2581, %v2623
        %v2625 = vpop.f32.mrb[0].mxu0
        %v2626 = vadd.f32 %v2583, %v2625
        %v2627 = vpop.f32.mrb[0].mxu0
        %v2628 = vadd.f32 %v2585, %v2627
        %2629 = vdwg.mxu0
        %2630 = vmatprep.subr.bf16.mxu0 %v1801
        %2631 = vmatpush1.bf16.msra.mxu0 %v1800
        %2632 = vmatprep.subr.bf16.mxu0 %v1807
        %2633 = vmatpush1.bf16.msra.mxu0 %v1806
        %2634 = vmatprep.subr.bf16.mxu0 %v1813
        %2635 = vmatpush1.bf16.msra.mxu0 %v1812
        %2636 = vmatprep.subr.bf16.mxu0 %v1819
        %2637 = vmatpush1.bf16.msra.mxu0 %v1818
        %2638 = vmatprep.subr.bf16.mxu0 %v1825
        %2639 = vmatpush1.bf16.msra.mxu0 %v1824
        %2640 = vmatprep.subr.bf16.mxu0 %v1831
        %2641 = vmatpush1.bf16.msra.mxu0 %v1830
        %2642 = vmatprep.subr.bf16.mxu0 %v1837
        %2643 = vmatpush1.bf16.msra.mxu0 %v1836
        %2644 = vmatprep.subr.bf16.mxu0 %v1843
        %2645 = vmatpush1.bf16.msra.mxu0 %v1842
        %2646 = vmatprep.subr.bf16.mxu0 %v1849
        %2647 = vmatpush1.bf16.msra.mxu0 %v1848
        %2648 = vmatprep.subr.bf16.mxu0 %v1855
        %2649 = vmatpush1.bf16.msra.mxu0 %v1854
        %2650 = vmatprep.subr.bf16.mxu0 %v1861
        %2651 = vmatpush1.bf16.msra.mxu0 %v1860
        %2652 = vmatprep.subr.bf16.mxu0 %v1867
        %2653 = vmatpush1.bf16.msra.mxu0 %v1866
        %2654 = vmatprep.subr.bf16.mxu0 %v1873
        %2655 = vmatpush1.bf16.msra.mxu0 %v1872
        %2656 = vmatprep.subr.bf16.mxu0 %v1879
        %2657 = vmatpush1.bf16.msra.mxu0 %v1878
        %2658 = vmatprep.subr.bf16.mxu0 %v1885
        %2659 = vmatpush1.bf16.msra.mxu0 %v1884
        %2660 = vmatprep.subr.bf16.mxu0 %v1891
        %2661 = vmatpush1.bf16.msra.mxu0 %v1890
        %2662 = vmatprep.mubr.bf16.mxu0 %v921
        %2663 = vmatmul.mubr.bf16.gmra.mrb[0].mxu0 %v920
        %v2664 = vpop.f32.mrb[0].mxu0
        %v2665 = vadd.f32 0.0, %v2664
        %v2666 = vpop.f32.mrb[0].mxu0
        %v2667 = vadd.f32 0.0, %v2666
        %v2668 = vpop.f32.mrb[0].mxu0
        %v2669 = vadd.f32 0.0, %v2668
        %v2670 = vpop.f32.mrb[0].mxu0
        %v2671 = vadd.f32 0.0, %v2670
        %2672 = vdwg.mxu0
        %2673 = vmatprep.subr.bf16.mxu0 %v1897
        %2674 = vmatpush1.bf16.msra.mxu0 %v1896
        %2675 = vmatprep.subr.bf16.mxu0 %v1903
        %2676 = vmatpush1.bf16.msra.mxu0 %v1902
        %2677 = vmatprep.subr.bf16.mxu0 %v1909
        %2678 = vmatpush1.bf16.msra.mxu0 %v1908
        %2679 = vmatprep.subr.bf16.mxu0 %v1915
        %2680 = vmatpush1.bf16.msra.mxu0 %v1914
        %2681 = vmatprep.subr.bf16.mxu0 %v1921
        %2682 = vmatpush1.bf16.msra.mxu0 %v1920
        %2683 = vmatprep.subr.bf16.mxu0 %v1927
        %2684 = vmatpush1.bf16.msra.mxu0 %v1926
        %2685 = vmatprep.subr.bf16.mxu0 %v1933
        %2686 = vmatpush1.bf16.msra.mxu0 %v1932
        %2687 = vmatprep.subr.bf16.mxu0 %v1939
        %2688 = vmatpush1.bf16.msra.mxu0 %v1938
        %2689 = vmatprep.subr.bf16.mxu0 %v1945
        %2690 = vmatpush1.bf16.msra.mxu0 %v1944
        %2691 = vmatprep.subr.bf16.mxu0 %v1951
        %2692 = vmatpush1.bf16.msra.mxu0 %v1950
        %2693 = vmatprep.subr.bf16.mxu0 %v1957
        %2694 = vmatpush1.bf16.msra.mxu0 %v1956
        %2695 = vmatprep.subr.bf16.mxu0 %v1963
        %2696 = vmatpush1.bf16.msra.mxu0 %v1962
        %2697 = vmatprep.subr.bf16.mxu0 %v1969
        %2698 = vmatpush1.bf16.msra.mxu0 %v1968
        %2699 = vmatprep.subr.bf16.mxu0 %v1975
        %2700 = vmatpush1.bf16.msra.mxu0 %v1974
        %2701 = vmatprep.subr.bf16.mxu0 %v1981
        %2702 = vmatpush1.bf16.msra.mxu0 %v1980
        %2703 = vmatprep.subr.bf16.mxu0 %v1987
        %2704 = vmatpush1.bf16.msra.mxu0 %v1986
        %2705 = vmatprep.mubr.bf16.mxu0 %v923
        %2706 = vmatmul.mubr.bf16.gmra.mrb[0].mxu0 %v922
        %v2707 = vpop.f32.mrb[0].mxu0
        %v2708 = vadd.f32 %v2665, %v2707
        %v2709 = vpop.f32.mrb[0].mxu0
        %v2710 = vadd.f32 %v2667, %v2709
        %v2711 = vpop.f32.mrb[0].mxu0
        %v2712 = vadd.f32 %v2669, %v2711
        %v2713 = vpop.f32.mrb[0].mxu0
        %v2714 = vadd.f32 %v2671, %v2713
        %2715 = vdwg.mxu0
        %2716 = vmatprep.subr.bf16.mxu0 %v1993
        %2717 = vmatpush1.bf16.msra.mxu0 %v1992
        %2718 = vmatprep.subr.bf16.mxu0 %v1999
        %2719 = vmatpush1.bf16.msra.mxu0 %v1998
        %2720 = vmatprep.subr.bf16.mxu0 %v2005
        %2721 = vmatpush1.bf16.msra.mxu0 %v2004
        %2722 = vmatprep.subr.bf16.mxu0 %v2011
        %2723 = vmatpush1.bf16.msra.mxu0 %v2010
        %2724 = vmatprep.subr.bf16.mxu0 %v2017
        %2725 = vmatpush1.bf16.msra.mxu0 %v2016
        %2726 = vmatprep.subr.bf16.mxu0 %v2023
        %2727 = vmatpush1.bf16.msra.mxu0 %v2022
        %2728 = vmatprep.subr.bf16.mxu0 %v2029
        %2729 = vmatpush1.bf16.msra.mxu0 %v2028
        %2730 = vmatprep.subr.bf16.mxu0 %v2035
        %2731 = vmatpush1.bf16.msra.mxu0 %v2034
        %2732 = vmatprep.subr.bf16.mxu0 %v2041
        %2733 = vmatpush1.bf16.msra.mxu0 %v2040
        %2734 = vmatprep.subr.bf16.mxu0 %v2047
        %2735 = vmatpush1.bf16.msra.mxu0 %v2046
        %2736 = vmatprep.subr.bf16.mxu0 %v2053
        %2737 = vmatpush1.bf16.msra.mxu0 %v2052
        %2738 = vmatprep.subr.bf16.mxu0 %v2059
        %2739 = vmatpush1.bf16.msra.mxu0 %v2058
        %2740 = vmatprep.subr.bf16.mxu0 %v2065
        %2741 = vmatpush1.bf16.msra.mxu0 %v2064
        %2742 = vmatprep.subr.bf16.mxu0 %v2071
        %2743 = vmatpush1.bf16.msra.mxu0 %v2070
        %2744 = vmatprep.subr.bf16.mxu0 %v2077
        %2745 = vmatpush1.bf16.msra.mxu0 %v2076
        %2746 = vmatprep.subr.bf16.mxu0 %v2083
        %2747 = vmatpush1.bf16.msra.mxu0 %v2082
        %2748 = vmatprep.mubr.bf16.mxu0 %v925
        %2749 = vmatmul.mubr.bf16.gmra.mrb[0].mxu0 %v924
        %v2750 = vpop.f32.mrb[0].mxu0
        %v2751 = vadd.f32 %v2708, %v2750
        %v2752 = vpop.f32.mrb[0].mxu0
        %v2753 = vadd.f32 %v2710, %v2752
        %v2754 = vpop.f32.mrb[0].mxu0
        %v2755 = vadd.f32 %v2712, %v2754
        %v2756 = vpop.f32.mrb[0].mxu0
        %v2757 = vadd.f32 %v2714, %v2756
        %2758 = vdwg.mxu0
        %v2759 = vadd.f32 %v596, %v2493
        %v2760 = vadd.f32 %v597, %v2495
        %v2761 = vadd.f32 %v598, %v2622
        %v2762 = vadd.f32 %v599, %v2624
        %v2763 = vadd.f32 %v600, %v2751
        %v2764 = vadd.f32 %v601, %v2753
        %v2765 = vadd.f32 %v602, %v2497
        %v2766 = vadd.f32 %v603, %v2499
        %v2767 = vadd.f32 %v604, %v2626
        %v2768 = vadd.f32 %v605, %v2628
        %v2769 = vadd.f32 %v606, %v2755
        %v2770 = vadd.f32 %v607, %v2757
        %2771 = vst [vmem:[#allocation2] sm:$0xff] %v2759
        %2772 = vst [vmem:[#allocation2 + $0x8] sm:$0xff] %v2760
        %2773 = vst [vmem:[#allocation2 + $0x10] sm:$0xff] %v2761
        %2774 = vst [vmem:[#allocation2 + $0x18] sm:$0xff] %v2762
        %2775 = vst [vmem:[#allocation2 + $0x20] sm:$0xff] %v2763
        %2776 = vst [vmem:[#allocation2 + $0x28] sm:$0xff] %v2764
        %2777 = vst [vmem:[#allocation2 + $0x30] sm:$0xff] %v2765
        %2778 = vst [vmem:[#allocation2 + $0x38] sm:$0xff] %v2766
        %2779 = vst [vmem:[#allocation2 + $0x40] sm:$0xff] %v2767
        %2780 = vst [vmem:[#allocation2 + $0x48] sm:$0xff] %v2768
        %2781 = vst [vmem:[#allocation2 + $0x50] sm:$0xff] %v2769
        %2782 = vst [vmem:[#allocation2 + $0x58] sm:$0xff] %v2770
        %p2783 = scmp.eq.s32.totalorder %s38, 2
        // Predicated region
        $region113: #{tpu_custom_call.1} parent=63 // pred_check
          %p2784 = pneg %p2783
        $region114: #{tpu_custom_call.1} parent=63 // pred_check_branch
          %2786 = sbr.rel (%p2784) target = $region116
        $region115: #{tpu_custom_call.1} parent=63 // pred_region
          %v2787 = vld [vmem:[#allocation2] sm:$0xff]
          %v2788 = vld [vmem:[#allocation2 + $0x8] sm:$0xff]
          %v2789 = vld [vmem:[#allocation2 + $0x10] sm:$0xff]
          %v2790 = vld [vmem:[#allocation2 + $0x18] sm:$0xff]
          %v2791 = vld [vmem:[#allocation2 + $0x20] sm:$0xff]
          %v2792 = vld [vmem:[#allocation2 + $0x28] sm:$0xff]
          %v2793 = vld [vmem:[#allocation2 + $0x30] sm:$0xff]
          %v2794 = vld [vmem:[#allocation2 + $0x38] sm:$0xff]
          %v2795 = vld [vmem:[#allocation2 + $0x40] sm:$0xff]
          %v2796 = vld [vmem:[#allocation2 + $0x48] sm:$0xff]
          %v2797 = vld [vmem:[#allocation2 + $0x50] sm:$0xff]
          %v2798 = vld [vmem:[#allocation2 + $0x58] sm:$0xff]
          %v2799 = vld [vmem:[#allocation8] sm:$0x3f]
          %v2801 = vlaneseq
          %v2802 = vshrl.u32 %v2801, 7
          %v2803 = vsub.s32 0, %v2802
          %v2804 = vrot.slane %v2799, %v2803
          %v2805 = vlaneseq
          %v2806 = vshrl.u32 %v2805, 7
          %v2807 = vsub.s32 1, %v2806
          %v2808 = vrot.slane %v2799, %v2807
          %v2809 = vlaneseq
          %v2810 = vshrl.u32 %v2809, 7
          %v2811 = vsub.s32 2, %v2810
          %v2812 = vrot.slane %v2799, %v2811
          %v2813 = vlaneseq
          %v2814 = vshrl.u32 %v2813, 7
          %v2815 = vsub.s32 3, %v2814
          %v2816 = vrot.slane %v2799, %v2815
          %v2817 = vlaneseq
          %v2818 = vshrl.u32 %v2817, 7
          %v2819 = vsub.s32 4, %v2818
          %v2820 = vrot.slane %v2799, %v2819
          %v2821 = vlaneseq
          %v2822 = vshrl.u32 %v2821, 7
          %v2823 = vsub.s32 5, %v2822
          %v2824 = vrot.slane %v2799, %v2823
          %v2831 = vadd.f32 %v2787, %v2804
          %v2832 = vadd.f32 %v2788, %v2808
          %v2833 = vadd.f32 %v2789, %v2812
          %v2834 = vadd.f32 %v2790, %v2816
          %v2835 = vadd.f32 %v2791, %v2820
          %v2836 = vadd.f32 %v2792, %v2824
          %v2837 = vadd.f32 %v2793, %v2804
          %v2838 = vadd.f32 %v2794, %v2808
          %v2839 = vadd.f32 %v2795, %v2812
          %v2840 = vadd.f32 %v2796, %v2816
          %v2841 = vadd.f32 %v2797, %v2820
          %v2842 = vadd.f32 %v2798, %v2824
          %v2843 = vmax.f32 %v2831, 0.0
          %v2844 = vmax.f32 %v2832, 0.0
          %v2845 = vmax.f32 %v2833, 0.0
          %v2846 = vmax.f32 %v2834, 0.0
          %v2847 = vmax.f32 %v2835, 0.0
          %v2848 = vmax.f32 %v2836, 0.0
          %v2849 = vmax.f32 %v2837, 0.0
          %v2850 = vmax.f32 %v2838, 0.0
          %v2851 = vmax.f32 %v2839, 0.0
          %v2852 = vmax.f32 %v2840, 0.0
          %v2853 = vmax.f32 %v2841, 0.0
          %v2854 = vmax.f32 %v2842, 0.0
          %v2855 = vpack.c.bf16 %v2849, %v2843
          %v2856 = vpack.c.bf16 %v2850, %v2844
          %v2857 = vpack.c.bf16 %v2851, %v2845
          %v2858 = vpack.c.bf16 %v2852, %v2846
          %v2859 = vpack.c.bf16 %v2853, %v2847
          %v2860 = vpack.c.bf16 %v2854, %v2848
          %v2861 = vld [vmem:[#allocation9] sm:$0xff]
          %v2862 = vld [vmem:[#allocation9 + $0x8] sm:$0xff]
          %v2863 = vld [vmem:[#allocation9 + $0x10] sm:$0xff]
          %v2864 = vld [vmem:[#allocation9 + $0x18] sm:$0xff]
          %v2865 = vld [vmem:[#allocation9 + $0x20] sm:$0xff]
          %v2866 = vld [vmem:[#allocation9 + $0x28] sm:$0xff]
          %v2867 = vld [vmem:[#allocation9 + $0x30] sm:$0xff]
          %v2868 = vld [vmem:[#allocation9 + $0x38] sm:$0xff]
          %v2869 = vld [vmem:[#allocation9 + $0x40] sm:$0xff]
          %v2870 = vld [vmem:[#allocation9 + $0x48] sm:$0xff]
          %v2871 = vld [vmem:[#allocation9 + $0x50] sm:$0xff]
          %v2872 = vld [vmem:[#allocation9 + $0x58] sm:$0xff]
          %v2873 = vld [vmem:[#allocation9 + $0x60] sm:$0xff]
          %v2874 = vld [vmem:[#allocation9 + $0x68] sm:$0xff]
          %v2875 = vld [vmem:[#allocation9 + $0x70] sm:$0xff]
          %v2876 = vld [vmem:[#allocation9 + $0x78] sm:$0xff]
          %v2877 = vld [vmem:[#allocation9 + $0x80] sm:$0xff]
          %v2878 = vld [vmem:[#allocation9 + $0x88] sm:$0xff]
          %v2879 = vld [vmem:[#allocation9 + $0x90] sm:$0xff]
          %v2880 = vld [vmem:[#allocation9 + $0x98] sm:$0xff]
          %v2881 = vld [vmem:[#allocation9 + $0xa0] sm:$0xff]
          %v2882 = vld [vmem:[#allocation9 + $0xa8] sm:$0xff]
          %v2883 = vld [vmem:[#allocation9 + $0xb0] sm:$0xff]
          %v2884 = vld [vmem:[#allocation9 + $0xb8] sm:$0xff]
          %v2885 = vld [vmem:[#allocation9 + $0xc0] sm:$0xff]
          %v2886 = vld [vmem:[#allocation9 + $0xc8] sm:$0xff]
          %v2887 = vld [vmem:[#allocation9 + $0xd0] sm:$0xff]
          %v2888 = vld [vmem:[#allocation9 + $0xd8] sm:$0xff]
          %v2889 = vld [vmem:[#allocation9 + $0xe0] sm:$0xff]
          %v2890 = vld [vmem:[#allocation9 + $0xe8] sm:$0xff]
          %v2891 = vld [vmem:[#allocation9 + $0xf0] sm:$0xff]
          %v2892 = vld [vmem:[#allocation9 + $0xf8] sm:$0xff]
          %v2893 = vld [vmem:[#allocation9 + $0x100] sm:$0xff]
          %v2894 = vld [vmem:[#allocation9 + $0x108] sm:$0xff]
          %v2895 = vld [vmem:[#allocation9 + $0x110] sm:$0xff]
          %v2896 = vld [vmem:[#allocation9 + $0x118] sm:$0xff]
          %v2897 = vld [vmem:[#allocation9 + $0x120] sm:$0xff]
          %v2898 = vld [vmem:[#allocation9 + $0x128] sm:$0xff]
          %v2899 = vld [vmem:[#allocation9 + $0x130] sm:$0xff]
          %v2900 = vld [vmem:[#allocation9 + $0x138] sm:$0xff]
          %v2901 = vld [vmem:[#allocation9 + $0x140] sm:$0xff]
          %v2902 = vld [vmem:[#allocation9 + $0x148] sm:$0xff]
          %v2903 = vld [vmem:[#allocation9 + $0x150] sm:$0xff]
          %v2904 = vld [vmem:[#allocation9 + $0x158] sm:$0xff]
          %v2905 = vld [vmem:[#allocation9 + $0x160] sm:$0xff]
          %v2906 = vld [vmem:[#allocation9 + $0x168] sm:$0xff]
          %v2907 = vld [vmem:[#allocation9 + $0x170] sm:$0xff]
          %v2908 = vld [vmem:[#allocation9 + $0x178] sm:$0xff]
          %v2909 = vld [vmem:[#allocation9 + $0x180] sm:$0xff]
          %v2910 = vld [vmem:[#allocation9 + $0x188] sm:$0xff]
          %v2911 = vld [vmem:[#allocation9 + $0x190] sm:$0xff]
          %v2912 = vld [vmem:[#allocation9 + $0x198] sm:$0xff]
          %v2913 = vld [vmem:[#allocation9 + $0x1a0] sm:$0xff]
          %v2914 = vld [vmem:[#allocation9 + $0x1a8] sm:$0xff]
          %v2915 = vld [vmem:[#allocation9 + $0x1b0] sm:$0xff]
          %v2916 = vld [vmem:[#allocation9 + $0x1b8] sm:$0xff]
          %v2917 = vld [vmem:[#allocation9 + $0x1c0] sm:$0xff]
          %v2918 = vld [vmem:[#allocation9 + $0x1c8] sm:$0xff]
          %v2919 = vld [vmem:[#allocation9 + $0x1d0] sm:$0xff]
          %v2920 = vld [vmem:[#allocation9 + $0x1d8] sm:$0xff]
          %v2921 = vld [vmem:[#allocation9 + $0x1e0] sm:$0xff]
          %v2922 = vld [vmem:[#allocation9 + $0x1e8] sm:$0xff]
          %v2923 = vld [vmem:[#allocation9 + $0x1f0] sm:$0xff]
          %v2924 = vld [vmem:[#allocation9 + $0x1f8] sm:$0xff]
          %v2925 = vld [vmem:[#allocation9 + $0x200] sm:$0xff]
          %v2926 = vld [vmem:[#allocation9 + $0x208] sm:$0xff]
          %v2927 = vld [vmem:[#allocation9 + $0x210] sm:$0xff]
          %v2928 = vld [vmem:[#allocation9 + $0x218] sm:$0xff]
          %v2929 = vld [vmem:[#allocation9 + $0x220] sm:$0xff]
          %v2930 = vld [vmem:[#allocation9 + $0x228] sm:$0xff]
          %v2931 = vld [vmem:[#allocation9 + $0x230] sm:$0xff]
          %v2932 = vld [vmem:[#allocation9 + $0x238] sm:$0xff]
          %v2933 = vld [vmem:[#allocation9 + $0x240] sm:$0xff]
          %v2934 = vld [vmem:[#allocation9 + $0x248] sm:$0xff]
          %v2935 = vld [vmem:[#allocation9 + $0x250] sm:$0xff]
          %v2936 = vld [vmem:[#allocation9 + $0x258] sm:$0xff]
          %v2937 = vld [vmem:[#allocation9 + $0x260] sm:$0xff]
          %v2938 = vld [vmem:[#allocation9 + $0x268] sm:$0xff]
          %v2939 = vld [vmem:[#allocation9 + $0x270] sm:$0xff]
          %v2940 = vld [vmem:[#allocation9 + $0x278] sm:$0xff]
          %v2941 = vld [vmem:[#allocation9 + $0x280] sm:$0xff]
          %v2942 = vld [vmem:[#allocation9 + $0x288] sm:$0xff]
          %v2943 = vld [vmem:[#allocation9 + $0x290] sm:$0xff]
          %v2944 = vld [vmem:[#allocation9 + $0x298] sm:$0xff]
          %v2945 = vld [vmem:[#allocation9 + $0x2a0] sm:$0xff]
          %v2946 = vld [vmem:[#allocation9 + $0x2a8] sm:$0xff]
          %v2947 = vld [vmem:[#allocation9 + $0x2b0] sm:$0xff]
          %v2948 = vld [vmem:[#allocation9 + $0x2b8] sm:$0xff]
          %v2949 = vld [vmem:[#allocation9 + $0x2c0] sm:$0xff]
          %v2950 = vld [vmem:[#allocation9 + $0x2c8] sm:$0xff]
          %v2951 = vld [vmem:[#allocation9 + $0x2d0] sm:$0xff]
          %v2952 = vld [vmem:[#allocation9 + $0x2d8] sm:$0xff]
          %v2953 = vld [vmem:[#allocation9 + $0x2e0] sm:$0xff]
          %v2954 = vld [vmem:[#allocation9 + $0x2e8] sm:$0xff]
          %v2955 = vld [vmem:[#allocation9 + $0x2f0] sm:$0xff]
          %v2956 = vld [vmem:[#allocation9 + $0x2f8] sm:$0xff]
          %v2957 = vld [vmem:[#allocation11] sm:$0x3]
          %v2959 = vlaneseq
          %v2960 = vshrl.u32 %v2959, 7
          %v2961 = vsub.s32 0, %v2960
          %v2962 = vrot.slane %v2957, %v2961
          %v2963 = vlaneseq
          %v2964 = vshrl.u32 %v2963, 7
          %v2965 = vsub.s32 1, %v2964
          %v2966 = vrot.slane %v2957, %v2965
          %v3065 = vunpack.c.l.b16 %v2861
          %v3066 = vunpack.c.h.b16 %v2861
          %v3067 = vunpack.c.l.b16 %v2862
          %v3068 = vunpack.c.h.b16 %v2862
          %v3069 = vunpack.c.l.b16 %v2863
          %v3070 = vunpack.c.h.b16 %v2863
          %v3071 = vunpack.c.l.b16 %v2864
          %v3072 = vunpack.c.h.b16 %v2864
          %v3073 = vunpack.c.l.b16 %v2865
          %v3074 = vunpack.c.h.b16 %v2865
          %v3075 = vunpack.c.l.b16 %v2866
          %v3076 = vunpack.c.h.b16 %v2866
          %v3077 = vunpack.c.l.b16 %v2867
          %v3078 = vunpack.c.h.b16 %v2867
          %v3079 = vunpack.c.l.b16 %v2868
          %v3080 = vunpack.c.h.b16 %v2868
          %v3081 = vunpack.c.l.b16 %v2869
          %v3082 = vunpack.c.h.b16 %v2869
          %v3083 = vunpack.c.l.b16 %v2870
          %v3084 = vunpack.c.h.b16 %v2870
          %v3085 = vunpack.c.l.b16 %v2871
          %v3086 = vunpack.c.h.b16 %v2871
          %v3087 = vunpack.c.l.b16 %v2872
          %v3088 = vunpack.c.h.b16 %v2872
          %v3089 = vunpack.c.l.b16 %v2873
          %v3090 = vunpack.c.h.b16 %v2873
          %v3091 = vunpack.c.l.b16 %v2874
          %v3092 = vunpack.c.h.b16 %v2874
          %v3093 = vunpack.c.l.b16 %v2875
          %v3094 = vunpack.c.h.b16 %v2875
          %v3095 = vunpack.c.l.b16 %v2876
          %v3096 = vunpack.c.h.b16 %v2876
          %v3097 = vunpack.c.l.b16 %v2877
          %v3098 = vunpack.c.h.b16 %v2877
          %v3099 = vunpack.c.l.b16 %v2878
          %v3100 = vunpack.c.h.b16 %v2878
          %v3101 = vunpack.c.l.b16 %v2879
          %v3102 = vunpack.c.h.b16 %v2879
          %v3103 = vunpack.c.l.b16 %v2880
          %v3104 = vunpack.c.h.b16 %v2880
          %v3105 = vunpack.c.l.b16 %v2881
          %v3106 = vunpack.c.h.b16 %v2881
          %v3107 = vunpack.c.l.b16 %v2882
          %v3108 = vunpack.c.h.b16 %v2882
          %v3109 = vunpack.c.l.b16 %v2883
          %v3110 = vunpack.c.h.b16 %v2883
          %v3111 = vunpack.c.l.b16 %v2884
          %v3112 = vunpack.c.h.b16 %v2884
          %v3113 = vunpack.c.l.b16 %v2885
          %v3114 = vunpack.c.h.b16 %v2885
          %v3115 = vunpack.c.l.b16 %v2886
          %v3116 = vunpack.c.h.b16 %v2886
          %v3117 = vunpack.c.l.b16 %v2887
          %v3118 = vunpack.c.h.b16 %v2887
          %v3119 = vunpack.c.l.b16 %v2888
          %v3120 = vunpack.c.h.b16 %v2888
          %v3121 = vunpack.c.l.b16 %v2889
          %v3122 = vunpack.c.h.b16 %v2889
          %v3123 = vunpack.c.l.b16 %v2890
          %v3124 = vunpack.c.h.b16 %v2890
          %v3125 = vunpack.c.l.b16 %v2891
          %v3126 = vunpack.c.h.b16 %v2891
          %v3127 = vunpack.c.l.b16 %v2892
          %v3128 = vunpack.c.h.b16 %v2892
          %v3129 = vunpack.c.l.b16 %v2893
          %v3130 = vunpack.c.h.b16 %v2893
          %v3131 = vunpack.c.l.b16 %v2894
          %v3132 = vunpack.c.h.b16 %v2894
          %v3133 = vunpack.c.l.b16 %v2895
          %v3134 = vunpack.c.h.b16 %v2895
          %v3135 = vunpack.c.l.b16 %v2896
          %v3136 = vunpack.c.h.b16 %v2896
          %v3137 = vunpack.c.l.b16 %v2897
          %v3138 = vunpack.c.h.b16 %v2897
          %v3139 = vunpack.c.l.b16 %v2898
          %v3140 = vunpack.c.h.b16 %v2898
          %v3141 = vunpack.c.l.b16 %v2899
          %v3142 = vunpack.c.h.b16 %v2899
          %v3143 = vunpack.c.l.b16 %v2900
          %v3144 = vunpack.c.h.b16 %v2900
          %v3145 = vunpack.c.l.b16 %v2901
          %v3146 = vunpack.c.h.b16 %v2901
          %v3147 = vunpack.c.l.b16 %v2902
          %v3148 = vunpack.c.h.b16 %v2902
          %v3149 = vunpack.c.l.b16 %v2903
          %v3150 = vunpack.c.h.b16 %v2903
          %v3151 = vunpack.c.l.b16 %v2904
          %v3152 = vunpack.c.h.b16 %v2904
          %v3153 = vunpack.c.l.b16 %v2905
          %v3154 = vunpack.c.h.b16 %v2905
          %v3155 = vunpack.c.l.b16 %v2906
          %v3156 = vunpack.c.h.b16 %v2906
          %v3157 = vunpack.c.l.b16 %v2907
          %v3158 = vunpack.c.h.b16 %v2907
          %v3159 = vunpack.c.l.b16 %v2908
          %v3160 = vunpack.c.h.b16 %v2908
          %v3161 = vunpack.c.l.b16 %v2909
          %v3162 = vunpack.c.h.b16 %v2909
          %v3163 = vunpack.c.l.b16 %v2910
          %v3164 = vunpack.c.h.b16 %v2910
          %v3165 = vunpack.c.l.b16 %v2911
          %v3166 = vunpack.c.h.b16 %v2911
          %v3167 = vunpack.c.l.b16 %v2912
          %v3168 = vunpack.c.h.b16 %v2912
          %v3169 = vunpack.c.l.b16 %v2913
          %v3170 = vunpack.c.h.b16 %v2913
          %v3171 = vunpack.c.l.b16 %v2914
          %v3172 = vunpack.c.h.b16 %v2914
          %v3173 = vunpack.c.l.b16 %v2915
          %v3174 = vunpack.c.h.b16 %v2915
          %v3175 = vunpack.c.l.b16 %v2916
          %v3176 = vunpack.c.h.b16 %v2916
          %v3177 = vunpack.c.l.b16 %v2917
          %v3178 = vunpack.c.h.b16 %v2917
          %v3179 = vunpack.c.l.b16 %v2918
          %v3180 = vunpack.c.h.b16 %v2918
          %v3181 = vunpack.c.l.b16 %v2919
          %v3182 = vunpack.c.h.b16 %v2919
          %v3183 = vunpack.c.l.b16 %v2920
          %v3184 = vunpack.c.h.b16 %v2920
          %v3185 = vunpack.c.l.b16 %v2921
          %v3186 = vunpack.c.h.b16 %v2921
          %v3187 = vunpack.c.l.b16 %v2922
          %v3188 = vunpack.c.h.b16 %v2922
          %v3189 = vunpack.c.l.b16 %v2923
          %v3190 = vunpack.c.h.b16 %v2923
          %v3191 = vunpack.c.l.b16 %v2924
          %v3192 = vunpack.c.h.b16 %v2924
          %v3193 = vunpack.c.l.b16 %v2925
          %v3194 = vunpack.c.h.b16 %v2925
          %v3195 = vunpack.c.l.b16 %v2926
          %v3196 = vunpack.c.h.b16 %v2926
          %v3197 = vunpack.c.l.b16 %v2927
          %v3198 = vunpack.c.h.b16 %v2927
          %v3199 = vunpack.c.l.b16 %v2928
          %v3200 = vunpack.c.h.b16 %v2928
          %v3201 = vunpack.c.l.b16 %v2929
          %v3202 = vunpack.c.h.b16 %v2929
          %v3203 = vunpack.c.l.b16 %v2930
          %v3204 = vunpack.c.h.b16 %v2930
          %v3205 = vunpack.c.l.b16 %v2931
          %v3206 = vunpack.c.h.b16 %v2931
          %v3207 = vunpack.c.l.b16 %v2932
          %v3208 = vunpack.c.h.b16 %v2932
          %v3209 = vunpack.c.l.b16 %v2933
          %v3210 = vunpack.c.h.b16 %v2933
          %v3211 = vunpack.c.l.b16 %v2934
          %v3212 = vunpack.c.h.b16 %v2934
          %v3213 = vunpack.c.l.b16 %v2935
          %v3214 = vunpack.c.h.b16 %v2935
          %v3215 = vunpack.c.l.b16 %v2936
          %v3216 = vunpack.c.h.b16 %v2936
          %v3217 = vunpack.c.l.b16 %v2937
          %v3218 = vunpack.c.h.b16 %v2937
          %v3219 = vunpack.c.l.b16 %v2938
          %v3220 = vunpack.c.h.b16 %v2938
          %v3221 = vunpack.c.l.b16 %v2939
          %v3222 = vunpack.c.h.b16 %v2939
          %v3223 = vunpack.c.l.b16 %v2940
          %v3224 = vunpack.c.h.b16 %v2940
          %v3225 = vunpack.c.l.b16 %v2941
          %v3226 = vunpack.c.h.b16 %v2941
          %v3227 = vunpack.c.l.b16 %v2942
          %v3228 = vunpack.c.h.b16 %v2942
          %v3229 = vunpack.c.l.b16 %v2943
          %v3230 = vunpack.c.h.b16 %v2943
          %v3231 = vunpack.c.l.b16 %v2944
          %v3232 = vunpack.c.h.b16 %v2944
          %v3233 = vunpack.c.l.b16 %v2945
          %v3234 = vunpack.c.h.b16 %v2945
          %v3235 = vunpack.c.l.b16 %v2946
          %v3236 = vunpack.c.h.b16 %v2946
          %v3237 = vunpack.c.l.b16 %v2947
          %v3238 = vunpack.c.h.b16 %v2947
          %v3239 = vunpack.c.l.b16 %v2948
          %v3240 = vunpack.c.h.b16 %v2948
          %v3241 = vunpack.c.l.b16 %v2949
          %v3242 = vunpack.c.h.b16 %v2949
          %v3243 = vunpack.c.l.b16 %v2950
          %v3244 = vunpack.c.h.b16 %v2950
          %v3245 = vunpack.c.l.b16 %v2951
          %v3246 = vunpack.c.h.b16 %v2951
          %v3247 = vunpack.c.l.b16 %v2952
          %v3248 = vunpack.c.h.b16 %v2952
          %v3249 = vunpack.c.l.b16 %v2953
          %v3250 = vunpack.c.h.b16 %v2953
          %v3251 = vunpack.c.l.b16 %v2954
          %v3252 = vunpack.c.h.b16 %v2954
          %v3253 = vunpack.c.l.b16 %v2955
          %v3254 = vunpack.c.h.b16 %v2955
          %v3255 = vunpack.c.l.b16 %v2956
          %v3256 = vunpack.c.h.b16 %v2956
          %v3257 = vpack.c.b16 %v3067, %v3065
          %v3258 = vpack.c.b16 %v3068, %v3066
          %v3259 = vpack.c.b16 %v3071, %v3069
          %v3260 = vpack.c.b16 %v3072, %v3070
          %v3261 = vpack.c.b16 %v3075, %v3073
          %v3262 = vpack.c.b16 %v3076, %v3074
          %v3263 = vpack.c.b16 %v3079, %v3077
          %v3264 = vpack.c.b16 %v3080, %v3078
          %v3265 = vpack.c.b16 %v3083, %v3081
          %v3266 = vpack.c.b16 %v3084, %v3082
          %v3267 = vpack.c.b16 %v3087, %v3085
          %v3268 = vpack.c.b16 %v3088, %v3086
          %v3269 = vpack.c.b16 %v3091, %v3089
          %v3270 = vpack.c.b16 %v3092, %v3090
          %v3271 = vpack.c.b16 %v3095, %v3093
          %v3272 = vpack.c.b16 %v3096, %v3094
          %v3273 = vpack.c.b16 %v3099, %v3097
          %v3274 = vpack.c.b16 %v3100, %v3098
          %v3275 = vpack.c.b16 %v3103, %v3101
          %v3276 = vpack.c.b16 %v3104, %v3102
          %v3277 = vpack.c.b16 %v3107, %v3105
          %v3278 = vpack.c.b16 %v3108, %v3106
          %v3279 = vpack.c.b16 %v3111, %v3109
          %v3280 = vpack.c.b16 %v3112, %v3110
          %v3281 = vpack.c.b16 %v3115, %v3113
          %v3282 = vpack.c.b16 %v3116, %v3114
          %v3283 = vpack.c.b16 %v3119, %v3117
          %v3284 = vpack.c.b16 %v3120, %v3118
          %v3285 = vpack.c.b16 %v3123, %v3121
          %v3286 = vpack.c.b16 %v3124, %v3122
          %v3287 = vpack.c.b16 %v3127, %v3125
          %v3288 = vpack.c.b16 %v3128, %v3126
          %v3289 = vpack.c.b16 %v3131, %v3129
          %v3290 = vpack.c.b16 %v3132, %v3130
          %v3291 = vpack.c.b16 %v3135, %v3133
          %v3292 = vpack.c.b16 %v3136, %v3134
          %v3293 = vpack.c.b16 %v3139, %v3137
          %v3294 = vpack.c.b16 %v3140, %v3138
          %v3295 = vpack.c.b16 %v3143, %v3141
          %v3296 = vpack.c.b16 %v3144, %v3142
          %v3297 = vpack.c.b16 %v3147, %v3145
          %v3298 = vpack.c.b16 %v3148, %v3146
          %v3299 = vpack.c.b16 %v3151, %v3149
          %v3300 = vpack.c.b16 %v3152, %v3150
          %v3301 = vpack.c.b16 %v3155, %v3153
          %v3302 = vpack.c.b16 %v3156, %v3154
          %v3303 = vpack.c.b16 %v3159, %v3157
          %v3304 = vpack.c.b16 %v3160, %v3158
          %v3305 = vpack.c.b16 %v3163, %v3161
          %v3306 = vpack.c.b16 %v3164, %v3162
          %v3307 = vpack.c.b16 %v3167, %v3165
          %v3308 = vpack.c.b16 %v3168, %v3166
          %v3309 = vpack.c.b16 %v3171, %v3169
          %v3310 = vpack.c.b16 %v3172, %v3170
          %v3311 = vpack.c.b16 %v3175, %v3173
          %v3312 = vpack.c.b16 %v3176, %v3174
          %v3313 = vpack.c.b16 %v3179, %v3177
          %v3314 = vpack.c.b16 %v3180, %v3178
          %v3315 = vpack.c.b16 %v3183, %v3181
          %v3316 = vpack.c.b16 %v3184, %v3182
          %v3317 = vpack.c.b16 %v3187, %v3185
          %v3318 = vpack.c.b16 %v3188, %v3186
          %v3319 = vpack.c.b16 %v3191, %v3189
          %v3320 = vpack.c.b16 %v3192, %v3190
          %v3321 = vpack.c.b16 %v3195, %v3193
          %v3322 = vpack.c.b16 %v3196, %v3194
          %v3323 = vpack.c.b16 %v3199, %v3197
          %v3324 = vpack.c.b16 %v3200, %v3198
          %v3325 = vpack.c.b16 %v3203, %v3201
          %v3326 = vpack.c.b16 %v3204, %v3202
          %v3327 = vpack.c.b16 %v3207, %v3205
          %v3328 = vpack.c.b16 %v3208, %v3206
          %v3329 = vpack.c.b16 %v3211, %v3209
          %v3330 = vpack.c.b16 %v3212, %v3210
          %v3331 = vpack.c.b16 %v3215, %v3213
          %v3332 = vpack.c.b16 %v3216, %v3214
          %v3333 = vpack.c.b16 %v3219, %v3217
          %v3334 = vpack.c.b16 %v3220, %v3218
          %v3335 = vpack.c.b16 %v3223, %v3221
          %v3336 = vpack.c.b16 %v3224, %v3222
          %v3337 = vpack.c.b16 %v3227, %v3225
          %v3338 = vpack.c.b16 %v3228, %v3226
          %v3339 = vpack.c.b16 %v3231, %v3229
          %v3340 = vpack.c.b16 %v3232, %v3230
          %v3341 = vpack.c.b16 %v3235, %v3233
          %v3342 = vpack.c.b16 %v3236, %v3234
          %v3343 = vpack.c.b16 %v3239, %v3237
          %v3344 = vpack.c.b16 %v3240, %v3238
          %v3345 = vpack.c.b16 %v3243, %v3241
          %v3346 = vpack.c.b16 %v3244, %v3242
          %v3347 = vpack.c.b16 %v3247, %v3245
          %v3348 = vpack.c.b16 %v3248, %v3246
          %v3349 = vpack.c.b16 %v3251, %v3249
          %v3350 = vpack.c.b16 %v3252, %v3250
          %v3351 = vpack.c.b16 %v3255, %v3253
          %v3352 = vpack.c.b16 %v3256, %v3254
          %3449 = vmatprep.subr.bf16.mxu0 %v3258
          %3450 = vmatpush1.bf16.msra.mxu0 %v3257
          %3451 = vmatprep.subr.bf16.mxu0 %v3260
          %3452 = vmatpush1.bf16.msra.mxu0 %v3259
          %3453 = vmatprep.subr.bf16.mxu0 %v3262
          %3454 = vmatpush1.bf16.msra.mxu0 %v3261
          %3455 = vmatprep.subr.bf16.mxu0 %v3264
          %3456 = vmatpush1.bf16.msra.mxu0 %v3263
          %3457 = vmatprep.subr.bf16.mxu0 %v3266
          %3458 = vmatpush1.bf16.msra.mxu0 %v3265
          %3459 = vmatprep.subr.bf16.mxu0 %v3268
          %3460 = vmatpush1.bf16.msra.mxu0 %v3267
          %3461 = vmatprep.subr.bf16.mxu0 %v3270
          %3462 = vmatpush1.bf16.msra.mxu0 %v3269
          %3463 = vmatprep.subr.bf16.mxu0 %v3272
          %3464 = vmatpush1.bf16.msra.mxu0 %v3271
          %3465 = vmatprep.subr.bf16.mxu0 %v3274
          %3466 = vmatpush1.bf16.msra.mxu0 %v3273
          %3467 = vmatprep.subr.bf16.mxu0 %v3276
          %3468 = vmatpush1.bf16.msra.mxu0 %v3275
          %3469 = vmatprep.subr.bf16.mxu0 %v3278
          %3470 = vmatpush1.bf16.msra.mxu0 %v3277
          %3471 = vmatprep.subr.bf16.mxu0 %v3280
          %3472 = vmatpush1.bf16.msra.mxu0 %v3279
          %3473 = vmatprep.subr.bf16.mxu0 %v3282
          %3474 = vmatpush1.bf16.msra.mxu0 %v3281
          %3475 = vmatprep.subr.bf16.mxu0 %v3284
          %3476 = vmatpush1.bf16.msra.mxu0 %v3283
          %3477 = vmatprep.subr.bf16.mxu0 %v3286
          %3478 = vmatpush1.bf16.msra.mxu0 %v3285
          %3479 = vmatprep.subr.bf16.mxu0 %v3288
          %3480 = vmatpush1.bf16.msra.mxu0 %v3287
          %3481 = vmatprep.mubr.bf16.mxu0 %v2856
          %3482 = vmatmul.mubr.bf16.gmra.mrb[0].mxu0 %v2855
          %v3483 = vpop.f32.mrb[0].mxu0
          %v3484 = vadd.f32 %v2962, %v3483
          %v3485 = vpop.f32.mrb[0].mxu0
          %v3486 = vadd.f32 %v2966, %v3485
          %v3487 = vpop.f32.mrb[0].mxu0
          %v3488 = vadd.f32 %v2962, %v3487
          %v3489 = vpop.f32.mrb[0].mxu0
          %v3490 = vadd.f32 %v2966, %v3489
          %3491 = vdwg.mxu0
          %3492 = vmatprep.subr.bf16.mxu0 %v3290
          %3493 = vmatpush1.bf16.msra.mxu0 %v3289
          %3494 = vmatprep.subr.bf16.mxu0 %v3292
          %3495 = vmatpush1.bf16.msra.mxu0 %v3291
          %3496 = vmatprep.subr.bf16.mxu0 %v3294
          %3497 = vmatpush1.bf16.msra.mxu0 %v3293
          %3498 = vmatprep.subr.bf16.mxu0 %v3296
          %3499 = vmatpush1.bf16.msra.mxu0 %v3295
          %3500 = vmatprep.subr.bf16.mxu0 %v3298
          %3501 = vmatpush1.bf16.msra.mxu0 %v3297
          %3502 = vmatprep.subr.bf16.mxu0 %v3300
          %3503 = vmatpush1.bf16.msra.mxu0 %v3299
          %3504 = vmatprep.subr.bf16.mxu0 %v3302
          %3505 = vmatpush1.bf16.msra.mxu0 %v3301
          %3506 = vmatprep.subr.bf16.mxu0 %v3304
          %3507 = vmatpush1.bf16.msra.mxu0 %v3303
          %3508 = vmatprep.subr.bf16.mxu0 %v3306
          %3509 = vmatpush1.bf16.msra.mxu0 %v3305
          %3510 = vmatprep.subr.bf16.mxu0 %v3308
          %3511 = vmatpush1.bf16.msra.mxu0 %v3307
          %3512 = vmatprep.subr.bf16.mxu0 %v3310
          %3513 = vmatpush1.bf16.msra.mxu0 %v3309
          %3514 = vmatprep.subr.bf16.mxu0 %v3312
          %3515 = vmatpush1.bf16.msra.mxu0 %v3311
          %3516 = vmatprep.subr.bf16.mxu0 %v3314
          %3517 = vmatpush1.bf16.msra.mxu0 %v3313
          %3518 = vmatprep.subr.bf16.mxu0 %v3316
          %3519 = vmatpush1.bf16.msra.mxu0 %v3315
          %3520 = vmatprep.subr.bf16.mxu0 %v3318
          %3521 = vmatpush1.bf16.msra.mxu0 %v3317
          %3522 = vmatprep.subr.bf16.mxu0 %v3320
          %3523 = vmatpush1.bf16.msra.mxu0 %v3319
          %3524 = vmatprep.mubr.bf16.mxu0 %v2858
          %3525 = vmatmul.mubr.bf16.gmra.mrb[0].mxu0 %v2857
          %v3526 = vpop.f32.mrb[0].mxu0
          %v3527 = vadd.f32 %v3484, %v3526
          %v3528 = vpop.f32.mrb[0].mxu0
          %v3529 = vadd.f32 %v3486, %v3528
          %v3530 = vpop.f32.mrb[0].mxu0
          %v3531 = vadd.f32 %v3488, %v3530
          %v3532 = vpop.f32.mrb[0].mxu0
          %v3533 = vadd.f32 %v3490, %v3532
          %3534 = vdwg.mxu0
          %3535 = vmatprep.subr.bf16.mxu0 %v3322
          %3536 = vmatpush1.bf16.msra.mxu0 %v3321
          %3537 = vmatprep.subr.bf16.mxu0 %v3324
          %3538 = vmatpush1.bf16.msra.mxu0 %v3323
          %3539 = vmatprep.subr.bf16.mxu0 %v3326
          %3540 = vmatpush1.bf16.msra.mxu0 %v3325
          %3541 = vmatprep.subr.bf16.mxu0 %v3328
          %3542 = vmatpush1.bf16.msra.mxu0 %v3327
          %3543 = vmatprep.subr.bf16.mxu0 %v3330
          %3544 = vmatpush1.bf16.msra.mxu0 %v3329
          %3545 = vmatprep.subr.bf16.mxu0 %v3332
          %3546 = vmatpush1.bf16.msra.mxu0 %v3331
          %3547 = vmatprep.subr.bf16.mxu0 %v3334
          %3548 = vmatpush1.bf16.msra.mxu0 %v3333
          %3549 = vmatprep.subr.bf16.mxu0 %v3336
          %3550 = vmatpush1.bf16.msra.mxu0 %v3335
          %3551 = vmatprep.subr.bf16.mxu0 %v3338
          %3552 = vmatpush1.bf16.msra.mxu0 %v3337
          %3553 = vmatprep.subr.bf16.mxu0 %v3340
          %3554 = vmatpush1.bf16.msra.mxu0 %v3339
          %3555 = vmatprep.subr.bf16.mxu0 %v3342
          %3556 = vmatpush1.bf16.msra.mxu0 %v3341
          %3557 = vmatprep.subr.bf16.mxu0 %v3344
          %3558 = vmatpush1.bf16.msra.mxu0 %v3343
          %3559 = vmatprep.subr.bf16.mxu0 %v3346
          %3560 = vmatpush1.bf16.msra.mxu0 %v3345
          %3561 = vmatprep.subr.bf16.mxu0 %v3348
          %3562 = vmatpush1.bf16.msra.mxu0 %v3347
          %3563 = vmatprep.subr.bf16.mxu0 %v3350
          %3564 = vmatpush1.bf16.msra.mxu0 %v3349
          %3565 = vmatprep.subr.bf16.mxu0 %v3352
          %3566 = vmatpush1.bf16.msra.mxu0 %v3351
          %3567 = vmatprep.mubr.bf16.mxu0 %v2860
          %3568 = vmatmul.mubr.bf16.gmra.mrb[0].mxu0 %v2859
          %v3569 = vpop.f32.mrb[0].mxu0
          %v3570 = vadd.f32 %v3527, %v3569
          %v3571 = vpop.f32.mrb[0].mxu0
          %v3572 = vadd.f32 %v3529, %v3571
          %v3573 = vpop.f32.mrb[0].mxu0
          %v3574 = vadd.f32 %v3531, %v3573
          %v3575 = vpop.f32.mrb[0].mxu0
          %v3576 = vadd.f32 %v3533, %v3575
          %3577 = vdwg.mxu0
          %v3578 = vmax.f32 %v3570, 0.0
          %v3579 = vmax.f32 %v3572, 0.0
          %v3580 = vmax.f32 %v3574, 0.0
          %v3581 = vmax.f32 %v3576, 0.0
          %v3582 = vpack.c.bf16 %v3580, %v3578
          %v3583 = vpack.c.bf16 %v3581, %v3579
          %v3584 = vld [vmem:[#allocation12] sm:$0xf]
          %v3585 = vld [vmem:[#allocation12 + $0x4] sm:$0xf]
          %v3586 = vld [vmem:[#allocation12 + $0x8] sm:$0xf]
          %v3587 = vld [vmem:[#allocation12 + $0xc] sm:$0xf]
          %v3588 = vld [vmem:[#allocation12 + $0x10] sm:$0xf]
          %v3589 = vld [vmem:[#allocation12 + $0x14] sm:$0xf]
          %v3590 = vld [vmem:[#allocation12 + $0x18] sm:$0xf]
          %v3591 = vld [vmem:[#allocation12 + $0x1c] sm:$0xf]
          %v3592 = vld [vmem:[#allocation12 + $0x20] sm:$0xf]
          %v3593 = vld [vmem:[#allocation12 + $0x24] sm:$0xf]
          %v3594 = vld [vmem:[#allocation12 + $0x28] sm:$0xf]
          %v3595 = vld [vmem:[#allocation12 + $0x2c] sm:$0xf]
          %v3596 = vld [vmem:[#allocation12 + $0x30] sm:$0xf]
          %v3597 = vld [vmem:[#allocation12 + $0x34] sm:$0xf]
          %v3598 = vld [vmem:[#allocation12 + $0x38] sm:$0xf]
          %v3599 = vld [vmem:[#allocation12 + $0x3c] sm:$0xf]
          %v3600 = vld [vmem:[#allocation12 + $0x40] sm:$0xf]
          %v3601 = vld [vmem:[#allocation12 + $0x44] sm:$0xf]
          %v3602 = vld [vmem:[#allocation12 + $0x48] sm:$0xf]
          %v3603 = vld [vmem:[#allocation12 + $0x4c] sm:$0xf]
          %v3604 = vld [vmem:[#allocation12 + $0x50] sm:$0xf]
          %v3605 = vld [vmem:[#allocation12 + $0x54] sm:$0xf]
          %v3606 = vld [vmem:[#allocation12 + $0x58] sm:$0xf]
          %v3607 = vld [vmem:[#allocation12 + $0x5c] sm:$0xf]
          %v3608 = vld [vmem:[#allocation12 + $0x60] sm:$0xf]
          %v3609 = vld [vmem:[#allocation12 + $0x64] sm:$0xf]
          %v3610 = vld [vmem:[#allocation12 + $0x68] sm:$0xf]
          %v3611 = vld [vmem:[#allocation12 + $0x6c] sm:$0xf]
          %v3612 = vld [vmem:[#allocation12 + $0x70] sm:$0xf]
          %v3613 = vld [vmem:[#allocation12 + $0x74] sm:$0xf]
          %v3614 = vld [vmem:[#allocation12 + $0x78] sm:$0xf]
          %v3615 = vld [vmem:[#allocation12 + $0x7c] sm:$0xf]
          %v3616 = vld [vmem:[#allocation14] sm:$0x1]
          %v3618 = vlaneseq
          %v3619 = vshrl.u32 %v3618, 7
          %v3620 = vsub.s32 0, %v3619
          %v3621 = vrot.slane %v3616, %v3620
          %v3655 = vunpack.c.l.b16 %v3584
          %v3656 = vunpack.c.l.b16 %v3585
          %v3657 = vunpack.c.l.b16 %v3586
          %v3658 = vunpack.c.l.b16 %v3587
          %v3659 = vunpack.c.l.b16 %v3588
          %v3660 = vunpack.c.l.b16 %v3589
          %v3661 = vunpack.c.l.b16 %v3590
          %v3662 = vunpack.c.l.b16 %v3591
          %v3663 = vunpack.c.l.b16 %v3592
          %v3664 = vunpack.c.l.b16 %v3593
          %v3665 = vunpack.c.l.b16 %v3594
          %v3666 = vunpack.c.l.b16 %v3595
          %v3667 = vunpack.c.l.b16 %v3596
          %v3668 = vunpack.c.l.b16 %v3597
          %v3669 = vunpack.c.l.b16 %v3598
          %v3670 = vunpack.c.l.b16 %v3599
          %v3671 = vunpack.c.l.b16 %v3600
          %v3672 = vunpack.c.l.b16 %v3601
          %v3673 = vunpack.c.l.b16 %v3602
          %v3674 = vunpack.c.l.b16 %v3603
          %v3675 = vunpack.c.l.b16 %v3604
          %v3676 = vunpack.c.l.b16 %v3605
          %v3677 = vunpack.c.l.b16 %v3606
          %v3678 = vunpack.c.l.b16 %v3607
          %v3679 = vunpack.c.l.b16 %v3608
          %v3680 = vunpack.c.l.b16 %v3609
          %v3681 = vunpack.c.l.b16 %v3610
          %v3682 = vunpack.c.l.b16 %v3611
          %v3683 = vunpack.c.l.b16 %v3612
          %v3684 = vunpack.c.l.b16 %v3613
          %v3685 = vunpack.c.l.b16 %v3614
          %v3686 = vunpack.c.l.b16 %v3615
          %v3687 = vpack.c.b16 %v3656, %v3655
          %v3688 = vpack.c.b16 %v3658, %v3657
          %v3689 = vpack.c.b16 %v3660, %v3659
          %v3690 = vpack.c.b16 %v3662, %v3661
          %v3691 = vpack.c.b16 %v3664, %v3663
          %v3692 = vpack.c.b16 %v3666, %v3665
          %v3693 = vpack.c.b16 %v3668, %v3667
          %v3694 = vpack.c.b16 %v3670, %v3669
          %v3695 = vpack.c.b16 %v3672, %v3671
          %v3696 = vpack.c.b16 %v3674, %v3673
          %v3697 = vpack.c.b16 %v3676, %v3675
          %v3698 = vpack.c.b16 %v3678, %v3677
          %v3699 = vpack.c.b16 %v3680, %v3679
          %v3700 = vpack.c.b16 %v3682, %v3681
          %v3701 = vpack.c.b16 %v3684, %v3683
          %v3702 = vpack.c.b16 %v3686, %v3685
          %3719 = vmatprep.subr.bf16.mxu0 0
          %3720 = vmatpush1.bf16.msra.mxu0 %v3687
          %3721 = vmatprep.subr.bf16.mxu0 0
          %3722 = vmatpush1.bf16.msra.mxu0 %v3688
          %3723 = vmatprep.subr.bf16.mxu0 0
          %3724 = vmatpush1.bf16.msra.mxu0 %v3689
          %3725 = vmatprep.subr.bf16.mxu0 0
          %3726 = vmatpush1.bf16.msra.mxu0 %v3690
          %3727 = vmatprep.subr.bf16.mxu0 0
          %3728 = vmatpush1.bf16.msra.mxu0 %v3691
          %3729 = vmatprep.subr.bf16.mxu0 0
          %3730 = vmatpush1.bf16.msra.mxu0 %v3692
          %3731 = vmatprep.subr.bf16.mxu0 0
          %3732 = vmatpush1.bf16.msra.mxu0 %v3693
          %3733 = vmatprep.subr.bf16.mxu0 0
          %3734 = vmatpush1.bf16.msra.mxu0 %v3694
          %3735 = vmatprep.subr.bf16.mxu0 0
          %3736 = vmatpush1.bf16.msra.mxu0 %v3695
          %3737 = vmatprep.subr.bf16.mxu0 0
          %3738 = vmatpush1.bf16.msra.mxu0 %v3696
          %3739 = vmatprep.subr.bf16.mxu0 0
          %3740 = vmatpush1.bf16.msra.mxu0 %v3697
          %3741 = vmatprep.subr.bf16.mxu0 0
          %3742 = vmatpush1.bf16.msra.mxu0 %v3698
          %3743 = vmatprep.subr.bf16.mxu0 0
          %3744 = vmatpush1.bf16.msra.mxu0 %v3699
          %3745 = vmatprep.subr.bf16.mxu0 0
          %3746 = vmatpush1.bf16.msra.mxu0 %v3700
          %3747 = vmatprep.subr.bf16.mxu0 0
          %3748 = vmatpush1.bf16.msra.mxu0 %v3701
          %3749 = vmatprep.subr.bf16.mxu0 0
          %3750 = vmatpush1.bf16.msra.mxu0 %v3702
          %3751 = vmatprep.mubr.bf16.mxu0 %v3583
          %3752 = vmatmul.mubr.bf16.gmra.mrb[0].mxu0 %v3582
          %v3753 = vpop.f32.mrb[0].mxu0
          %v3754 = vadd.f32 %v3621, %v3753
          %v3755 = vpop.f32.mrb[0].mxu0
          %v3756 = vpop.f32.mrb[0].mxu0
          %v3757 = vadd.f32 %v3621, %v3756
          %v3758 = vpop.f32.mrb[0].mxu0
          %3759 = vdwg.mxu0
          %v3760 = vmax.f32 %v3754, 0.0
          %v3761 = vmax.f32 %v3757, 0.0
          %v3762 = vpack.c.bf16 %v3761, %v3760
          %v3763 = vld [vmem:[#allocation15] sm:$0xf]
          %v3764 = vld [vmem:[#allocation15 + $0x4] sm:$0xf]
          %v3765 = vld [vmem:[#allocation15 + $0x8] sm:$0xf]
          %v3766 = vld [vmem:[#allocation15 + $0xc] sm:$0xf]
          %v3767 = vld [vmem:[#allocation15 + $0x10] sm:$0xf]
          %v3768 = vld [vmem:[#allocation15 + $0x14] sm:$0xf]
          %v3769 = vld [vmem:[#allocation15 + $0x18] sm:$0xf]
          %v3770 = vld [vmem:[#allocation15 + $0x1c] sm:$0xf]
          %v3771 = vld [vmem:[#allocation15 + $0x20] sm:$0xf]
          %v3772 = vld [vmem:[#allocation15 + $0x24] sm:$0xf]
          %v3773 = vld [vmem:[#allocation15 + $0x28] sm:$0xf]
          %v3774 = vld [vmem:[#allocation15 + $0x2c] sm:$0xf]
          %v3775 = vld [vmem:[#allocation15 + $0x30] sm:$0xf]
          %v3776 = vld [vmem:[#allocation15 + $0x34] sm:$0xf]
          %v3777 = vld [vmem:[#allocation15 + $0x38] sm:$0xf]
          %v3778 = vld [vmem:[#allocation15 + $0x3c] sm:$0xf]
          %v3779 = vld [vmem:[#allocation17] sm:$0x1]
          %v3781 = vlaneseq
          %v3782 = vshrl.u32 %v3781, 7
          %v3783 = vsub.s32 0, %v3782
          %v3784 = vrot.slane %v3779, %v3783
          %v3802 = vunpack.c.l.b16 %v3763
          %v3803 = vunpack.c.l.b16 %v3764
          %v3804 = vunpack.c.l.b16 %v3765
          %v3805 = vunpack.c.l.b16 %v3766
          %v3806 = vunpack.c.l.b16 %v3767
          %v3807 = vunpack.c.l.b16 %v3768
          %v3808 = vunpack.c.l.b16 %v3769
          %v3809 = vunpack.c.l.b16 %v3770
          %v3810 = vunpack.c.l.b16 %v3771
          %v3811 = vunpack.c.l.b16 %v3772
          %v3812 = vunpack.c.l.b16 %v3773
          %v3813 = vunpack.c.l.b16 %v3774
          %v3814 = vunpack.c.l.b16 %v3775
          %v3815 = vunpack.c.l.b16 %v3776
          %v3816 = vunpack.c.l.b16 %v3777
          %v3817 = vunpack.c.l.b16 %v3778
          %v3818 = vpack.c.b16 %v3803, %v3802
          %v3819 = vpack.c.b16 %v3805, %v3804
          %v3820 = vpack.c.b16 %v3807, %v3806
          %v3821 = vpack.c.b16 %v3809, %v3808
          %v3822 = vpack.c.b16 %v3811, %v3810
          %v3823 = vpack.c.b16 %v3813, %v3812
          %v3824 = vpack.c.b16 %v3815, %v3814
          %v3825 = vpack.c.b16 %v3817, %v3816
          %3834 = vmatprep.subr.bf16.mxu0 0
          %3835 = vmatpush1.bf16.msra.mxu0 %v3818
          %3836 = vmatprep.subr.bf16.mxu0 0
          %3837 = vmatpush1.bf16.msra.mxu0 %v3819
          %3838 = vmatprep.subr.bf16.mxu0 0
          %3839 = vmatpush1.bf16.msra.mxu0 %v3820
          %3840 = vmatprep.subr.bf16.mxu0 0
          %3841 = vmatpush1.bf16.msra.mxu0 %v3821
          %3842 = vmatprep.subr.bf16.mxu0 0
          %3843 = vmatpush1.bf16.msra.mxu0 %v3822
          %3844 = vmatprep.subr.bf16.mxu0 0
          %3845 = vmatpush1.bf16.msra.mxu0 %v3823
          %3846 = vmatprep.subr.bf16.mxu0 0
          %3847 = vmatpush1.bf16.msra.mxu0 %v3824
          %3848 = vmatprep.subr.bf16.mxu0 0
          %3849 = vmatpush1.bf16.msra.mxu0 %v3825
          %3850 = vmatprep.subr.bf16.mxu0 0
          %3851 = vmatpush1.bf16.msra.mxu0 0
          %3852 = vmatprep.subr.bf16.mxu0 0
          %3853 = vmatpush1.bf16.msra.mxu0 0
          %3854 = vmatprep.subr.bf16.mxu0 0
          %3855 = vmatpush1.bf16.msra.mxu0 0
          %3856 = vmatprep.subr.bf16.mxu0 0
          %3857 = vmatpush1.bf16.msra.mxu0 0
          %3858 = vmatprep.subr.bf16.mxu0 0
          %3859 = vmatpush1.bf16.msra.mxu0 0
          %3860 = vmatprep.subr.bf16.mxu0 0
          %3861 = vmatpush1.bf16.msra.mxu0 0
          %3862 = vmatprep.subr.bf16.mxu0 0
          %3863 = vmatpush1.bf16.msra.mxu0 0
          %3864 = vmatprep.subr.bf16.mxu0 0
          %3865 = vmatpush1.bf16.msra.mxu0 0
          %3866 = vmatprep.mubr.bf16.mxu0 0
          %3867 = vmatmul.mubr.bf16.gmra.mrb[0].mxu0 %v3762
          %v3868 = vpop.f32.mrb[0].mxu0
          %v3869 = vadd.f32 %v3784, %v3868
          %v3870 = vpop.f32.mrb[0].mxu0
          %v3871 = vpop.f32.mrb[0].mxu0
          %v3872 = vadd.f32 %v3784, %v3871
          %v3873 = vpop.f32.mrb[0].mxu0
          %3874 = vdwg.mxu0
          %v3875 = vmax.f32 %v3869, 0.0
          %v3876 = vmax.f32 %v3872, 0.0
          %v3877 = vpack.c.bf16 %v3876, %v3875
          %v3878 = vld [vmem:[#allocation18] sm:$0xf]
          %v3879 = vld [vmem:[#allocation18 + $0x4] sm:$0xf]
          %v3880 = vld [vmem:[#allocation18 + $0x8] sm:$0xf]
          %v3881 = vld [vmem:[#allocation18 + $0xc] sm:$0xf]
          %v3882 = vld [vmem:[#allocation18 + $0x10] sm:$0xf]
          %v3883 = vld [vmem:[#allocation18 + $0x14] sm:$0xf]
          %v3884 = vld [vmem:[#allocation18 + $0x18] sm:$0xf]
          %v3885 = vld [vmem:[#allocation18 + $0x1c] sm:$0xf]
          %v3886 = vld [vmem:[#allocation18 + $0x20] sm:$0xf]
          %v3887 = vld [vmem:[#allocation18 + $0x24] sm:$0xf]
          %v3888 = vld [vmem:[#allocation18 + $0x28] sm:$0xf]
          %v3889 = vld [vmem:[#allocation18 + $0x2c] sm:$0xf]
          %v3890 = vld [vmem:[#allocation18 + $0x30] sm:$0xf]
          %v3891 = vld [vmem:[#allocation18 + $0x34] sm:$0xf]
          %v3892 = vld [vmem:[#allocation18 + $0x38] sm:$0xf]
          %v3893 = vld [vmem:[#allocation18 + $0x3c] sm:$0xf]
          %v3894 = vld [vmem:[#allocation20] sm:$0x1]
          %v3896 = vlaneseq
          %v3897 = vshrl.u32 %v3896, 7
          %v3898 = vsub.s32 0, %v3897
          %v3899 = vrot.slane %v3894, %v3898
          %v3917 = vunpack.c.l.b16 %v3878
          %v3918 = vunpack.c.l.b16 %v3879
          %v3919 = vunpack.c.l.b16 %v3880
          %v3920 = vunpack.c.l.b16 %v3881
          %v3921 = vunpack.c.l.b16 %v3882
          %v3922 = vunpack.c.l.b16 %v3883
          %v3923 = vunpack.c.l.b16 %v3884
          %v3924 = vunpack.c.l.b16 %v3885
          %v3925 = vunpack.c.l.b16 %v3886
          %v3926 = vunpack.c.l.b16 %v3887
          %v3927 = vunpack.c.l.b16 %v3888
          %v3928 = vunpack.c.l.b16 %v3889
          %v3929 = vunpack.c.l.b16 %v3890
          %v3930 = vunpack.c.l.b16 %v3891
          %v3931 = vunpack.c.l.b16 %v3892
          %v3932 = vunpack.c.l.b16 %v3893
          %v3933 = vpack.c.b16 %v3918, %v3917
          %v3934 = vpack.c.b16 %v3920, %v3919
          %v3935 = vpack.c.b16 %v3922, %v3921
          %v3936 = vpack.c.b16 %v3924, %v3923
          %v3937 = vpack.c.b16 %v3926, %v3925
          %v3938 = vpack.c.b16 %v3928, %v3927
          %v3939 = vpack.c.b16 %v3930, %v3929
          %v3940 = vpack.c.b16 %v3932, %v3931
          %3949 = vmatprep.subr.bf16.mxu0 0
          %3950 = vmatpush1.bf16.msra.mxu0 %v3933
          %3951 = vmatprep.subr.bf16.mxu0 0
          %3952 = vmatpush1.bf16.msra.mxu0 %v3934
          %3953 = vmatprep.subr.bf16.mxu0 0
          %3954 = vmatpush1.bf16.msra.mxu0 %v3935
          %3955 = vmatprep.subr.bf16.mxu0 0
          %3956 = vmatpush1.bf16.msra.mxu0 %v3936
          %3957 = vmatprep.subr.bf16.mxu0 0
          %3958 = vmatpush1.bf16.msra.mxu0 %v3937
          %3959 = vmatprep.subr.bf16.mxu0 0
          %3960 = vmatpush1.bf16.msra.mxu0 %v3938
          %3961 = vmatprep.subr.bf16.mxu0 0
          %3962 = vmatpush1.bf16.msra.mxu0 %v3939
          %3963 = vmatprep.subr.bf16.mxu0 0
          %3964 = vmatpush1.bf16.msra.mxu0 %v3940
          %3965 = vmatprep.subr.bf16.mxu0 0
          %3966 = vmatpush1.bf16.msra.mxu0 0
          %3967 = vmatprep.subr.bf16.mxu0 0
          %3968 = vmatpush1.bf16.msra.mxu0 0
          %3969 = vmatprep.subr.bf16.mxu0 0
          %3970 = vmatpush1.bf16.msra.mxu0 0
          %3971 = vmatprep.subr.bf16.mxu0 0
          %3972 = vmatpush1.bf16.msra.mxu0 0
          %3973 = vmatprep.subr.bf16.mxu0 0
          %3974 = vmatpush1.bf16.msra.mxu0 0
          %3975 = vmatprep.subr.bf16.mxu0 0
          %3976 = vmatpush1.bf16.msra.mxu0 0
          %3977 = vmatprep.subr.bf16.mxu0 0
          %3978 = vmatpush1.bf16.msra.mxu0 0
          %3979 = vmatprep.subr.bf16.mxu0 0
          %3980 = vmatpush1.bf16.msra.mxu0 0
          %3981 = vmatprep.mubr.bf16.mxu0 0
          %3982 = vmatmul.mubr.bf16.gmra.mrb[0].mxu0 %v3877
          %v3983 = vpop.f32.mrb[0].mxu0
          %v3984 = vadd.f32 %v3899, %v3983
          %v3985 = vpop.f32.mrb[0].mxu0
          %v3986 = vpop.f32.mrb[0].mxu0
          %v3987 = vadd.f32 %v3899, %v3986
          %v3988 = vpop.f32.mrb[0].mxu0
          %3989 = vdwg.mxu0
          %v3990 = vmax.f32 %v3984, 0.0
          %v3991 = vmax.f32 %v3987, 0.0
          %3992 = vst [vmem:[#allocation21] sm:$0xff] %v3990
          %3993 = vst [vmem:[#allocation21 + $0x8] sm:$0xff] %v3991
        $region116: #{tpu_custom_call.1} parent=63 // pred_fallthru
          _
        // Predicated region
        $region117: #{tpu_custom_call.1} parent=63 // pred_check
          %p3994 = pneg %p306
        $region118: #{tpu_custom_call.1} parent=63 // pred_check_branch
          %3996 = sbr.rel (%p3994) target = $region120
        $region119: #{tpu_custom_call.1} parent=63 // pred_region
          %s3997 = smul.u32 2, %s37
          %s3999 = ssub.s32 256, 256
          %4000 = vsyncadd [#allocation5], %s3999
          %s4001 = smul.addr %s3997, 128
          %s4002 = scalar_lea.hbm %s11, %s4001
          %s4003 = sshll.u32 [#allocation21], 4
          %s4004 = int_to_ptr.vmem [resolvable:$true] %s4003
          %4009 = dma.vmem_to_hbm [thread:$0]  %s4004, 256, %s4002, [#allocation5], 128, 128, 8
        $region120: #{tpu_custom_call.1} parent=63 // pred_fallthru
          _
        // Predicated region
        $region121: #{tpu_custom_call.1} parent=63 // pred_check
          %p4010 = pneg %p306
        $region122: #{tpu_custom_call.1} parent=63 // pred_check_branch
          %4012 = sbr.rel (%p4010) target = $region124
        $region123: #{tpu_custom_call.1} parent=63 // pred_region
          %4013 = dma.done [#allocation5], 256
        $region124: #{tpu_custom_call.1} parent=63 // pred_fallthru
          _
      $region64: #{tpu_custom_call.1} parent=5 // pred_fallthru
        _
      %p4014 = scmp.le.s32.totalorder 2, %s28
      // Predicated region
      $region125: #{tpu_custom_call.1} parent=5 // pred_check
        %p4015 = pneg %p4014
      $region126: #{tpu_custom_call.1} parent=5 // pred_check_branch
        %4017 = sbr.rel (%p4015) target = $region128
      $region127: #{tpu_custom_call.1} parent=5 // pred_region
        %s4018 = ssub.s32 %s28, 2
      $region128: #{tpu_custom_call.1} parent=5 // pred_fallthru
        _
    $region6: #{tpu_custom_call.1} parent=1 // loop_footer
      %s32 = sadd.s32 1, %s28
    $region7: #{tpu_custom_call.1} parent=1 // loop_footer_branch
      %27 = sbr.rel target = $region3
    $region8: #{tpu_custom_call.1} parent=1 // loop_exit
      _
    %4019 = vsyncpa [#allocation4], 1
    %s4020 = scalar_lea.sflag [#allocation4], 1
    %4021 = vsyncpa %s4020, 1
    %4022 = vsyncpa [#allocation7], 1
    %s4023 = scalar_lea.sflag [#allocation7], 1
    %4024 = vsyncpa %s4023, 1
    %4025 = vsyncpa [#allocation10], 1
    %4026 = vsyncpa [#allocation13], 1
    %4027 = vsyncpa [#allocation16], 1
    %4028 = vsyncpa [#allocation19], 1
    %4029 = vsyncpa [#allocation5], 1
    %s4030 = scalar_lea.sflag [#allocation5], 1
    %4031 = vsyncpa %s4030, 1

</llo_original>
